<compile_context>
chip_gen: v7x
topology: tpu7x:2x2x1
jax: 0.10.0
libtpu: 0.0.40
codegen_flags: <defaults>
</compile_context>

<pallas_src>
import functools
import math

import jax
import jax.numpy as jnp
from jax.experimental import pallas as pl
from jax.experimental.pallas import tpu as pltpu


def _context_block_kernel(x_ref, w1_ref, shift_ref, alpha_ref, wd_ref,
                          o_ref, pad_ref, *,
                          N, n_ch, H, W, dilations, pad_max):
    """Fused ContextBlock forward; one grid step = the whole (small) batch.

    x_ref:     (N, Cin, H*W)         input, lane-dense (H*W lanes)          [VMEM]
    w1_ref:    (n_ch, Cin)           1x1 conv weight with BN scale folded   [VMEM]
    shift_ref: (n_ch, 1)             BN shift  beta - mean*scale            [VMEM]
    alpha_ref: (n_ch, 1)             PReLU per-channel slope                [VMEM]
    wd_ref:    (4*n_ch*9,)           depthwise weights, 4 branches          [SMEM]
    o_ref:     (N, 4*n_ch, H*W)      output, lane-dense                     [VMEM]
    pad_ref:   (N, n_ch, H+2p, W+2p) zero-padded intermediate scratch       [VMEM]
    """
    HW = H * W

    # ---- stage 1: 1x1 conv (BN scale folded) + BN shift + PReLU -------------
    pad_ref[...] = jnp.zeros_like(pad_ref)      # zero the halo once
    w1 = w1_ref[...]                            # (n_ch, Cin)
    shift = shift_ref[...]                      # (n_ch, 1) -> broadcast over lanes
    alpha = alpha_ref[...]                      # (n_ch, 1)
    for nb in range(N):                         # N is tiny; fully unrolled
        y = jnp.dot(w1, x_ref[nb],              # single MXU matmul -> (n_ch, HW)
                    preferred_element_type=jnp.float32)
        y = y + shift
        y = jnp.where(y > 0, y, alpha * y)      # PReLU
        pad_ref[nb, :, pad_max:pad_max + H, pad_max:pad_max + W] = (
            y.reshape(n_ch, H, W))

    # ---- stage 2: 4 depthwise 3x3 branches (dilations 1,2,4,6) on the VPU ----
    taps = [(i, j) for i in range(3) for j in range(3)]
    for b, d in enumerate(dilations):
        for c in range(n_ch):
            base = (b * n_ch + c) * 9
            acc = None
            for (i, j) in taps:
                r0 = pad_max + (i - 1) * d
                c0 = pad_max + (j - 1) * d
                sl = pad_ref[:, c, r0:r0 + H, c0:c0 + W]      # (N, H, W)
                term = sl * wd_ref[base + i * 3 + j]          # SMEM scalar broadcast
                acc = term if acc is None else acc + term
            # lane-dense store: (N, H, W) -> (N, H*W) lanes
            o_ref[:, b * n_ch + c, :] = acc.reshape(N, HW)


def context_block(x_nchw, w1, bn_gamma, bn_beta, bn_mean, bn_var, prelu_alpha,
                  w_loc, w_sur1, w_sur2, w_sur3, *,
                  dilation_rate=(2, 4, 6), eps=1e-3):
    """ContextBlock forward (eval-mode BN).

    x_nchw : (N, nIn, H, W)           — PyTorch layout
    w1     : (n, nIn, 1, 1)           — 1x1 conv weight, n = nOut // 4
    w_loc, w_sur1..3 : (n, 1, 3, 3)   — depthwise conv weights (groups = n)
    returns: (N, 4*n, H, W)
    """
    N, Cin, H, W = x_nchw.shape
    n_ch = w1.shape[0]
    Cout = 4 * n_ch
    HW = H * W
    dilations = (1,) + tuple(dilation_rate)       # [F_loc, F_sur1, F_sur2, F_sur3]
    pad_max = max(dilations)                      # 3x3 with pad=d -> halo = max dilation
    Hp, Wp = H + 2 * pad_max, W + 2 * pad_max

    # Free trailing-dim reshape (memory layout preserved; no transpose, no pad).
    x_flat = x_nchw.reshape(N, Cin, HW).astype(jnp.float32)

    # Fold BN scale into the 1x1 weight; only shift + PReLU remain in the kernel.
    scale = (bn_gamma.astype(jnp.float32)
             / jnp.sqrt(bn_var.astype(jnp.float32) + eps))                 # (n,)
    w1s = w1[:, :, 0, 0].astype(jnp.float32) * scale[:, None]              # (n, Cin)
    shift = (bn_beta.astype(jnp.float32)
             - bn_mean.astype(jnp.float32) * scale).reshape(n_ch, 1)
    alpha = prelu_alpha.astype(jnp.float32).reshape(n_ch, 1)

    # Depthwise weights flattened for SMEM:  idx = ((branch*n + c)*3 + kh)*3 + kw
    wd_flat = jnp.concatenate(
        [w.astype(jnp.float32).reshape(n_ch * 9)
         for w in (w_loc, w_sur1, w_sur2, w_sur3)])                        # (4*n*9,)

    kernel = functools.partial(_context_block_kernel,
                               N=N, n_ch=n_ch, H=H, W=W,
                               dilations=dilations, pad_max=pad_max)

    out_flat = pl.pallas_call(
        kernel,
        out_shape=jax.ShapeDtypeStruct((N, Cout, HW), jnp.float32),
        grid=(1,),                                # whole (tiny) batch in one step
        in_specs=[
            pl.BlockSpec((N, Cin, HW), lambda i: (0, 0, 0)),
            pl.BlockSpec((n_ch, Cin), lambda i: (0, 0)),
            pl.BlockSpec((n_ch, 1), lambda i: (0, 0)),
            pl.BlockSpec((n_ch, 1), lambda i: (0, 0)),
            pl.BlockSpec(memory_space=pltpu.MemorySpace.SMEM),
        ],
        out_specs=pl.BlockSpec((N, Cout, HW), lambda i: (0, 0, 0)),
        scratch_shapes=[pltpu.VMEM((N, n_ch, Hp, Wp), jnp.float32)],
        compiler_params=pltpu.CompilerParams(
            dimension_semantics=("arbitrary",)),
    )(x_flat, w1s, shift, alpha, wd_flat)

    # Free trailing-dim reshape back to NCHW.
    return out_flat.reshape(N, Cout, H, W)


def _reference(x, w1, gamma, beta, rmean, rvar, alpha,
               w_loc, w_sur1, w_sur2, w_sur3, *,
               dilation_rate=(2, 4, 6), eps=1e-3):
    """Pure-JAX reference mirroring the PyTorch forward (eval-mode BN)."""
    x = x.astype(jnp.float32)
    y = jax.lax.conv_general_dilated(
        x, w1.astype(jnp.float32), (1, 1), ((0, 0), (0, 0)),
        dimension_numbers=("NCHW", "OIHW", "NCHW"))
    scale = gamma / jnp.sqrt(rvar + eps)
    shift = beta - rmean * scale
    y = y * scale[None, :, None, None] + shift[None, :, None, None]
    y = jnp.where(y > 0, y, alpha[None, :, None, None] * y)

    def depthwise(feat, w, d):
        return jax.lax.conv_general_dilated(
            feat, w.astype(jnp.float32), (1, 1), ((d, d), (d, d)),
            rhs_dilation=(d, d),
            dimension_numbers=("NCHW", "OIHW", "NCHW"),
            feature_group_count=feat.shape[1])

    outs = [depthwise(y, w_loc, 1),
            depthwise(y, w_sur1, dilation_rate[0]),
            depthwise(y, w_sur2, dilation_rate[1]),
            depthwise(y, w_sur3, dilation_rate[2])]
    return jnp.concatenate(outs, axis=1)


if __name__ == "__main__":
    # ContextBlock(nIn=4, nOut=16) -> n = 4; input (2, 4, 16, 16).
    N, nIn, nOut, H, W = 2, 4, 16, 16, 16
    n_ch = nOut // 4
    dil = (2, 4, 6)

    key = jax.random.PRNGKey(0)
    keys = jax.random.split(key, 11)

    x = jax.random.normal(keys[0], (N, nIn, H, W), jnp.float32)

    # Conv2d 1x1 weight (kaiming-uniform-like bound), no bias.
    b1 = 1.0 / math.sqrt(nIn * 1 * 1)
    w1 = jax.random.uniform(keys[1], (n_ch, nIn, 1, 1), jnp.float32,
                            minval=-b1, maxval=b1)

    # BatchNorm2d(eps=1e-3) parameters / running stats (eval-mode), non-trivial.
    gamma = 1.0 + 0.1 * jax.random.normal(keys[2], (n_ch,), jnp.float32)
    beta = 0.1 * jax.random.normal(keys[3], (n_ch,), jnp.float32)
    rmean = 0.1 * jax.random.normal(keys[4], (n_ch,), jnp.float32)
    rvar = jnp.abs(1.0 + 0.1 * jax.random.normal(keys[5], (n_ch,), jnp.float32))

    # PReLU per-channel slope (PyTorch default 0.25 + small jitter).
    alpha = 0.25 + 0.01 * jax.random.normal(keys[6], (n_ch,), jnp.float32)

    # Depthwise 3x3 weights (groups = n_ch -> PyTorch weight shape (n_ch, 1, 3, 3)).
    bd = 1.0 / math.sqrt(1 * 3 * 3)
    w_loc = jax.random.uniform(keys[7], (n_ch, 1, 3, 3), jnp.float32, minval=-bd, maxval=bd)
    w_s1 = jax.random.uniform(keys[8], (n_ch, 1, 3, 3), jnp.float32, minval=-bd, maxval=bd)
    w_s2 = jax.random.uniform(keys[9], (n_ch, 1, 3, 3), jnp.float32, minval=-bd, maxval=bd)
    w_s3 = jax.random.uniform(keys[10], (n_ch, 1, 3, 3), jnp.float32, minval=-bd, maxval=bd)

    out = context_block(x, w1, gamma, beta, rmean, rvar, alpha,
                        w_loc, w_s1, w_s2, w_s3, dilation_rate=dil, eps=1e-3)
    out = jax.block_until_ready(out)

    ref = _reference(x, w1, gamma, beta, rmean, rvar, alpha,
                     w_loc, w_s1, w_s2, w_s3, dilation_rate=dil, eps=1e-3)

    assert out.shape == (N, nOut, H, W), out.shape
    max_err = float(jnp.max(jnp.abs(out - ref)))
    assert jnp.allclose(out, ref, atol=1e-4, rtol=1e-4), max_err

    print("KERNEL_OK")
</pallas_src>

<mosaic_0001>
module attributes {stable_mosaic.version = 11 : i64} {
  func.func @_context_block_kernel(%arg0: i32, %arg1: memref<2x4x256xf32, #tpu.memory_space<vmem>>, %arg2: memref<4x4xf32, #tpu.memory_space<vmem>>, %arg3: memref<4x1xf32, #tpu.memory_space<vmem>>, %arg4: memref<4x1xf32, #tpu.memory_space<vmem>>, %arg5: memref<144xf32, #tpu.memory_space<smem>>, %arg6: memref<2x16x256xf32, #tpu.memory_space<vmem>>, %arg7: memref<2x4x28x28xf32, #tpu.memory_space<vmem>>) attributes {dimension_semantics = [#tpu.dimension_semantics<arbitrary>], iteration_bounds = array<i64: 1>, scalar_prefetch = 0 : i64, scratch_operands = 1 : i64, tpu.core_type = #tpu.core_type<tc>, window_params = [{pipeline_mode = #tpu.pipeline_mode<synchronous>, transform_indices = @transform_0, window_bounds = array<i64: 2, 4, 256>}, {pipeline_mode = #tpu.pipeline_mode<synchronous>, transform_indices = @transform_1, window_bounds = array<i64: 4, 4>}, {pipeline_mode = #tpu.pipeline_mode<synchronous>, transform_indices = @transform_2, window_bounds = array<i64: 4, 1>}, {pipeline_mode = #tpu.pipeline_mode<synchronous>, transform_indices = @transform_3, window_bounds = array<i64: 4, 1>}, {transform_indices = @transform_4, window_bounds = array<i64: 144>}, {pipeline_mode = #tpu.pipeline_mode<synchronous>, transform_indices = @transform_5, window_bounds = array<i64: 2, 16, 256>}]} {
    %cst = arith.constant 0.000000e+00 : f32
    %0 = vector.broadcast %cst : f32 to vector<2x4x28x28xf32>
    %c0 = arith.constant 0 : index
    %c0_0 = arith.constant 0 : index
    %c0_1 = arith.constant 0 : index
    %c0_2 = arith.constant 0 : index
    %1 = vector.load %arg7[%c0, %c0_0, %c0_1, %c0_2] : memref<2x4x28x28xf32, #tpu.memory_space<vmem>>, vector<2x4x28x28xf32>
    tpu.vector_store %arg7[%c0, %c0_0, %c0_1, %c0_2], %0 {strides = array<i32>} : memref<2x4x28x28xf32, #tpu.memory_space<vmem>>, vector<2x4x28x28xf32>,
    %c0_3 = arith.constant 0 : index
    %c0_4 = arith.constant 0 : index
    %2 = vector.load %arg2[%c0_3, %c0_4] : memref<4x4xf32, #tpu.memory_space<vmem>>, vector<4x4xf32>
    %c0_5 = arith.constant 0 : index
    %c0_6 = arith.constant 0 : index
    %3 = vector.load %arg3[%c0_5, %c0_6] : memref<4x1xf32, #tpu.memory_space<vmem>>, vector<4x1xf32>
    %c0_7 = arith.constant 0 : index
    %c0_8 = arith.constant 0 : index
    %4 = vector.load %arg4[%c0_7, %c0_8] : memref<4x1xf32, #tpu.memory_space<vmem>>, vector<4x1xf32>
    %c0_9 = arith.constant 0 : index
    %c0_10 = arith.constant 0 : index
    %c0_11 = arith.constant 0 : index
    %5 = vector.load %arg1[%c0_9, %c0_10, %c0_11] : memref<2x4x256xf32, #tpu.memory_space<vmem>>, vector<1x4x256xf32>
    %6 = vector.shape_cast %5 : vector<1x4x256xf32> to vector<4x256xf32>
    %cst_12 = arith.constant dense<0.000000e+00> : vector<4x256xf32>
    %7 = tpu.matmul %2, %6, %cst_12 {dimension_numbers = #tpu.dot_dimension_numbers<[1], [0], [0], [1], [0, 0, 1, 1], [], []>} : vector<4x4xf32>, vector<4x256xf32>, vector<4x256xf32> -> vector<4x256xf32>
    %8 = vector.broadcast %3 : vector<4x1xf32> to vector<4x256xf32>
    %9 = arith.addf %7, %8 : vector<4x256xf32>
    %cst_13 = arith.constant 0.000000e+00 : f32
    %10 = vector.broadcast %cst_13 : f32 to vector<4x256xf32>
    %11 = arith.cmpf ogt, %9, %10 : vector<4x256xf32>
    %12 = vector.broadcast %4 : vector<4x1xf32> to vector<4x256xf32>
    %13 = arith.mulf %12, %9 : vector<4x256xf32>
    %14 = arith.select %11, %9, %13 : vector<4x256xi1>, vector<4x256xf32>
    %15 = vector.shape_cast %14 : vector<4x256xf32> to vector<4x16x16xf32>
    %c0_14 = arith.constant 0 : index
    %c0_15 = arith.constant 0 : index
    %c6 = arith.constant 6 : index
    %c6_16 = arith.constant 6 : index
    %16 = vector.load %arg7[%c0_14, %c0_15, %c6, %c6_16] : memref<2x4x28x28xf32, #tpu.memory_space<vmem>>, vector<1x4x16x16xf32>
    %17 = vector.shape_cast %16 : vector<1x4x16x16xf32> to vector<4x16x16xf32>
    %18 = vector.shape_cast %15 : vector<4x16x16xf32> to vector<1x4x16x16xf32>
    tpu.vector_store %arg7[%c0_14, %c0_15, %c6, %c6_16], %18 {strides = array<i32>} : memref<2x4x28x28xf32, #tpu.memory_space<vmem>>, vector<1x4x16x16xf32>,
    %c1 = arith.constant 1 : index
    %c0_17 = arith.constant 0 : index
    %c0_18 = arith.constant 0 : index
    %19 = vector.load %arg1[%c1, %c0_17, %c0_18] : memref<2x4x256xf32, #tpu.memory_space<vmem>>, vector<1x4x256xf32>
    %20 = vector.shape_cast %19 : vector<1x4x256xf32> to vector<4x256xf32>
    %cst_19 = arith.constant dense<0.000000e+00> : vector<4x256xf32>
    %21 = tpu.matmul %2, %20, %cst_19 {dimension_numbers = #tpu.dot_dimension_numbers<[1], [0], [0], [1], [0, 0, 1, 1], [], []>} : vector<4x4xf32>, vector<4x256xf32>, vector<4x256xf32> -> vector<4x256xf32>
    %22 = vector.broadcast %3 : vector<4x1xf32> to vector<4x256xf32>
    %23 = arith.addf %21, %22 : vector<4x256xf32>
    %cst_20 = arith.constant 0.000000e+00 : f32
    %24 = vector.broadcast %cst_20 : f32 to vector<4x256xf32>
    %25 = arith.cmpf ogt, %23, %24 : vector<4x256xf32>
    %26 = vector.broadcast %4 : vector<4x1xf32> to vector<4x256xf32>
    %27 = arith.mulf %26, %23 : vector<4x256xf32>
    %28 = arith.select %25, %23, %27 : vector<4x256xi1>, vector<4x256xf32>
    %29 = vector.shape_cast %28 : vector<4x256xf32> to vector<4x16x16xf32>
    %c1_21 = arith.constant 1 : index
    %c0_22 = arith.constant 0 : index
    %c6_23 = arith.constant 6 : index
    %c6_24 = arith.constant 6 : index
    %30 = vector.load %arg7[%c1_21, %c0_22, %c6_23, %c6_24] : memref<2x4x28x28xf32, #tpu.memory_space<vmem>>, vector<1x4x16x16xf32>
    %31 = vector.shape_cast %30 : vector<1x4x16x16xf32> to vector<4x16x16xf32>
    %32 = vector.shape_cast %29 : vector<4x16x16xf32> to vector<1x4x16x16xf32>
    tpu.vector_store %arg7[%c1_21, %c0_22, %c6_23, %c6_24], %32 {strides = array<i32>} : memref<2x4x28x28xf32, #tpu.memory_space<vmem>>, vector<1x4x16x16xf32>,
    %c0_25 = arith.constant 0 : index
    %c0_26 = arith.constant 0 : index
    %c5 = arith.constant 5 : index
    %c5_27 = arith.constant 5 : index
    %33 = vector.load %arg7[%c0_25, %c0_26, %c5, %c5_27] : memref<2x4x28x28xf32, #tpu.memory_space<vmem>>, vector<2x1x16x16xf32>
    %34 = vector.shape_cast %33 : vector<2x1x16x16xf32> to vector<2x16x16xf32>
    %c0_28 = arith.constant 0 : index
    %35 = memref.load %arg5[%c0_28] : memref<144xf32, #tpu.memory_space<smem>>
    %36 = vector.broadcast %35 : f32 to vector<2x16x16xf32>
    %37 = arith.mulf %34, %36 : vector<2x16x16xf32>
    %c0_29 = arith.constant 0 : index
    %c0_30 = arith.constant 0 : index
    %c5_31 = arith.constant 5 : index
    %c6_32 = arith.constant 6 : index
    %38 = vector.load %arg7[%c0_29, %c0_30, %c5_31, %c6_32] : memref<2x4x28x28xf32, #tpu.memory_space<vmem>>, vector<2x1x16x16xf32>
    %39 = vector.shape_cast %38 : vector<2x1x16x16xf32> to vector<2x16x16xf32>
    %c1_33 = arith.constant 1 : index
    %40 = memref.load %arg5[%c1_33] : memref<144xf32, #tpu.memory_space<smem>>
    %41 = vector.broadcast %40 : f32 to vector<2x16x16xf32>
    %42 = arith.mulf %39, %41 : vector<2x16x16xf32>
    %43 = arith.addf %37, %42 : vector<2x16x16xf32>
    %c0_34 = arith.constant 0 : index
    %c0_35 = arith.constant 0 : index
    %c5_36 = arith.constant 5 : index
    %c7 = arith.constant 7 : index
    %44 = vector.load %arg7[%c0_34, %c0_35, %c5_36, %c7] : memref<2x4x28x28xf32, #tpu.memory_space<vmem>>, vector<2x1x16x16xf32>
    %45 = vector.shape_cast %44 : vector<2x1x16x16xf32> to vector<2x16x16xf32>
    %c2 = arith.constant 2 : index
    %46 = memref.load %arg5[%c2] : memref<144xf32, #tpu.memory_space<smem>>
    %47 = vector.broadcast %46 : f32 to vector<2x16x16xf32>
    %48 = arith.mulf %45, %47 : vector<2x16x16xf32>
    %49 = arith.addf %43, %48 : vector<2x16x16xf32>
    %c0_37 = arith.constant 0 : index
    %c0_38 = arith.constant 0 : index
    %c6_39 = arith.constant 6 : index
    %c5_40 = arith.constant 5 : index
    %50 = vector.load %arg7[%c0_37, %c0_38, %c6_39, %c5_40] : memref<2x4x28x28xf32, #tpu.memory_space<vmem>>, vector<2x1x16x16xf32>
    %51 = vector.shape_cast %50 : vector<2x1x16x16xf32> to vector<2x16x16xf32>
    %c3 = arith.constant 3 : index
    %52 = memref.load %arg5[%c3] : memref<144xf32, #tpu.memory_space<smem>>
    %53 = vector.broadcast %52 : f32 to vector<2x16x16xf32>
    %54 = arith.mulf %51, %53 : vector<2x16x16xf32>
    %55 = arith.addf %49, %54 : vector<2x16x16xf32>
    %c0_41 = arith.constant 0 : index
    %c0_42 = arith.constant 0 : index
    %c6_43 = arith.constant 6 : index
    %c6_44 = arith.constant 6 : index
    %56 = vector.load %arg7[%c0_41, %c0_42, %c6_43, %c6_44] : memref<2x4x28x28xf32, #tpu.memory_space<vmem>>, vector<2x1x16x16xf32>
    %57 = vector.shape_cast %56 : vector<2x1x16x16xf32> to vector<2x16x16xf32>
    %c4 = arith.constant 4 : index
    %58 = memref.load %arg5[%c4] : memref<144xf32, #tpu.memory_space<smem>>
    %59 = vector.broadcast %58 : f32 to vector<2x16x16xf32>
    %60 = arith.mulf %57, %59 : vector<2x16x16xf32>
    %61 = arith.addf %55, %60 : vector<2x16x16xf32>
    %c0_45 = arith.constant 0 : index
    %c0_46 = arith.constant 0 : index
    %c6_47 = arith.constant 6 : index
    %c7_48 = arith.constant 7 : index
    %62 = vector.load %arg7[%c0_45, %c0_46, %c6_47, %c7_48] : memref<2x4x28x28xf32, #tpu.memory_space<vmem>>, vector<2x1x16x16xf32>
    %63 = vector.shape_cast %62 : vector<2x1x16x16xf32> to vector<2x16x16xf32>
    %c5_49 = arith.constant 5 : index
    %64 = memref.load %arg5[%c5_49] : memref<144xf32, #tpu.memory_space<smem>>
    %65 = vector.broadcast %64 : f32 to vector<2x16x16xf32>
    %66 = arith.mulf %63, %65 : vector<2x16x16xf32>
    %67 = arith.addf %61, %66 : vector<2x16x16xf32>
    %c0_50 = arith.constant 0 : index
    %c0_51 = arith.constant 0 : index
    %c7_52 = arith.constant 7 : index
    %c5_53 = arith.constant 5 : index
    %68 = vector.load %arg7[%c0_50, %c0_51, %c7_52, %c5_53] : memref<2x4x28x28xf32, #tpu.memory_space<vmem>>, vector<2x1x16x16xf32>
    %69 = vector.shape_cast %68 : vector<2x1x16x16xf32> to vector<2x16x16xf32>
    %c6_54 = arith.constant 6 : index
    %70 = memref.load %arg5[%c6_54] : memref<144xf32, #tpu.memory_space<smem>>
    %71 = vector.broadcast %70 : f32 to vector<2x16x16xf32>
    %72 = arith.mulf %69, %71 : vector<2x16x16xf32>
    %73 = arith.addf %67, %72 : vector<2x16x16xf32>
    %c0_55 = arith.constant 0 : index
    %c0_56 = arith.constant 0 : index
    %c7_57 = arith.constant 7 : index
    %c6_58 = arith.constant 6 : index
    %74 = vector.load %arg7[%c0_55, %c0_56, %c7_57, %c6_58] : memref<2x4x28x28xf32, #tpu.memory_space<vmem>>, vector<2x1x16x16xf32>
    %75 = vector.shape_cast %74 : vector<2x1x16x16xf32> to vector<2x16x16xf32>
    %c7_59 = arith.constant 7 : index
    %76 = memref.load %arg5[%c7_59] : memref<144xf32, #tpu.memory_space<smem>>
    %77 = vector.broadcast %76 : f32 to vector<2x16x16xf32>
    %78 = arith.mulf %75, %77 : vector<2x16x16xf32>
    %79 = arith.addf %73, %78 : vector<2x16x16xf32>
    %c0_60 = arith.constant 0 : index
    %c0_61 = arith.constant 0 : index
    %c7_62 = arith.constant 7 : index
    %c7_63 = arith.constant 7 : index
    %80 = vector.load %arg7[%c0_60, %c0_61, %c7_62, %c7_63] : memref<2x4x28x28xf32, #tpu.memory_space<vmem>>, vector<2x1x16x16xf32>
    %81 = vector.shape_cast %80 : vector<2x1x16x16xf32> to vector<2x16x16xf32>
    %c8 = arith.constant 8 : index
    %82 = memref.load %arg5[%c8] : memref<144xf32, #tpu.memory_space<smem>>
    %83 = vector.broadcast %82 : f32 to vector<2x16x16xf32>
    %84 = arith.mulf %81, %83 : vector<2x16x16xf32>
    %85 = arith.addf %79, %84 : vector<2x16x16xf32>
    %86 = vector.shape_cast %85 : vector<2x16x16xf32> to vector<2x256xf32>
    %c0_64 = arith.constant 0 : index
    %c0_65 = arith.constant 0 : index
    %c0_66 = arith.constant 0 : index
    %87 = vector.load %arg6[%c0_64, %c0_65, %c0_66] : memref<2x16x256xf32, #tpu.memory_space<vmem>>, vector<2x1x256xf32>
    %88 = vector.shape_cast %87 : vector<2x1x256xf32> to vector<2x256xf32>
    %89 = vector.shape_cast %86 : vector<2x256xf32> to vector<2x1x256xf32>
    tpu.vector_store %arg6[%c0_64, %c0_65, %c0_66], %89 {strides = array<i32>} : memref<2x16x256xf32, #tpu.memory_space<vmem>>, vector<2x1x256xf32>,
    %c0_67 = arith.constant 0 : index
    %c1_68 = arith.constant 1 : index
    %c5_69 = arith.constant 5 : index
    %c5_70 = arith.constant 5 : index
    %90 = vector.load %arg7[%c0_67, %c1_68, %c5_69, %c5_70] : memref<2x4x28x28xf32, #tpu.memory_space<vmem>>, vector<2x1x16x16xf32>
    %91 = vector.shape_cast %90 : vector<2x1x16x16xf32> to vector<2x16x16xf32>
    %c9 = arith.constant 9 : index
    %92 = memref.load %arg5[%c9] : memref<144xf32, #tpu.memory_space<smem>>
    %93 = vector.broadcast %92 : f32 to vector<2x16x16xf32>
    %94 = arith.mulf %91, %93 : vector<2x16x16xf32>
    %c0_71 = arith.constant 0 : index
    %c1_72 = arith.constant 1 : index
    %c5_73 = arith.constant 5 : index
    %c6_74 = arith.constant 6 : index
    %95 = vector.load %arg7[%c0_71, %c1_72, %c5_73, %c6_74] : memref<2x4x28x28xf32, #tpu.memory_space<vmem>>, vector<2x1x16x16xf32>
    %96 = vector.shape_cast %95 : vector<2x1x16x16xf32> to vector<2x16x16xf32>
    %c10 = arith.constant 10 : index
    %97 = memref.load %arg5[%c10] : memref<144xf32, #tpu.memory_space<smem>>
    %98 = vector.broadcast %97 : f32 to vector<2x16x16xf32>
    %99 = arith.mulf %96, %98 : vector<2x16x16xf32>
    %100 = arith.addf %94, %99 : vector<2x16x16xf32>
    %c0_75 = arith.constant 0 : index
    %c1_76 = arith.constant 1 : index
    %c5_77 = arith.constant 5 : index
    %c7_78 = arith.constant 7 : index
    %101 = vector.load %arg7[%c0_75, %c1_76, %c5_77, %c7_78] : memref<2x4x28x28xf32, #tpu.memory_space<vmem>>, vector<2x1x16x16xf32>
    %102 = vector.shape_cast %101 : vector<2x1x16x16xf32> to vector<2x16x16xf32>
    %c11 = arith.constant 11 : index
    %103 = memref.load %arg5[%c11] : memref<144xf32, #tpu.memory_space<smem>>
    %104 = vector.broadcast %103 : f32 to vector<2x16x16xf32>
    %105 = arith.mulf %102, %104 : vector<2x16x16xf32>
    %106 = arith.addf %100, %105 : vector<2x16x16xf32>
    %c0_79 = arith.constant 0 : index
    %c1_80 = arith.constant 1 : index
    %c6_81 = arith.constant 6 : index
    %c5_82 = arith.constant 5 : index
    %107 = vector.load %arg7[%c0_79, %c1_80, %c6_81, %c5_82] : memref<2x4x28x28xf32, #tpu.memory_space<vmem>>, vector<2x1x16x16xf32>
    %108 = vector.shape_cast %107 : vector<2x1x16x16xf32> to vector<2x16x16xf32>
    %c12 = arith.constant 12 : index
    %109 = memref.load %arg5[%c12] : memref<144xf32, #tpu.memory_space<smem>>
    %110 = vector.broadcast %109 : f32 to vector<2x16x16xf32>
    %111 = arith.mulf %108, %110 : vector<2x16x16xf32>
    %112 = arith.addf %106, %111 : vector<2x16x16xf32>
    %c0_83 = arith.constant 0 : index
    %c1_84 = arith.constant 1 : index
    %c6_85 = arith.constant 6 : index
    %c6_86 = arith.constant 6 : index
    %113 = vector.load %arg7[%c0_83, %c1_84, %c6_85, %c6_86] : memref<2x4x28x28xf32, #tpu.memory_space<vmem>>, vector<2x1x16x16xf32>
    %114 = vector.shape_cast %113 : vector<2x1x16x16xf32> to vector<2x16x16xf32>
    %c13 = arith.constant 13 : index
    %115 = memref.load %arg5[%c13] : memref<144xf32, #tpu.memory_space<smem>>
    %116 = vector.broadcast %115 : f32 to vector<2x16x16xf32>
    %117 = arith.mulf %114, %116 : vector<2x16x16xf32>
    %118 = arith.addf %112, %117 : vector<2x16x16xf32>
    %c0_87 = arith.constant 0 : index
    %c1_88 = arith.constant 1 : index
    %c6_89 = arith.constant 6 : index
    %c7_90 = arith.constant 7 : index
    %119 = vector.load %arg7[%c0_87, %c1_88, %c6_89, %c7_90] : memref<2x4x28x28xf32, #tpu.memory_space<vmem>>, vector<2x1x16x16xf32>
    %120 = vector.shape_cast %119 : vector<2x1x16x16xf32> to vector<2x16x16xf32>
    %c14 = arith.constant 14 : index
    %121 = memref.load %arg5[%c14] : memref<144xf32, #tpu.memory_space<smem>>
    %122 = vector.broadcast %121 : f32 to vector<2x16x16xf32>
    %123 = arith.mulf %120, %122 : vector<2x16x16xf32>
    %124 = arith.addf %118, %123 : vector<2x16x16xf32>
    %c0_91 = arith.constant 0 : index
    %c1_92 = arith.constant 1 : index
    %c7_93 = arith.constant 7 : index
    %c5_94 = arith.constant 5 : index
    %125 = vector.load %arg7[%c0_91, %c1_92, %c7_93, %c5_94] : memref<2x4x28x28xf32, #tpu.memory_space<vmem>>, vector<2x1x16x16xf32>
    %126 = vector.shape_cast %125 : vector<2x1x16x16xf32> to vector<2x16x16xf32>
    %c15 = arith.constant 15 : index
    %127 = memref.load %arg5[%c15] : memref<144xf32, #tpu.memory_space<smem>>
    %128 = vector.broadcast %127 : f32 to vector<2x16x16xf32>
    %129 = arith.mulf %126, %128 : vector<2x16x16xf32>
    %130 = arith.addf %124, %129 : vector<2x16x16xf32>
    %c0_95 = arith.constant 0 : index
    %c1_96 = arith.constant 1 : index
    %c7_97 = arith.constant 7 : index
    %c6_98 = arith.constant 6 : index
    %131 = vector.load %arg7[%c0_95, %c1_96, %c7_97, %c6_98] : memref<2x4x28x28xf32, #tpu.memory_space<vmem>>, vector<2x1x16x16xf32>
    %132 = vector.shape_cast %131 : vector<2x1x16x16xf32> to vector<2x16x16xf32>
    %c16 = arith.constant 16 : index
    %133 = memref.load %arg5[%c16] : memref<144xf32, #tpu.memory_space<smem>>
    %134 = vector.broadcast %133 : f32 to vector<2x16x16xf32>
    %135 = arith.mulf %132, %134 : vector<2x16x16xf32>
    %136 = arith.addf %130, %135 : vector<2x16x16xf32>
    %c0_99 = arith.constant 0 : index
    %c1_100 = arith.constant 1 : index
    %c7_101 = arith.constant 7 : index
    %c7_102 = arith.constant 7 : index
    %137 = vector.load %arg7[%c0_99, %c1_100, %c7_101, %c7_102] : memref<2x4x28x28xf32, #tpu.memory_space<vmem>>, vector<2x1x16x16xf32>
    %138 = vector.shape_cast %137 : vector<2x1x16x16xf32> to vector<2x16x16xf32>
    %c17 = arith.constant 17 : index
    %139 = memref.load %arg5[%c17] : memref<144xf32, #tpu.memory_space<smem>>
    %140 = vector.broadcast %139 : f32 to vector<2x16x16xf32>
    %141 = arith.mulf %138, %140 : vector<2x16x16xf32>
    %142 = arith.addf %136, %141 : vector<2x16x16xf32>
    %143 = vector.shape_cast %142 : vector<2x16x16xf32> to vector<2x256xf32>
    %c0_103 = arith.constant 0 : index
    %c1_104 = arith.constant 1 : index
    %c0_105 = arith.constant 0 : index
    %144 = vector.load %arg6[%c0_103, %c1_104, %c0_105] : memref<2x16x256xf32, #tpu.memory_space<vmem>>, vector<2x1x256xf32>
    %145 = vector.shape_cast %144 : vector<2x1x256xf32> to vector<2x256xf32>
    %146 = vector.shape_cast %143 : vector<2x256xf32> to vector<2x1x256xf32>
    tpu.vector_store %arg6[%c0_103, %c1_104, %c0_105], %146 {strides = array<i32>} : memref<2x16x256xf32, #tpu.memory_space<vmem>>, vector<2x1x256xf32>,
    %c0_106 = arith.constant 0 : index
    %c2_107 = arith.constant 2 : index
    %c5_108 = arith.constant 5 : index
    %c5_109 = arith.constant 5 : index
    %147 = vector.load %arg7[%c0_106, %c2_107, %c5_108, %c5_109] : memref<2x4x28x28xf32, #tpu.memory_space<vmem>>, vector<2x1x16x16xf32>
    %148 = vector.shape_cast %147 : vector<2x1x16x16xf32> to vector<2x16x16xf32>
    %c18 = arith.constant 18 : index
    %149 = memref.load %arg5[%c18] : memref<144xf32, #tpu.memory_space<smem>>
    %150 = vector.broadcast %149 : f32 to vector<2x16x16xf32>
    %151 = arith.mulf %148, %150 : vector<2x16x16xf32>
    %c0_110 = arith.constant 0 : index
    %c2_111 = arith.constant 2 : index
    %c5_112 = arith.constant 5 : index
    %c6_113 = arith.constant 6 : index
    %152 = vector.load %arg7[%c0_110, %c2_111, %c5_112, %c6_113] : memref<2x4x28x28xf32, #tpu.memory_space<vmem>>, vector<2x1x16x16xf32>
    %153 = vector.shape_cast %152 : vector<2x1x16x16xf32> to vector<2x16x16xf32>
    %c19 = arith.constant 19 : index
    %154 = memref.load %arg5[%c19] : memref<144xf32, #tpu.memory_space<smem>>
    %155 = vector.broadcast %154 : f32 to vector<2x16x16xf32>
    %156 = arith.mulf %153, %155 : vector<2x16x16xf32>
    %157 = arith.addf %151, %156 : vector<2x16x16xf32>
    %c0_114 = arith.constant 0 : index
    %c2_115 = arith.constant 2 : index
    %c5_116 = arith.constant 5 : index
    %c7_117 = arith.constant 7 : index
    %158 = vector.load %arg7[%c0_114, %c2_115, %c5_116, %c7_117] : memref<2x4x28x28xf32, #tpu.memory_space<vmem>>, vector<2x1x16x16xf32>
    %159 = vector.shape_cast %158 : vector<2x1x16x16xf32> to vector<2x16x16xf32>
    %c20 = arith.constant 20 : index
    %160 = memref.load %arg5[%c20] : memref<144xf32, #tpu.memory_space<smem>>
    %161 = vector.broadcast %160 : f32 to vector<2x16x16xf32>
    %162 = arith.mulf %159, %161 : vector<2x16x16xf32>
    %163 = arith.addf %157, %162 : vector<2x16x16xf32>
    %c0_118 = arith.constant 0 : index
    %c2_119 = arith.constant 2 : index
    %c6_120 = arith.constant 6 : index
    %c5_121 = arith.constant 5 : index
    %164 = vector.load %arg7[%c0_118, %c2_119, %c6_120, %c5_121] : memref<2x4x28x28xf32, #tpu.memory_space<vmem>>, vector<2x1x16x16xf32>
    %165 = vector.shape_cast %164 : vector<2x1x16x16xf32> to vector<2x16x16xf32>
    %c21 = arith.constant 21 : index
    %166 = memref.load %arg5[%c21] : memref<144xf32, #tpu.memory_space<smem>>
    %167 = vector.broadcast %166 : f32 to vector<2x16x16xf32>
    %168 = arith.mulf %165, %167 : vector<2x16x16xf32>
    %169 = arith.addf %163, %168 : vector<2x16x16xf32>
    %c0_122 = arith.constant 0 : index
    %c2_123 = arith.constant 2 : index
    %c6_124 = arith.constant 6 : index
    %c6_125 = arith.constant 6 : index
    %170 = vector.load %arg7[%c0_122, %c2_123, %c6_124, %c6_125] : memref<2x4x28x28xf32, #tpu.memory_space<vmem>>, vector<2x1x16x16xf32>
    %171 = vector.shape_cast %170 : vector<2x1x16x16xf32> to vector<2x16x16xf32>
    %c22 = arith.constant 22 : index
    %172 = memref.load %arg5[%c22] : memref<144xf32, #tpu.memory_space<smem>>
    %173 = vector.broadcast %172 : f32 to vector<2x16x16xf32>
    %174 = arith.mulf %171, %173 : vector<2x16x16xf32>
    %175 = arith.addf %169, %174 : vector<2x16x16xf32>
    %c0_126 = arith.constant 0 : index
    %c2_127 = arith.constant 2 : index
    %c6_128 = arith.constant 6 : index
    %c7_129 = arith.constant 7 : index
    %176 = vector.load %arg7[%c0_126, %c2_127, %c6_128, %c7_129] : memref<2x4x28x28xf32, #tpu.memory_space<vmem>>, vector<2x1x16x16xf32>
    %177 = vector.shape_cast %176 : vector<2x1x16x16xf32> to vector<2x16x16xf32>
    %c23 = arith.constant 23 : index
    %178 = memref.load %arg5[%c23] : memref<144xf32, #tpu.memory_space<smem>>
    %179 = vector.broadcast %178 : f32 to vector<2x16x16xf32>
    %180 = arith.mulf %177, %179 : vector<2x16x16xf32>
    %181 = arith.addf %175, %180 : vector<2x16x16xf32>
    %c0_130 = arith.constant 0 : index
    %c2_131 = arith.constant 2 : index
    %c7_132 = arith.constant 7 : index
    %c5_133 = arith.constant 5 : index
    %182 = vector.load %arg7[%c0_130, %c2_131, %c7_132, %c5_133] : memref<2x4x28x28xf32, #tpu.memory_space<vmem>>, vector<2x1x16x16xf32>
    %183 = vector.shape_cast %182 : vector<2x1x16x16xf32> to vector<2x16x16xf32>
    %c24 = arith.constant 24 : index
    %184 = memref.load %arg5[%c24] : memref<144xf32, #tpu.memory_space<smem>>
    %185 = vector.broadcast %184 : f32 to vector<2x16x16xf32>
    %186 = arith.mulf %183, %185 : vector<2x16x16xf32>
    %187 = arith.addf %181, %186 : vector<2x16x16xf32>
    %c0_134 = arith.constant 0 : index
    %c2_135 = arith.constant 2 : index
    %c7_136 = arith.constant 7 : index
    %c6_137 = arith.constant 6 : index
    %188 = vector.load %arg7[%c0_134, %c2_135, %c7_136, %c6_137] : memref<2x4x28x28xf32, #tpu.memory_space<vmem>>, vector<2x1x16x16xf32>
    %189 = vector.shape_cast %188 : vector<2x1x16x16xf32> to vector<2x16x16xf32>
    %c25 = arith.constant 25 : index
    %190 = memref.load %arg5[%c25] : memref<144xf32, #tpu.memory_space<smem>>
    %191 = vector.broadcast %190 : f32 to vector<2x16x16xf32>
    %192 = arith.mulf %189, %191 : vector<2x16x16xf32>
    %193 = arith.addf %187, %192 : vector<2x16x16xf32>
    %c0_138 = arith.constant 0 : index
    %c2_139 = arith.constant 2 : index
    %c7_140 = arith.constant 7 : index
    %c7_141 = arith.constant 7 : index
    %194 = vector.load %arg7[%c0_138, %c2_139, %c7_140, %c7_141] : memref<2x4x28x28xf32, #tpu.memory_space<vmem>>, vector<2x1x16x16xf32>
    %195 = vector.shape_cast %194 : vector<2x1x16x16xf32> to vector<2x16x16xf32>
    %c26 = arith.constant 26 : index
    %196 = memref.load %arg5[%c26] : memref<144xf32, #tpu.memory_space<smem>>
    %197 = vector.broadcast %196 : f32 to vector<2x16x16xf32>
    %198 = arith.mulf %195, %197 : vector<2x16x16xf32>
    %199 = arith.addf %193, %198 : vector<2x16x16xf32>
    %200 = vector.shape_cast %199 : vector<2x16x16xf32> to vector<2x256xf32>
    %c0_142 = arith.constant 0 : index
    %c2_143 = arith.constant 2 : index
    %c0_144 = arith.constant 0 : index
    %201 = vector.load %arg6[%c0_142, %c2_143, %c0_144] : memref<2x16x256xf32, #tpu.memory_space<vmem>>, vector<2x1x256xf32>
    %202 = vector.shape_cast %201 : vector<2x1x256xf32> to vector<2x256xf32>
    %203 = vector.shape_cast %200 : vector<2x256xf32> to vector<2x1x256xf32>
    tpu.vector_store %arg6[%c0_142, %c2_143, %c0_144], %203 {strides = array<i32>} : memref<2x16x256xf32, #tpu.memory_space<vmem>>, vector<2x1x256xf32>,
    %c0_145 = arith.constant 0 : index
    %c3_146 = arith.constant 3 : index
    %c5_147 = arith.constant 5 : index
    %c5_148 = arith.constant 5 : index
    %204 = vector.load %arg7[%c0_145, %c3_146, %c5_147, %c5_148] : memref<2x4x28x28xf32, #tpu.memory_space<vmem>>, vector<2x1x16x16xf32>
    %205 = vector.shape_cast %204 : vector<2x1x16x16xf32> to vector<2x16x16xf32>
    %c27 = arith.constant 27 : index
    %206 = memref.load %arg5[%c27] : memref<144xf32, #tpu.memory_space<smem>>
    %207 = vector.broadcast %206 : f32 to vector<2x16x16xf32>
    %208 = arith.mulf %205, %207 : vector<2x16x16xf32>
    %c0_149 = arith.constant 0 : index
    %c3_150 = arith.constant 3 : index
    %c5_151 = arith.constant 5 : index
    %c6_152 = arith.constant 6 : index
    %209 = vector.load %arg7[%c0_149, %c3_150, %c5_151, %c6_152] : memref<2x4x28x28xf32, #tpu.memory_space<vmem>>, vector<2x1x16x16xf32>
    %210 = vector.shape_cast %209 : vector<2x1x16x16xf32> to vector<2x16x16xf32>
    %c28 = arith.constant 28 : index
    %211 = memref.load %arg5[%c28] : memref<144xf32, #tpu.memory_space<smem>>
    %212 = vector.broadcast %211 : f32 to vector<2x16x16xf32>
    %213 = arith.mulf %210, %212 : vector<2x16x16xf32>
    %214 = arith.addf %208, %213 : vector<2x16x16xf32>
    %c0_153 = arith.constant 0 : index
    %c3_154 = arith.constant 3 : index
    %c5_155 = arith.constant 5 : index
    %c7_156 = arith.constant 7 : index
    %215 = vector.load %arg7[%c0_153, %c3_154, %c5_155, %c7_156] : memref<2x4x28x28xf32, #tpu.memory_space<vmem>>, vector<2x1x16x16xf32>
    %216 = vector.shape_cast %215 : vector<2x1x16x16xf32> to vector<2x16x16xf32>
    %c29 = arith.constant 29 : index
    %217 = memref.load %arg5[%c29] : memref<144xf32, #tpu.memory_space<smem>>
    %218 = vector.broadcast %217 : f32 to vector<2x16x16xf32>
    %219 = arith.mulf %216, %218 : vector<2x16x16xf32>
    %220 = arith.addf %214, %219 : vector<2x16x16xf32>
    %c0_157 = arith.constant 0 : index
    %c3_158 = arith.constant 3 : index
    %c6_159 = arith.constant 6 : index
    %c5_160 = arith.constant 5 : index
    %221 = vector.load %arg7[%c0_157, %c3_158, %c6_159, %c5_160] : memref<2x4x28x28xf32, #tpu.memory_space<vmem>>, vector<2x1x16x16xf32>
    %222 = vector.shape_cast %221 : vector<2x1x16x16xf32> to vector<2x16x16xf32>
    %c30 = arith.constant 30 : index
    %223 = memref.load %arg5[%c30] : memref<144xf32, #tpu.memory_space<smem>>
    %224 = vector.broadcast %223 : f32 to vector<2x16x16xf32>
    %225 = arith.mulf %222, %224 : vector<2x16x16xf32>
    %226 = arith.addf %220, %225 : vector<2x16x16xf32>
    %c0_161 = arith.constant 0 : index
    %c3_162 = arith.constant 3 : index
    %c6_163 = arith.constant 6 : index
    %c6_164 = arith.constant 6 : index
    %227 = vector.load %arg7[%c0_161, %c3_162, %c6_163, %c6_164] : memref<2x4x28x28xf32, #tpu.memory_space<vmem>>, vector<2x1x16x16xf32>
    %228 = vector.shape_cast %227 : vector<2x1x16x16xf32> to vector<2x16x16xf32>
    %c31 = arith.constant 31 : index
    %229 = memref.load %arg5[%c31] : memref<144xf32, #tpu.memory_space<smem>>
    %230 = vector.broadcast %229 : f32 to vector<2x16x16xf32>
    %231 = arith.mulf %228, %230 : vector<2x16x16xf32>
    %232 = arith.addf %226, %231 : vector<2x16x16xf32>
    %c0_165 = arith.constant 0 : index
    %c3_166 = arith.constant 3 : index
    %c6_167 = arith.constant 6 : index
    %c7_168 = arith.constant 7 : index
    %233 = vector.load %arg7[%c0_165, %c3_166, %c6_167, %c7_168] : memref<2x4x28x28xf32, #tpu.memory_space<vmem>>, vector<2x1x16x16xf32>
    %234 = vector.shape_cast %233 : vector<2x1x16x16xf32> to vector<2x16x16xf32>
    %c32 = arith.constant 32 : index
    %235 = memref.load %arg5[%c32] : memref<144xf32, #tpu.memory_space<smem>>
    %236 = vector.broadcast %235 : f32 to vector<2x16x16xf32>
    %237 = arith.mulf %234, %236 : vector<2x16x16xf32>
    %238 = arith.addf %232, %237 : vector<2x16x16xf32>
    %c0_169 = arith.constant 0 : index
    %c3_170 = arith.constant 3 : index
    %c7_171 = arith.constant 7 : index
    %c5_172 = arith.constant 5 : index
    %239 = vector.load %arg7[%c0_169, %c3_170, %c7_171, %c5_172] : memref<2x4x28x28xf32, #tpu.memory_space<vmem>>, vector<2x1x16x16xf32>
    %240 = vector.shape_cast %239 : vector<2x1x16x16xf32> to vector<2x16x16xf32>
    %c33 = arith.constant 33 : index
    %241 = memref.load %arg5[%c33] : memref<144xf32, #tpu.memory_space<smem>>
    %242 = vector.broadcast %241 : f32 to vector<2x16x16xf32>
    %243 = arith.mulf %240, %242 : vector<2x16x16xf32>
    %244 = arith.addf %238, %243 : vector<2x16x16xf32>
    %c0_173 = arith.constant 0 : index
    %c3_174 = arith.constant 3 : index
    %c7_175 = arith.constant 7 : index
    %c6_176 = arith.constant 6 : index
    %245 = vector.load %arg7[%c0_173, %c3_174, %c7_175, %c6_176] : memref<2x4x28x28xf32, #tpu.memory_space<vmem>>, vector<2x1x16x16xf32>
    %246 = vector.shape_cast %245 : vector<2x1x16x16xf32> to vector<2x16x16xf32>
    %c34 = arith.constant 34 : index
    %247 = memref.load %arg5[%c34] : memref<144xf32, #tpu.memory_space<smem>>
    %248 = vector.broadcast %247 : f32 to vector<2x16x16xf32>
    %249 = arith.mulf %246, %248 : vector<2x16x16xf32>
    %250 = arith.addf %244, %249 : vector<2x16x16xf32>
    %c0_177 = arith.constant 0 : index
    %c3_178 = arith.constant 3 : index
    %c7_179 = arith.constant 7 : index
    %c7_180 = arith.constant 7 : index
    %251 = vector.load %arg7[%c0_177, %c3_178, %c7_179, %c7_180] : memref<2x4x28x28xf32, #tpu.memory_space<vmem>>, vector<2x1x16x16xf32>
    %252 = vector.shape_cast %251 : vector<2x1x16x16xf32> to vector<2x16x16xf32>
    %c35 = arith.constant 35 : index
    %253 = memref.load %arg5[%c35] : memref<144xf32, #tpu.memory_space<smem>>
    %254 = vector.broadcast %253 : f32 to vector<2x16x16xf32>
    %255 = arith.mulf %252, %254 : vector<2x16x16xf32>
    %256 = arith.addf %250, %255 : vector<2x16x16xf32>
    %257 = vector.shape_cast %256 : vector<2x16x16xf32> to vector<2x256xf32>
    %c0_181 = arith.constant 0 : index
    %c3_182 = arith.constant 3 : index
    %c0_183 = arith.constant 0 : index
    %258 = vector.load %arg6[%c0_181, %c3_182, %c0_183] : memref<2x16x256xf32, #tpu.memory_space<vmem>>, vector<2x1x256xf32>
    %259 = vector.shape_cast %258 : vector<2x1x256xf32> to vector<2x256xf32>
    %260 = vector.shape_cast %257 : vector<2x256xf32> to vector<2x1x256xf32>
    tpu.vector_store %arg6[%c0_181, %c3_182, %c0_183], %260 {strides = array<i32>} : memref<2x16x256xf32, #tpu.memory_space<vmem>>, vector<2x1x256xf32>,
    %c0_184 = arith.constant 0 : index
    %c0_185 = arith.constant 0 : index
    %c4_186 = arith.constant 4 : index
    %c4_187 = arith.constant 4 : index
    %261 = vector.load %arg7[%c0_184, %c0_185, %c4_186, %c4_187] : memref<2x4x28x28xf32, #tpu.memory_space<vmem>>, vector<2x1x16x16xf32>
    %262 = vector.shape_cast %261 : vector<2x1x16x16xf32> to vector<2x16x16xf32>
    %c36 = arith.constant 36 : index
    %263 = memref.load %arg5[%c36] : memref<144xf32, #tpu.memory_space<smem>>
    %264 = vector.broadcast %263 : f32 to vector<2x16x16xf32>
    %265 = arith.mulf %262, %264 : vector<2x16x16xf32>
    %c0_188 = arith.constant 0 : index
    %c0_189 = arith.constant 0 : index
    %c4_190 = arith.constant 4 : index
    %c6_191 = arith.constant 6 : index
    %266 = vector.load %arg7[%c0_188, %c0_189, %c4_190, %c6_191] : memref<2x4x28x28xf32, #tpu.memory_space<vmem>>, vector<2x1x16x16xf32>
    %267 = vector.shape_cast %266 : vector<2x1x16x16xf32> to vector<2x16x16xf32>
    %c37 = arith.constant 37 : index
    %268 = memref.load %arg5[%c37] : memref<144xf32, #tpu.memory_space<smem>>
    %269 = vector.broadcast %268 : f32 to vector<2x16x16xf32>
    %270 = arith.mulf %267, %269 : vector<2x16x16xf32>
    %271 = arith.addf %265, %270 : vector<2x16x16xf32>
    %c0_192 = arith.constant 0 : index
    %c0_193 = arith.constant 0 : index
    %c4_194 = arith.constant 4 : index
    %c8_195 = arith.constant 8 : index
    %272 = vector.load %arg7[%c0_192, %c0_193, %c4_194, %c8_195] : memref<2x4x28x28xf32, #tpu.memory_space<vmem>>, vector<2x1x16x16xf32>
    %273 = vector.shape_cast %272 : vector<2x1x16x16xf32> to vector<2x16x16xf32>
    %c38 = arith.constant 38 : index
    %274 = memref.load %arg5[%c38] : memref<144xf32, #tpu.memory_space<smem>>
    %275 = vector.broadcast %274 : f32 to vector<2x16x16xf32>
    %276 = arith.mulf %273, %275 : vector<2x16x16xf32>
    %277 = arith.addf %271, %276 : vector<2x16x16xf32>
    %c0_196 = arith.constant 0 : index
    %c0_197 = arith.constant 0 : index
    %c6_198 = arith.constant 6 : index
    %c4_199 = arith.constant 4 : index
    %278 = vector.load %arg7[%c0_196, %c0_197, %c6_198, %c4_199] : memref<2x4x28x28xf32, #tpu.memory_space<vmem>>, vector<2x1x16x16xf32>
    %279 = vector.shape_cast %278 : vector<2x1x16x16xf32> to vector<2x16x16xf32>
    %c39 = arith.constant 39 : index
    %280 = memref.load %arg5[%c39] : memref<144xf32, #tpu.memory_space<smem>>
    %281 = vector.broadcast %280 : f32 to vector<2x16x16xf32>
    %282 = arith.mulf %279, %281 : vector<2x16x16xf32>
    %283 = arith.addf %277, %282 : vector<2x16x16xf32>
    %c0_200 = arith.constant 0 : index
    %c0_201 = arith.constant 0 : index
    %c6_202 = arith.constant 6 : index
    %c6_203 = arith.constant 6 : index
    %284 = vector.load %arg7[%c0_200, %c0_201, %c6_202, %c6_203] : memref<2x4x28x28xf32, #tpu.memory_space<vmem>>, vector<2x1x16x16xf32>
    %285 = vector.shape_cast %284 : vector<2x1x16x16xf32> to vector<2x16x16xf32>
    %c40 = arith.constant 40 : index
    %286 = memref.load %arg5[%c40] : memref<144xf32, #tpu.memory_space<smem>>
    %287 = vector.broadcast %286 : f32 to vector<2x16x16xf32>
    %288 = arith.mulf %285, %287 : vector<2x16x16xf32>
    %289 = arith.addf %283, %288 : vector<2x16x16xf32>
    %c0_204 = arith.constant 0 : index
    %c0_205 = arith.constant 0 : index
    %c6_206 = arith.constant 6 : index
    %c8_207 = arith.constant 8 : index
    %290 = vector.load %arg7[%c0_204, %c0_205, %c6_206, %c8_207] : memref<2x4x28x28xf32, #tpu.memory_space<vmem>>, vector<2x1x16x16xf32>
    %291 = vector.shape_cast %290 : vector<2x1x16x16xf32> to vector<2x16x16xf32>
    %c41 = arith.constant 41 : index
    %292 = memref.load %arg5[%c41] : memref<144xf32, #tpu.memory_space<smem>>
    %293 = vector.broadcast %292 : f32 to vector<2x16x16xf32>
    %294 = arith.mulf %291, %293 : vector<2x16x16xf32>
    %295 = arith.addf %289, %294 : vector<2x16x16xf32>
    %c0_208 = arith.constant 0 : index
    %c0_209 = arith.constant 0 : index
    %c8_210 = arith.constant 8 : index
    %c4_211 = arith.constant 4 : index
    %296 = vector.load %arg7[%c0_208, %c0_209, %c8_210, %c4_211] : memref<2x4x28x28xf32, #tpu.memory_space<vmem>>, vector<2x1x16x16xf32>
    %297 = vector.shape_cast %296 : vector<2x1x16x16xf32> to vector<2x16x16xf32>
    %c42 = arith.constant 42 : index
    %298 = memref.load %arg5[%c42] : memref<144xf32, #tpu.memory_space<smem>>
    %299 = vector.broadcast %298 : f32 to vector<2x16x16xf32>
    %300 = arith.mulf %297, %299 : vector<2x16x16xf32>
    %301 = arith.addf %295, %300 : vector<2x16x16xf32>
    %c0_212 = arith.constant 0 : index
    %c0_213 = arith.constant 0 : index
    %c8_214 = arith.constant 8 : index
    %c6_215 = arith.constant 6 : index
    %302 = vector.load %arg7[%c0_212, %c0_213, %c8_214, %c6_215] : memref<2x4x28x28xf32, #tpu.memory_space<vmem>>, vector<2x1x16x16xf32>
    %303 = vector.shape_cast %302 : vector<2x1x16x16xf32> to vector<2x16x16xf32>
    %c43 = arith.constant 43 : index
    %304 = memref.load %arg5[%c43] : memref<144xf32, #tpu.memory_space<smem>>
    %305 = vector.broadcast %304 : f32 to vector<2x16x16xf32>
    %306 = arith.mulf %303, %305 : vector<2x16x16xf32>
    %307 = arith.addf %301, %306 : vector<2x16x16xf32>
    %c0_216 = arith.constant 0 : index
    %c0_217 = arith.constant 0 : index
    %c8_218 = arith.constant 8 : index
    %c8_219 = arith.constant 8 : index
    %308 = vector.load %arg7[%c0_216, %c0_217, %c8_218, %c8_219] : memref<2x4x28x28xf32, #tpu.memory_space<vmem>>, vector<2x1x16x16xf32>
    %309 = vector.shape_cast %308 : vector<2x1x16x16xf32> to vector<2x16x16xf32>
    %c44 = arith.constant 44 : index
    %310 = memref.load %arg5[%c44] : memref<144xf32, #tpu.memory_space<smem>>
    %311 = vector.broadcast %310 : f32 to vector<2x16x16xf32>
    %312 = arith.mulf %309, %311 : vector<2x16x16xf32>
    %313 = arith.addf %307, %312 : vector<2x16x16xf32>
    %314 = vector.shape_cast %313 : vector<2x16x16xf32> to vector<2x256xf32>
    %c0_220 = arith.constant 0 : index
    %c4_221 = arith.constant 4 : index
    %c0_222 = arith.constant 0 : index
    %315 = vector.load %arg6[%c0_220, %c4_221, %c0_222] : memref<2x16x256xf32, #tpu.memory_space<vmem>>, vector<2x1x256xf32>
    %316 = vector.shape_cast %315 : vector<2x1x256xf32> to vector<2x256xf32>
    %317 = vector.shape_cast %314 : vector<2x256xf32> to vector<2x1x256xf32>
    tpu.vector_store %arg6[%c0_220, %c4_221, %c0_222], %317 {strides = array<i32>} : memref<2x16x256xf32, #tpu.memory_space<vmem>>, vector<2x1x256xf32>,
    %c0_223 = arith.constant 0 : index
    %c1_224 = arith.constant 1 : index
    %c4_225 = arith.constant 4 : index
    %c4_226 = arith.constant 4 : index
    %318 = vector.load %arg7[%c0_223, %c1_224, %c4_225, %c4_226] : memref<2x4x28x28xf32, #tpu.memory_space<vmem>>, vector<2x1x16x16xf32>
    %319 = vector.shape_cast %318 : vector<2x1x16x16xf32> to vector<2x16x16xf32>
    %c45 = arith.constant 45 : index
    %320 = memref.load %arg5[%c45] : memref<144xf32, #tpu.memory_space<smem>>
    %321 = vector.broadcast %320 : f32 to vector<2x16x16xf32>
    %322 = arith.mulf %319, %321 : vector<2x16x16xf32>
    %c0_227 = arith.constant 0 : index
    %c1_228 = arith.constant 1 : index
    %c4_229 = arith.constant 4 : index
    %c6_230 = arith.constant 6 : index
    %323 = vector.load %arg7[%c0_227, %c1_228, %c4_229, %c6_230] : memref<2x4x28x28xf32, #tpu.memory_space<vmem>>, vector<2x1x16x16xf32>
    %324 = vector.shape_cast %323 : vector<2x1x16x16xf32> to vector<2x16x16xf32>
    %c46 = arith.constant 46 : index
    %325 = memref.load %arg5[%c46] : memref<144xf32, #tpu.memory_space<smem>>
    %326 = vector.broadcast %325 : f32 to vector<2x16x16xf32>
    %327 = arith.mulf %324, %326 : vector<2x16x16xf32>
    %328 = arith.addf %322, %327 : vector<2x16x16xf32>
    %c0_231 = arith.constant 0 : index
    %c1_232 = arith.constant 1 : index
    %c4_233 = arith.constant 4 : index
    %c8_234 = arith.constant 8 : index
    %329 = vector.load %arg7[%c0_231, %c1_232, %c4_233, %c8_234] : memref<2x4x28x28xf32, #tpu.memory_space<vmem>>, vector<2x1x16x16xf32>
    %330 = vector.shape_cast %329 : vector<2x1x16x16xf32> to vector<2x16x16xf32>
    %c47 = arith.constant 47 : index
    %331 = memref.load %arg5[%c47] : memref<144xf32, #tpu.memory_space<smem>>
    %332 = vector.broadcast %331 : f32 to vector<2x16x16xf32>
    %333 = arith.mulf %330, %332 : vector<2x16x16xf32>
    %334 = arith.addf %328, %333 : vector<2x16x16xf32>
    %c0_235 = arith.constant 0 : index
    %c1_236 = arith.constant 1 : index
    %c6_237 = arith.constant 6 : index
    %c4_238 = arith.constant 4 : index
    %335 = vector.load %arg7[%c0_235, %c1_236, %c6_237, %c4_238] : memref<2x4x28x28xf32, #tpu.memory_space<vmem>>, vector<2x1x16x16xf32>
    %336 = vector.shape_cast %335 : vector<2x1x16x16xf32> to vector<2x16x16xf32>
    %c48 = arith.constant 48 : index
    %337 = memref.load %arg5[%c48] : memref<144xf32, #tpu.memory_space<smem>>
    %338 = vector.broadcast %337 : f32 to vector<2x16x16xf32>
    %339 = arith.mulf %336, %338 : vector<2x16x16xf32>
    %340 = arith.addf %334, %339 : vector<2x16x16xf32>
    %c0_239 = arith.constant 0 : index
    %c1_240 = arith.constant 1 : index
    %c6_241 = arith.constant 6 : index
    %c6_242 = arith.constant 6 : index
    %341 = vector.load %arg7[%c0_239, %c1_240, %c6_241, %c6_242] : memref<2x4x28x28xf32, #tpu.memory_space<vmem>>, vector<2x1x16x16xf32>
    %342 = vector.shape_cast %341 : vector<2x1x16x16xf32> to vector<2x16x16xf32>
    %c49 = arith.constant 49 : index
    %343 = memref.load %arg5[%c49] : memref<144xf32, #tpu.memory_space<smem>>
    %344 = vector.broadcast %343 : f32 to vector<2x16x16xf32>
    %345 = arith.mulf %342, %344 : vector<2x16x16xf32>
    %346 = arith.addf %340, %345 : vector<2x16x16xf32>
    %c0_243 = arith.constant 0 : index
    %c1_244 = arith.constant 1 : index
    %c6_245 = arith.constant 6 : index
    %c8_246 = arith.constant 8 : index
    %347 = vector.load %arg7[%c0_243, %c1_244, %c6_245, %c8_246] : memref<2x4x28x28xf32, #tpu.memory_space<vmem>>, vector<2x1x16x16xf32>
    %348 = vector.shape_cast %347 : vector<2x1x16x16xf32> to vector<2x16x16xf32>
    %c50 = arith.constant 50 : index
    %349 = memref.load %arg5[%c50] : memref<144xf32, #tpu.memory_space<smem>>
    %350 = vector.broadcast %349 : f32 to vector<2x16x16xf32>
    %351 = arith.mulf %348, %350 : vector<2x16x16xf32>
    %352 = arith.addf %346, %351 : vector<2x16x16xf32>
    %c0_247 = arith.constant 0 : index
    %c1_248 = arith.constant 1 : index
    %c8_249 = arith.constant 8 : index
    %c4_250 = arith.constant 4 : index
    %353 = vector.load %arg7[%c0_247, %c1_248, %c8_249, %c4_250] : memref<2x4x28x28xf32, #tpu.memory_space<vmem>>, vector<2x1x16x16xf32>
    %354 = vector.shape_cast %353 : vector<2x1x16x16xf32> to vector<2x16x16xf32>
    %c51 = arith.constant 51 : index
    %355 = memref.load %arg5[%c51] : memref<144xf32, #tpu.memory_space<smem>>
    %356 = vector.broadcast %355 : f32 to vector<2x16x16xf32>
    %357 = arith.mulf %354, %356 : vector<2x16x16xf32>
    %358 = arith.addf %352, %357 : vector<2x16x16xf32>
    %c0_251 = arith.constant 0 : index
    %c1_252 = arith.constant 1 : index
    %c8_253 = arith.constant 8 : index
    %c6_254 = arith.constant 6 : index
    %359 = vector.load %arg7[%c0_251, %c1_252, %c8_253, %c6_254] : memref<2x4x28x28xf32, #tpu.memory_space<vmem>>, vector<2x1x16x16xf32>
    %360 = vector.shape_cast %359 : vector<2x1x16x16xf32> to vector<2x16x16xf32>
    %c52 = arith.constant 52 : index
    %361 = memref.load %arg5[%c52] : memref<144xf32, #tpu.memory_space<smem>>
    %362 = vector.broadcast %361 : f32 to vector<2x16x16xf32>
    %363 = arith.mulf %360, %362 : vector<2x16x16xf32>
    %364 = arith.addf %358, %363 : vector<2x16x16xf32>
    %c0_255 = arith.constant 0 : index
    %c1_256 = arith.constant 1 : index
    %c8_257 = arith.constant 8 : index
    %c8_258 = arith.constant 8 : index
    %365 = vector.load %arg7[%c0_255, %c1_256, %c8_257, %c8_258] : memref<2x4x28x28xf32, #tpu.memory_space<vmem>>, vector<2x1x16x16xf32>
    %366 = vector.shape_cast %365 : vector<2x1x16x16xf32> to vector<2x16x16xf32>
    %c53 = arith.constant 53 : index
    %367 = memref.load %arg5[%c53] : memref<144xf32, #tpu.memory_space<smem>>
    %368 = vector.broadcast %367 : f32 to vector<2x16x16xf32>
    %369 = arith.mulf %366, %368 : vector<2x16x16xf32>
    %370 = arith.addf %364, %369 : vector<2x16x16xf32>
    %371 = vector.shape_cast %370 : vector<2x16x16xf32> to vector<2x256xf32>
    %c0_259 = arith.constant 0 : index
    %c5_260 = arith.constant 5 : index
    %c0_261 = arith.constant 0 : index
    %372 = vector.load %arg6[%c0_259, %c5_260, %c0_261] : memref<2x16x256xf32, #tpu.memory_space<vmem>>, vector<2x1x256xf32>
    %373 = vector.shape_cast %372 : vector<2x1x256xf32> to vector<2x256xf32>
    %374 = vector.shape_cast %371 : vector<2x256xf32> to vector<2x1x256xf32>
    tpu.vector_store %arg6[%c0_259, %c5_260, %c0_261], %374 {strides = array<i32>} : memref<2x16x256xf32, #tpu.memory_space<vmem>>, vector<2x1x256xf32>,
    %c0_262 = arith.constant 0 : index
    %c2_263 = arith.constant 2 : index
    %c4_264 = arith.constant 4 : index
    %c4_265 = arith.constant 4 : index
    %375 = vector.load %arg7[%c0_262, %c2_263, %c4_264, %c4_265] : memref<2x4x28x28xf32, #tpu.memory_space<vmem>>, vector<2x1x16x16xf32>
    %376 = vector.shape_cast %375 : vector<2x1x16x16xf32> to vector<2x16x16xf32>
    %c54 = arith.constant 54 : index
    %377 = memref.load %arg5[%c54] : memref<144xf32, #tpu.memory_space<smem>>
    %378 = vector.broadcast %377 : f32 to vector<2x16x16xf32>
    %379 = arith.mulf %376, %378 : vector<2x16x16xf32>
    %c0_266 = arith.constant 0 : index
    %c2_267 = arith.constant 2 : index
    %c4_268 = arith.constant 4 : index
    %c6_269 = arith.constant 6 : index
    %380 = vector.load %arg7[%c0_266, %c2_267, %c4_268, %c6_269] : memref<2x4x28x28xf32, #tpu.memory_space<vmem>>, vector<2x1x16x16xf32>
    %381 = vector.shape_cast %380 : vector<2x1x16x16xf32> to vector<2x16x16xf32>
    %c55 = arith.constant 55 : index
    %382 = memref.load %arg5[%c55] : memref<144xf32, #tpu.memory_space<smem>>
    %383 = vector.broadcast %382 : f32 to vector<2x16x16xf32>
    %384 = arith.mulf %381, %383 : vector<2x16x16xf32>
    %385 = arith.addf %379, %384 : vector<2x16x16xf32>
    %c0_270 = arith.constant 0 : index
    %c2_271 = arith.constant 2 : index
    %c4_272 = arith.constant 4 : index
    %c8_273 = arith.constant 8 : index
    %386 = vector.load %arg7[%c0_270, %c2_271, %c4_272, %c8_273] : memref<2x4x28x28xf32, #tpu.memory_space<vmem>>, vector<2x1x16x16xf32>
    %387 = vector.shape_cast %386 : vector<2x1x16x16xf32> to vector<2x16x16xf32>
    %c56 = arith.constant 56 : index
    %388 = memref.load %arg5[%c56] : memref<144xf32, #tpu.memory_space<smem>>
    %389 = vector.broadcast %388 : f32 to vector<2x16x16xf32>
    %390 = arith.mulf %387, %389 : vector<2x16x16xf32>
    %391 = arith.addf %385, %390 : vector<2x16x16xf32>
    %c0_274 = arith.constant 0 : index
    %c2_275 = arith.constant 2 : index
    %c6_276 = arith.constant 6 : index
    %c4_277 = arith.constant 4 : index
    %392 = vector.load %arg7[%c0_274, %c2_275, %c6_276, %c4_277] : memref<2x4x28x28xf32, #tpu.memory_space<vmem>>, vector<2x1x16x16xf32>
    %393 = vector.shape_cast %392 : vector<2x1x16x16xf32> to vector<2x16x16xf32>
    %c57 = arith.constant 57 : index
    %394 = memref.load %arg5[%c57] : memref<144xf32, #tpu.memory_space<smem>>
    %395 = vector.broadcast %394 : f32 to vector<2x16x16xf32>
    %396 = arith.mulf %393, %395 : vector<2x16x16xf32>
    %397 = arith.addf %391, %396 : vector<2x16x16xf32>
    %c0_278 = arith.constant 0 : index
    %c2_279 = arith.constant 2 : index
    %c6_280 = arith.constant 6 : index
    %c6_281 = arith.constant 6 : index
    %398 = vector.load %arg7[%c0_278, %c2_279, %c6_280, %c6_281] : memref<2x4x28x28xf32, #tpu.memory_space<vmem>>, vector<2x1x16x16xf32>
    %399 = vector.shape_cast %398 : vector<2x1x16x16xf32> to vector<2x16x16xf32>
    %c58 = arith.constant 58 : index
    %400 = memref.load %arg5[%c58] : memref<144xf32, #tpu.memory_space<smem>>
    %401 = vector.broadcast %400 : f32 to vector<2x16x16xf32>
    %402 = arith.mulf %399, %401 : vector<2x16x16xf32>
    %403 = arith.addf %397, %402 : vector<2x16x16xf32>
    %c0_282 = arith.constant 0 : index
    %c2_283 = arith.constant 2 : index
    %c6_284 = arith.constant 6 : index
    %c8_285 = arith.constant 8 : index
    %404 = vector.load %arg7[%c0_282, %c2_283, %c6_284, %c8_285] : memref<2x4x28x28xf32, #tpu.memory_space<vmem>>, vector<2x1x16x16xf32>
    %405 = vector.shape_cast %404 : vector<2x1x16x16xf32> to vector<2x16x16xf32>
    %c59 = arith.constant 59 : index
    %406 = memref.load %arg5[%c59] : memref<144xf32, #tpu.memory_space<smem>>
    %407 = vector.broadcast %406 : f32 to vector<2x16x16xf32>
    %408 = arith.mulf %405, %407 : vector<2x16x16xf32>
    %409 = arith.addf %403, %408 : vector<2x16x16xf32>
    %c0_286 = arith.constant 0 : index
    %c2_287 = arith.constant 2 : index
    %c8_288 = arith.constant 8 : index
    %c4_289 = arith.constant 4 : index
    %410 = vector.load %arg7[%c0_286, %c2_287, %c8_288, %c4_289] : memref<2x4x28x28xf32, #tpu.memory_space<vmem>>, vector<2x1x16x16xf32>
    %411 = vector.shape_cast %410 : vector<2x1x16x16xf32> to vector<2x16x16xf32>
    %c60 = arith.constant 60 : index
    %412 = memref.load %arg5[%c60] : memref<144xf32, #tpu.memory_space<smem>>
    %413 = vector.broadcast %412 : f32 to vector<2x16x16xf32>
    %414 = arith.mulf %411, %413 : vector<2x16x16xf32>
    %415 = arith.addf %409, %414 : vector<2x16x16xf32>
    %c0_290 = arith.constant 0 : index
    %c2_291 = arith.constant 2 : index
    %c8_292 = arith.constant 8 : index
    %c6_293 = arith.constant 6 : index
    %416 = vector.load %arg7[%c0_290, %c2_291, %c8_292, %c6_293] : memref<2x4x28x28xf32, #tpu.memory_space<vmem>>, vector<2x1x16x16xf32>
    %417 = vector.shape_cast %416 : vector<2x1x16x16xf32> to vector<2x16x16xf32>
    %c61 = arith.constant 61 : index
    %418 = memref.load %arg5[%c61] : memref<144xf32, #tpu.memory_space<smem>>
    %419 = vector.broadcast %418 : f32 to vector<2x16x16xf32>
    %420 = arith.mulf %417, %419 : vector<2x16x16xf32>
    %421 = arith.addf %415, %420 : vector<2x16x16xf32>
    %c0_294 = arith.constant 0 : index
    %c2_295 = arith.constant 2 : index
    %c8_296 = arith.constant 8 : index
    %c8_297 = arith.constant 8 : index
    %422 = vector.load %arg7[%c0_294, %c2_295, %c8_296, %c8_297] : memref<2x4x28x28xf32, #tpu.memory_space<vmem>>, vector<2x1x16x16xf32>
    %423 = vector.shape_cast %422 : vector<2x1x16x16xf32> to vector<2x16x16xf32>
    %c62 = arith.constant 62 : index
    %424 = memref.load %arg5[%c62] : memref<144xf32, #tpu.memory_space<smem>>
    %425 = vector.broadcast %424 : f32 to vector<2x16x16xf32>
    %426 = arith.mulf %423, %425 : vector<2x16x16xf32>
    %427 = arith.addf %421, %426 : vector<2x16x16xf32>
    %428 = vector.shape_cast %427 : vector<2x16x16xf32> to vector<2x256xf32>
    %c0_298 = arith.constant 0 : index
    %c6_299 = arith.constant 6 : index
    %c0_300 = arith.constant 0 : index
    %429 = vector.load %arg6[%c0_298, %c6_299, %c0_300] : memref<2x16x256xf32, #tpu.memory_space<vmem>>, vector<2x1x256xf32>
    %430 = vector.shape_cast %429 : vector<2x1x256xf32> to vector<2x256xf32>
    %431 = vector.shape_cast %428 : vector<2x256xf32> to vector<2x1x256xf32>
    tpu.vector_store %arg6[%c0_298, %c6_299, %c0_300], %431 {strides = array<i32>} : memref<2x16x256xf32, #tpu.memory_space<vmem>>, vector<2x1x256xf32>,
    %c0_301 = arith.constant 0 : index
    %c3_302 = arith.constant 3 : index
    %c4_303 = arith.constant 4 : index
    %c4_304 = arith.constant 4 : index
    %432 = vector.load %arg7[%c0_301, %c3_302, %c4_303, %c4_304] : memref<2x4x28x28xf32, #tpu.memory_space<vmem>>, vector<2x1x16x16xf32>
    %433 = vector.shape_cast %432 : vector<2x1x16x16xf32> to vector<2x16x16xf32>
    %c63 = arith.constant 63 : index
    %434 = memref.load %arg5[%c63] : memref<144xf32, #tpu.memory_space<smem>>
    %435 = vector.broadcast %434 : f32 to vector<2x16x16xf32>
    %436 = arith.mulf %433, %435 : vector<2x16x16xf32>
    %c0_305 = arith.constant 0 : index
    %c3_306 = arith.constant 3 : index
    %c4_307 = arith.constant 4 : index
    %c6_308 = arith.constant 6 : index
    %437 = vector.load %arg7[%c0_305, %c3_306, %c4_307, %c6_308] : memref<2x4x28x28xf32, #tpu.memory_space<vmem>>, vector<2x1x16x16xf32>
    %438 = vector.shape_cast %437 : vector<2x1x16x16xf32> to vector<2x16x16xf32>
    %c64 = arith.constant 64 : index
    %439 = memref.load %arg5[%c64] : memref<144xf32, #tpu.memory_space<smem>>
    %440 = vector.broadcast %439 : f32 to vector<2x16x16xf32>
    %441 = arith.mulf %438, %440 : vector<2x16x16xf32>
    %442 = arith.addf %436, %441 : vector<2x16x16xf32>
    %c0_309 = arith.constant 0 : index
    %c3_310 = arith.constant 3 : index
    %c4_311 = arith.constant 4 : index
    %c8_312 = arith.constant 8 : index
    %443 = vector.load %arg7[%c0_309, %c3_310, %c4_311, %c8_312] : memref<2x4x28x28xf32, #tpu.memory_space<vmem>>, vector<2x1x16x16xf32>
    %444 = vector.shape_cast %443 : vector<2x1x16x16xf32> to vector<2x16x16xf32>
    %c65 = arith.constant 65 : index
    %445 = memref.load %arg5[%c65] : memref<144xf32, #tpu.memory_space<smem>>
    %446 = vector.broadcast %445 : f32 to vector<2x16x16xf32>
    %447 = arith.mulf %444, %446 : vector<2x16x16xf32>
    %448 = arith.addf %442, %447 : vector<2x16x16xf32>
    %c0_313 = arith.constant 0 : index
    %c3_314 = arith.constant 3 : index
    %c6_315 = arith.constant 6 : index
    %c4_316 = arith.constant 4 : index
    %449 = vector.load %arg7[%c0_313, %c3_314, %c6_315, %c4_316] : memref<2x4x28x28xf32, #tpu.memory_space<vmem>>, vector<2x1x16x16xf32>
    %450 = vector.shape_cast %449 : vector<2x1x16x16xf32> to vector<2x16x16xf32>
    %c66 = arith.constant 66 : index
    %451 = memref.load %arg5[%c66] : memref<144xf32, #tpu.memory_space<smem>>
    %452 = vector.broadcast %451 : f32 to vector<2x16x16xf32>
    %453 = arith.mulf %450, %452 : vector<2x16x16xf32>
    %454 = arith.addf %448, %453 : vector<2x16x16xf32>
    %c0_317 = arith.constant 0 : index
    %c3_318 = arith.constant 3 : index
    %c6_319 = arith.constant 6 : index
    %c6_320 = arith.constant 6 : index
    %455 = vector.load %arg7[%c0_317, %c3_318, %c6_319, %c6_320] : memref<2x4x28x28xf32, #tpu.memory_space<vmem>>, vector<2x1x16x16xf32>
    %456 = vector.shape_cast %455 : vector<2x1x16x16xf32> to vector<2x16x16xf32>
    %c67 = arith.constant 67 : index
    %457 = memref.load %arg5[%c67] : memref<144xf32, #tpu.memory_space<smem>>
    %458 = vector.broadcast %457 : f32 to vector<2x16x16xf32>
    %459 = arith.mulf %456, %458 : vector<2x16x16xf32>
    %460 = arith.addf %454, %459 : vector<2x16x16xf32>
    %c0_321 = arith.constant 0 : index
    %c3_322 = arith.constant 3 : index
    %c6_323 = arith.constant 6 : index
    %c8_324 = arith.constant 8 : index
    %461 = vector.load %arg7[%c0_321, %c3_322, %c6_323, %c8_324] : memref<2x4x28x28xf32, #tpu.memory_space<vmem>>, vector<2x1x16x16xf32>
    %462 = vector.shape_cast %461 : vector<2x1x16x16xf32> to vector<2x16x16xf32>
    %c68 = arith.constant 68 : index
    %463 = memref.load %arg5[%c68] : memref<144xf32, #tpu.memory_space<smem>>
    %464 = vector.broadcast %463 : f32 to vector<2x16x16xf32>
    %465 = arith.mulf %462, %464 : vector<2x16x16xf32>
    %466 = arith.addf %460, %465 : vector<2x16x16xf32>
    %c0_325 = arith.constant 0 : index
    %c3_326 = arith.constant 3 : index
    %c8_327 = arith.constant 8 : index
    %c4_328 = arith.constant 4 : index
    %467 = vector.load %arg7[%c0_325, %c3_326, %c8_327, %c4_328] : memref<2x4x28x28xf32, #tpu.memory_space<vmem>>, vector<2x1x16x16xf32>
    %468 = vector.shape_cast %467 : vector<2x1x16x16xf32> to vector<2x16x16xf32>
    %c69 = arith.constant 69 : index
    %469 = memref.load %arg5[%c69] : memref<144xf32, #tpu.memory_space<smem>>
    %470 = vector.broadcast %469 : f32 to vector<2x16x16xf32>
    %471 = arith.mulf %468, %470 : vector<2x16x16xf32>
    %472 = arith.addf %466, %471 : vector<2x16x16xf32>
    %c0_329 = arith.constant 0 : index
    %c3_330 = arith.constant 3 : index
    %c8_331 = arith.constant 8 : index
    %c6_332 = arith.constant 6 : index
    %473 = vector.load %arg7[%c0_329, %c3_330, %c8_331, %c6_332] : memref<2x4x28x28xf32, #tpu.memory_space<vmem>>, vector<2x1x16x16xf32>
    %474 = vector.shape_cast %473 : vector<2x1x16x16xf32> to vector<2x16x16xf32>
    %c70 = arith.constant 70 : index
    %475 = memref.load %arg5[%c70] : memref<144xf32, #tpu.memory_space<smem>>
    %476 = vector.broadcast %475 : f32 to vector<2x16x16xf32>
    %477 = arith.mulf %474, %476 : vector<2x16x16xf32>
    %478 = arith.addf %472, %477 : vector<2x16x16xf32>
    %c0_333 = arith.constant 0 : index
    %c3_334 = arith.constant 3 : index
    %c8_335 = arith.constant 8 : index
    %c8_336 = arith.constant 8 : index
    %479 = vector.load %arg7[%c0_333, %c3_334, %c8_335, %c8_336] : memref<2x4x28x28xf32, #tpu.memory_space<vmem>>, vector<2x1x16x16xf32>
    %480 = vector.shape_cast %479 : vector<2x1x16x16xf32> to vector<2x16x16xf32>
    %c71 = arith.constant 71 : index
    %481 = memref.load %arg5[%c71] : memref<144xf32, #tpu.memory_space<smem>>
    %482 = vector.broadcast %481 : f32 to vector<2x16x16xf32>
    %483 = arith.mulf %480, %482 : vector<2x16x16xf32>
    %484 = arith.addf %478, %483 : vector<2x16x16xf32>
    %485 = vector.shape_cast %484 : vector<2x16x16xf32> to vector<2x256xf32>
    %c0_337 = arith.constant 0 : index
    %c7_338 = arith.constant 7 : index
    %c0_339 = arith.constant 0 : index
    %486 = vector.load %arg6[%c0_337, %c7_338, %c0_339] : memref<2x16x256xf32, #tpu.memory_space<vmem>>, vector<2x1x256xf32>
    %487 = vector.shape_cast %486 : vector<2x1x256xf32> to vector<2x256xf32>
    %488 = vector.shape_cast %485 : vector<2x256xf32> to vector<2x1x256xf32>
    tpu.vector_store %arg6[%c0_337, %c7_338, %c0_339], %488 {strides = array<i32>} : memref<2x16x256xf32, #tpu.memory_space<vmem>>, vector<2x1x256xf32>,
    %c0_340 = arith.constant 0 : index
    %c0_341 = arith.constant 0 : index
    %c2_342 = arith.constant 2 : index
    %c2_343 = arith.constant 2 : index
    %489 = vector.load %arg7[%c0_340, %c0_341, %c2_342, %c2_343] : memref<2x4x28x28xf32, #tpu.memory_space<vmem>>, vector<2x1x16x16xf32>
    %490 = vector.shape_cast %489 : vector<2x1x16x16xf32> to vector<2x16x16xf32>
    %c72 = arith.constant 72 : index
    %491 = memref.load %arg5[%c72] : memref<144xf32, #tpu.memory_space<smem>>
    %492 = vector.broadcast %491 : f32 to vector<2x16x16xf32>
    %493 = arith.mulf %490, %492 : vector<2x16x16xf32>
    %c0_344 = arith.constant 0 : index
    %c0_345 = arith.constant 0 : index
    %c2_346 = arith.constant 2 : index
    %c6_347 = arith.constant 6 : index
    %494 = vector.load %arg7[%c0_344, %c0_345, %c2_346, %c6_347] : memref<2x4x28x28xf32, #tpu.memory_space<vmem>>, vector<2x1x16x16xf32>
    %495 = vector.shape_cast %494 : vector<2x1x16x16xf32> to vector<2x16x16xf32>
    %c73 = arith.constant 73 : index
    %496 = memref.load %arg5[%c73] : memref<144xf32, #tpu.memory_space<smem>>
    %497 = vector.broadcast %496 : f32 to vector<2x16x16xf32>
    %498 = arith.mulf %495, %497 : vector<2x16x16xf32>
    %499 = arith.addf %493, %498 : vector<2x16x16xf32>
    %c0_348 = arith.constant 0 : index
    %c0_349 = arith.constant 0 : index
    %c2_350 = arith.constant 2 : index
    %c10_351 = arith.constant 10 : index
    %500 = vector.load %arg7[%c0_348, %c0_349, %c2_350, %c10_351] : memref<2x4x28x28xf32, #tpu.memory_space<vmem>>, vector<2x1x16x16xf32>
    %501 = vector.shape_cast %500 : vector<2x1x16x16xf32> to vector<2x16x16xf32>
    %c74 = arith.constant 74 : index
    %502 = memref.load %arg5[%c74] : memref<144xf32, #tpu.memory_space<smem>>
    %503 = vector.broadcast %502 : f32 to vector<2x16x16xf32>
    %504 = arith.mulf %501, %503 : vector<2x16x16xf32>
    %505 = arith.addf %499, %504 : vector<2x16x16xf32>
    %c0_352 = arith.constant 0 : index
    %c0_353 = arith.constant 0 : index
    %c6_354 = arith.constant 6 : index
    %c2_355 = arith.constant 2 : index
    %506 = vector.load %arg7[%c0_352, %c0_353, %c6_354, %c2_355] : memref<2x4x28x28xf32, #tpu.memory_space<vmem>>, vector<2x1x16x16xf32>
    %507 = vector.shape_cast %506 : vector<2x1x16x16xf32> to vector<2x16x16xf32>
    %c75 = arith.constant 75 : index
    %508 = memref.load %arg5[%c75] : memref<144xf32, #tpu.memory_space<smem>>
    %509 = vector.broadcast %508 : f32 to vector<2x16x16xf32>
    %510 = arith.mulf %507, %509 : vector<2x16x16xf32>
    %511 = arith.addf %505, %510 : vector<2x16x16xf32>
    %c0_356 = arith.constant 0 : index
    %c0_357 = arith.constant 0 : index
    %c6_358 = arith.constant 6 : index
    %c6_359 = arith.constant 6 : index
    %512 = vector.load %arg7[%c0_356, %c0_357, %c6_358, %c6_359] : memref<2x4x28x28xf32, #tpu.memory_space<vmem>>, vector<2x1x16x16xf32>
    %513 = vector.shape_cast %512 : vector<2x1x16x16xf32> to vector<2x16x16xf32>
    %c76 = arith.constant 76 : index
    %514 = memref.load %arg5[%c76] : memref<144xf32, #tpu.memory_space<smem>>
    %515 = vector.broadcast %514 : f32 to vector<2x16x16xf32>
    %516 = arith.mulf %513, %515 : vector<2x16x16xf32>
    %517 = arith.addf %511, %516 : vector<2x16x16xf32>
    %c0_360 = arith.constant 0 : index
    %c0_361 = arith.constant 0 : index
    %c6_362 = arith.constant 6 : index
    %c10_363 = arith.constant 10 : index
    %518 = vector.load %arg7[%c0_360, %c0_361, %c6_362, %c10_363] : memref<2x4x28x28xf32, #tpu.memory_space<vmem>>, vector<2x1x16x16xf32>
    %519 = vector.shape_cast %518 : vector<2x1x16x16xf32> to vector<2x16x16xf32>
    %c77 = arith.constant 77 : index
    %520 = memref.load %arg5[%c77] : memref<144xf32, #tpu.memory_space<smem>>
    %521 = vector.broadcast %520 : f32 to vector<2x16x16xf32>
    %522 = arith.mulf %519, %521 : vector<2x16x16xf32>
    %523 = arith.addf %517, %522 : vector<2x16x16xf32>
    %c0_364 = arith.constant 0 : index
    %c0_365 = arith.constant 0 : index
    %c10_366 = arith.constant 10 : index
    %c2_367 = arith.constant 2 : index
    %524 = vector.load %arg7[%c0_364, %c0_365, %c10_366, %c2_367] : memref<2x4x28x28xf32, #tpu.memory_space<vmem>>, vector<2x1x16x16xf32>
    %525 = vector.shape_cast %524 : vector<2x1x16x16xf32> to vector<2x16x16xf32>
    %c78 = arith.constant 78 : index
    %526 = memref.load %arg5[%c78] : memref<144xf32, #tpu.memory_space<smem>>
    %527 = vector.broadcast %526 : f32 to vector<2x16x16xf32>
    %528 = arith.mulf %525, %527 : vector<2x16x16xf32>
    %529 = arith.addf %523, %528 : vector<2x16x16xf32>
    %c0_368 = arith.constant 0 : index
    %c0_369 = arith.constant 0 : index
    %c10_370 = arith.constant 10 : index
    %c6_371 = arith.constant 6 : index
    %530 = vector.load %arg7[%c0_368, %c0_369, %c10_370, %c6_371] : memref<2x4x28x28xf32, #tpu.memory_space<vmem>>, vector<2x1x16x16xf32>
    %531 = vector.shape_cast %530 : vector<2x1x16x16xf32> to vector<2x16x16xf32>
    %c79 = arith.constant 79 : index
    %532 = memref.load %arg5[%c79] : memref<144xf32, #tpu.memory_space<smem>>
    %533 = vector.broadcast %532 : f32 to vector<2x16x16xf32>
    %534 = arith.mulf %531, %533 : vector<2x16x16xf32>
    %535 = arith.addf %529, %534 : vector<2x16x16xf32>
    %c0_372 = arith.constant 0 : index
    %c0_373 = arith.constant 0 : index
    %c10_374 = arith.constant 10 : index
    %c10_375 = arith.constant 10 : index
    %536 = vector.load %arg7[%c0_372, %c0_373, %c10_374, %c10_375] : memref<2x4x28x28xf32, #tpu.memory_space<vmem>>, vector<2x1x16x16xf32>
    %537 = vector.shape_cast %536 : vector<2x1x16x16xf32> to vector<2x16x16xf32>
    %c80 = arith.constant 80 : index
    %538 = memref.load %arg5[%c80] : memref<144xf32, #tpu.memory_space<smem>>
    %539 = vector.broadcast %538 : f32 to vector<2x16x16xf32>
    %540 = arith.mulf %537, %539 : vector<2x16x16xf32>
    %541 = arith.addf %535, %540 : vector<2x16x16xf32>
    %542 = vector.shape_cast %541 : vector<2x16x16xf32> to vector<2x256xf32>
    %c0_376 = arith.constant 0 : index
    %c8_377 = arith.constant 8 : index
    %c0_378 = arith.constant 0 : index
    %543 = vector.load %arg6[%c0_376, %c8_377, %c0_378] : memref<2x16x256xf32, #tpu.memory_space<vmem>>, vector<2x1x256xf32>
    %544 = vector.shape_cast %543 : vector<2x1x256xf32> to vector<2x256xf32>
    %545 = vector.shape_cast %542 : vector<2x256xf32> to vector<2x1x256xf32>
    tpu.vector_store %arg6[%c0_376, %c8_377, %c0_378], %545 {strides = array<i32>} : memref<2x16x256xf32, #tpu.memory_space<vmem>>, vector<2x1x256xf32>,
    %c0_379 = arith.constant 0 : index
    %c1_380 = arith.constant 1 : index
    %c2_381 = arith.constant 2 : index
    %c2_382 = arith.constant 2 : index
    %546 = vector.load %arg7[%c0_379, %c1_380, %c2_381, %c2_382] : memref<2x4x28x28xf32, #tpu.memory_space<vmem>>, vector<2x1x16x16xf32>
    %547 = vector.shape_cast %546 : vector<2x1x16x16xf32> to vector<2x16x16xf32>
    %c81 = arith.constant 81 : index
    %548 = memref.load %arg5[%c81] : memref<144xf32, #tpu.memory_space<smem>>
    %549 = vector.broadcast %548 : f32 to vector<2x16x16xf32>
    %550 = arith.mulf %547, %549 : vector<2x16x16xf32>
    %c0_383 = arith.constant 0 : index
    %c1_384 = arith.constant 1 : index
    %c2_385 = arith.constant 2 : index
    %c6_386 = arith.constant 6 : index
    %551 = vector.load %arg7[%c0_383, %c1_384, %c2_385, %c6_386] : memref<2x4x28x28xf32, #tpu.memory_space<vmem>>, vector<2x1x16x16xf32>
    %552 = vector.shape_cast %551 : vector<2x1x16x16xf32> to vector<2x16x16xf32>
    %c82 = arith.constant 82 : index
    %553 = memref.load %arg5[%c82] : memref<144xf32, #tpu.memory_space<smem>>
    %554 = vector.broadcast %553 : f32 to vector<2x16x16xf32>
    %555 = arith.mulf %552, %554 : vector<2x16x16xf32>
    %556 = arith.addf %550, %555 : vector<2x16x16xf32>
    %c0_387 = arith.constant 0 : index
    %c1_388 = arith.constant 1 : index
    %c2_389 = arith.constant 2 : index
    %c10_390 = arith.constant 10 : index
    %557 = vector.load %arg7[%c0_387, %c1_388, %c2_389, %c10_390] : memref<2x4x28x28xf32, #tpu.memory_space<vmem>>, vector<2x1x16x16xf32>
    %558 = vector.shape_cast %557 : vector<2x1x16x16xf32> to vector<2x16x16xf32>
    %c83 = arith.constant 83 : index
    %559 = memref.load %arg5[%c83] : memref<144xf32, #tpu.memory_space<smem>>
    %560 = vector.broadcast %559 : f32 to vector<2x16x16xf32>
    %561 = arith.mulf %558, %560 : vector<2x16x16xf32>
    %562 = arith.addf %556, %561 : vector<2x16x16xf32>
    %c0_391 = arith.constant 0 : index
    %c1_392 = arith.constant 1 : index
    %c6_393 = arith.constant 6 : index
    %c2_394 = arith.constant 2 : index
    %563 = vector.load %arg7[%c0_391, %c1_392, %c6_393, %c2_394] : memref<2x4x28x28xf32, #tpu.memory_space<vmem>>, vector<2x1x16x16xf32>
    %564 = vector.shape_cast %563 : vector<2x1x16x16xf32> to vector<2x16x16xf32>
    %c84 = arith.constant 84 : index
    %565 = memref.load %arg5[%c84] : memref<144xf32, #tpu.memory_space<smem>>
    %566 = vector.broadcast %565 : f32 to vector<2x16x16xf32>
    %567 = arith.mulf %564, %566 : vector<2x16x16xf32>
    %568 = arith.addf %562, %567 : vector<2x16x16xf32>
    %c0_395 = arith.constant 0 : index
    %c1_396 = arith.constant 1 : index
    %c6_397 = arith.constant 6 : index
    %c6_398 = arith.constant 6 : index
    %569 = vector.load %arg7[%c0_395, %c1_396, %c6_397, %c6_398] : memref<2x4x28x28xf32, #tpu.memory_space<vmem>>, vector<2x1x16x16xf32>
    %570 = vector.shape_cast %569 : vector<2x1x16x16xf32> to vector<2x16x16xf32>
    %c85 = arith.constant 85 : index
    %571 = memref.load %arg5[%c85] : memref<144xf32, #tpu.memory_space<smem>>
    %572 = vector.broadcast %571 : f32 to vector<2x16x16xf32>
    %573 = arith.mulf %570, %572 : vector<2x16x16xf32>
    %574 = arith.addf %568, %573 : vector<2x16x16xf32>
    %c0_399 = arith.constant 0 : index
    %c1_400 = arith.constant 1 : index
    %c6_401 = arith.constant 6 : index
    %c10_402 = arith.constant 10 : index
    %575 = vector.load %arg7[%c0_399, %c1_400, %c6_401, %c10_402] : memref<2x4x28x28xf32, #tpu.memory_space<vmem>>, vector<2x1x16x16xf32>
    %576 = vector.shape_cast %575 : vector<2x1x16x16xf32> to vector<2x16x16xf32>
    %c86 = arith.constant 86 : index
    %577 = memref.load %arg5[%c86] : memref<144xf32, #tpu.memory_space<smem>>
    %578 = vector.broadcast %577 : f32 to vector<2x16x16xf32>
    %579 = arith.mulf %576, %578 : vector<2x16x16xf32>
    %580 = arith.addf %574, %579 : vector<2x16x16xf32>
    %c0_403 = arith.constant 0 : index
    %c1_404 = arith.constant 1 : index
    %c10_405 = arith.constant 10 : index
    %c2_406 = arith.constant 2 : index
    %581 = vector.load %arg7[%c0_403, %c1_404, %c10_405, %c2_406] : memref<2x4x28x28xf32, #tpu.memory_space<vmem>>, vector<2x1x16x16xf32>
    %582 = vector.shape_cast %581 : vector<2x1x16x16xf32> to vector<2x16x16xf32>
    %c87 = arith.constant 87 : index
    %583 = memref.load %arg5[%c87] : memref<144xf32, #tpu.memory_space<smem>>
    %584 = vector.broadcast %583 : f32 to vector<2x16x16xf32>
    %585 = arith.mulf %582, %584 : vector<2x16x16xf32>
    %586 = arith.addf %580, %585 : vector<2x16x16xf32>
    %c0_407 = arith.constant 0 : index
    %c1_408 = arith.constant 1 : index
    %c10_409 = arith.constant 10 : index
    %c6_410 = arith.constant 6 : index
    %587 = vector.load %arg7[%c0_407, %c1_408, %c10_409, %c6_410] : memref<2x4x28x28xf32, #tpu.memory_space<vmem>>, vector<2x1x16x16xf32>
    %588 = vector.shape_cast %587 : vector<2x1x16x16xf32> to vector<2x16x16xf32>
    %c88 = arith.constant 88 : index
    %589 = memref.load %arg5[%c88] : memref<144xf32, #tpu.memory_space<smem>>
    %590 = vector.broadcast %589 : f32 to vector<2x16x16xf32>
    %591 = arith.mulf %588, %590 : vector<2x16x16xf32>
    %592 = arith.addf %586, %591 : vector<2x16x16xf32>
    %c0_411 = arith.constant 0 : index
    %c1_412 = arith.constant 1 : index
    %c10_413 = arith.constant 10 : index
    %c10_414 = arith.constant 10 : index
    %593 = vector.load %arg7[%c0_411, %c1_412, %c10_413, %c10_414] : memref<2x4x28x28xf32, #tpu.memory_space<vmem>>, vector<2x1x16x16xf32>
    %594 = vector.shape_cast %593 : vector<2x1x16x16xf32> to vector<2x16x16xf32>
    %c89 = arith.constant 89 : index
    %595 = memref.load %arg5[%c89] : memref<144xf32, #tpu.memory_space<smem>>
    %596 = vector.broadcast %595 : f32 to vector<2x16x16xf32>
    %597 = arith.mulf %594, %596 : vector<2x16x16xf32>
    %598 = arith.addf %592, %597 : vector<2x16x16xf32>
    %599 = vector.shape_cast %598 : vector<2x16x16xf32> to vector<2x256xf32>
    %c0_415 = arith.constant 0 : index
    %c9_416 = arith.constant 9 : index
    %c0_417 = arith.constant 0 : index
    %600 = vector.load %arg6[%c0_415, %c9_416, %c0_417] : memref<2x16x256xf32, #tpu.memory_space<vmem>>, vector<2x1x256xf32>
    %601 = vector.shape_cast %600 : vector<2x1x256xf32> to vector<2x256xf32>
    %602 = vector.shape_cast %599 : vector<2x256xf32> to vector<2x1x256xf32>
    tpu.vector_store %arg6[%c0_415, %c9_416, %c0_417], %602 {strides = array<i32>} : memref<2x16x256xf32, #tpu.memory_space<vmem>>, vector<2x1x256xf32>,
    %c0_418 = arith.constant 0 : index
    %c2_419 = arith.constant 2 : index
    %c2_420 = arith.constant 2 : index
    %c2_421 = arith.constant 2 : index
    %603 = vector.load %arg7[%c0_418, %c2_419, %c2_420, %c2_421] : memref<2x4x28x28xf32, #tpu.memory_space<vmem>>, vector<2x1x16x16xf32>
    %604 = vector.shape_cast %603 : vector<2x1x16x16xf32> to vector<2x16x16xf32>
    %c90 = arith.constant 90 : index
    %605 = memref.load %arg5[%c90] : memref<144xf32, #tpu.memory_space<smem>>
    %606 = vector.broadcast %605 : f32 to vector<2x16x16xf32>
    %607 = arith.mulf %604, %606 : vector<2x16x16xf32>
    %c0_422 = arith.constant 0 : index
    %c2_423 = arith.constant 2 : index
    %c2_424 = arith.constant 2 : index
    %c6_425 = arith.constant 6 : index
    %608 = vector.load %arg7[%c0_422, %c2_423, %c2_424, %c6_425] : memref<2x4x28x28xf32, #tpu.memory_space<vmem>>, vector<2x1x16x16xf32>
    %609 = vector.shape_cast %608 : vector<2x1x16x16xf32> to vector<2x16x16xf32>
    %c91 = arith.constant 91 : index
    %610 = memref.load %arg5[%c91] : memref<144xf32, #tpu.memory_space<smem>>
    %611 = vector.broadcast %610 : f32 to vector<2x16x16xf32>
    %612 = arith.mulf %609, %611 : vector<2x16x16xf32>
    %613 = arith.addf %607, %612 : vector<2x16x16xf32>
    %c0_426 = arith.constant 0 : index
    %c2_427 = arith.constant 2 : index
    %c2_428 = arith.constant 2 : index
    %c10_429 = arith.constant 10 : index
    %614 = vector.load %arg7[%c0_426, %c2_427, %c2_428, %c10_429] : memref<2x4x28x28xf32, #tpu.memory_space<vmem>>, vector<2x1x16x16xf32>
    %615 = vector.shape_cast %614 : vector<2x1x16x16xf32> to vector<2x16x16xf32>
    %c92 = arith.constant 92 : index
    %616 = memref.load %arg5[%c92] : memref<144xf32, #tpu.memory_space<smem>>
    %617 = vector.broadcast %616 : f32 to vector<2x16x16xf32>
    %618 = arith.mulf %615, %617 : vector<2x16x16xf32>
    %619 = arith.addf %613, %618 : vector<2x16x16xf32>
    %c0_430 = arith.constant 0 : index
    %c2_431 = arith.constant 2 : index
    %c6_432 = arith.constant 6 : index
    %c2_433 = arith.constant 2 : index
    %620 = vector.load %arg7[%c0_430, %c2_431, %c6_432, %c2_433] : memref<2x4x28x28xf32, #tpu.memory_space<vmem>>, vector<2x1x16x16xf32>
    %621 = vector.shape_cast %620 : vector<2x1x16x16xf32> to vector<2x16x16xf32>
    %c93 = arith.constant 93 : index
    %622 = memref.load %arg5[%c93] : memref<144xf32, #tpu.memory_space<smem>>
    %623 = vector.broadcast %622 : f32 to vector<2x16x16xf32>
    %624 = arith.mulf %621, %623 : vector<2x16x16xf32>
    %625 = arith.addf %619, %624 : vector<2x16x16xf32>
    %c0_434 = arith.constant 0 : index
    %c2_435 = arith.constant 2 : index
    %c6_436 = arith.constant 6 : index
    %c6_437 = arith.constant 6 : index
    %626 = vector.load %arg7[%c0_434, %c2_435, %c6_436, %c6_437] : memref<2x4x28x28xf32, #tpu.memory_space<vmem>>, vector<2x1x16x16xf32>
    %627 = vector.shape_cast %626 : vector<2x1x16x16xf32> to vector<2x16x16xf32>
    %c94 = arith.constant 94 : index
    %628 = memref.load %arg5[%c94] : memref<144xf32, #tpu.memory_space<smem>>
    %629 = vector.broadcast %628 : f32 to vector<2x16x16xf32>
    %630 = arith.mulf %627, %629 : vector<2x16x16xf32>
    %631 = arith.addf %625, %630 : vector<2x16x16xf32>
    %c0_438 = arith.constant 0 : index
    %c2_439 = arith.constant 2 : index
    %c6_440 = arith.constant 6 : index
    %c10_441 = arith.constant 10 : index
    %632 = vector.load %arg7[%c0_438, %c2_439, %c6_440, %c10_441] : memref<2x4x28x28xf32, #tpu.memory_space<vmem>>, vector<2x1x16x16xf32>
    %633 = vector.shape_cast %632 : vector<2x1x16x16xf32> to vector<2x16x16xf32>
    %c95 = arith.constant 95 : index
    %634 = memref.load %arg5[%c95] : memref<144xf32, #tpu.memory_space<smem>>
    %635 = vector.broadcast %634 : f32 to vector<2x16x16xf32>
    %636 = arith.mulf %633, %635 : vector<2x16x16xf32>
    %637 = arith.addf %631, %636 : vector<2x16x16xf32>
    %c0_442 = arith.constant 0 : index
    %c2_443 = arith.constant 2 : index
    %c10_444 = arith.constant 10 : index
    %c2_445 = arith.constant 2 : index
    %638 = vector.load %arg7[%c0_442, %c2_443, %c10_444, %c2_445] : memref<2x4x28x28xf32, #tpu.memory_space<vmem>>, vector<2x1x16x16xf32>
    %639 = vector.shape_cast %638 : vector<2x1x16x16xf32> to vector<2x16x16xf32>
    %c96 = arith.constant 96 : index
    %640 = memref.load %arg5[%c96] : memref<144xf32, #tpu.memory_space<smem>>
    %641 = vector.broadcast %640 : f32 to vector<2x16x16xf32>
    %642 = arith.mulf %639, %641 : vector<2x16x16xf32>
    %643 = arith.addf %637, %642 : vector<2x16x16xf32>
    %c0_446 = arith.constant 0 : index
    %c2_447 = arith.constant 2 : index
    %c10_448 = arith.constant 10 : index
    %c6_449 = arith.constant 6 : index
    %644 = vector.load %arg7[%c0_446, %c2_447, %c10_448, %c6_449] : memref<2x4x28x28xf32, #tpu.memory_space<vmem>>, vector<2x1x16x16xf32>
    %645 = vector.shape_cast %644 : vector<2x1x16x16xf32> to vector<2x16x16xf32>
    %c97 = arith.constant 97 : index
    %646 = memref.load %arg5[%c97] : memref<144xf32, #tpu.memory_space<smem>>
    %647 = vector.broadcast %646 : f32 to vector<2x16x16xf32>
    %648 = arith.mulf %645, %647 : vector<2x16x16xf32>
    %649 = arith.addf %643, %648 : vector<2x16x16xf32>
    %c0_450 = arith.constant 0 : index
    %c2_451 = arith.constant 2 : index
    %c10_452 = arith.constant 10 : index
    %c10_453 = arith.constant 10 : index
    %650 = vector.load %arg7[%c0_450, %c2_451, %c10_452, %c10_453] : memref<2x4x28x28xf32, #tpu.memory_space<vmem>>, vector<2x1x16x16xf32>
    %651 = vector.shape_cast %650 : vector<2x1x16x16xf32> to vector<2x16x16xf32>
    %c98 = arith.constant 98 : index
    %652 = memref.load %arg5[%c98] : memref<144xf32, #tpu.memory_space<smem>>
    %653 = vector.broadcast %652 : f32 to vector<2x16x16xf32>
    %654 = arith.mulf %651, %653 : vector<2x16x16xf32>
    %655 = arith.addf %649, %654 : vector<2x16x16xf32>
    %656 = vector.shape_cast %655 : vector<2x16x16xf32> to vector<2x256xf32>
    %c0_454 = arith.constant 0 : index
    %c10_455 = arith.constant 10 : index
    %c0_456 = arith.constant 0 : index
    %657 = vector.load %arg6[%c0_454, %c10_455, %c0_456] : memref<2x16x256xf32, #tpu.memory_space<vmem>>, vector<2x1x256xf32>
    %658 = vector.shape_cast %657 : vector<2x1x256xf32> to vector<2x256xf32>
    %659 = vector.shape_cast %656 : vector<2x256xf32> to vector<2x1x256xf32>
    tpu.vector_store %arg6[%c0_454, %c10_455, %c0_456], %659 {strides = array<i32>} : memref<2x16x256xf32, #tpu.memory_space<vmem>>, vector<2x1x256xf32>,
    %c0_457 = arith.constant 0 : index
    %c3_458 = arith.constant 3 : index
    %c2_459 = arith.constant 2 : index
    %c2_460 = arith.constant 2 : index
    %660 = vector.load %arg7[%c0_457, %c3_458, %c2_459, %c2_460] : memref<2x4x28x28xf32, #tpu.memory_space<vmem>>, vector<2x1x16x16xf32>
    %661 = vector.shape_cast %660 : vector<2x1x16x16xf32> to vector<2x16x16xf32>
    %c99 = arith.constant 99 : index
    %662 = memref.load %arg5[%c99] : memref<144xf32, #tpu.memory_space<smem>>
    %663 = vector.broadcast %662 : f32 to vector<2x16x16xf32>
    %664 = arith.mulf %661, %663 : vector<2x16x16xf32>
    %c0_461 = arith.constant 0 : index
    %c3_462 = arith.constant 3 : index
    %c2_463 = arith.constant 2 : index
    %c6_464 = arith.constant 6 : index
    %665 = vector.load %arg7[%c0_461, %c3_462, %c2_463, %c6_464] : memref<2x4x28x28xf32, #tpu.memory_space<vmem>>, vector<2x1x16x16xf32>
    %666 = vector.shape_cast %665 : vector<2x1x16x16xf32> to vector<2x16x16xf32>
    %c100 = arith.constant 100 : index
    %667 = memref.load %arg5[%c100] : memref<144xf32, #tpu.memory_space<smem>>
    %668 = vector.broadcast %667 : f32 to vector<2x16x16xf32>
    %669 = arith.mulf %666, %668 : vector<2x16x16xf32>
    %670 = arith.addf %664, %669 : vector<2x16x16xf32>
    %c0_465 = arith.constant 0 : index
    %c3_466 = arith.constant 3 : index
    %c2_467 = arith.constant 2 : index
    %c10_468 = arith.constant 10 : index
    %671 = vector.load %arg7[%c0_465, %c3_466, %c2_467, %c10_468] : memref<2x4x28x28xf32, #tpu.memory_space<vmem>>, vector<2x1x16x16xf32>
    %672 = vector.shape_cast %671 : vector<2x1x16x16xf32> to vector<2x16x16xf32>
    %c101 = arith.constant 101 : index
    %673 = memref.load %arg5[%c101] : memref<144xf32, #tpu.memory_space<smem>>
    %674 = vector.broadcast %673 : f32 to vector<2x16x16xf32>
    %675 = arith.mulf %672, %674 : vector<2x16x16xf32>
    %676 = arith.addf %670, %675 : vector<2x16x16xf32>
    %c0_469 = arith.constant 0 : index
    %c3_470 = arith.constant 3 : index
    %c6_471 = arith.constant 6 : index
    %c2_472 = arith.constant 2 : index
    %677 = vector.load %arg7[%c0_469, %c3_470, %c6_471, %c2_472] : memref<2x4x28x28xf32, #tpu.memory_space<vmem>>, vector<2x1x16x16xf32>
    %678 = vector.shape_cast %677 : vector<2x1x16x16xf32> to vector<2x16x16xf32>
    %c102 = arith.constant 102 : index
    %679 = memref.load %arg5[%c102] : memref<144xf32, #tpu.memory_space<smem>>
    %680 = vector.broadcast %679 : f32 to vector<2x16x16xf32>
    %681 = arith.mulf %678, %680 : vector<2x16x16xf32>
    %682 = arith.addf %676, %681 : vector<2x16x16xf32>
    %c0_473 = arith.constant 0 : index
    %c3_474 = arith.constant 3 : index
    %c6_475 = arith.constant 6 : index
    %c6_476 = arith.constant 6 : index
    %683 = vector.load %arg7[%c0_473, %c3_474, %c6_475, %c6_476] : memref<2x4x28x28xf32, #tpu.memory_space<vmem>>, vector<2x1x16x16xf32>
    %684 = vector.shape_cast %683 : vector<2x1x16x16xf32> to vector<2x16x16xf32>
    %c103 = arith.constant 103 : index
    %685 = memref.load %arg5[%c103] : memref<144xf32, #tpu.memory_space<smem>>
    %686 = vector.broadcast %685 : f32 to vector<2x16x16xf32>
    %687 = arith.mulf %684, %686 : vector<2x16x16xf32>
    %688 = arith.addf %682, %687 : vector<2x16x16xf32>
    %c0_477 = arith.constant 0 : index
    %c3_478 = arith.constant 3 : index
    %c6_479 = arith.constant 6 : index
    %c10_480 = arith.constant 10 : index
    %689 = vector.load %arg7[%c0_477, %c3_478, %c6_479, %c10_480] : memref<2x4x28x28xf32, #tpu.memory_space<vmem>>, vector<2x1x16x16xf32>
    %690 = vector.shape_cast %689 : vector<2x1x16x16xf32> to vector<2x16x16xf32>
    %c104 = arith.constant 104 : index
    %691 = memref.load %arg5[%c104] : memref<144xf32, #tpu.memory_space<smem>>
    %692 = vector.broadcast %691 : f32 to vector<2x16x16xf32>
    %693 = arith.mulf %690, %692 : vector<2x16x16xf32>
    %694 = arith.addf %688, %693 : vector<2x16x16xf32>
    %c0_481 = arith.constant 0 : index
    %c3_482 = arith.constant 3 : index
    %c10_483 = arith.constant 10 : index
    %c2_484 = arith.constant 2 : index
    %695 = vector.load %arg7[%c0_481, %c3_482, %c10_483, %c2_484] : memref<2x4x28x28xf32, #tpu.memory_space<vmem>>, vector<2x1x16x16xf32>
    %696 = vector.shape_cast %695 : vector<2x1x16x16xf32> to vector<2x16x16xf32>
    %c105 = arith.constant 105 : index
    %697 = memref.load %arg5[%c105] : memref<144xf32, #tpu.memory_space<smem>>
    %698 = vector.broadcast %697 : f32 to vector<2x16x16xf32>
    %699 = arith.mulf %696, %698 : vector<2x16x16xf32>
    %700 = arith.addf %694, %699 : vector<2x16x16xf32>
    %c0_485 = arith.constant 0 : index
    %c3_486 = arith.constant 3 : index
    %c10_487 = arith.constant 10 : index
    %c6_488 = arith.constant 6 : index
    %701 = vector.load %arg7[%c0_485, %c3_486, %c10_487, %c6_488] : memref<2x4x28x28xf32, #tpu.memory_space<vmem>>, vector<2x1x16x16xf32>
    %702 = vector.shape_cast %701 : vector<2x1x16x16xf32> to vector<2x16x16xf32>
    %c106 = arith.constant 106 : index
    %703 = memref.load %arg5[%c106] : memref<144xf32, #tpu.memory_space<smem>>
    %704 = vector.broadcast %703 : f32 to vector<2x16x16xf32>
    %705 = arith.mulf %702, %704 : vector<2x16x16xf32>
    %706 = arith.addf %700, %705 : vector<2x16x16xf32>
    %c0_489 = arith.constant 0 : index
    %c3_490 = arith.constant 3 : index
    %c10_491 = arith.constant 10 : index
    %c10_492 = arith.constant 10 : index
    %707 = vector.load %arg7[%c0_489, %c3_490, %c10_491, %c10_492] : memref<2x4x28x28xf32, #tpu.memory_space<vmem>>, vector<2x1x16x16xf32>
    %708 = vector.shape_cast %707 : vector<2x1x16x16xf32> to vector<2x16x16xf32>
    %c107 = arith.constant 107 : index
    %709 = memref.load %arg5[%c107] : memref<144xf32, #tpu.memory_space<smem>>
    %710 = vector.broadcast %709 : f32 to vector<2x16x16xf32>
    %711 = arith.mulf %708, %710 : vector<2x16x16xf32>
    %712 = arith.addf %706, %711 : vector<2x16x16xf32>
    %713 = vector.shape_cast %712 : vector<2x16x16xf32> to vector<2x256xf32>
    %c0_493 = arith.constant 0 : index
    %c11_494 = arith.constant 11 : index
    %c0_495 = arith.constant 0 : index
    %714 = vector.load %arg6[%c0_493, %c11_494, %c0_495] : memref<2x16x256xf32, #tpu.memory_space<vmem>>, vector<2x1x256xf32>
    %715 = vector.shape_cast %714 : vector<2x1x256xf32> to vector<2x256xf32>
    %716 = vector.shape_cast %713 : vector<2x256xf32> to vector<2x1x256xf32>
    tpu.vector_store %arg6[%c0_493, %c11_494, %c0_495], %716 {strides = array<i32>} : memref<2x16x256xf32, #tpu.memory_space<vmem>>, vector<2x1x256xf32>,
    %c0_496 = arith.constant 0 : index
    %c0_497 = arith.constant 0 : index
    %c0_498 = arith.constant 0 : index
    %c0_499 = arith.constant 0 : index
    %717 = vector.load %arg7[%c0_496, %c0_497, %c0_498, %c0_499] : memref<2x4x28x28xf32, #tpu.memory_space<vmem>>, vector<2x1x16x16xf32>
    %718 = vector.shape_cast %717 : vector<2x1x16x16xf32> to vector<2x16x16xf32>
    %c108 = arith.constant 108 : index
    %719 = memref.load %arg5[%c108] : memref<144xf32, #tpu.memory_space<smem>>
    %720 = vector.broadcast %719 : f32 to vector<2x16x16xf32>
    %721 = arith.mulf %718, %720 : vector<2x16x16xf32>
    %c0_500 = arith.constant 0 : index
    %c0_501 = arith.constant 0 : index
    %c0_502 = arith.constant 0 : index
    %c6_503 = arith.constant 6 : index
    %722 = vector.load %arg7[%c0_500, %c0_501, %c0_502, %c6_503] : memref<2x4x28x28xf32, #tpu.memory_space<vmem>>, vector<2x1x16x16xf32>
    %723 = vector.shape_cast %722 : vector<2x1x16x16xf32> to vector<2x16x16xf32>
    %c109 = arith.constant 109 : index
    %724 = memref.load %arg5[%c109] : memref<144xf32, #tpu.memory_space<smem>>
    %725 = vector.broadcast %724 : f32 to vector<2x16x16xf32>
    %726 = arith.mulf %723, %725 : vector<2x16x16xf32>
    %727 = arith.addf %721, %726 : vector<2x16x16xf32>
    %c0_504 = arith.constant 0 : index
    %c0_505 = arith.constant 0 : index
    %c0_506 = arith.constant 0 : index
    %c12_507 = arith.constant 12 : index
    %728 = vector.load %arg7[%c0_504, %c0_505, %c0_506, %c12_507] : memref<2x4x28x28xf32, #tpu.memory_space<vmem>>, vector<2x1x16x16xf32>
    %729 = vector.shape_cast %728 : vector<2x1x16x16xf32> to vector<2x16x16xf32>
    %c110 = arith.constant 110 : index
    %730 = memref.load %arg5[%c110] : memref<144xf32, #tpu.memory_space<smem>>
    %731 = vector.broadcast %730 : f32 to vector<2x16x16xf32>
    %732 = arith.mulf %729, %731 : vector<2x16x16xf32>
    %733 = arith.addf %727, %732 : vector<2x16x16xf32>
    %c0_508 = arith.constant 0 : index
    %c0_509 = arith.constant 0 : index
    %c6_510 = arith.constant 6 : index
    %c0_511 = arith.constant 0 : index
    %734 = vector.load %arg7[%c0_508, %c0_509, %c6_510, %c0_511] : memref<2x4x28x28xf32, #tpu.memory_space<vmem>>, vector<2x1x16x16xf32>
    %735 = vector.shape_cast %734 : vector<2x1x16x16xf32> to vector<2x16x16xf32>
    %c111 = arith.constant 111 : index
    %736 = memref.load %arg5[%c111] : memref<144xf32, #tpu.memory_space<smem>>
    %737 = vector.broadcast %736 : f32 to vector<2x16x16xf32>
    %738 = arith.mulf %735, %737 : vector<2x16x16xf32>
    %739 = arith.addf %733, %738 : vector<2x16x16xf32>
    %c0_512 = arith.constant 0 : index
    %c0_513 = arith.constant 0 : index
    %c6_514 = arith.constant 6 : index
    %c6_515 = arith.constant 6 : index
    %740 = vector.load %arg7[%c0_512, %c0_513, %c6_514, %c6_515] : memref<2x4x28x28xf32, #tpu.memory_space<vmem>>, vector<2x1x16x16xf32>
    %741 = vector.shape_cast %740 : vector<2x1x16x16xf32> to vector<2x16x16xf32>
    %c112 = arith.constant 112 : index
    %742 = memref.load %arg5[%c112] : memref<144xf32, #tpu.memory_space<smem>>
    %743 = vector.broadcast %742 : f32 to vector<2x16x16xf32>
    %744 = arith.mulf %741, %743 : vector<2x16x16xf32>
    %745 = arith.addf %739, %744 : vector<2x16x16xf32>
    %c0_516 = arith.constant 0 : index
    %c0_517 = arith.constant 0 : index
    %c6_518 = arith.constant 6 : index
    %c12_519 = arith.constant 12 : index
    %746 = vector.load %arg7[%c0_516, %c0_517, %c6_518, %c12_519] : memref<2x4x28x28xf32, #tpu.memory_space<vmem>>, vector<2x1x16x16xf32>
    %747 = vector.shape_cast %746 : vector<2x1x16x16xf32> to vector<2x16x16xf32>
    %c113 = arith.constant 113 : index
    %748 = memref.load %arg5[%c113] : memref<144xf32, #tpu.memory_space<smem>>
    %749 = vector.broadcast %748 : f32 to vector<2x16x16xf32>
    %750 = arith.mulf %747, %749 : vector<2x16x16xf32>
    %751 = arith.addf %745, %750 : vector<2x16x16xf32>
    %c0_520 = arith.constant 0 : index
    %c0_521 = arith.constant 0 : index
    %c12_522 = arith.constant 12 : index
    %c0_523 = arith.constant 0 : index
    %752 = vector.load %arg7[%c0_520, %c0_521, %c12_522, %c0_523] : memref<2x4x28x28xf32, #tpu.memory_space<vmem>>, vector<2x1x16x16xf32>
    %753 = vector.shape_cast %752 : vector<2x1x16x16xf32> to vector<2x16x16xf32>
    %c114 = arith.constant 114 : index
    %754 = memref.load %arg5[%c114] : memref<144xf32, #tpu.memory_space<smem>>
    %755 = vector.broadcast %754 : f32 to vector<2x16x16xf32>
    %756 = arith.mulf %753, %755 : vector<2x16x16xf32>
    %757 = arith.addf %751, %756 : vector<2x16x16xf32>
    %c0_524 = arith.constant 0 : index
    %c0_525 = arith.constant 0 : index
    %c12_526 = arith.constant 12 : index
    %c6_527 = arith.constant 6 : index
    %758 = vector.load %arg7[%c0_524, %c0_525, %c12_526, %c6_527] : memref<2x4x28x28xf32, #tpu.memory_space<vmem>>, vector<2x1x16x16xf32>
    %759 = vector.shape_cast %758 : vector<2x1x16x16xf32> to vector<2x16x16xf32>
    %c115 = arith.constant 115 : index
    %760 = memref.load %arg5[%c115] : memref<144xf32, #tpu.memory_space<smem>>
    %761 = vector.broadcast %760 : f32 to vector<2x16x16xf32>
    %762 = arith.mulf %759, %761 : vector<2x16x16xf32>
    %763 = arith.addf %757, %762 : vector<2x16x16xf32>
    %c0_528 = arith.constant 0 : index
    %c0_529 = arith.constant 0 : index
    %c12_530 = arith.constant 12 : index
    %c12_531 = arith.constant 12 : index
    %764 = vector.load %arg7[%c0_528, %c0_529, %c12_530, %c12_531] : memref<2x4x28x28xf32, #tpu.memory_space<vmem>>, vector<2x1x16x16xf32>
    %765 = vector.shape_cast %764 : vector<2x1x16x16xf32> to vector<2x16x16xf32>
    %c116 = arith.constant 116 : index
    %766 = memref.load %arg5[%c116] : memref<144xf32, #tpu.memory_space<smem>>
    %767 = vector.broadcast %766 : f32 to vector<2x16x16xf32>
    %768 = arith.mulf %765, %767 : vector<2x16x16xf32>
    %769 = arith.addf %763, %768 : vector<2x16x16xf32>
    %770 = vector.shape_cast %769 : vector<2x16x16xf32> to vector<2x256xf32>
    %c0_532 = arith.constant 0 : index
    %c12_533 = arith.constant 12 : index
    %c0_534 = arith.constant 0 : index
    %771 = vector.load %arg6[%c0_532, %c12_533, %c0_534] : memref<2x16x256xf32, #tpu.memory_space<vmem>>, vector<2x1x256xf32>
    %772 = vector.shape_cast %771 : vector<2x1x256xf32> to vector<2x256xf32>
    %773 = vector.shape_cast %770 : vector<2x256xf32> to vector<2x1x256xf32>
    tpu.vector_store %arg6[%c0_532, %c12_533, %c0_534], %773 {strides = array<i32>} : memref<2x16x256xf32, #tpu.memory_space<vmem>>, vector<2x1x256xf32>,
    %c0_535 = arith.constant 0 : index
    %c1_536 = arith.constant 1 : index
    %c0_537 = arith.constant 0 : index
    %c0_538 = arith.constant 0 : index
    %774 = vector.load %arg7[%c0_535, %c1_536, %c0_537, %c0_538] : memref<2x4x28x28xf32, #tpu.memory_space<vmem>>, vector<2x1x16x16xf32>
    %775 = vector.shape_cast %774 : vector<2x1x16x16xf32> to vector<2x16x16xf32>
    %c117 = arith.constant 117 : index
    %776 = memref.load %arg5[%c117] : memref<144xf32, #tpu.memory_space<smem>>
    %777 = vector.broadcast %776 : f32 to vector<2x16x16xf32>
    %778 = arith.mulf %775, %777 : vector<2x16x16xf32>
    %c0_539 = arith.constant 0 : index
    %c1_540 = arith.constant 1 : index
    %c0_541 = arith.constant 0 : index
    %c6_542 = arith.constant 6 : index
    %779 = vector.load %arg7[%c0_539, %c1_540, %c0_541, %c6_542] : memref<2x4x28x28xf32, #tpu.memory_space<vmem>>, vector<2x1x16x16xf32>
    %780 = vector.shape_cast %779 : vector<2x1x16x16xf32> to vector<2x16x16xf32>
    %c118 = arith.constant 118 : index
    %781 = memref.load %arg5[%c118] : memref<144xf32, #tpu.memory_space<smem>>
    %782 = vector.broadcast %781 : f32 to vector<2x16x16xf32>
    %783 = arith.mulf %780, %782 : vector<2x16x16xf32>
    %784 = arith.addf %778, %783 : vector<2x16x16xf32>
    %c0_543 = arith.constant 0 : index
    %c1_544 = arith.constant 1 : index
    %c0_545 = arith.constant 0 : index
    %c12_546 = arith.constant 12 : index
    %785 = vector.load %arg7[%c0_543, %c1_544, %c0_545, %c12_546] : memref<2x4x28x28xf32, #tpu.memory_space<vmem>>, vector<2x1x16x16xf32>
    %786 = vector.shape_cast %785 : vector<2x1x16x16xf32> to vector<2x16x16xf32>
    %c119 = arith.constant 119 : index
    %787 = memref.load %arg5[%c119] : memref<144xf32, #tpu.memory_space<smem>>
    %788 = vector.broadcast %787 : f32 to vector<2x16x16xf32>
    %789 = arith.mulf %786, %788 : vector<2x16x16xf32>
    %790 = arith.addf %784, %789 : vector<2x16x16xf32>
    %c0_547 = arith.constant 0 : index
    %c1_548 = arith.constant 1 : index
    %c6_549 = arith.constant 6 : index
    %c0_550 = arith.constant 0 : index
    %791 = vector.load %arg7[%c0_547, %c1_548, %c6_549, %c0_550] : memref<2x4x28x28xf32, #tpu.memory_space<vmem>>, vector<2x1x16x16xf32>
    %792 = vector.shape_cast %791 : vector<2x1x16x16xf32> to vector<2x16x16xf32>
    %c120 = arith.constant 120 : index
    %793 = memref.load %arg5[%c120] : memref<144xf32, #tpu.memory_space<smem>>
    %794 = vector.broadcast %793 : f32 to vector<2x16x16xf32>
    %795 = arith.mulf %792, %794 : vector<2x16x16xf32>
    %796 = arith.addf %790, %795 : vector<2x16x16xf32>
    %c0_551 = arith.constant 0 : index
    %c1_552 = arith.constant 1 : index
    %c6_553 = arith.constant 6 : index
    %c6_554 = arith.constant 6 : index
    %797 = vector.load %arg7[%c0_551, %c1_552, %c6_553, %c6_554] : memref<2x4x28x28xf32, #tpu.memory_space<vmem>>, vector<2x1x16x16xf32>
    %798 = vector.shape_cast %797 : vector<2x1x16x16xf32> to vector<2x16x16xf32>
    %c121 = arith.constant 121 : index
    %799 = memref.load %arg5[%c121] : memref<144xf32, #tpu.memory_space<smem>>
    %800 = vector.broadcast %799 : f32 to vector<2x16x16xf32>
    %801 = arith.mulf %798, %800 : vector<2x16x16xf32>
    %802 = arith.addf %796, %801 : vector<2x16x16xf32>
    %c0_555 = arith.constant 0 : index
    %c1_556 = arith.constant 1 : index
    %c6_557 = arith.constant 6 : index
    %c12_558 = arith.constant 12 : index
    %803 = vector.load %arg7[%c0_555, %c1_556, %c6_557, %c12_558] : memref<2x4x28x28xf32, #tpu.memory_space<vmem>>, vector<2x1x16x16xf32>
    %804 = vector.shape_cast %803 : vector<2x1x16x16xf32> to vector<2x16x16xf32>
    %c122 = arith.constant 122 : index
    %805 = memref.load %arg5[%c122] : memref<144xf32, #tpu.memory_space<smem>>
    %806 = vector.broadcast %805 : f32 to vector<2x16x16xf32>
    %807 = arith.mulf %804, %806 : vector<2x16x16xf32>
    %808 = arith.addf %802, %807 : vector<2x16x16xf32>
    %c0_559 = arith.constant 0 : index
    %c1_560 = arith.constant 1 : index
    %c12_561 = arith.constant 12 : index
    %c0_562 = arith.constant 0 : index
    %809 = vector.load %arg7[%c0_559, %c1_560, %c12_561, %c0_562] : memref<2x4x28x28xf32, #tpu.memory_space<vmem>>, vector<2x1x16x16xf32>
    %810 = vector.shape_cast %809 : vector<2x1x16x16xf32> to vector<2x16x16xf32>
    %c123 = arith.constant 123 : index
    %811 = memref.load %arg5[%c123] : memref<144xf32, #tpu.memory_space<smem>>
    %812 = vector.broadcast %811 : f32 to vector<2x16x16xf32>
    %813 = arith.mulf %810, %812 : vector<2x16x16xf32>
    %814 = arith.addf %808, %813 : vector<2x16x16xf32>
    %c0_563 = arith.constant 0 : index
    %c1_564 = arith.constant 1 : index
    %c12_565 = arith.constant 12 : index
    %c6_566 = arith.constant 6 : index
    %815 = vector.load %arg7[%c0_563, %c1_564, %c12_565, %c6_566] : memref<2x4x28x28xf32, #tpu.memory_space<vmem>>, vector<2x1x16x16xf32>
    %816 = vector.shape_cast %815 : vector<2x1x16x16xf32> to vector<2x16x16xf32>
    %c124 = arith.constant 124 : index
    %817 = memref.load %arg5[%c124] : memref<144xf32, #tpu.memory_space<smem>>
    %818 = vector.broadcast %817 : f32 to vector<2x16x16xf32>
    %819 = arith.mulf %816, %818 : vector<2x16x16xf32>
    %820 = arith.addf %814, %819 : vector<2x16x16xf32>
    %c0_567 = arith.constant 0 : index
    %c1_568 = arith.constant 1 : index
    %c12_569 = arith.constant 12 : index
    %c12_570 = arith.constant 12 : index
    %821 = vector.load %arg7[%c0_567, %c1_568, %c12_569, %c12_570] : memref<2x4x28x28xf32, #tpu.memory_space<vmem>>, vector<2x1x16x16xf32>
    %822 = vector.shape_cast %821 : vector<2x1x16x16xf32> to vector<2x16x16xf32>
    %c125 = arith.constant 125 : index
    %823 = memref.load %arg5[%c125] : memref<144xf32, #tpu.memory_space<smem>>
    %824 = vector.broadcast %823 : f32 to vector<2x16x16xf32>
    %825 = arith.mulf %822, %824 : vector<2x16x16xf32>
    %826 = arith.addf %820, %825 : vector<2x16x16xf32>
    %827 = vector.shape_cast %826 : vector<2x16x16xf32> to vector<2x256xf32>
    %c0_571 = arith.constant 0 : index
    %c13_572 = arith.constant 13 : index
    %c0_573 = arith.constant 0 : index
    %828 = vector.load %arg6[%c0_571, %c13_572, %c0_573] : memref<2x16x256xf32, #tpu.memory_space<vmem>>, vector<2x1x256xf32>
    %829 = vector.shape_cast %828 : vector<2x1x256xf32> to vector<2x256xf32>
    %830 = vector.shape_cast %827 : vector<2x256xf32> to vector<2x1x256xf32>
    tpu.vector_store %arg6[%c0_571, %c13_572, %c0_573], %830 {strides = array<i32>} : memref<2x16x256xf32, #tpu.memory_space<vmem>>, vector<2x1x256xf32>,
    %c0_574 = arith.constant 0 : index
    %c2_575 = arith.constant 2 : index
    %c0_576 = arith.constant 0 : index
    %c0_577 = arith.constant 0 : index
    %831 = vector.load %arg7[%c0_574, %c2_575, %c0_576, %c0_577] : memref<2x4x28x28xf32, #tpu.memory_space<vmem>>, vector<2x1x16x16xf32>
    %832 = vector.shape_cast %831 : vector<2x1x16x16xf32> to vector<2x16x16xf32>
    %c126 = arith.constant 126 : index
    %833 = memref.load %arg5[%c126] : memref<144xf32, #tpu.memory_space<smem>>
    %834 = vector.broadcast %833 : f32 to vector<2x16x16xf32>
    %835 = arith.mulf %832, %834 : vector<2x16x16xf32>
    %c0_578 = arith.constant 0 : index
    %c2_579 = arith.constant 2 : index
    %c0_580 = arith.constant 0 : index
    %c6_581 = arith.constant 6 : index
    %836 = vector.load %arg7[%c0_578, %c2_579, %c0_580, %c6_581] : memref<2x4x28x28xf32, #tpu.memory_space<vmem>>, vector<2x1x16x16xf32>
    %837 = vector.shape_cast %836 : vector<2x1x16x16xf32> to vector<2x16x16xf32>
    %c127 = arith.constant 127 : index
    %838 = memref.load %arg5[%c127] : memref<144xf32, #tpu.memory_space<smem>>
    %839 = vector.broadcast %838 : f32 to vector<2x16x16xf32>
    %840 = arith.mulf %837, %839 : vector<2x16x16xf32>
    %841 = arith.addf %835, %840 : vector<2x16x16xf32>
    %c0_582 = arith.constant 0 : index
    %c2_583 = arith.constant 2 : index
    %c0_584 = arith.constant 0 : index
    %c12_585 = arith.constant 12 : index
    %842 = vector.load %arg7[%c0_582, %c2_583, %c0_584, %c12_585] : memref<2x4x28x28xf32, #tpu.memory_space<vmem>>, vector<2x1x16x16xf32>
    %843 = vector.shape_cast %842 : vector<2x1x16x16xf32> to vector<2x16x16xf32>
    %c128 = arith.constant 128 : index
    %844 = memref.load %arg5[%c128] : memref<144xf32, #tpu.memory_space<smem>>
    %845 = vector.broadcast %844 : f32 to vector<2x16x16xf32>
    %846 = arith.mulf %843, %845 : vector<2x16x16xf32>
    %847 = arith.addf %841, %846 : vector<2x16x16xf32>
    %c0_586 = arith.constant 0 : index
    %c2_587 = arith.constant 2 : index
    %c6_588 = arith.constant 6 : index
    %c0_589 = arith.constant 0 : index
    %848 = vector.load %arg7[%c0_586, %c2_587, %c6_588, %c0_589] : memref<2x4x28x28xf32, #tpu.memory_space<vmem>>, vector<2x1x16x16xf32>
    %849 = vector.shape_cast %848 : vector<2x1x16x16xf32> to vector<2x16x16xf32>
    %c129 = arith.constant 129 : index
    %850 = memref.load %arg5[%c129] : memref<144xf32, #tpu.memory_space<smem>>
    %851 = vector.broadcast %850 : f32 to vector<2x16x16xf32>
    %852 = arith.mulf %849, %851 : vector<2x16x16xf32>
    %853 = arith.addf %847, %852 : vector<2x16x16xf32>
    %c0_590 = arith.constant 0 : index
    %c2_591 = arith.constant 2 : index
    %c6_592 = arith.constant 6 : index
    %c6_593 = arith.constant 6 : index
    %854 = vector.load %arg7[%c0_590, %c2_591, %c6_592, %c6_593] : memref<2x4x28x28xf32, #tpu.memory_space<vmem>>, vector<2x1x16x16xf32>
    %855 = vector.shape_cast %854 : vector<2x1x16x16xf32> to vector<2x16x16xf32>
    %c130 = arith.constant 130 : index
    %856 = memref.load %arg5[%c130] : memref<144xf32, #tpu.memory_space<smem>>
    %857 = vector.broadcast %856 : f32 to vector<2x16x16xf32>
    %858 = arith.mulf %855, %857 : vector<2x16x16xf32>
    %859 = arith.addf %853, %858 : vector<2x16x16xf32>
    %c0_594 = arith.constant 0 : index
    %c2_595 = arith.constant 2 : index
    %c6_596 = arith.constant 6 : index
    %c12_597 = arith.constant 12 : index
    %860 = vector.load %arg7[%c0_594, %c2_595, %c6_596, %c12_597] : memref<2x4x28x28xf32, #tpu.memory_space<vmem>>, vector<2x1x16x16xf32>
    %861 = vector.shape_cast %860 : vector<2x1x16x16xf32> to vector<2x16x16xf32>
    %c131 = arith.constant 131 : index
    %862 = memref.load %arg5[%c131] : memref<144xf32, #tpu.memory_space<smem>>
    %863 = vector.broadcast %862 : f32 to vector<2x16x16xf32>
    %864 = arith.mulf %861, %863 : vector<2x16x16xf32>
    %865 = arith.addf %859, %864 : vector<2x16x16xf32>
    %c0_598 = arith.constant 0 : index
    %c2_599 = arith.constant 2 : index
    %c12_600 = arith.constant 12 : index
    %c0_601 = arith.constant 0 : index
    %866 = vector.load %arg7[%c0_598, %c2_599, %c12_600, %c0_601] : memref<2x4x28x28xf32, #tpu.memory_space<vmem>>, vector<2x1x16x16xf32>
    %867 = vector.shape_cast %866 : vector<2x1x16x16xf32> to vector<2x16x16xf32>
    %c132 = arith.constant 132 : index
    %868 = memref.load %arg5[%c132] : memref<144xf32, #tpu.memory_space<smem>>
    %869 = vector.broadcast %868 : f32 to vector<2x16x16xf32>
    %870 = arith.mulf %867, %869 : vector<2x16x16xf32>
    %871 = arith.addf %865, %870 : vector<2x16x16xf32>
    %c0_602 = arith.constant 0 : index
    %c2_603 = arith.constant 2 : index
    %c12_604 = arith.constant 12 : index
    %c6_605 = arith.constant 6 : index
    %872 = vector.load %arg7[%c0_602, %c2_603, %c12_604, %c6_605] : memref<2x4x28x28xf32, #tpu.memory_space<vmem>>, vector<2x1x16x16xf32>
    %873 = vector.shape_cast %872 : vector<2x1x16x16xf32> to vector<2x16x16xf32>
    %c133 = arith.constant 133 : index
    %874 = memref.load %arg5[%c133] : memref<144xf32, #tpu.memory_space<smem>>
    %875 = vector.broadcast %874 : f32 to vector<2x16x16xf32>
    %876 = arith.mulf %873, %875 : vector<2x16x16xf32>
    %877 = arith.addf %871, %876 : vector<2x16x16xf32>
    %c0_606 = arith.constant 0 : index
    %c2_607 = arith.constant 2 : index
    %c12_608 = arith.constant 12 : index
    %c12_609 = arith.constant 12 : index
    %878 = vector.load %arg7[%c0_606, %c2_607, %c12_608, %c12_609] : memref<2x4x28x28xf32, #tpu.memory_space<vmem>>, vector<2x1x16x16xf32>
    %879 = vector.shape_cast %878 : vector<2x1x16x16xf32> to vector<2x16x16xf32>
    %c134 = arith.constant 134 : index
    %880 = memref.load %arg5[%c134] : memref<144xf32, #tpu.memory_space<smem>>
    %881 = vector.broadcast %880 : f32 to vector<2x16x16xf32>
    %882 = arith.mulf %879, %881 : vector<2x16x16xf32>
    %883 = arith.addf %877, %882 : vector<2x16x16xf32>
    %884 = vector.shape_cast %883 : vector<2x16x16xf32> to vector<2x256xf32>
    %c0_610 = arith.constant 0 : index
    %c14_611 = arith.constant 14 : index
    %c0_612 = arith.constant 0 : index
    %885 = vector.load %arg6[%c0_610, %c14_611, %c0_612] : memref<2x16x256xf32, #tpu.memory_space<vmem>>, vector<2x1x256xf32>
    %886 = vector.shape_cast %885 : vector<2x1x256xf32> to vector<2x256xf32>
    %887 = vector.shape_cast %884 : vector<2x256xf32> to vector<2x1x256xf32>
    tpu.vector_store %arg6[%c0_610, %c14_611, %c0_612], %887 {strides = array<i32>} : memref<2x16x256xf32, #tpu.memory_space<vmem>>, vector<2x1x256xf32>,
    %c0_613 = arith.constant 0 : index
    %c3_614 = arith.constant 3 : index
    %c0_615 = arith.constant 0 : index
    %c0_616 = arith.constant 0 : index
    %888 = vector.load %arg7[%c0_613, %c3_614, %c0_615, %c0_616] : memref<2x4x28x28xf32, #tpu.memory_space<vmem>>, vector<2x1x16x16xf32>
    %889 = vector.shape_cast %888 : vector<2x1x16x16xf32> to vector<2x16x16xf32>
    %c135 = arith.constant 135 : index
    %890 = memref.load %arg5[%c135] : memref<144xf32, #tpu.memory_space<smem>>
    %891 = vector.broadcast %890 : f32 to vector<2x16x16xf32>
    %892 = arith.mulf %889, %891 : vector<2x16x16xf32>
    %c0_617 = arith.constant 0 : index
    %c3_618 = arith.constant 3 : index
    %c0_619 = arith.constant 0 : index
    %c6_620 = arith.constant 6 : index
    %893 = vector.load %arg7[%c0_617, %c3_618, %c0_619, %c6_620] : memref<2x4x28x28xf32, #tpu.memory_space<vmem>>, vector<2x1x16x16xf32>
    %894 = vector.shape_cast %893 : vector<2x1x16x16xf32> to vector<2x16x16xf32>
    %c136 = arith.constant 136 : index
    %895 = memref.load %arg5[%c136] : memref<144xf32, #tpu.memory_space<smem>>
    %896 = vector.broadcast %895 : f32 to vector<2x16x16xf32>
    %897 = arith.mulf %894, %896 : vector<2x16x16xf32>
    %898 = arith.addf %892, %897 : vector<2x16x16xf32>
    %c0_621 = arith.constant 0 : index
    %c3_622 = arith.constant 3 : index
    %c0_623 = arith.constant 0 : index
    %c12_624 = arith.constant 12 : index
    %899 = vector.load %arg7[%c0_621, %c3_622, %c0_623, %c12_624] : memref<2x4x28x28xf32, #tpu.memory_space<vmem>>, vector<2x1x16x16xf32>
    %900 = vector.shape_cast %899 : vector<2x1x16x16xf32> to vector<2x16x16xf32>
    %c137 = arith.constant 137 : index
    %901 = memref.load %arg5[%c137] : memref<144xf32, #tpu.memory_space<smem>>
    %902 = vector.broadcast %901 : f32 to vector<2x16x16xf32>
    %903 = arith.mulf %900, %902 : vector<2x16x16xf32>
    %904 = arith.addf %898, %903 : vector<2x16x16xf32>
    %c0_625 = arith.constant 0 : index
    %c3_626 = arith.constant 3 : index
    %c6_627 = arith.constant 6 : index
    %c0_628 = arith.constant 0 : index
    %905 = vector.load %arg7[%c0_625, %c3_626, %c6_627, %c0_628] : memref<2x4x28x28xf32, #tpu.memory_space<vmem>>, vector<2x1x16x16xf32>
    %906 = vector.shape_cast %905 : vector<2x1x16x16xf32> to vector<2x16x16xf32>
    %c138 = arith.constant 138 : index
    %907 = memref.load %arg5[%c138] : memref<144xf32, #tpu.memory_space<smem>>
    %908 = vector.broadcast %907 : f32 to vector<2x16x16xf32>
    %909 = arith.mulf %906, %908 : vector<2x16x16xf32>
    %910 = arith.addf %904, %909 : vector<2x16x16xf32>
    %c0_629 = arith.constant 0 : index
    %c3_630 = arith.constant 3 : index
    %c6_631 = arith.constant 6 : index
    %c6_632 = arith.constant 6 : index
    %911 = vector.load %arg7[%c0_629, %c3_630, %c6_631, %c6_632] : memref<2x4x28x28xf32, #tpu.memory_space<vmem>>, vector<2x1x16x16xf32>
    %912 = vector.shape_cast %911 : vector<2x1x16x16xf32> to vector<2x16x16xf32>
    %c139 = arith.constant 139 : index
    %913 = memref.load %arg5[%c139] : memref<144xf32, #tpu.memory_space<smem>>
    %914 = vector.broadcast %913 : f32 to vector<2x16x16xf32>
    %915 = arith.mulf %912, %914 : vector<2x16x16xf32>
    %916 = arith.addf %910, %915 : vector<2x16x16xf32>
    %c0_633 = arith.constant 0 : index
    %c3_634 = arith.constant 3 : index
    %c6_635 = arith.constant 6 : index
    %c12_636 = arith.constant 12 : index
    %917 = vector.load %arg7[%c0_633, %c3_634, %c6_635, %c12_636] : memref<2x4x28x28xf32, #tpu.memory_space<vmem>>, vector<2x1x16x16xf32>
    %918 = vector.shape_cast %917 : vector<2x1x16x16xf32> to vector<2x16x16xf32>
    %c140 = arith.constant 140 : index
    %919 = memref.load %arg5[%c140] : memref<144xf32, #tpu.memory_space<smem>>
    %920 = vector.broadcast %919 : f32 to vector<2x16x16xf32>
    %921 = arith.mulf %918, %920 : vector<2x16x16xf32>
    %922 = arith.addf %916, %921 : vector<2x16x16xf32>
    %c0_637 = arith.constant 0 : index
    %c3_638 = arith.constant 3 : index
    %c12_639 = arith.constant 12 : index
    %c0_640 = arith.constant 0 : index
    %923 = vector.load %arg7[%c0_637, %c3_638, %c12_639, %c0_640] : memref<2x4x28x28xf32, #tpu.memory_space<vmem>>, vector<2x1x16x16xf32>
    %924 = vector.shape_cast %923 : vector<2x1x16x16xf32> to vector<2x16x16xf32>
    %c141 = arith.constant 141 : index
    %925 = memref.load %arg5[%c141] : memref<144xf32, #tpu.memory_space<smem>>
    %926 = vector.broadcast %925 : f32 to vector<2x16x16xf32>
    %927 = arith.mulf %924, %926 : vector<2x16x16xf32>
    %928 = arith.addf %922, %927 : vector<2x16x16xf32>
    %c0_641 = arith.constant 0 : index
    %c3_642 = arith.constant 3 : index
    %c12_643 = arith.constant 12 : index
    %c6_644 = arith.constant 6 : index
    %929 = vector.load %arg7[%c0_641, %c3_642, %c12_643, %c6_644] : memref<2x4x28x28xf32, #tpu.memory_space<vmem>>, vector<2x1x16x16xf32>
    %930 = vector.shape_cast %929 : vector<2x1x16x16xf32> to vector<2x16x16xf32>
    %c142 = arith.constant 142 : index
    %931 = memref.load %arg5[%c142] : memref<144xf32, #tpu.memory_space<smem>>
    %932 = vector.broadcast %931 : f32 to vector<2x16x16xf32>
    %933 = arith.mulf %930, %932 : vector<2x16x16xf32>
    %934 = arith.addf %928, %933 : vector<2x16x16xf32>
    %c0_645 = arith.constant 0 : index
    %c3_646 = arith.constant 3 : index
    %c12_647 = arith.constant 12 : index
    %c12_648 = arith.constant 12 : index
    %935 = vector.load %arg7[%c0_645, %c3_646, %c12_647, %c12_648] : memref<2x4x28x28xf32, #tpu.memory_space<vmem>>, vector<2x1x16x16xf32>
    %936 = vector.shape_cast %935 : vector<2x1x16x16xf32> to vector<2x16x16xf32>
    %c143 = arith.constant 143 : index
    %937 = memref.load %arg5[%c143] : memref<144xf32, #tpu.memory_space<smem>>
    %938 = vector.broadcast %937 : f32 to vector<2x16x16xf32>
    %939 = arith.mulf %936, %938 : vector<2x16x16xf32>
    %940 = arith.addf %934, %939 : vector<2x16x16xf32>
    %941 = vector.shape_cast %940 : vector<2x16x16xf32> to vector<2x256xf32>
    %c0_649 = arith.constant 0 : index
    %c15_650 = arith.constant 15 : index
    %c0_651 = arith.constant 0 : index
    %942 = vector.load %arg6[%c0_649, %c15_650, %c0_651] : memref<2x16x256xf32, #tpu.memory_space<vmem>>, vector<2x1x256xf32>
    %943 = vector.shape_cast %942 : vector<2x1x256xf32> to vector<2x256xf32>
    %944 = vector.shape_cast %941 : vector<2x256xf32> to vector<2x1x256xf32>
    tpu.vector_store %arg6[%c0_649, %c15_650, %c0_651], %944 {strides = array<i32>} : memref<2x16x256xf32, #tpu.memory_space<vmem>>, vector<2x1x256xf32>,
    return
  }
  func.func @transform_0(%arg0: i32) -> (i32, i32, i32) {
    %c0_i32 = arith.constant 0 : i32
    %c0_i32_0 = arith.constant 0 : i32
    %c0_i32_1 = arith.constant 0 : i32
    %c0_i32_2 = arith.constant 0 : i32
    return %c0_i32, %c0_i32_0, %c0_i32_1 : i32, i32, i32
  }
  func.func @transform_1(%arg0: i32) -> (i32, i32) {
    %c0_i32 = arith.constant 0 : i32
    %c0_i32_0 = arith.constant 0 : i32
    %c0_i32_1 = arith.constant 0 : i32
    return %c0_i32, %c0_i32_0 : i32, i32
  }
  func.func @transform_2(%arg0: i32) -> (i32, i32) {
    %c0_i32 = arith.constant 0 : i32
    %c0_i32_0 = arith.constant 0 : i32
    %c0_i32_1 = arith.constant 0 : i32
    return %c0_i32, %c0_i32_0 : i32, i32
  }
  func.func @transform_3(%arg0: i32) -> (i32, i32) {
    %c0_i32 = arith.constant 0 : i32
    %c0_i32_0 = arith.constant 0 : i32
    %c0_i32_1 = arith.constant 0 : i32
    return %c0_i32, %c0_i32_0 : i32, i32
  }
  func.func @transform_4(%arg0: i32) -> i32 {
    %c0_i32 = arith.constant 0 : i32
    %c0_i32_0 = arith.constant 0 : i32
    return %c0_i32 : i32
  }
  func.func @transform_5(%arg0: i32) -> (i32, i32, i32) {
    %c0_i32 = arith.constant 0 : i32
    %c0_i32_0 = arith.constant 0 : i32
    %c0_i32_1 = arith.constant 0 : i32
    %c0_i32_2 = arith.constant 0 : i32
    return %c0_i32, %c0_i32_0, %c0_i32_1 : i32, i32, i32
  }
}

</mosaic_0001>

<llo_original>
// kernel: tpu_custom_call.1
$region0: #{tpu_custom_call.1}
  #allocation0 [shape = 'u32[]', space=smem, size = 0x4, offset = 0x4, fixed_abs, tag = 'smem constant byte address 0x4 - core index']
  #allocation1 [shape = 'u32[144,128]{1,0:T(1,128)}', space=vmem, size = 0x12000, scoped, tag = 'internal scratch']
  #allocation2 [shape = 'f32[2,4,28,28]{3,2,1,0:T(8,128)}', space=vmem, size = 0x20000, scoped, tag = 'scratch operand']
  %s0 = inlined_call_operand.hbm [shape: f32[2,4,256], index: 0, kind: input, shape index: {}]
  %s1 = inlined_call_operand.vmem [shape: f32[4,4], index: 1, kind: input, shape index: {}]
  %s2 = inlined_call_operand.vmem [shape: f32[4,1], index: 2, kind: input, shape index: {}]
  %s3 = inlined_call_operand.vmem [shape: f32[4,1], index: 3, kind: input, shape index: {}]
  %s4 = inlined_call_operand.vmem [shape: f32[144], index: 4, kind: input, shape index: {}]
  %s5 = inlined_call_operand.hbm [shape: f32[2,16,256], index: 5, kind: output, shape index: {}]
  %s6 = sld [smem:[#allocation0]]
  $region38: #{tpu_custom_call.1} parent=0
    _
  %s8 = ssub.s32 1, %s6
  %s9 = scalar_select 0, %s8, %s6
  $region1: #{tpu_custom_call.1} parent=0
    #allocation3 [shape = 'u8[8192]{0}', space=vmem, size = 0x2000, scoped, tag = 'input window, operand 0, single buffered']
    #allocation4 [shape = 's32[1]{0}', space=sflag, size = 0x4, scoped, tag = 'scoped memory for tpu_custom_call.1']
    #allocation5 [shape = 's32[1]{0}', space=sflag, size = 0x4, scoped, tag = 'scoped memory for tpu_custom_call.1']
    #allocation6 [shape = 's32[1]{0}', space=sflag, size = 0x4, scoped, tag = 'scoped memory for tpu_custom_call.1']
    #allocation7 [shape = 'u8[1024]{0}', space=smem, size = 0x400, scoped, tag = 'input window, operand 4, single buffered']
    #allocation8 [shape = 'u8[32768]{0}', space=vmem, size = 0x8000, scoped, tag = 'output window, operand 0, single buffered']
    %10 = vsyncpa [#allocation4], 0
    %11 = vsyncpa [#allocation6], 0
    %12 = vsyncpa [#allocation5], 0
    // Predicated region
    $region2: #{tpu_custom_call.1} parent=1 // pred_check
      _
    $region3: #{tpu_custom_call.1} parent=1 // pred_check_branch
      %14 = sbr.rel (0) target = $region5
    $region4: #{tpu_custom_call.1} parent=1 // pred_region
      %s16 = ssub.s32 256, 256
      %17 = vsyncadd [#allocation4], %s16
      %s18 = sshll.u32 [#allocation3], 4
      %s19 = int_to_ptr.vmem [resolvable:$true] %s18
      %24 = dma.hbm_to_vmem [thread:$0]  %s0, 256, %s19, [#allocation4], 128, 128, 8
    $region5: #{tpu_custom_call.1} parent=1 // pred_fallthru
      _
    // Predicated region
    $region6: #{tpu_custom_call.1} parent=1 // pred_check
      _
    $region7: #{tpu_custom_call.1} parent=1 // pred_check_branch
      %26 = sbr.rel (0) target = $region9
    $region8: #{tpu_custom_call.1} parent=1 // pred_region
      _
    $region9: #{tpu_custom_call.1} parent=1 // pred_fallthru
      _
    // Predicated region
    $region10: #{tpu_custom_call.1} parent=1 // pred_check
      _
    $region11: #{tpu_custom_call.1} parent=1 // pred_check_branch
      %28 = sbr.rel (0) target = $region13
    $region12: #{tpu_custom_call.1} parent=1 // pred_region
      _
    $region13: #{tpu_custom_call.1} parent=1 // pred_fallthru
      _
    // Predicated region
    $region14: #{tpu_custom_call.1} parent=1 // pred_check
      _
    $region15: #{tpu_custom_call.1} parent=1 // pred_check_branch
      %30 = sbr.rel (0) target = $region17
    $region16: #{tpu_custom_call.1} parent=1 // pred_region
      _
    $region17: #{tpu_custom_call.1} parent=1 // pred_fallthru
      _
    // Predicated region
    $region18: #{tpu_custom_call.1} parent=1 // pred_check
      _
    $region19: #{tpu_custom_call.1} parent=1 // pred_check_branch
      %32 = sbr.rel (0) target = $region21
    $region20: #{tpu_custom_call.1} parent=1 // pred_region
      %s34 = ssub.s32 32, 32
      %35 = vsyncadd [#allocation6], %s34
      %s37 = sshll.u32 %s4, 4
      %s38 = int_to_ptr.vmem [resolvable:$true] %s37
      %40 = dma.vmem_to_smem %s38, 32, [#allocation7], [#allocation6]
    $region21: #{tpu_custom_call.1} parent=1 // pred_fallthru
      _
    // Predicated region
    $region22: #{tpu_custom_call.1} parent=1 // pred_check
      _
    $region23: #{tpu_custom_call.1} parent=1 // pred_check_branch
      %42 = sbr.rel (0) target = $region25
    $region24: #{tpu_custom_call.1} parent=1 // pred_region
      %43 = dma.done [#allocation4], 256
    $region25: #{tpu_custom_call.1} parent=1 // pred_fallthru
      _
    // Predicated region
    $region26: #{tpu_custom_call.1} parent=1 // pred_check
      _
    $region27: #{tpu_custom_call.1} parent=1 // pred_check_branch
      %45 = sbr.rel (0) target = $region29
    $region28: #{tpu_custom_call.1} parent=1 // pred_region
      %46 = dma.done [#allocation6], 32
    $region29: #{tpu_custom_call.1} parent=1 // pred_fallthru
      _
    %47 = sfence
    %vm48 = vcmask 228352
    %49 = vst.msk [vmem:[#allocation2] sm:$0xff] %vm48, 0.0
    %50 = vst.msk [vmem:[#allocation2 + $0x8] sm:$0xff] %vm48, 0.0
    %51 = vst.msk [vmem:[#allocation2 + $0x10] sm:$0xff] %vm48, 0.0
    %vm52 = vcmask 224256
    %53 = vst.msk [vmem:[#allocation2 + $0x18] sm:$0xf] %vm52, 0.0
    %54 = vst.msk [vmem:[#allocation2 + $0x20] sm:$0xff] %vm48, 0.0
    %55 = vst.msk [vmem:[#allocation2 + $0x28] sm:$0xff] %vm48, 0.0
    %56 = vst.msk [vmem:[#allocation2 + $0x30] sm:$0xff] %vm48, 0.0
    %57 = vst.msk [vmem:[#allocation2 + $0x38] sm:$0xf] %vm52, 0.0
    %58 = vst.msk [vmem:[#allocation2 + $0x40] sm:$0xff] %vm48, 0.0
    %59 = vst.msk [vmem:[#allocation2 + $0x48] sm:$0xff] %vm48, 0.0
    %60 = vst.msk [vmem:[#allocation2 + $0x50] sm:$0xff] %vm48, 0.0
    %61 = vst.msk [vmem:[#allocation2 + $0x58] sm:$0xf] %vm52, 0.0
    %62 = vst.msk [vmem:[#allocation2 + $0x60] sm:$0xff] %vm48, 0.0
    %63 = vst.msk [vmem:[#allocation2 + $0x68] sm:$0xff] %vm48, 0.0
    %64 = vst.msk [vmem:[#allocation2 + $0x70] sm:$0xff] %vm48, 0.0
    %65 = vst.msk [vmem:[#allocation2 + $0x78] sm:$0xf] %vm52, 0.0
    %66 = vst.msk [vmem:[#allocation2 + $0x80] sm:$0xff] %vm48, 0.0
    %67 = vst.msk [vmem:[#allocation2 + $0x88] sm:$0xff] %vm48, 0.0
    %68 = vst.msk [vmem:[#allocation2 + $0x90] sm:$0xff] %vm48, 0.0
    %69 = vst.msk [vmem:[#allocation2 + $0x98] sm:$0xf] %vm52, 0.0
    %70 = vst.msk [vmem:[#allocation2 + $0xa0] sm:$0xff] %vm48, 0.0
    %71 = vst.msk [vmem:[#allocation2 + $0xa8] sm:$0xff] %vm48, 0.0
    %72 = vst.msk [vmem:[#allocation2 + $0xb0] sm:$0xff] %vm48, 0.0
    %73 = vst.msk [vmem:[#allocation2 + $0xb8] sm:$0xf] %vm52, 0.0
    %74 = vst.msk [vmem:[#allocation2 + $0xc0] sm:$0xff] %vm48, 0.0
    %75 = vst.msk [vmem:[#allocation2 + $0xc8] sm:$0xff] %vm48, 0.0
    %76 = vst.msk [vmem:[#allocation2 + $0xd0] sm:$0xff] %vm48, 0.0
    %77 = vst.msk [vmem:[#allocation2 + $0xd8] sm:$0xf] %vm52, 0.0
    %78 = vst.msk [vmem:[#allocation2 + $0xe0] sm:$0xff] %vm48, 0.0
    %79 = vst.msk [vmem:[#allocation2 + $0xe8] sm:$0xff] %vm48, 0.0
    %80 = vst.msk [vmem:[#allocation2 + $0xf0] sm:$0xff] %vm48, 0.0
    %81 = vst.msk [vmem:[#allocation2 + $0xf8] sm:$0xf] %vm52, 0.0
    %v82 = vld [vmem:[%s1] sm:$0xf]
    %v83 = vld [vmem:[%s2] sm:$0xf]
    %v84 = vld [vmem:[%s3] sm:$0xf]
    %v85 = vld [vmem:[#allocation3] sm:$0xff]
    %87 = vset.pattern.permute.xlu0 0
    %88 = vperm.xlu0 %87, %v83
    %v89 = vpop.permute.xlu0 %88
    %v92 = vcombine.high %v85, %v85
    %vm93 = vcmask 31744
    %v95 = vsel %vm93, %v82, 0
    %vm97 = vcmask 1043456
    %v98 = vsel %vm97, %v85, 0
    %v100 = vsel %vm97, %v92, 0
    %102 = vmatprep.subr.mxu0 %v100
    %103 = vmatpush1.msra.mxu0 %v98
    %104 = vmatprep.subr.mxu0 0.0
    %105 = vmatpush1.msra.mxu0 0.0
    %106 = vmatprep.subr.mxu0 0.0
    %107 = vmatpush1.msra.mxu0 0.0
    %108 = vmatprep.subr.mxu0 0.0
    %109 = vmatpush1.msra.mxu0 0.0
    %110 = vmatprep.subr.mxu0 0.0
    %111 = vmatpush1.msra.mxu0 0.0
    %112 = vmatprep.subr.mxu0 0.0
    %113 = vmatpush1.msra.mxu0 0.0
    %114 = vmatprep.subr.mxu0 0.0
    %115 = vmatpush1.msra.mxu0 0.0
    %116 = vmatprep.subr.mxu0 0.0
    %117 = vmatpush1.msra.mxu0 0.0
    %118 = vmatprep.subr.mxu0 0.0
    %119 = vmatpush1.msra.mxu0 0.0
    %120 = vmatprep.subr.mxu0 0.0
    %121 = vmatpush1.msra.mxu0 0.0
    %122 = vmatprep.subr.mxu0 0.0
    %123 = vmatpush1.msra.mxu0 0.0
    %124 = vmatprep.subr.mxu0 0.0
    %125 = vmatpush1.msra.mxu0 0.0
    %126 = vmatprep.subr.mxu0 0.0
    %127 = vmatpush1.msra.mxu0 0.0
    %128 = vmatprep.subr.mxu0 0.0
    %129 = vmatpush1.msra.mxu0 0.0
    %130 = vmatprep.subr.mxu0 0.0
    %131 = vmatpush1.msra.mxu0 0.0
    %132 = vmatprep.subr.mxu0 0.0
    %133 = vmatpush1.msra.mxu0 0.0
    %134 = vmatprep.subr.mxu0 0.0
    %135 = vmatpush1.msra.mxu0 0.0
    %136 = vmatprep.subr.mxu0 0.0
    %137 = vmatpush1.msra.mxu0 0.0
    %138 = vmatprep.subr.mxu0 0.0
    %139 = vmatpush1.msra.mxu0 0.0
    %140 = vmatprep.subr.mxu0 0.0
    %141 = vmatpush1.msra.mxu0 0.0
    %142 = vmatprep.subr.mxu0 0.0
    %143 = vmatpush1.msra.mxu0 0.0
    %144 = vmatprep.subr.mxu0 0.0
    %145 = vmatpush1.msra.mxu0 0.0
    %146 = vmatprep.subr.mxu0 0.0
    %147 = vmatpush1.msra.mxu0 0.0
    %148 = vmatprep.subr.mxu0 0.0
    %149 = vmatpush1.msra.mxu0 0.0
    %150 = vmatprep.subr.mxu0 0.0
    %151 = vmatpush1.msra.mxu0 0.0
    %152 = vmatprep.subr.mxu0 0.0
    %153 = vmatpush1.msra.mxu0 0.0
    %154 = vmatprep.subr.mxu0 0.0
    %155 = vmatpush1.msra.mxu0 0.0
    %156 = vmatprep.subr.mxu0 0.0
    %157 = vmatpush1.msra.mxu0 0.0
    %158 = vmatprep.subr.mxu0 0.0
    %159 = vmatpush1.msra.mxu0 0.0
    %160 = vmatprep.subr.mxu0 0.0
    %161 = vmatpush1.msra.mxu0 0.0
    %162 = vmatprep.subr.mxu0 0.0
    %163 = vmatpush1.msra.mxu0 0.0
    %164 = vmatprep.subr.mxu0 0.0
    %165 = vmatpush1.msra.mxu0 0.0
    %166 = vmatprep.mubr.f32.mxu0 0.0
    %167 = vmatmul.mubr.f32.gmra.mrb[0].mxu0 %v95
    %v168 = vpop.f32.mrb[0].mxu0
    %v169 = vadd.f32 %v89, %v168
    %v170 = vpop.f32.mrb[0].mxu0
    %v171 = vadd.f32 %v89, %v170
    %172 = vdwg.mxu0
    %vm173 = vcmp.gt.f32.partialorder %v169, 0.0
    %vm174 = vcmp.gt.f32.partialorder %v171, 0.0
    %176 = vset.pattern.permute.xlu0 0
    %177 = vperm.xlu0 %176, %v84
    %v178 = vpop.permute.xlu0 %177
    %v180 = vmul.f32 %v178, %v169
    %v181 = vmul.f32 %v178, %v171
    %v182 = vsel %vm173, %v169, %v180
    %v183 = vsel %vm174, %v171, %v181
    %185 = vrot.lane.b32.xlu0 %v182, 112
    %v186 = vpop.permute.xlu0 %185
    %188 = vrot.lane.b32.xlu0 %v182, 96
    %v189 = vpop.permute.xlu0 %188
    %191 = vrot.lane.b32.xlu0 %v182, 80
    %v192 = vpop.permute.xlu0 %191
    %194 = vrot.lane.b32.xlu0 %v182, 64
    %v195 = vpop.permute.xlu0 %194
    %197 = vrot.lane.b32.xlu0 %v182, 48
    %v198 = vpop.permute.xlu0 %197
    %200 = vrot.lane.b32.xlu0 %v182, 32
    %v201 = vpop.permute.xlu0 %200
    %203 = vrot.lane.b32.xlu0 %v182, 16
    %v204 = vpop.permute.xlu0 %203
    %207 = vrot.lane.b32.xlu0 %v183, 112
    %v208 = vpop.permute.xlu0 %207
    %210 = vrot.lane.b32.xlu0 %v183, 96
    %v211 = vpop.permute.xlu0 %210
    %213 = vrot.lane.b32.xlu0 %v183, 80
    %v214 = vpop.permute.xlu0 %213
    %216 = vrot.lane.b32.xlu0 %v183, 64
    %v217 = vpop.permute.xlu0 %216
    %219 = vrot.lane.b32.xlu0 %v183, 48
    %v220 = vpop.permute.xlu0 %219
    %222 = vrot.lane.b32.xlu0 %v183, 32
    %v223 = vpop.permute.xlu0 %222
    %225 = vrot.lane.b32.xlu0 %v183, 16
    %v226 = vpop.permute.xlu0 %225
    %v228 = vcombine.low %v182, %v189
    %v230 = vunpack.c.l.s4 1983009808
    %v231 = vunpack.c.0.s8 %v230
    %v232 = vlaneseq
    %v233 = vshrl.u32 %v232, 7
    %v234 = vsub.s32 %v231, %v233
    %v235 = vrot.slane %v228, %v234
    %v236 = vcombine.low %v186, %v192
    %v238 = vunpack.c.l.s4 1983009808
    %v239 = vunpack.c.0.s8 %v238
    %v240 = vlaneseq
    %v241 = vshrl.u32 %v240, 7
    %v242 = vsub.s32 %v239, %v241
    %v243 = vrot.slane %v236, %v242
    %v244 = vcombine.low %v195, %v201
    %v246 = vunpack.c.l.s4 1983009808
    %v247 = vunpack.c.0.s8 %v246
    %v248 = vlaneseq
    %v249 = vshrl.u32 %v248, 7
    %v250 = vsub.s32 %v247, %v249
    %v251 = vrot.slane %v244, %v250
    %v252 = vcombine.low %v198, %v204
    %v254 = vunpack.c.l.s4 1983009808
    %v255 = vunpack.c.0.s8 %v254
    %v256 = vlaneseq
    %v257 = vshrl.u32 %v256, 7
    %v258 = vsub.s32 %v255, %v257
    %v259 = vrot.slane %v252, %v258
    %v260 = vcombine.low %v235, %v243
    %v261 = vcombine.high %v235, %v243
    %v263 = vunpack.c.l.s4 1934713408
    %v264 = vunpack.c.0.s8 %v263
    %v265 = vlaneseq
    %v266 = vshrl.u32 %v265, 7
    %v267 = vsub.s32 %v264, %v266
    %v268 = vrot.slane %v260, %v267
    %v270 = vunpack.c.l.s4 1934713408
    %v271 = vunpack.c.0.s8 %v270
    %v272 = vlaneseq
    %v273 = vshrl.u32 %v272, 7
    %v274 = vsub.s32 %v271, %v273
    %v275 = vrot.slane %v261, %v274
    %v276 = vcombine.low %v251, %v259
    %v277 = vcombine.high %v251, %v259
    %v279 = vunpack.c.l.s4 1934713408
    %v280 = vunpack.c.0.s8 %v279
    %v281 = vlaneseq
    %v282 = vshrl.u32 %v281, 7
    %v283 = vsub.s32 %v280, %v282
    %v284 = vrot.slane %v276, %v283
    %v286 = vunpack.c.l.s4 1934713408
    %v287 = vunpack.c.0.s8 %v286
    %v288 = vlaneseq
    %v289 = vshrl.u32 %v288, 7
    %v290 = vsub.s32 %v287, %v289
    %v291 = vrot.slane %v277, %v290
    %v292 = vcombine.low %v268, %v284
    %v293 = vcombine.high %v268, %v284
    %v294 = vcombine.low %v275, %v291
    %v295 = vcombine.high %v275, %v291
    %v296 = vcombine.low %v183, %v211
    %v298 = vunpack.c.l.s4 1983009808
    %v299 = vunpack.c.0.s8 %v298
    %v300 = vlaneseq
    %v301 = vshrl.u32 %v300, 7
    %v302 = vsub.s32 %v299, %v301
    %v303 = vrot.slane %v296, %v302
    %v304 = vcombine.low %v208, %v214
    %v306 = vunpack.c.l.s4 1983009808
    %v307 = vunpack.c.0.s8 %v306
    %v308 = vlaneseq
    %v309 = vshrl.u32 %v308, 7
    %v310 = vsub.s32 %v307, %v309
    %v311 = vrot.slane %v304, %v310
    %v312 = vcombine.low %v217, %v223
    %v314 = vunpack.c.l.s4 1983009808
    %v315 = vunpack.c.0.s8 %v314
    %v316 = vlaneseq
    %v317 = vshrl.u32 %v316, 7
    %v318 = vsub.s32 %v315, %v317
    %v319 = vrot.slane %v312, %v318
    %v320 = vcombine.low %v220, %v226
    %v322 = vunpack.c.l.s4 1983009808
    %v323 = vunpack.c.0.s8 %v322
    %v324 = vlaneseq
    %v325 = vshrl.u32 %v324, 7
    %v326 = vsub.s32 %v323, %v325
    %v327 = vrot.slane %v320, %v326
    %v328 = vcombine.low %v303, %v311
    %v329 = vcombine.high %v303, %v311
    %v331 = vunpack.c.l.s4 1934713408
    %v332 = vunpack.c.0.s8 %v331
    %v333 = vlaneseq
    %v334 = vshrl.u32 %v333, 7
    %v335 = vsub.s32 %v332, %v334
    %v336 = vrot.slane %v328, %v335
    %v338 = vunpack.c.l.s4 1934713408
    %v339 = vunpack.c.0.s8 %v338
    %v340 = vlaneseq
    %v341 = vshrl.u32 %v340, 7
    %v342 = vsub.s32 %v339, %v341
    %v343 = vrot.slane %v329, %v342
    %v344 = vcombine.low %v319, %v327
    %v345 = vcombine.high %v319, %v327
    %v347 = vunpack.c.l.s4 1934713408
    %v348 = vunpack.c.0.s8 %v347
    %v349 = vlaneseq
    %v350 = vshrl.u32 %v349, 7
    %v351 = vsub.s32 %v348, %v350
    %v352 = vrot.slane %v344, %v351
    %v354 = vunpack.c.l.s4 1934713408
    %v355 = vunpack.c.0.s8 %v354
    %v356 = vlaneseq
    %v357 = vshrl.u32 %v356, 7
    %v358 = vsub.s32 %v355, %v357
    %v359 = vrot.slane %v345, %v358
    %v360 = vcombine.low %v336, %v352
    %v361 = vcombine.high %v336, %v352
    %v362 = vcombine.low %v343, %v359
    %v363 = vcombine.high %v343, %v359
    %372 = vrot.lane.b32.xlu0 %v292, 6
    %v373 = vpop.permute.xlu0 %372
    %374 = vrot.lane.b32.xlu0 %v360, 6
    %v375 = vpop.permute.xlu0 %374
    %376 = vrot.lane.b32.xlu0 %v293, 6
    %v377 = vpop.permute.xlu0 %376
    %378 = vrot.lane.b32.xlu0 %v361, 6
    %v379 = vpop.permute.xlu0 %378
    %380 = vrot.lane.b32.xlu0 %v294, 6
    %v381 = vpop.permute.xlu0 %380
    %382 = vrot.lane.b32.xlu0 %v362, 6
    %v383 = vpop.permute.xlu0 %382
    %384 = vrot.lane.b32.xlu0 %v295, 6
    %v385 = vpop.permute.xlu0 %384
    %386 = vrot.lane.b32.xlu0 %v363, 6
    %v387 = vpop.permute.xlu0 %386
    %vm396 = vcmask 179248
    %397 = vst.msk [vmem:[#allocation2 + $0x6] sm:$0xff] %vm396, %v373
    %398 = vst.msk [vmem:[#allocation2 + $0xe] sm:$0xff] %vm396, %v375
    %399 = vst.msk [vmem:[#allocation2 + $0x26] sm:$0xff] %vm396, %v377
    %400 = vst.msk [vmem:[#allocation2 + $0x2e] sm:$0xff] %vm396, %v379
    %401 = vst.msk [vmem:[#allocation2 + $0x46] sm:$0xff] %vm396, %v381
    %402 = vst.msk [vmem:[#allocation2 + $0x4e] sm:$0xff] %vm396, %v383
    %403 = vst.msk [vmem:[#allocation2 + $0x66] sm:$0xff] %vm396, %v385
    %404 = vst.msk [vmem:[#allocation2 + $0x6e] sm:$0xff] %vm396, %v387
    %s405 = scalar_lea.vmem [#allocation3], 8
    %v406 = vld [vmem:[%s405] sm:$0xff]
    %v408 = vcombine.high %v406, %v406
    %v409 = vsel %vm97, %v406, 0
    %v411 = vsel %vm97, %v408, 0
    %413 = vmatprep.subr.mxu0 %v411
    %414 = vmatpush1.msra.mxu0 %v409
    %415 = vmatprep.subr.mxu0 0.0
    %416 = vmatpush1.msra.mxu0 0.0
    %417 = vmatprep.subr.mxu0 0.0
    %418 = vmatpush1.msra.mxu0 0.0
    %419 = vmatprep.subr.mxu0 0.0
    %420 = vmatpush1.msra.mxu0 0.0
    %421 = vmatprep.subr.mxu0 0.0
    %422 = vmatpush1.msra.mxu0 0.0
    %423 = vmatprep.subr.mxu0 0.0
    %424 = vmatpush1.msra.mxu0 0.0
    %425 = vmatprep.subr.mxu0 0.0
    %426 = vmatpush1.msra.mxu0 0.0
    %427 = vmatprep.subr.mxu0 0.0
    %428 = vmatpush1.msra.mxu0 0.0
    %429 = vmatprep.subr.mxu0 0.0
    %430 = vmatpush1.msra.mxu0 0.0
    %431 = vmatprep.subr.mxu0 0.0
    %432 = vmatpush1.msra.mxu0 0.0
    %433 = vmatprep.subr.mxu0 0.0
    %434 = vmatpush1.msra.mxu0 0.0
    %435 = vmatprep.subr.mxu0 0.0
    %436 = vmatpush1.msra.mxu0 0.0
    %437 = vmatprep.subr.mxu0 0.0
    %438 = vmatpush1.msra.mxu0 0.0
    %439 = vmatprep.subr.mxu0 0.0
    %440 = vmatpush1.msra.mxu0 0.0
    %441 = vmatprep.subr.mxu0 0.0
    %442 = vmatpush1.msra.mxu0 0.0
    %443 = vmatprep.subr.mxu0 0.0
    %444 = vmatpush1.msra.mxu0 0.0
    %445 = vmatprep.subr.mxu0 0.0
    %446 = vmatpush1.msra.mxu0 0.0
    %447 = vmatprep.subr.mxu0 0.0
    %448 = vmatpush1.msra.mxu0 0.0
    %449 = vmatprep.subr.mxu0 0.0
    %450 = vmatpush1.msra.mxu0 0.0
    %451 = vmatprep.subr.mxu0 0.0
    %452 = vmatpush1.msra.mxu0 0.0
    %453 = vmatprep.subr.mxu0 0.0
    %454 = vmatpush1.msra.mxu0 0.0
    %455 = vmatprep.subr.mxu0 0.0
    %456 = vmatpush1.msra.mxu0 0.0
    %457 = vmatprep.subr.mxu0 0.0
    %458 = vmatpush1.msra.mxu0 0.0
    %459 = vmatprep.subr.mxu0 0.0
    %460 = vmatpush1.msra.mxu0 0.0
    %461 = vmatprep.subr.mxu0 0.0
    %462 = vmatpush1.msra.mxu0 0.0
    %463 = vmatprep.subr.mxu0 0.0
    %464 = vmatpush1.msra.mxu0 0.0
    %465 = vmatprep.subr.mxu0 0.0
    %466 = vmatpush1.msra.mxu0 0.0
    %467 = vmatprep.subr.mxu0 0.0
    %468 = vmatpush1.msra.mxu0 0.0
    %469 = vmatprep.subr.mxu0 0.0
    %470 = vmatpush1.msra.mxu0 0.0
    %471 = vmatprep.subr.mxu0 0.0
    %472 = vmatpush1.msra.mxu0 0.0
    %473 = vmatprep.subr.mxu0 0.0
    %474 = vmatpush1.msra.mxu0 0.0
    %475 = vmatprep.subr.mxu0 0.0
    %476 = vmatpush1.msra.mxu0 0.0
    %477 = vmatprep.mubr.f32.mxu0 0.0
    %478 = vmatmul.mubr.f32.gmra.mrb[0].mxu0 %v95
    %v479 = vpop.f32.mrb[0].mxu0
    %v480 = vadd.f32 %v89, %v479
    %v481 = vpop.f32.mrb[0].mxu0
    %v482 = vadd.f32 %v89, %v481
    %483 = vdwg.mxu0
    %vm484 = vcmp.gt.f32.partialorder %v480, 0.0
    %vm485 = vcmp.gt.f32.partialorder %v482, 0.0
    %v486 = vmul.f32 %v178, %v480
    %v487 = vmul.f32 %v178, %v482
    %v488 = vsel %vm484, %v480, %v486
    %v489 = vsel %vm485, %v482, %v487
    %491 = vrot.lane.b32.xlu0 %v488, 112
    %v492 = vpop.permute.xlu0 %491
    %494 = vrot.lane.b32.xlu0 %v488, 96
    %v495 = vpop.permute.xlu0 %494
    %497 = vrot.lane.b32.xlu0 %v488, 80
    %v498 = vpop.permute.xlu0 %497
    %500 = vrot.lane.b32.xlu0 %v488, 64
    %v501 = vpop.permute.xlu0 %500
    %503 = vrot.lane.b32.xlu0 %v488, 48
    %v504 = vpop.permute.xlu0 %503
    %506 = vrot.lane.b32.xlu0 %v488, 32
    %v507 = vpop.permute.xlu0 %506
    %509 = vrot.lane.b32.xlu0 %v488, 16
    %v510 = vpop.permute.xlu0 %509
    %513 = vrot.lane.b32.xlu0 %v489, 112
    %v514 = vpop.permute.xlu0 %513
    %516 = vrot.lane.b32.xlu0 %v489, 96
    %v517 = vpop.permute.xlu0 %516
    %519 = vrot.lane.b32.xlu0 %v489, 80
    %v520 = vpop.permute.xlu0 %519
    %522 = vrot.lane.b32.xlu0 %v489, 64
    %v523 = vpop.permute.xlu0 %522
    %525 = vrot.lane.b32.xlu0 %v489, 48
    %v526 = vpop.permute.xlu0 %525
    %528 = vrot.lane.b32.xlu0 %v489, 32
    %v529 = vpop.permute.xlu0 %528
    %531 = vrot.lane.b32.xlu0 %v489, 16
    %v532 = vpop.permute.xlu0 %531
    %v534 = vcombine.low %v488, %v495
    %v536 = vunpack.c.l.s4 1983009808
    %v537 = vunpack.c.0.s8 %v536
    %v538 = vlaneseq
    %v539 = vshrl.u32 %v538, 7
    %v540 = vsub.s32 %v537, %v539
    %v541 = vrot.slane %v534, %v540
    %v542 = vcombine.low %v492, %v498
    %v544 = vunpack.c.l.s4 1983009808
    %v545 = vunpack.c.0.s8 %v544
    %v546 = vlaneseq
    %v547 = vshrl.u32 %v546, 7
    %v548 = vsub.s32 %v545, %v547
    %v549 = vrot.slane %v542, %v548
    %v550 = vcombine.low %v501, %v507
    %v552 = vunpack.c.l.s4 1983009808
    %v553 = vunpack.c.0.s8 %v552
    %v554 = vlaneseq
    %v555 = vshrl.u32 %v554, 7
    %v556 = vsub.s32 %v553, %v555
    %v557 = vrot.slane %v550, %v556
    %v558 = vcombine.low %v504, %v510
    %v560 = vunpack.c.l.s4 1983009808
    %v561 = vunpack.c.0.s8 %v560
    %v562 = vlaneseq
    %v563 = vshrl.u32 %v562, 7
    %v564 = vsub.s32 %v561, %v563
    %v565 = vrot.slane %v558, %v564
    %v566 = vcombine.low %v541, %v549
    %v567 = vcombine.high %v541, %v549
    %v569 = vunpack.c.l.s4 1934713408
    %v570 = vunpack.c.0.s8 %v569
    %v571 = vlaneseq
    %v572 = vshrl.u32 %v571, 7
    %v573 = vsub.s32 %v570, %v572
    %v574 = vrot.slane %v566, %v573
    %v576 = vunpack.c.l.s4 1934713408
    %v577 = vunpack.c.0.s8 %v576
    %v578 = vlaneseq
    %v579 = vshrl.u32 %v578, 7
    %v580 = vsub.s32 %v577, %v579
    %v581 = vrot.slane %v567, %v580
    %v582 = vcombine.low %v557, %v565
    %v583 = vcombine.high %v557, %v565
    %v585 = vunpack.c.l.s4 1934713408
    %v586 = vunpack.c.0.s8 %v585
    %v587 = vlaneseq
    %v588 = vshrl.u32 %v587, 7
    %v589 = vsub.s32 %v586, %v588
    %v590 = vrot.slane %v582, %v589
    %v592 = vunpack.c.l.s4 1934713408
    %v593 = vunpack.c.0.s8 %v592
    %v594 = vlaneseq
    %v595 = vshrl.u32 %v594, 7
    %v596 = vsub.s32 %v593, %v595
    %v597 = vrot.slane %v583, %v596
    %v598 = vcombine.low %v574, %v590
    %v599 = vcombine.high %v574, %v590
    %v600 = vcombine.low %v581, %v597
    %v601 = vcombine.high %v581, %v597
    %v602 = vcombine.low %v489, %v517
    %v604 = vunpack.c.l.s4 1983009808
    %v605 = vunpack.c.0.s8 %v604
    %v606 = vlaneseq
    %v607 = vshrl.u32 %v606, 7
    %v608 = vsub.s32 %v605, %v607
    %v609 = vrot.slane %v602, %v608
    %v610 = vcombine.low %v514, %v520
    %v612 = vunpack.c.l.s4 1983009808
    %v613 = vunpack.c.0.s8 %v612
    %v614 = vlaneseq
    %v615 = vshrl.u32 %v614, 7
    %v616 = vsub.s32 %v613, %v615
    %v617 = vrot.slane %v610, %v616
    %v618 = vcombine.low %v523, %v529
    %v620 = vunpack.c.l.s4 1983009808
    %v621 = vunpack.c.0.s8 %v620
    %v622 = vlaneseq
    %v623 = vshrl.u32 %v622, 7
    %v624 = vsub.s32 %v621, %v623
    %v625 = vrot.slane %v618, %v624
    %v626 = vcombine.low %v526, %v532
    %v628 = vunpack.c.l.s4 1983009808
    %v629 = vunpack.c.0.s8 %v628
    %v630 = vlaneseq
    %v631 = vshrl.u32 %v630, 7
    %v632 = vsub.s32 %v629, %v631
    %v633 = vrot.slane %v626, %v632
    %v634 = vcombine.low %v609, %v617
    %v635 = vcombine.high %v609, %v617
    %v637 = vunpack.c.l.s4 1934713408
    %v638 = vunpack.c.0.s8 %v637
    %v639 = vlaneseq
    %v640 = vshrl.u32 %v639, 7
    %v641 = vsub.s32 %v638, %v640
    %v642 = vrot.slane %v634, %v641
    %v644 = vunpack.c.l.s4 1934713408
    %v645 = vunpack.c.0.s8 %v644
    %v646 = vlaneseq
    %v647 = vshrl.u32 %v646, 7
    %v648 = vsub.s32 %v645, %v647
    %v649 = vrot.slane %v635, %v648
    %v650 = vcombine.low %v625, %v633
    %v651 = vcombine.high %v625, %v633
    %v653 = vunpack.c.l.s4 1934713408
    %v654 = vunpack.c.0.s8 %v653
    %v655 = vlaneseq
    %v656 = vshrl.u32 %v655, 7
    %v657 = vsub.s32 %v654, %v656
    %v658 = vrot.slane %v650, %v657
    %v660 = vunpack.c.l.s4 1934713408
    %v661 = vunpack.c.0.s8 %v660
    %v662 = vlaneseq
    %v663 = vshrl.u32 %v662, 7
    %v664 = vsub.s32 %v661, %v663
    %v665 = vrot.slane %v651, %v664
    %v666 = vcombine.low %v642, %v658
    %v667 = vcombine.high %v642, %v658
    %v668 = vcombine.low %v649, %v665
    %v669 = vcombine.high %v649, %v665
    %678 = vrot.lane.b32.xlu0 %v598, 6
    %v679 = vpop.permute.xlu0 %678
    %680 = vrot.lane.b32.xlu0 %v666, 6
    %v681 = vpop.permute.xlu0 %680
    %682 = vrot.lane.b32.xlu0 %v599, 6
    %v683 = vpop.permute.xlu0 %682
    %684 = vrot.lane.b32.xlu0 %v667, 6
    %v685 = vpop.permute.xlu0 %684
    %686 = vrot.lane.b32.xlu0 %v600, 6
    %v687 = vpop.permute.xlu0 %686
    %688 = vrot.lane.b32.xlu0 %v668, 6
    %v689 = vpop.permute.xlu0 %688
    %690 = vrot.lane.b32.xlu0 %v601, 6
    %v691 = vpop.permute.xlu0 %690
    %692 = vrot.lane.b32.xlu0 %v669, 6
    %v693 = vpop.permute.xlu0 %692
    %s702 = scalar_lea.vmem [#allocation2], 128
    %703 = vst.msk [vmem:[%s702 + $0x6] sm:$0xff] %vm396, %v679
    %704 = vst.msk [vmem:[%s702 + $0xe] sm:$0xff] %vm396, %v681
    %705 = vst.msk [vmem:[%s702 + $0x26] sm:$0xff] %vm396, %v683
    %706 = vst.msk [vmem:[%s702 + $0x2e] sm:$0xff] %vm396, %v685
    %707 = vst.msk [vmem:[%s702 + $0x46] sm:$0xff] %vm396, %v687
    %708 = vst.msk [vmem:[%s702 + $0x4e] sm:$0xff] %vm396, %v689
    %709 = vst.msk [vmem:[%s702 + $0x66] sm:$0xff] %vm396, %v691
    %710 = vst.msk [vmem:[%s702 + $0x6e] sm:$0xff] %vm396, %v693
    %v711 = vld [vmem:[#allocation2 + $0x5] sm:$0xff]
    %v712 = vld [vmem:[#allocation2 + $0xd] sm:$0xff]
    %v713 = vld [vmem:[#allocation2 + $0x85] sm:$0xff]
    %v714 = vld [vmem:[#allocation2 + $0x8d] sm:$0xff]
    %s715 = sld [smem:[#allocation7]]
    %v716 = vstv %s715
    %v717 = vmul.f32 %v711, %v716
    %v718 = vmul.f32 %v712, %v716
    %v719 = vmul.f32 %v713, %v716
    %v720 = vmul.f32 %v714, %v716
    %s721 = sld [smem:[#allocation7 + $0x1]]
    %v722 = vstv %s721
    %v723 = vmul.f32 %v711, %v722
    %v724 = vmul.f32 %v712, %v722
    %v725 = vmul.f32 %v713, %v722
    %v726 = vmul.f32 %v714, %v722
    %731 = vrot.lane.b32.xlu0 %v723, 127
    %v732 = vpop.permute.xlu0 %731
    %733 = vrot.lane.b32.xlu0 %v724, 127
    %v734 = vpop.permute.xlu0 %733
    %735 = vrot.lane.b32.xlu0 %v725, 127
    %v736 = vpop.permute.xlu0 %735
    %737 = vrot.lane.b32.xlu0 %v726, 127
    %v738 = vpop.permute.xlu0 %737
    %v743 = vadd.f32 %v717, %v732
    %v744 = vadd.f32 %v718, %v734
    %v745 = vadd.f32 %v719, %v736
    %v746 = vadd.f32 %v720, %v738
    %s747 = sld [smem:[#allocation7 + $0x2]]
    %v748 = vstv %s747
    %v749 = vmul.f32 %v711, %v748
    %v750 = vmul.f32 %v712, %v748
    %v751 = vmul.f32 %v713, %v748
    %v752 = vmul.f32 %v714, %v748
    %757 = vrot.lane.b32.xlu0 %v749, 126
    %v758 = vpop.permute.xlu0 %757
    %759 = vrot.lane.b32.xlu0 %v750, 126
    %v760 = vpop.permute.xlu0 %759
    %761 = vrot.lane.b32.xlu0 %v751, 126
    %v762 = vpop.permute.xlu0 %761
    %763 = vrot.lane.b32.xlu0 %v752, 126
    %v764 = vpop.permute.xlu0 %763
    %v769 = vadd.f32 %v743, %v758
    %v770 = vadd.f32 %v744, %v760
    %v771 = vadd.f32 %v745, %v762
    %v772 = vadd.f32 %v746, %v764
    %v773 = vld [vmem:[#allocation2 + $0x6] sm:$0xff]
    %v774 = vld [vmem:[#allocation2 + $0xe] sm:$0xff]
    %v775 = vld [vmem:[#allocation2 + $0x86] sm:$0xff]
    %v776 = vld [vmem:[#allocation2 + $0x8e] sm:$0xff]
    %s777 = sld [smem:[#allocation7 + $0x3]]
    %v778 = vstv %s777
    %v779 = vmul.f32 %v773, %v778
    %v780 = vmul.f32 %v774, %v778
    %v781 = vmul.f32 %v775, %v778
    %v782 = vmul.f32 %v776, %v778
    %v783 = vadd.f32 %v769, %v779
    %v784 = vadd.f32 %v770, %v780
    %v785 = vadd.f32 %v771, %v781
    %v786 = vadd.f32 %v772, %v782
    %s787 = sld [smem:[#allocation7 + $0x4]]
    %v788 = vstv %s787
    %v789 = vmul.f32 %v773, %v788
    %v790 = vmul.f32 %v774, %v788
    %v791 = vmul.f32 %v775, %v788
    %v792 = vmul.f32 %v776, %v788
    %797 = vrot.lane.b32.xlu0 %v789, 127
    %v798 = vpop.permute.xlu0 %797
    %799 = vrot.lane.b32.xlu0 %v790, 127
    %v800 = vpop.permute.xlu0 %799
    %801 = vrot.lane.b32.xlu0 %v791, 127
    %v802 = vpop.permute.xlu0 %801
    %803 = vrot.lane.b32.xlu0 %v792, 127
    %v804 = vpop.permute.xlu0 %803
    %v809 = vadd.f32 %v783, %v798
    %v810 = vadd.f32 %v784, %v800
    %v811 = vadd.f32 %v785, %v802
    %v812 = vadd.f32 %v786, %v804
    %s813 = sld [smem:[#allocation7 + $0x5]]
    %v814 = vstv %s813
    %v815 = vmul.f32 %v773, %v814
    %v816 = vmul.f32 %v774, %v814
    %v817 = vmul.f32 %v775, %v814
    %v818 = vmul.f32 %v776, %v814
    %823 = vrot.lane.b32.xlu0 %v815, 126
    %v824 = vpop.permute.xlu0 %823
    %825 = vrot.lane.b32.xlu0 %v816, 126
    %v826 = vpop.permute.xlu0 %825
    %827 = vrot.lane.b32.xlu0 %v817, 126
    %v828 = vpop.permute.xlu0 %827
    %829 = vrot.lane.b32.xlu0 %v818, 126
    %v830 = vpop.permute.xlu0 %829
    %v835 = vadd.f32 %v809, %v824
    %v836 = vadd.f32 %v810, %v826
    %v837 = vadd.f32 %v811, %v828
    %v838 = vadd.f32 %v812, %v830
    %v839 = vld [vmem:[#allocation2 + $0x7] sm:$0xff]
    %v840 = vld [vmem:[#allocation2 + $0xf] sm:$0xff]
    %v841 = vld [vmem:[#allocation2 + $0x87] sm:$0xff]
    %v842 = vld [vmem:[#allocation2 + $0x8f] sm:$0xff]
    %s843 = sld [smem:[#allocation7 + $0x6]]
    %v844 = vstv %s843
    %v845 = vmul.f32 %v839, %v844
    %v846 = vmul.f32 %v840, %v844
    %v847 = vmul.f32 %v841, %v844
    %v848 = vmul.f32 %v842, %v844
    %v849 = vadd.f32 %v835, %v845
    %v850 = vadd.f32 %v836, %v846
    %v851 = vadd.f32 %v837, %v847
    %v852 = vadd.f32 %v838, %v848
    %s853 = sld [smem:[#allocation7 + $0x7]]
    %v854 = vstv %s853
    %v855 = vmul.f32 %v839, %v854
    %v856 = vmul.f32 %v840, %v854
    %v857 = vmul.f32 %v841, %v854
    %v858 = vmul.f32 %v842, %v854
    %863 = vrot.lane.b32.xlu0 %v855, 127
    %v864 = vpop.permute.xlu0 %863
    %865 = vrot.lane.b32.xlu0 %v856, 127
    %v866 = vpop.permute.xlu0 %865
    %867 = vrot.lane.b32.xlu0 %v857, 127
    %v868 = vpop.permute.xlu0 %867
    %869 = vrot.lane.b32.xlu0 %v858, 127
    %v870 = vpop.permute.xlu0 %869
    %v875 = vadd.f32 %v849, %v864
    %v876 = vadd.f32 %v850, %v866
    %v877 = vadd.f32 %v851, %v868
    %v878 = vadd.f32 %v852, %v870
    %s879 = sld [smem:[#allocation7 + $0x8]]
    %v880 = vstv %s879
    %v881 = vmul.f32 %v839, %v880
    %v882 = vmul.f32 %v840, %v880
    %v883 = vmul.f32 %v841, %v880
    %v884 = vmul.f32 %v842, %v880
    %889 = vrot.lane.b32.xlu0 %v881, 126
    %v890 = vpop.permute.xlu0 %889
    %891 = vrot.lane.b32.xlu0 %v882, 126
    %v892 = vpop.permute.xlu0 %891
    %893 = vrot.lane.b32.xlu0 %v883, 126
    %v894 = vpop.permute.xlu0 %893
    %895 = vrot.lane.b32.xlu0 %v884, 126
    %v896 = vpop.permute.xlu0 %895
    %v901 = vadd.f32 %v875, %v890
    %v902 = vadd.f32 %v876, %v892
    %v903 = vadd.f32 %v877, %v894
    %v904 = vadd.f32 %v878, %v896
    %909 = vrot.lane.b32.xlu0 %v901, 123
    %v910 = vpop.permute.xlu0 %909
    %911 = vrot.lane.b32.xlu0 %v902, 123
    %v912 = vpop.permute.xlu0 %911
    %913 = vrot.lane.b32.xlu0 %v903, 123
    %v914 = vpop.permute.xlu0 %913
    %915 = vrot.lane.b32.xlu0 %v904, 123
    %v916 = vpop.permute.xlu0 %915
    %v921 = vcombine.high %v910, 0.0
    %v923 = vunpack.c.l.s4 1983009808
    %v924 = vunpack.c.0.s8 %v923
    %v925 = vlaneseq
    %v926 = vshrl.u32 %v925, 7
    %v927 = vsub.s32 %v924, %v926
    %v928 = vrot.slane %v910, %v927
    %v930 = vunpack.c.l.s4 1983009808
    %v931 = vunpack.c.0.s8 %v930
    %v932 = vlaneseq
    %v933 = vshrl.u32 %v932, 7
    %v934 = vsub.s32 %v931, %v933
    %v935 = vrot.slane %v921, %v934
    %v936 = vcombine.high %v928, 0.0
    %v938 = vunpack.c.l.s4 1934713408
    %v939 = vunpack.c.0.s8 %v938
    %v940 = vlaneseq
    %v941 = vshrl.u32 %v940, 7
    %v942 = vsub.s32 %v939, %v941
    %v943 = vrot.slane %v928, %v942
    %v945 = vunpack.c.l.s4 1934713408
    %v946 = vunpack.c.0.s8 %v945
    %v947 = vlaneseq
    %v948 = vshrl.u32 %v947, 7
    %v949 = vsub.s32 %v946, %v948
    %v950 = vrot.slane %v936, %v949
    %v951 = vcombine.high %v935, 0.0
    %v953 = vunpack.c.l.s4 1934713408
    %v954 = vunpack.c.0.s8 %v953
    %v955 = vlaneseq
    %v956 = vshrl.u32 %v955, 7
    %v957 = vsub.s32 %v954, %v956
    %v958 = vrot.slane %v935, %v957
    %v960 = vunpack.c.l.s4 1934713408
    %v961 = vunpack.c.0.s8 %v960
    %v962 = vlaneseq
    %v963 = vshrl.u32 %v962, 7
    %v964 = vsub.s32 %v961, %v963
    %v965 = vrot.slane %v951, %v964
    %v966 = vcombine.high %v943, 0.0
    %v967 = vcombine.high %v950, 0.0
    %v968 = vcombine.high %v958, 0.0
    %v969 = vcombine.high %v965, 0.0
    %v970 = vcombine.high %v912, 0.0
    %v972 = vunpack.c.l.s4 1983009808
    %v973 = vunpack.c.0.s8 %v972
    %v974 = vlaneseq
    %v975 = vshrl.u32 %v974, 7
    %v976 = vsub.s32 %v973, %v975
    %v977 = vrot.slane %v912, %v976
    %v979 = vunpack.c.l.s4 1983009808
    %v980 = vunpack.c.0.s8 %v979
    %v981 = vlaneseq
    %v982 = vshrl.u32 %v981, 7
    %v983 = vsub.s32 %v980, %v982
    %v984 = vrot.slane %v970, %v983
    %v985 = vcombine.high %v977, 0.0
    %v987 = vunpack.c.l.s4 1934713408
    %v988 = vunpack.c.0.s8 %v987
    %v989 = vlaneseq
    %v990 = vshrl.u32 %v989, 7
    %v991 = vsub.s32 %v988, %v990
    %v992 = vrot.slane %v977, %v991
    %v994 = vunpack.c.l.s4 1934713408
    %v995 = vunpack.c.0.s8 %v994
    %v996 = vlaneseq
    %v997 = vshrl.u32 %v996, 7
    %v998 = vsub.s32 %v995, %v997
    %v999 = vrot.slane %v985, %v998
    %v1000 = vcombine.high %v984, 0.0
    %v1002 = vunpack.c.l.s4 1934713408
    %v1003 = vunpack.c.0.s8 %v1002
    %v1004 = vlaneseq
    %v1005 = vshrl.u32 %v1004, 7
    %v1006 = vsub.s32 %v1003, %v1005
    %v1007 = vrot.slane %v984, %v1006
    %v1009 = vunpack.c.l.s4 1934713408
    %v1010 = vunpack.c.0.s8 %v1009
    %v1011 = vlaneseq
    %v1012 = vshrl.u32 %v1011, 7
    %v1013 = vsub.s32 %v1010, %v1012
    %v1014 = vrot.slane %v1000, %v1013
    %v1015 = vcombine.high %v992, 0.0
    %v1016 = vcombine.high %v999, 0.0
    %v1017 = vcombine.high %v1007, 0.0
    %v1018 = vcombine.high %v1014, 0.0
    %v1019 = vcombine.high %v914, 0.0
    %v1021 = vunpack.c.l.s4 1983009808
    %v1022 = vunpack.c.0.s8 %v1021
    %v1023 = vlaneseq
    %v1024 = vshrl.u32 %v1023, 7
    %v1025 = vsub.s32 %v1022, %v1024
    %v1026 = vrot.slane %v914, %v1025
    %v1028 = vunpack.c.l.s4 1983009808
    %v1029 = vunpack.c.0.s8 %v1028
    %v1030 = vlaneseq
    %v1031 = vshrl.u32 %v1030, 7
    %v1032 = vsub.s32 %v1029, %v1031
    %v1033 = vrot.slane %v1019, %v1032
    %v1034 = vcombine.high %v1026, 0.0
    %v1036 = vunpack.c.l.s4 1934713408
    %v1037 = vunpack.c.0.s8 %v1036
    %v1038 = vlaneseq
    %v1039 = vshrl.u32 %v1038, 7
    %v1040 = vsub.s32 %v1037, %v1039
    %v1041 = vrot.slane %v1026, %v1040
    %v1043 = vunpack.c.l.s4 1934713408
    %v1044 = vunpack.c.0.s8 %v1043
    %v1045 = vlaneseq
    %v1046 = vshrl.u32 %v1045, 7
    %v1047 = vsub.s32 %v1044, %v1046
    %v1048 = vrot.slane %v1034, %v1047
    %v1049 = vcombine.high %v1033, 0.0
    %v1051 = vunpack.c.l.s4 1934713408
    %v1052 = vunpack.c.0.s8 %v1051
    %v1053 = vlaneseq
    %v1054 = vshrl.u32 %v1053, 7
    %v1055 = vsub.s32 %v1052, %v1054
    %v1056 = vrot.slane %v1033, %v1055
    %v1058 = vunpack.c.l.s4 1934713408
    %v1059 = vunpack.c.0.s8 %v1058
    %v1060 = vlaneseq
    %v1061 = vshrl.u32 %v1060, 7
    %v1062 = vsub.s32 %v1059, %v1061
    %v1063 = vrot.slane %v1049, %v1062
    %v1064 = vcombine.high %v1041, 0.0
    %v1065 = vcombine.high %v1048, 0.0
    %v1066 = vcombine.high %v1056, 0.0
    %v1067 = vcombine.high %v1063, 0.0
    %v1068 = vcombine.high %v916, 0.0
    %v1070 = vunpack.c.l.s4 1983009808
    %v1071 = vunpack.c.0.s8 %v1070
    %v1072 = vlaneseq
    %v1073 = vshrl.u32 %v1072, 7
    %v1074 = vsub.s32 %v1071, %v1073
    %v1075 = vrot.slane %v916, %v1074
    %v1077 = vunpack.c.l.s4 1983009808
    %v1078 = vunpack.c.0.s8 %v1077
    %v1079 = vlaneseq
    %v1080 = vshrl.u32 %v1079, 7
    %v1081 = vsub.s32 %v1078, %v1080
    %v1082 = vrot.slane %v1068, %v1081
    %v1083 = vcombine.high %v1075, 0.0
    %v1085 = vunpack.c.l.s4 1934713408
    %v1086 = vunpack.c.0.s8 %v1085
    %v1087 = vlaneseq
    %v1088 = vshrl.u32 %v1087, 7
    %v1089 = vsub.s32 %v1086, %v1088
    %v1090 = vrot.slane %v1075, %v1089
    %v1092 = vunpack.c.l.s4 1934713408
    %v1093 = vunpack.c.0.s8 %v1092
    %v1094 = vlaneseq
    %v1095 = vshrl.u32 %v1094, 7
    %v1096 = vsub.s32 %v1093, %v1095
    %v1097 = vrot.slane %v1083, %v1096
    %v1098 = vcombine.high %v1082, 0.0
    %v1100 = vunpack.c.l.s4 1934713408
    %v1101 = vunpack.c.0.s8 %v1100
    %v1102 = vlaneseq
    %v1103 = vshrl.u32 %v1102, 7
    %v1104 = vsub.s32 %v1101, %v1103
    %v1105 = vrot.slane %v1082, %v1104
    %v1107 = vunpack.c.l.s4 1934713408
    %v1108 = vunpack.c.0.s8 %v1107
    %v1109 = vlaneseq
    %v1110 = vshrl.u32 %v1109, 7
    %v1111 = vsub.s32 %v1108, %v1110
    %v1112 = vrot.slane %v1098, %v1111
    %v1113 = vcombine.high %v1090, 0.0
    %v1114 = vcombine.high %v1097, 0.0
    %v1115 = vcombine.high %v1105, 0.0
    %v1116 = vcombine.high %v1112, 0.0
    %1119 = vrot.lane.b32.xlu0 %v966, 16
    %v1120 = vpop.permute.xlu0 %1119
    %1121 = vrot.lane.b32.xlu0 %v1064, 16
    %v1122 = vpop.permute.xlu0 %1121
    %1127 = vrot.lane.b32.xlu0 %v950, 32
    %v1128 = vpop.permute.xlu0 %1127
    %1129 = vrot.lane.b32.xlu0 %v1048, 32
    %v1130 = vpop.permute.xlu0 %1129
    %1135 = vrot.lane.b32.xlu0 %v967, 48
    %v1136 = vpop.permute.xlu0 %1135
    %1137 = vrot.lane.b32.xlu0 %v1065, 48
    %v1138 = vpop.permute.xlu0 %1137
    %1143 = vrot.lane.b32.xlu0 %v958, 64
    %v1144 = vpop.permute.xlu0 %1143
    %1145 = vrot.lane.b32.xlu0 %v1056, 64
    %v1146 = vpop.permute.xlu0 %1145
    %1151 = vrot.lane.b32.xlu0 %v968, 80
    %v1152 = vpop.permute.xlu0 %1151
    %1153 = vrot.lane.b32.xlu0 %v1066, 80
    %v1154 = vpop.permute.xlu0 %1153
    %1159 = vrot.lane.b32.xlu0 %v965, 96
    %v1160 = vpop.permute.xlu0 %1159
    %1161 = vrot.lane.b32.xlu0 %v1063, 96
    %v1162 = vpop.permute.xlu0 %1161
    %1167 = vrot.lane.b32.xlu0 %v969, 112
    %v1168 = vpop.permute.xlu0 %1167
    %1169 = vrot.lane.b32.xlu0 %v1067, 112
    %v1170 = vpop.permute.xlu0 %1169
    %1175 = vrot.lane.b32.xlu0 %v1015, 16
    %v1176 = vpop.permute.xlu0 %1175
    %1177 = vrot.lane.b32.xlu0 %v1113, 16
    %v1178 = vpop.permute.xlu0 %1177
    %1183 = vrot.lane.b32.xlu0 %v999, 32
    %v1184 = vpop.permute.xlu0 %1183
    %1185 = vrot.lane.b32.xlu0 %v1097, 32
    %v1186 = vpop.permute.xlu0 %1185
    %1191 = vrot.lane.b32.xlu0 %v1016, 48
    %v1192 = vpop.permute.xlu0 %1191
    %1193 = vrot.lane.b32.xlu0 %v1114, 48
    %v1194 = vpop.permute.xlu0 %1193
    %1199 = vrot.lane.b32.xlu0 %v1007, 64
    %v1200 = vpop.permute.xlu0 %1199
    %1201 = vrot.lane.b32.xlu0 %v1105, 64
    %v1202 = vpop.permute.xlu0 %1201
    %1207 = vrot.lane.b32.xlu0 %v1017, 80
    %v1208 = vpop.permute.xlu0 %1207
    %1209 = vrot.lane.b32.xlu0 %v1115, 80
    %v1210 = vpop.permute.xlu0 %1209
    %1215 = vrot.lane.b32.xlu0 %v1014, 96
    %v1216 = vpop.permute.xlu0 %1215
    %1217 = vrot.lane.b32.xlu0 %v1112, 96
    %v1218 = vpop.permute.xlu0 %1217
    %1223 = vrot.lane.b32.xlu0 %v1018, 112
    %v1224 = vpop.permute.xlu0 %1223
    %1225 = vrot.lane.b32.xlu0 %v1116, 112
    %v1226 = vpop.permute.xlu0 %1225
    %vm1229 = vcmask 130048
    %v1230 = vsel %vm1229, %v943, %v1120
    %v1231 = vsel %vm1229, %v1041, %v1122
    %vm1232 = vcmask 261120
    %v1233 = vsel %vm1232, %v1230, %v1128
    %v1234 = vsel %vm1232, %v1231, %v1130
    %vm1235 = vcmask 392192
    %v1236 = vsel %vm1235, %v1233, %v1136
    %v1237 = vsel %vm1235, %v1234, %v1138
    %vm1238 = vcmask 523264
    %v1239 = vsel %vm1238, %v1236, %v1144
    %v1240 = vsel %vm1238, %v1237, %v1146
    %vm1241 = vcmask 654336
    %v1242 = vsel %vm1241, %v1239, %v1152
    %v1243 = vsel %vm1241, %v1240, %v1154
    %vm1244 = vcmask 785408
    %v1245 = vsel %vm1244, %v1242, %v1160
    %v1246 = vsel %vm1244, %v1243, %v1162
    %vm1247 = vcmask 916480
    %v1248 = vsel %vm1247, %v1245, %v1168
    %v1249 = vsel %vm1247, %v1246, %v1170
    %v1250 = vsel %vm1229, %v992, %v1176
    %v1251 = vsel %vm1229, %v1090, %v1178
    %v1252 = vsel %vm1232, %v1250, %v1184
    %v1253 = vsel %vm1232, %v1251, %v1186
    %v1254 = vsel %vm1235, %v1252, %v1192
    %v1255 = vsel %vm1235, %v1253, %v1194
    %v1256 = vsel %vm1238, %v1254, %v1200
    %v1257 = vsel %vm1238, %v1255, %v1202
    %v1258 = vsel %vm1241, %v1256, %v1208
    %v1259 = vsel %vm1241, %v1257, %v1210
    %v1260 = vsel %vm1244, %v1258, %v1216
    %v1261 = vsel %vm1244, %v1259, %v1218
    %v1262 = vsel %vm1247, %v1260, %v1224
    %v1263 = vsel %vm1247, %v1261, %v1226
    %v1268 = vcombine.low %v1248, %v1262
    %v1270 = vunpack.c.l.s4 1966171168
    %v1271 = vunpack.c.0.s8 %v1270
    %v1272 = vlaneseq
    %v1273 = vshrl.u32 %v1272, 7
    %v1274 = vsub.s32 %v1271, %v1273
    %v1275 = vrot.slane %v1268, %v1274
    %v1277 = vunpack.c.l.s4 1966171168
    %v1278 = vunpack.c.0.s8 %v1277
    %v1279 = vlaneseq
    %v1280 = vshrl.u32 %v1279, 7
    %v1281 = vsub.s32 %v1278, %v1280
    %v1282 = vrot.slane %v1275, %v1281
    %v1283 = vcombine.low %v1249, %v1263
    %v1285 = vunpack.c.l.s4 1966171168
    %v1286 = vunpack.c.0.s8 %v1285
    %v1287 = vlaneseq
    %v1288 = vshrl.u32 %v1287, 7
    %v1289 = vsub.s32 %v1286, %v1288
    %v1290 = vrot.slane %v1283, %v1289
    %v1292 = vunpack.c.l.s4 1966171168
    %v1293 = vunpack.c.0.s8 %v1292
    %v1294 = vlaneseq
    %v1295 = vshrl.u32 %v1294, 7
    %v1296 = vsub.s32 %v1293, %v1295
    %v1297 = vrot.slane %v1290, %v1296
    %v1300 = vlaneseq
    %vm1301 = vcmp.ge.s32.totalorder %v1300, 0
    %vm1302 = vcmp.lt.s32.totalorder %v1300, 256
    %vm1303 = vmand %vm1301, %vm1302
    %1304 = vst.msk [vmem:[#allocation8] ss:$8 sm:$0x3] %vm1303, %v1282
    %1305 = vst.msk [vmem:[#allocation8] ss:$8 sm:$0x0] %vm1303, %v1282
    %s1306 = scalar_lea.vmem [#allocation8], 32
    %1307 = vst.msk [vmem:[%s1306] ss:$8 sm:$0x3] %vm1303, %v1297
    %1308 = vst.msk [vmem:[%s1306] ss:$8 sm:$0x0] %vm1303, %v1297
    %s1309 = scalar_lea.vmem [#allocation2], 32
    %v1310 = vld [vmem:[%s1309 + $0x5] sm:$0xff]
    %v1311 = vld [vmem:[%s1309 + $0xd] sm:$0xff]
    %v1312 = vld [vmem:[%s1309 + $0x85] sm:$0xff]
    %v1313 = vld [vmem:[%s1309 + $0x8d] sm:$0xff]
    %s1314 = sld [smem:[#allocation7 + $0x9]]
    %v1315 = vstv %s1314
    %v1316 = vmul.f32 %v1310, %v1315
    %v1317 = vmul.f32 %v1311, %v1315
    %v1318 = vmul.f32 %v1312, %v1315
    %v1319 = vmul.f32 %v1313, %v1315
    %s1320 = sld [smem:[#allocation7 + $0xa]]
    %v1321 = vstv %s1320
    %v1322 = vmul.f32 %v1310, %v1321
    %v1323 = vmul.f32 %v1311, %v1321
    %v1324 = vmul.f32 %v1312, %v1321
    %v1325 = vmul.f32 %v1313, %v1321
    %1330 = vrot.lane.b32.xlu0 %v1322, 127
    %v1331 = vpop.permute.xlu0 %1330
    %1332 = vrot.lane.b32.xlu0 %v1323, 127
    %v1333 = vpop.permute.xlu0 %1332
    %1334 = vrot.lane.b32.xlu0 %v1324, 127
    %v1335 = vpop.permute.xlu0 %1334
    %1336 = vrot.lane.b32.xlu0 %v1325, 127
    %v1337 = vpop.permute.xlu0 %1336
    %v1342 = vadd.f32 %v1316, %v1331
    %v1343 = vadd.f32 %v1317, %v1333
    %v1344 = vadd.f32 %v1318, %v1335
    %v1345 = vadd.f32 %v1319, %v1337
    %s1346 = sld [smem:[#allocation7 + $0xb]]
    %v1347 = vstv %s1346
    %v1348 = vmul.f32 %v1310, %v1347
    %v1349 = vmul.f32 %v1311, %v1347
    %v1350 = vmul.f32 %v1312, %v1347
    %v1351 = vmul.f32 %v1313, %v1347
    %1356 = vrot.lane.b32.xlu0 %v1348, 126
    %v1357 = vpop.permute.xlu0 %1356
    %1358 = vrot.lane.b32.xlu0 %v1349, 126
    %v1359 = vpop.permute.xlu0 %1358
    %1360 = vrot.lane.b32.xlu0 %v1350, 126
    %v1361 = vpop.permute.xlu0 %1360
    %1362 = vrot.lane.b32.xlu0 %v1351, 126
    %v1363 = vpop.permute.xlu0 %1362
    %v1368 = vadd.f32 %v1342, %v1357
    %v1369 = vadd.f32 %v1343, %v1359
    %v1370 = vadd.f32 %v1344, %v1361
    %v1371 = vadd.f32 %v1345, %v1363
    %v1372 = vld [vmem:[%s1309 + $0x6] sm:$0xff]
    %v1373 = vld [vmem:[%s1309 + $0xe] sm:$0xff]
    %v1374 = vld [vmem:[%s1309 + $0x86] sm:$0xff]
    %v1375 = vld [vmem:[%s1309 + $0x8e] sm:$0xff]
    %s1376 = sld [smem:[#allocation7 + $0xc]]
    %v1377 = vstv %s1376
    %v1378 = vmul.f32 %v1372, %v1377
    %v1379 = vmul.f32 %v1373, %v1377
    %v1380 = vmul.f32 %v1374, %v1377
    %v1381 = vmul.f32 %v1375, %v1377
    %v1382 = vadd.f32 %v1368, %v1378
    %v1383 = vadd.f32 %v1369, %v1379
    %v1384 = vadd.f32 %v1370, %v1380
    %v1385 = vadd.f32 %v1371, %v1381
    %s1386 = sld [smem:[#allocation7 + $0xd]]
    %v1387 = vstv %s1386
    %v1388 = vmul.f32 %v1372, %v1387
    %v1389 = vmul.f32 %v1373, %v1387
    %v1390 = vmul.f32 %v1374, %v1387
    %v1391 = vmul.f32 %v1375, %v1387
    %1396 = vrot.lane.b32.xlu0 %v1388, 127
    %v1397 = vpop.permute.xlu0 %1396
    %1398 = vrot.lane.b32.xlu0 %v1389, 127
    %v1399 = vpop.permute.xlu0 %1398
    %1400 = vrot.lane.b32.xlu0 %v1390, 127
    %v1401 = vpop.permute.xlu0 %1400
    %1402 = vrot.lane.b32.xlu0 %v1391, 127
    %v1403 = vpop.permute.xlu0 %1402
    %v1408 = vadd.f32 %v1382, %v1397
    %v1409 = vadd.f32 %v1383, %v1399
    %v1410 = vadd.f32 %v1384, %v1401
    %v1411 = vadd.f32 %v1385, %v1403
    %s1412 = sld [smem:[#allocation7 + $0xe]]
    %v1413 = vstv %s1412
    %v1414 = vmul.f32 %v1372, %v1413
    %v1415 = vmul.f32 %v1373, %v1413
    %v1416 = vmul.f32 %v1374, %v1413
    %v1417 = vmul.f32 %v1375, %v1413
    %1422 = vrot.lane.b32.xlu0 %v1414, 126
    %v1423 = vpop.permute.xlu0 %1422
    %1424 = vrot.lane.b32.xlu0 %v1415, 126
    %v1425 = vpop.permute.xlu0 %1424
    %1426 = vrot.lane.b32.xlu0 %v1416, 126
    %v1427 = vpop.permute.xlu0 %1426
    %1428 = vrot.lane.b32.xlu0 %v1417, 126
    %v1429 = vpop.permute.xlu0 %1428
    %v1434 = vadd.f32 %v1408, %v1423
    %v1435 = vadd.f32 %v1409, %v1425
    %v1436 = vadd.f32 %v1410, %v1427
    %v1437 = vadd.f32 %v1411, %v1429
    %v1438 = vld [vmem:[%s1309 + $0x7] sm:$0xff]
    %v1439 = vld [vmem:[%s1309 + $0xf] sm:$0xff]
    %v1440 = vld [vmem:[%s1309 + $0x87] sm:$0xff]
    %v1441 = vld [vmem:[%s1309 + $0x8f] sm:$0xff]
    %s1442 = sld [smem:[#allocation7 + $0xf]]
    %v1443 = vstv %s1442
    %v1444 = vmul.f32 %v1438, %v1443
    %v1445 = vmul.f32 %v1439, %v1443
    %v1446 = vmul.f32 %v1440, %v1443
    %v1447 = vmul.f32 %v1441, %v1443
    %v1448 = vadd.f32 %v1434, %v1444
    %v1449 = vadd.f32 %v1435, %v1445
    %v1450 = vadd.f32 %v1436, %v1446
    %v1451 = vadd.f32 %v1437, %v1447
    %s1452 = sld [smem:[#allocation7 + $0x10]]
    %v1453 = vstv %s1452
    %v1454 = vmul.f32 %v1438, %v1453
    %v1455 = vmul.f32 %v1439, %v1453
    %v1456 = vmul.f32 %v1440, %v1453
    %v1457 = vmul.f32 %v1441, %v1453
    %1462 = vrot.lane.b32.xlu0 %v1454, 127
    %v1463 = vpop.permute.xlu0 %1462
    %1464 = vrot.lane.b32.xlu0 %v1455, 127
    %v1465 = vpop.permute.xlu0 %1464
    %1466 = vrot.lane.b32.xlu0 %v1456, 127
    %v1467 = vpop.permute.xlu0 %1466
    %1468 = vrot.lane.b32.xlu0 %v1457, 127
    %v1469 = vpop.permute.xlu0 %1468
    %v1474 = vadd.f32 %v1448, %v1463
    %v1475 = vadd.f32 %v1449, %v1465
    %v1476 = vadd.f32 %v1450, %v1467
    %v1477 = vadd.f32 %v1451, %v1469
    %s1478 = sld [smem:[#allocation7 + $0x11]]
    %v1479 = vstv %s1478
    %v1480 = vmul.f32 %v1438, %v1479
    %v1481 = vmul.f32 %v1439, %v1479
    %v1482 = vmul.f32 %v1440, %v1479
    %v1483 = vmul.f32 %v1441, %v1479
    %1488 = vrot.lane.b32.xlu0 %v1480, 126
    %v1489 = vpop.permute.xlu0 %1488
    %1490 = vrot.lane.b32.xlu0 %v1481, 126
    %v1491 = vpop.permute.xlu0 %1490
    %1492 = vrot.lane.b32.xlu0 %v1482, 126
    %v1493 = vpop.permute.xlu0 %1492
    %1494 = vrot.lane.b32.xlu0 %v1483, 126
    %v1495 = vpop.permute.xlu0 %1494
    %v1500 = vadd.f32 %v1474, %v1489
    %v1501 = vadd.f32 %v1475, %v1491
    %v1502 = vadd.f32 %v1476, %v1493
    %v1503 = vadd.f32 %v1477, %v1495
    %1508 = vrot.lane.b32.xlu0 %v1500, 123
    %v1509 = vpop.permute.xlu0 %1508
    %1510 = vrot.lane.b32.xlu0 %v1501, 123
    %v1511 = vpop.permute.xlu0 %1510
    %1512 = vrot.lane.b32.xlu0 %v1502, 123
    %v1513 = vpop.permute.xlu0 %1512
    %1514 = vrot.lane.b32.xlu0 %v1503, 123
    %v1515 = vpop.permute.xlu0 %1514
    %v1520 = vcombine.high %v1509, 0.0
    %v1522 = vunpack.c.l.s4 1983009808
    %v1523 = vunpack.c.0.s8 %v1522
    %v1524 = vlaneseq
    %v1525 = vshrl.u32 %v1524, 7
    %v1526 = vsub.s32 %v1523, %v1525
    %v1527 = vrot.slane %v1509, %v1526
    %v1529 = vunpack.c.l.s4 1983009808
    %v1530 = vunpack.c.0.s8 %v1529
    %v1531 = vlaneseq
    %v1532 = vshrl.u32 %v1531, 7
    %v1533 = vsub.s32 %v1530, %v1532
    %v1534 = vrot.slane %v1520, %v1533
    %v1535 = vcombine.high %v1527, 0.0
    %v1537 = vunpack.c.l.s4 1934713408
    %v1538 = vunpack.c.0.s8 %v1537
    %v1539 = vlaneseq
    %v1540 = vshrl.u32 %v1539, 7
    %v1541 = vsub.s32 %v1538, %v1540
    %v1542 = vrot.slane %v1527, %v1541
    %v1544 = vunpack.c.l.s4 1934713408
    %v1545 = vunpack.c.0.s8 %v1544
    %v1546 = vlaneseq
    %v1547 = vshrl.u32 %v1546, 7
    %v1548 = vsub.s32 %v1545, %v1547
    %v1549 = vrot.slane %v1535, %v1548
    %v1550 = vcombine.high %v1534, 0.0
    %v1552 = vunpack.c.l.s4 1934713408
    %v1553 = vunpack.c.0.s8 %v1552
    %v1554 = vlaneseq
    %v1555 = vshrl.u32 %v1554, 7
    %v1556 = vsub.s32 %v1553, %v1555
    %v1557 = vrot.slane %v1534, %v1556
    %v1559 = vunpack.c.l.s4 1934713408
    %v1560 = vunpack.c.0.s8 %v1559
    %v1561 = vlaneseq
    %v1562 = vshrl.u32 %v1561, 7
    %v1563 = vsub.s32 %v1560, %v1562
    %v1564 = vrot.slane %v1550, %v1563
    %v1565 = vcombine.high %v1542, 0.0
    %v1566 = vcombine.high %v1549, 0.0
    %v1567 = vcombine.high %v1557, 0.0
    %v1568 = vcombine.high %v1564, 0.0
    %v1569 = vcombine.high %v1511, 0.0
    %v1571 = vunpack.c.l.s4 1983009808
    %v1572 = vunpack.c.0.s8 %v1571
    %v1573 = vlaneseq
    %v1574 = vshrl.u32 %v1573, 7
    %v1575 = vsub.s32 %v1572, %v1574
    %v1576 = vrot.slane %v1511, %v1575
    %v1578 = vunpack.c.l.s4 1983009808
    %v1579 = vunpack.c.0.s8 %v1578
    %v1580 = vlaneseq
    %v1581 = vshrl.u32 %v1580, 7
    %v1582 = vsub.s32 %v1579, %v1581
    %v1583 = vrot.slane %v1569, %v1582
    %v1584 = vcombine.high %v1576, 0.0
    %v1586 = vunpack.c.l.s4 1934713408
    %v1587 = vunpack.c.0.s8 %v1586
    %v1588 = vlaneseq
    %v1589 = vshrl.u32 %v1588, 7
    %v1590 = vsub.s32 %v1587, %v1589
    %v1591 = vrot.slane %v1576, %v1590
    %v1593 = vunpack.c.l.s4 1934713408
    %v1594 = vunpack.c.0.s8 %v1593
    %v1595 = vlaneseq
    %v1596 = vshrl.u32 %v1595, 7
    %v1597 = vsub.s32 %v1594, %v1596
    %v1598 = vrot.slane %v1584, %v1597
    %v1599 = vcombine.high %v1583, 0.0
    %v1601 = vunpack.c.l.s4 1934713408
    %v1602 = vunpack.c.0.s8 %v1601
    %v1603 = vlaneseq
    %v1604 = vshrl.u32 %v1603, 7
    %v1605 = vsub.s32 %v1602, %v1604
    %v1606 = vrot.slane %v1583, %v1605
    %v1608 = vunpack.c.l.s4 1934713408
    %v1609 = vunpack.c.0.s8 %v1608
    %v1610 = vlaneseq
    %v1611 = vshrl.u32 %v1610, 7
    %v1612 = vsub.s32 %v1609, %v1611
    %v1613 = vrot.slane %v1599, %v1612
    %v1614 = vcombine.high %v1591, 0.0
    %v1615 = vcombine.high %v1598, 0.0
    %v1616 = vcombine.high %v1606, 0.0
    %v1617 = vcombine.high %v1613, 0.0
    %v1618 = vcombine.high %v1513, 0.0
    %v1620 = vunpack.c.l.s4 1983009808
    %v1621 = vunpack.c.0.s8 %v1620
    %v1622 = vlaneseq
    %v1623 = vshrl.u32 %v1622, 7
    %v1624 = vsub.s32 %v1621, %v1623
    %v1625 = vrot.slane %v1513, %v1624
    %v1627 = vunpack.c.l.s4 1983009808
    %v1628 = vunpack.c.0.s8 %v1627
    %v1629 = vlaneseq
    %v1630 = vshrl.u32 %v1629, 7
    %v1631 = vsub.s32 %v1628, %v1630
    %v1632 = vrot.slane %v1618, %v1631
    %v1633 = vcombine.high %v1625, 0.0
    %v1635 = vunpack.c.l.s4 1934713408
    %v1636 = vunpack.c.0.s8 %v1635
    %v1637 = vlaneseq
    %v1638 = vshrl.u32 %v1637, 7
    %v1639 = vsub.s32 %v1636, %v1638
    %v1640 = vrot.slane %v1625, %v1639
    %v1642 = vunpack.c.l.s4 1934713408
    %v1643 = vunpack.c.0.s8 %v1642
    %v1644 = vlaneseq
    %v1645 = vshrl.u32 %v1644, 7
    %v1646 = vsub.s32 %v1643, %v1645
    %v1647 = vrot.slane %v1633, %v1646
    %v1648 = vcombine.high %v1632, 0.0
    %v1650 = vunpack.c.l.s4 1934713408
    %v1651 = vunpack.c.0.s8 %v1650
    %v1652 = vlaneseq
    %v1653 = vshrl.u32 %v1652, 7
    %v1654 = vsub.s32 %v1651, %v1653
    %v1655 = vrot.slane %v1632, %v1654
    %v1657 = vunpack.c.l.s4 1934713408
    %v1658 = vunpack.c.0.s8 %v1657
    %v1659 = vlaneseq
    %v1660 = vshrl.u32 %v1659, 7
    %v1661 = vsub.s32 %v1658, %v1660
    %v1662 = vrot.slane %v1648, %v1661
    %v1663 = vcombine.high %v1640, 0.0
    %v1664 = vcombine.high %v1647, 0.0
    %v1665 = vcombine.high %v1655, 0.0
    %v1666 = vcombine.high %v1662, 0.0
    %v1667 = vcombine.high %v1515, 0.0
    %v1669 = vunpack.c.l.s4 1983009808
    %v1670 = vunpack.c.0.s8 %v1669
    %v1671 = vlaneseq
    %v1672 = vshrl.u32 %v1671, 7
    %v1673 = vsub.s32 %v1670, %v1672
    %v1674 = vrot.slane %v1515, %v1673
    %v1676 = vunpack.c.l.s4 1983009808
    %v1677 = vunpack.c.0.s8 %v1676
    %v1678 = vlaneseq
    %v1679 = vshrl.u32 %v1678, 7
    %v1680 = vsub.s32 %v1677, %v1679
    %v1681 = vrot.slane %v1667, %v1680
    %v1682 = vcombine.high %v1674, 0.0
    %v1684 = vunpack.c.l.s4 1934713408
    %v1685 = vunpack.c.0.s8 %v1684
    %v1686 = vlaneseq
    %v1687 = vshrl.u32 %v1686, 7
    %v1688 = vsub.s32 %v1685, %v1687
    %v1689 = vrot.slane %v1674, %v1688
    %v1691 = vunpack.c.l.s4 1934713408
    %v1692 = vunpack.c.0.s8 %v1691
    %v1693 = vlaneseq
    %v1694 = vshrl.u32 %v1693, 7
    %v1695 = vsub.s32 %v1692, %v1694
    %v1696 = vrot.slane %v1682, %v1695
    %v1697 = vcombine.high %v1681, 0.0
    %v1699 = vunpack.c.l.s4 1934713408
    %v1700 = vunpack.c.0.s8 %v1699
    %v1701 = vlaneseq
    %v1702 = vshrl.u32 %v1701, 7
    %v1703 = vsub.s32 %v1700, %v1702
    %v1704 = vrot.slane %v1681, %v1703
    %v1706 = vunpack.c.l.s4 1934713408
    %v1707 = vunpack.c.0.s8 %v1706
    %v1708 = vlaneseq
    %v1709 = vshrl.u32 %v1708, 7
    %v1710 = vsub.s32 %v1707, %v1709
    %v1711 = vrot.slane %v1697, %v1710
    %v1712 = vcombine.high %v1689, 0.0
    %v1713 = vcombine.high %v1696, 0.0
    %v1714 = vcombine.high %v1704, 0.0
    %v1715 = vcombine.high %v1711, 0.0
    %1718 = vrot.lane.b32.xlu0 %v1565, 16
    %v1719 = vpop.permute.xlu0 %1718
    %1720 = vrot.lane.b32.xlu0 %v1663, 16
    %v1721 = vpop.permute.xlu0 %1720
    %1726 = vrot.lane.b32.xlu0 %v1549, 32
    %v1727 = vpop.permute.xlu0 %1726
    %1728 = vrot.lane.b32.xlu0 %v1647, 32
    %v1729 = vpop.permute.xlu0 %1728
    %1734 = vrot.lane.b32.xlu0 %v1566, 48
    %v1735 = vpop.permute.xlu0 %1734
    %1736 = vrot.lane.b32.xlu0 %v1664, 48
    %v1737 = vpop.permute.xlu0 %1736
    %1742 = vrot.lane.b32.xlu0 %v1557, 64
    %v1743 = vpop.permute.xlu0 %1742
    %1744 = vrot.lane.b32.xlu0 %v1655, 64
    %v1745 = vpop.permute.xlu0 %1744
    %1750 = vrot.lane.b32.xlu0 %v1567, 80
    %v1751 = vpop.permute.xlu0 %1750
    %1752 = vrot.lane.b32.xlu0 %v1665, 80
    %v1753 = vpop.permute.xlu0 %1752
    %1758 = vrot.lane.b32.xlu0 %v1564, 96
    %v1759 = vpop.permute.xlu0 %1758
    %1760 = vrot.lane.b32.xlu0 %v1662, 96
    %v1761 = vpop.permute.xlu0 %1760
    %1766 = vrot.lane.b32.xlu0 %v1568, 112
    %v1767 = vpop.permute.xlu0 %1766
    %1768 = vrot.lane.b32.xlu0 %v1666, 112
    %v1769 = vpop.permute.xlu0 %1768
    %1774 = vrot.lane.b32.xlu0 %v1614, 16
    %v1775 = vpop.permute.xlu0 %1774
    %1776 = vrot.lane.b32.xlu0 %v1712, 16
    %v1777 = vpop.permute.xlu0 %1776
    %1782 = vrot.lane.b32.xlu0 %v1598, 32
    %v1783 = vpop.permute.xlu0 %1782
    %1784 = vrot.lane.b32.xlu0 %v1696, 32
    %v1785 = vpop.permute.xlu0 %1784
    %1790 = vrot.lane.b32.xlu0 %v1615, 48
    %v1791 = vpop.permute.xlu0 %1790
    %1792 = vrot.lane.b32.xlu0 %v1713, 48
    %v1793 = vpop.permute.xlu0 %1792
    %1798 = vrot.lane.b32.xlu0 %v1606, 64
    %v1799 = vpop.permute.xlu0 %1798
    %1800 = vrot.lane.b32.xlu0 %v1704, 64
    %v1801 = vpop.permute.xlu0 %1800
    %1806 = vrot.lane.b32.xlu0 %v1616, 80
    %v1807 = vpop.permute.xlu0 %1806
    %1808 = vrot.lane.b32.xlu0 %v1714, 80
    %v1809 = vpop.permute.xlu0 %1808
    %1814 = vrot.lane.b32.xlu0 %v1613, 96
    %v1815 = vpop.permute.xlu0 %1814
    %1816 = vrot.lane.b32.xlu0 %v1711, 96
    %v1817 = vpop.permute.xlu0 %1816
    %1822 = vrot.lane.b32.xlu0 %v1617, 112
    %v1823 = vpop.permute.xlu0 %1822
    %1824 = vrot.lane.b32.xlu0 %v1715, 112
    %v1825 = vpop.permute.xlu0 %1824
    %v1828 = vsel %vm1229, %v1542, %v1719
    %v1829 = vsel %vm1229, %v1640, %v1721
    %v1830 = vsel %vm1232, %v1828, %v1727
    %v1831 = vsel %vm1232, %v1829, %v1729
    %v1832 = vsel %vm1235, %v1830, %v1735
    %v1833 = vsel %vm1235, %v1831, %v1737
    %v1834 = vsel %vm1238, %v1832, %v1743
    %v1835 = vsel %vm1238, %v1833, %v1745
    %v1836 = vsel %vm1241, %v1834, %v1751
    %v1837 = vsel %vm1241, %v1835, %v1753
    %v1838 = vsel %vm1244, %v1836, %v1759
    %v1839 = vsel %vm1244, %v1837, %v1761
    %v1840 = vsel %vm1247, %v1838, %v1767
    %v1841 = vsel %vm1247, %v1839, %v1769
    %v1842 = vsel %vm1229, %v1591, %v1775
    %v1843 = vsel %vm1229, %v1689, %v1777
    %v1844 = vsel %vm1232, %v1842, %v1783
    %v1845 = vsel %vm1232, %v1843, %v1785
    %v1846 = vsel %vm1235, %v1844, %v1791
    %v1847 = vsel %vm1235, %v1845, %v1793
    %v1848 = vsel %vm1238, %v1846, %v1799
    %v1849 = vsel %vm1238, %v1847, %v1801
    %v1850 = vsel %vm1241, %v1848, %v1807
    %v1851 = vsel %vm1241, %v1849, %v1809
    %v1852 = vsel %vm1244, %v1850, %v1815
    %v1853 = vsel %vm1244, %v1851, %v1817
    %v1854 = vsel %vm1247, %v1852, %v1823
    %v1855 = vsel %vm1247, %v1853, %v1825
    %v1860 = vcombine.low %v1840, %v1854
    %v1862 = vunpack.c.l.s4 1966171168
    %v1863 = vunpack.c.0.s8 %v1862
    %v1864 = vlaneseq
    %v1865 = vshrl.u32 %v1864, 7
    %v1866 = vsub.s32 %v1863, %v1865
    %v1867 = vrot.slane %v1860, %v1866
    %v1869 = vunpack.c.l.s4 1966171168
    %v1870 = vunpack.c.0.s8 %v1869
    %v1871 = vlaneseq
    %v1872 = vshrl.u32 %v1871, 7
    %v1873 = vsub.s32 %v1870, %v1872
    %v1874 = vrot.slane %v1867, %v1873
    %v1875 = vcombine.low %v1841, %v1855
    %v1877 = vunpack.c.l.s4 1966171168
    %v1878 = vunpack.c.0.s8 %v1877
    %v1879 = vlaneseq
    %v1880 = vshrl.u32 %v1879, 7
    %v1881 = vsub.s32 %v1878, %v1880
    %v1882 = vrot.slane %v1875, %v1881
    %v1884 = vunpack.c.l.s4 1966171168
    %v1885 = vunpack.c.0.s8 %v1884
    %v1886 = vlaneseq
    %v1887 = vshrl.u32 %v1886, 7
    %v1888 = vsub.s32 %v1885, %v1887
    %v1889 = vrot.slane %v1882, %v1888
    %s1892 = scalar_lea.vmem [#allocation8], 1
    %1893 = vst.msk [vmem:[%s1892] ss:$8 sm:$0x3] %vm1303, %v1874
    %1894 = vst.msk [vmem:[%s1892] ss:$8 sm:$0x0] %vm1303, %v1874
    %s1895 = scalar_lea.vmem [#allocation8], 33
    %1896 = vst.msk [vmem:[%s1895] ss:$8 sm:$0x3] %vm1303, %v1889
    %1897 = vst.msk [vmem:[%s1895] ss:$8 sm:$0x0] %vm1303, %v1889
    %s1898 = scalar_lea.vmem [#allocation2], 64
    %v1899 = vld [vmem:[%s1898 + $0x5] sm:$0xff]
    %v1900 = vld [vmem:[%s1898 + $0xd] sm:$0xff]
    %v1901 = vld [vmem:[%s1898 + $0x85] sm:$0xff]
    %v1902 = vld [vmem:[%s1898 + $0x8d] sm:$0xff]
    %s1903 = sld [smem:[#allocation7 + $0x12]]
    %v1904 = vstv %s1903
    %v1905 = vmul.f32 %v1899, %v1904
    %v1906 = vmul.f32 %v1900, %v1904
    %v1907 = vmul.f32 %v1901, %v1904
    %v1908 = vmul.f32 %v1902, %v1904
    %s1909 = sld [smem:[#allocation7 + $0x13]]
    %v1910 = vstv %s1909
    %v1911 = vmul.f32 %v1899, %v1910
    %v1912 = vmul.f32 %v1900, %v1910
    %v1913 = vmul.f32 %v1901, %v1910
    %v1914 = vmul.f32 %v1902, %v1910
    %1919 = vrot.lane.b32.xlu0 %v1911, 127
    %v1920 = vpop.permute.xlu0 %1919
    %1921 = vrot.lane.b32.xlu0 %v1912, 127
    %v1922 = vpop.permute.xlu0 %1921
    %1923 = vrot.lane.b32.xlu0 %v1913, 127
    %v1924 = vpop.permute.xlu0 %1923
    %1925 = vrot.lane.b32.xlu0 %v1914, 127
    %v1926 = vpop.permute.xlu0 %1925
    %v1931 = vadd.f32 %v1905, %v1920
    %v1932 = vadd.f32 %v1906, %v1922
    %v1933 = vadd.f32 %v1907, %v1924
    %v1934 = vadd.f32 %v1908, %v1926
    %s1935 = sld [smem:[#allocation7 + $0x14]]
    %v1936 = vstv %s1935
    %v1937 = vmul.f32 %v1899, %v1936
    %v1938 = vmul.f32 %v1900, %v1936
    %v1939 = vmul.f32 %v1901, %v1936
    %v1940 = vmul.f32 %v1902, %v1936
    %1945 = vrot.lane.b32.xlu0 %v1937, 126
    %v1946 = vpop.permute.xlu0 %1945
    %1947 = vrot.lane.b32.xlu0 %v1938, 126
    %v1948 = vpop.permute.xlu0 %1947
    %1949 = vrot.lane.b32.xlu0 %v1939, 126
    %v1950 = vpop.permute.xlu0 %1949
    %1951 = vrot.lane.b32.xlu0 %v1940, 126
    %v1952 = vpop.permute.xlu0 %1951
    %v1957 = vadd.f32 %v1931, %v1946
    %v1958 = vadd.f32 %v1932, %v1948
    %v1959 = vadd.f32 %v1933, %v1950
    %v1960 = vadd.f32 %v1934, %v1952
    %v1961 = vld [vmem:[%s1898 + $0x6] sm:$0xff]
    %v1962 = vld [vmem:[%s1898 + $0xe] sm:$0xff]
    %v1963 = vld [vmem:[%s1898 + $0x86] sm:$0xff]
    %v1964 = vld [vmem:[%s1898 + $0x8e] sm:$0xff]
    %s1965 = sld [smem:[#allocation7 + $0x15]]
    %v1966 = vstv %s1965
    %v1967 = vmul.f32 %v1961, %v1966
    %v1968 = vmul.f32 %v1962, %v1966
    %v1969 = vmul.f32 %v1963, %v1966
    %v1970 = vmul.f32 %v1964, %v1966
    %v1971 = vadd.f32 %v1957, %v1967
    %v1972 = vadd.f32 %v1958, %v1968
    %v1973 = vadd.f32 %v1959, %v1969
    %v1974 = vadd.f32 %v1960, %v1970
    %s1975 = sld [smem:[#allocation7 + $0x16]]
    %v1976 = vstv %s1975
    %v1977 = vmul.f32 %v1961, %v1976
    %v1978 = vmul.f32 %v1962, %v1976
    %v1979 = vmul.f32 %v1963, %v1976
    %v1980 = vmul.f32 %v1964, %v1976
    %1985 = vrot.lane.b32.xlu0 %v1977, 127
    %v1986 = vpop.permute.xlu0 %1985
    %1987 = vrot.lane.b32.xlu0 %v1978, 127
    %v1988 = vpop.permute.xlu0 %1987
    %1989 = vrot.lane.b32.xlu0 %v1979, 127
    %v1990 = vpop.permute.xlu0 %1989
    %1991 = vrot.lane.b32.xlu0 %v1980, 127
    %v1992 = vpop.permute.xlu0 %1991
    %v1997 = vadd.f32 %v1971, %v1986
    %v1998 = vadd.f32 %v1972, %v1988
    %v1999 = vadd.f32 %v1973, %v1990
    %v2000 = vadd.f32 %v1974, %v1992
    %s2001 = sld [smem:[#allocation7 + $0x17]]
    %v2002 = vstv %s2001
    %v2003 = vmul.f32 %v1961, %v2002
    %v2004 = vmul.f32 %v1962, %v2002
    %v2005 = vmul.f32 %v1963, %v2002
    %v2006 = vmul.f32 %v1964, %v2002
    %2011 = vrot.lane.b32.xlu0 %v2003, 126
    %v2012 = vpop.permute.xlu0 %2011
    %2013 = vrot.lane.b32.xlu0 %v2004, 126
    %v2014 = vpop.permute.xlu0 %2013
    %2015 = vrot.lane.b32.xlu0 %v2005, 126
    %v2016 = vpop.permute.xlu0 %2015
    %2017 = vrot.lane.b32.xlu0 %v2006, 126
    %v2018 = vpop.permute.xlu0 %2017
    %v2023 = vadd.f32 %v1997, %v2012
    %v2024 = vadd.f32 %v1998, %v2014
    %v2025 = vadd.f32 %v1999, %v2016
    %v2026 = vadd.f32 %v2000, %v2018
    %v2027 = vld [vmem:[%s1898 + $0x7] sm:$0xff]
    %v2028 = vld [vmem:[%s1898 + $0xf] sm:$0xff]
    %v2029 = vld [vmem:[%s1898 + $0x87] sm:$0xff]
    %v2030 = vld [vmem:[%s1898 + $0x8f] sm:$0xff]
    %s2031 = sld [smem:[#allocation7 + $0x18]]
    %v2032 = vstv %s2031
    %v2033 = vmul.f32 %v2027, %v2032
    %v2034 = vmul.f32 %v2028, %v2032
    %v2035 = vmul.f32 %v2029, %v2032
    %v2036 = vmul.f32 %v2030, %v2032
    %v2037 = vadd.f32 %v2023, %v2033
    %v2038 = vadd.f32 %v2024, %v2034
    %v2039 = vadd.f32 %v2025, %v2035
    %v2040 = vadd.f32 %v2026, %v2036
    %s2041 = sld [smem:[#allocation7 + $0x19]]
    %v2042 = vstv %s2041
    %v2043 = vmul.f32 %v2027, %v2042
    %v2044 = vmul.f32 %v2028, %v2042
    %v2045 = vmul.f32 %v2029, %v2042
    %v2046 = vmul.f32 %v2030, %v2042
    %2051 = vrot.lane.b32.xlu0 %v2043, 127
    %v2052 = vpop.permute.xlu0 %2051
    %2053 = vrot.lane.b32.xlu0 %v2044, 127
    %v2054 = vpop.permute.xlu0 %2053
    %2055 = vrot.lane.b32.xlu0 %v2045, 127
    %v2056 = vpop.permute.xlu0 %2055
    %2057 = vrot.lane.b32.xlu0 %v2046, 127
    %v2058 = vpop.permute.xlu0 %2057
    %v2063 = vadd.f32 %v2037, %v2052
    %v2064 = vadd.f32 %v2038, %v2054
    %v2065 = vadd.f32 %v2039, %v2056
    %v2066 = vadd.f32 %v2040, %v2058
    %s2067 = sld [smem:[#allocation7 + $0x1a]]
    %v2068 = vstv %s2067
    %v2069 = vmul.f32 %v2027, %v2068
    %v2070 = vmul.f32 %v2028, %v2068
    %v2071 = vmul.f32 %v2029, %v2068
    %v2072 = vmul.f32 %v2030, %v2068
    %2077 = vrot.lane.b32.xlu0 %v2069, 126
    %v2078 = vpop.permute.xlu0 %2077
    %2079 = vrot.lane.b32.xlu0 %v2070, 126
    %v2080 = vpop.permute.xlu0 %2079
    %2081 = vrot.lane.b32.xlu0 %v2071, 126
    %v2082 = vpop.permute.xlu0 %2081
    %2083 = vrot.lane.b32.xlu0 %v2072, 126
    %v2084 = vpop.permute.xlu0 %2083
    %v2089 = vadd.f32 %v2063, %v2078
    %v2090 = vadd.f32 %v2064, %v2080
    %v2091 = vadd.f32 %v2065, %v2082
    %v2092 = vadd.f32 %v2066, %v2084
    %2097 = vrot.lane.b32.xlu0 %v2089, 123
    %v2098 = vpop.permute.xlu0 %2097
    %2099 = vrot.lane.b32.xlu0 %v2090, 123
    %v2100 = vpop.permute.xlu0 %2099
    %2101 = vrot.lane.b32.xlu0 %v2091, 123
    %v2102 = vpop.permute.xlu0 %2101
    %2103 = vrot.lane.b32.xlu0 %v2092, 123
    %v2104 = vpop.permute.xlu0 %2103
    %v2109 = vcombine.high %v2098, 0.0
    %v2111 = vunpack.c.l.s4 1983009808
    %v2112 = vunpack.c.0.s8 %v2111
    %v2113 = vlaneseq
    %v2114 = vshrl.u32 %v2113, 7
    %v2115 = vsub.s32 %v2112, %v2114
    %v2116 = vrot.slane %v2098, %v2115
    %v2118 = vunpack.c.l.s4 1983009808
    %v2119 = vunpack.c.0.s8 %v2118
    %v2120 = vlaneseq
    %v2121 = vshrl.u32 %v2120, 7
    %v2122 = vsub.s32 %v2119, %v2121
    %v2123 = vrot.slane %v2109, %v2122
    %v2124 = vcombine.high %v2116, 0.0
    %v2126 = vunpack.c.l.s4 1934713408
    %v2127 = vunpack.c.0.s8 %v2126
    %v2128 = vlaneseq
    %v2129 = vshrl.u32 %v2128, 7
    %v2130 = vsub.s32 %v2127, %v2129
    %v2131 = vrot.slane %v2116, %v2130
    %v2133 = vunpack.c.l.s4 1934713408
    %v2134 = vunpack.c.0.s8 %v2133
    %v2135 = vlaneseq
    %v2136 = vshrl.u32 %v2135, 7
    %v2137 = vsub.s32 %v2134, %v2136
    %v2138 = vrot.slane %v2124, %v2137
    %v2139 = vcombine.high %v2123, 0.0
    %v2141 = vunpack.c.l.s4 1934713408
    %v2142 = vunpack.c.0.s8 %v2141
    %v2143 = vlaneseq
    %v2144 = vshrl.u32 %v2143, 7
    %v2145 = vsub.s32 %v2142, %v2144
    %v2146 = vrot.slane %v2123, %v2145
    %v2148 = vunpack.c.l.s4 1934713408
    %v2149 = vunpack.c.0.s8 %v2148
    %v2150 = vlaneseq
    %v2151 = vshrl.u32 %v2150, 7
    %v2152 = vsub.s32 %v2149, %v2151
    %v2153 = vrot.slane %v2139, %v2152
    %v2154 = vcombine.high %v2131, 0.0
    %v2155 = vcombine.high %v2138, 0.0
    %v2156 = vcombine.high %v2146, 0.0
    %v2157 = vcombine.high %v2153, 0.0
    %v2158 = vcombine.high %v2100, 0.0
    %v2160 = vunpack.c.l.s4 1983009808
    %v2161 = vunpack.c.0.s8 %v2160
    %v2162 = vlaneseq
    %v2163 = vshrl.u32 %v2162, 7
    %v2164 = vsub.s32 %v2161, %v2163
    %v2165 = vrot.slane %v2100, %v2164
    %v2167 = vunpack.c.l.s4 1983009808
    %v2168 = vunpack.c.0.s8 %v2167
    %v2169 = vlaneseq
    %v2170 = vshrl.u32 %v2169, 7
    %v2171 = vsub.s32 %v2168, %v2170
    %v2172 = vrot.slane %v2158, %v2171
    %v2173 = vcombine.high %v2165, 0.0
    %v2175 = vunpack.c.l.s4 1934713408
    %v2176 = vunpack.c.0.s8 %v2175
    %v2177 = vlaneseq
    %v2178 = vshrl.u32 %v2177, 7
    %v2179 = vsub.s32 %v2176, %v2178
    %v2180 = vrot.slane %v2165, %v2179
    %v2182 = vunpack.c.l.s4 1934713408
    %v2183 = vunpack.c.0.s8 %v2182
    %v2184 = vlaneseq
    %v2185 = vshrl.u32 %v2184, 7
    %v2186 = vsub.s32 %v2183, %v2185
    %v2187 = vrot.slane %v2173, %v2186
    %v2188 = vcombine.high %v2172, 0.0
    %v2190 = vunpack.c.l.s4 1934713408
    %v2191 = vunpack.c.0.s8 %v2190
    %v2192 = vlaneseq
    %v2193 = vshrl.u32 %v2192, 7
    %v2194 = vsub.s32 %v2191, %v2193
    %v2195 = vrot.slane %v2172, %v2194
    %v2197 = vunpack.c.l.s4 1934713408
    %v2198 = vunpack.c.0.s8 %v2197
    %v2199 = vlaneseq
    %v2200 = vshrl.u32 %v2199, 7
    %v2201 = vsub.s32 %v2198, %v2200
    %v2202 = vrot.slane %v2188, %v2201
    %v2203 = vcombine.high %v2180, 0.0
    %v2204 = vcombine.high %v2187, 0.0
    %v2205 = vcombine.high %v2195, 0.0
    %v2206 = vcombine.high %v2202, 0.0
    %v2207 = vcombine.high %v2102, 0.0
    %v2209 = vunpack.c.l.s4 1983009808
    %v2210 = vunpack.c.0.s8 %v2209
    %v2211 = vlaneseq
    %v2212 = vshrl.u32 %v2211, 7
    %v2213 = vsub.s32 %v2210, %v2212
    %v2214 = vrot.slane %v2102, %v2213
    %v2216 = vunpack.c.l.s4 1983009808
    %v2217 = vunpack.c.0.s8 %v2216
    %v2218 = vlaneseq
    %v2219 = vshrl.u32 %v2218, 7
    %v2220 = vsub.s32 %v2217, %v2219
    %v2221 = vrot.slane %v2207, %v2220
    %v2222 = vcombine.high %v2214, 0.0
    %v2224 = vunpack.c.l.s4 1934713408
    %v2225 = vunpack.c.0.s8 %v2224
    %v2226 = vlaneseq
    %v2227 = vshrl.u32 %v2226, 7
    %v2228 = vsub.s32 %v2225, %v2227
    %v2229 = vrot.slane %v2214, %v2228
    %v2231 = vunpack.c.l.s4 1934713408
    %v2232 = vunpack.c.0.s8 %v2231
    %v2233 = vlaneseq
    %v2234 = vshrl.u32 %v2233, 7
    %v2235 = vsub.s32 %v2232, %v2234
    %v2236 = vrot.slane %v2222, %v2235
    %v2237 = vcombine.high %v2221, 0.0
    %v2239 = vunpack.c.l.s4 1934713408
    %v2240 = vunpack.c.0.s8 %v2239
    %v2241 = vlaneseq
    %v2242 = vshrl.u32 %v2241, 7
    %v2243 = vsub.s32 %v2240, %v2242
    %v2244 = vrot.slane %v2221, %v2243
    %v2246 = vunpack.c.l.s4 1934713408
    %v2247 = vunpack.c.0.s8 %v2246
    %v2248 = vlaneseq
    %v2249 = vshrl.u32 %v2248, 7
    %v2250 = vsub.s32 %v2247, %v2249
    %v2251 = vrot.slane %v2237, %v2250
    %v2252 = vcombine.high %v2229, 0.0
    %v2253 = vcombine.high %v2236, 0.0
    %v2254 = vcombine.high %v2244, 0.0
    %v2255 = vcombine.high %v2251, 0.0
    %v2256 = vcombine.high %v2104, 0.0
    %v2258 = vunpack.c.l.s4 1983009808
    %v2259 = vunpack.c.0.s8 %v2258
    %v2260 = vlaneseq
    %v2261 = vshrl.u32 %v2260, 7
    %v2262 = vsub.s32 %v2259, %v2261
    %v2263 = vrot.slane %v2104, %v2262
    %v2265 = vunpack.c.l.s4 1983009808
    %v2266 = vunpack.c.0.s8 %v2265
    %v2267 = vlaneseq
    %v2268 = vshrl.u32 %v2267, 7
    %v2269 = vsub.s32 %v2266, %v2268
    %v2270 = vrot.slane %v2256, %v2269
    %v2271 = vcombine.high %v2263, 0.0
    %v2273 = vunpack.c.l.s4 1934713408
    %v2274 = vunpack.c.0.s8 %v2273
    %v2275 = vlaneseq
    %v2276 = vshrl.u32 %v2275, 7
    %v2277 = vsub.s32 %v2274, %v2276
    %v2278 = vrot.slane %v2263, %v2277
    %v2280 = vunpack.c.l.s4 1934713408
    %v2281 = vunpack.c.0.s8 %v2280
    %v2282 = vlaneseq
    %v2283 = vshrl.u32 %v2282, 7
    %v2284 = vsub.s32 %v2281, %v2283
    %v2285 = vrot.slane %v2271, %v2284
    %v2286 = vcombine.high %v2270, 0.0
    %v2288 = vunpack.c.l.s4 1934713408
    %v2289 = vunpack.c.0.s8 %v2288
    %v2290 = vlaneseq
    %v2291 = vshrl.u32 %v2290, 7
    %v2292 = vsub.s32 %v2289, %v2291
    %v2293 = vrot.slane %v2270, %v2292
    %v2295 = vunpack.c.l.s4 1934713408
    %v2296 = vunpack.c.0.s8 %v2295
    %v2297 = vlaneseq
    %v2298 = vshrl.u32 %v2297, 7
    %v2299 = vsub.s32 %v2296, %v2298
    %v2300 = vrot.slane %v2286, %v2299
    %v2301 = vcombine.high %v2278, 0.0
    %v2302 = vcombine.high %v2285, 0.0
    %v2303 = vcombine.high %v2293, 0.0
    %v2304 = vcombine.high %v2300, 0.0
    %2307 = vrot.lane.b32.xlu0 %v2154, 16
    %v2308 = vpop.permute.xlu0 %2307
    %2309 = vrot.lane.b32.xlu0 %v2252, 16
    %v2310 = vpop.permute.xlu0 %2309
    %2315 = vrot.lane.b32.xlu0 %v2138, 32
    %v2316 = vpop.permute.xlu0 %2315
    %2317 = vrot.lane.b32.xlu0 %v2236, 32
    %v2318 = vpop.permute.xlu0 %2317
    %2323 = vrot.lane.b32.xlu0 %v2155, 48
    %v2324 = vpop.permute.xlu0 %2323
    %2325 = vrot.lane.b32.xlu0 %v2253, 48
    %v2326 = vpop.permute.xlu0 %2325
    %2331 = vrot.lane.b32.xlu0 %v2146, 64
    %v2332 = vpop.permute.xlu0 %2331
    %2333 = vrot.lane.b32.xlu0 %v2244, 64
    %v2334 = vpop.permute.xlu0 %2333
    %2339 = vrot.lane.b32.xlu0 %v2156, 80
    %v2340 = vpop.permute.xlu0 %2339
    %2341 = vrot.lane.b32.xlu0 %v2254, 80
    %v2342 = vpop.permute.xlu0 %2341
    %2347 = vrot.lane.b32.xlu0 %v2153, 96
    %v2348 = vpop.permute.xlu0 %2347
    %2349 = vrot.lane.b32.xlu0 %v2251, 96
    %v2350 = vpop.permute.xlu0 %2349
    %2355 = vrot.lane.b32.xlu0 %v2157, 112
    %v2356 = vpop.permute.xlu0 %2355
    %2357 = vrot.lane.b32.xlu0 %v2255, 112
    %v2358 = vpop.permute.xlu0 %2357
    %2363 = vrot.lane.b32.xlu0 %v2203, 16
    %v2364 = vpop.permute.xlu0 %2363
    %2365 = vrot.lane.b32.xlu0 %v2301, 16
    %v2366 = vpop.permute.xlu0 %2365
    %2371 = vrot.lane.b32.xlu0 %v2187, 32
    %v2372 = vpop.permute.xlu0 %2371
    %2373 = vrot.lane.b32.xlu0 %v2285, 32
    %v2374 = vpop.permute.xlu0 %2373
    %2379 = vrot.lane.b32.xlu0 %v2204, 48
    %v2380 = vpop.permute.xlu0 %2379
    %2381 = vrot.lane.b32.xlu0 %v2302, 48
    %v2382 = vpop.permute.xlu0 %2381
    %2387 = vrot.lane.b32.xlu0 %v2195, 64
    %v2388 = vpop.permute.xlu0 %2387
    %2389 = vrot.lane.b32.xlu0 %v2293, 64
    %v2390 = vpop.permute.xlu0 %2389
    %2395 = vrot.lane.b32.xlu0 %v2205, 80
    %v2396 = vpop.permute.xlu0 %2395
    %2397 = vrot.lane.b32.xlu0 %v2303, 80
    %v2398 = vpop.permute.xlu0 %2397
    %2403 = vrot.lane.b32.xlu0 %v2202, 96
    %v2404 = vpop.permute.xlu0 %2403
    %2405 = vrot.lane.b32.xlu0 %v2300, 96
    %v2406 = vpop.permute.xlu0 %2405
    %2411 = vrot.lane.b32.xlu0 %v2206, 112
    %v2412 = vpop.permute.xlu0 %2411
    %2413 = vrot.lane.b32.xlu0 %v2304, 112
    %v2414 = vpop.permute.xlu0 %2413
    %v2417 = vsel %vm1229, %v2131, %v2308
    %v2418 = vsel %vm1229, %v2229, %v2310
    %v2419 = vsel %vm1232, %v2417, %v2316
    %v2420 = vsel %vm1232, %v2418, %v2318
    %v2421 = vsel %vm1235, %v2419, %v2324
    %v2422 = vsel %vm1235, %v2420, %v2326
    %v2423 = vsel %vm1238, %v2421, %v2332
    %v2424 = vsel %vm1238, %v2422, %v2334
    %v2425 = vsel %vm1241, %v2423, %v2340
    %v2426 = vsel %vm1241, %v2424, %v2342
    %v2427 = vsel %vm1244, %v2425, %v2348
    %v2428 = vsel %vm1244, %v2426, %v2350
    %v2429 = vsel %vm1247, %v2427, %v2356
    %v2430 = vsel %vm1247, %v2428, %v2358
    %v2431 = vsel %vm1229, %v2180, %v2364
    %v2432 = vsel %vm1229, %v2278, %v2366
    %v2433 = vsel %vm1232, %v2431, %v2372
    %v2434 = vsel %vm1232, %v2432, %v2374
    %v2435 = vsel %vm1235, %v2433, %v2380
    %v2436 = vsel %vm1235, %v2434, %v2382
    %v2437 = vsel %vm1238, %v2435, %v2388
    %v2438 = vsel %vm1238, %v2436, %v2390
    %v2439 = vsel %vm1241, %v2437, %v2396
    %v2440 = vsel %vm1241, %v2438, %v2398
    %v2441 = vsel %vm1244, %v2439, %v2404
    %v2442 = vsel %vm1244, %v2440, %v2406
    %v2443 = vsel %vm1247, %v2441, %v2412
    %v2444 = vsel %vm1247, %v2442, %v2414
    %v2449 = vcombine.low %v2429, %v2443
    %v2451 = vunpack.c.l.s4 1966171168
    %v2452 = vunpack.c.0.s8 %v2451
    %v2453 = vlaneseq
    %v2454 = vshrl.u32 %v2453, 7
    %v2455 = vsub.s32 %v2452, %v2454
    %v2456 = vrot.slane %v2449, %v2455
    %v2458 = vunpack.c.l.s4 1966171168
    %v2459 = vunpack.c.0.s8 %v2458
    %v2460 = vlaneseq
    %v2461 = vshrl.u32 %v2460, 7
    %v2462 = vsub.s32 %v2459, %v2461
    %v2463 = vrot.slane %v2456, %v2462
    %v2464 = vcombine.low %v2430, %v2444
    %v2466 = vunpack.c.l.s4 1966171168
    %v2467 = vunpack.c.0.s8 %v2466
    %v2468 = vlaneseq
    %v2469 = vshrl.u32 %v2468, 7
    %v2470 = vsub.s32 %v2467, %v2469
    %v2471 = vrot.slane %v2464, %v2470
    %v2473 = vunpack.c.l.s4 1966171168
    %v2474 = vunpack.c.0.s8 %v2473
    %v2475 = vlaneseq
    %v2476 = vshrl.u32 %v2475, 7
    %v2477 = vsub.s32 %v2474, %v2476
    %v2478 = vrot.slane %v2471, %v2477
    %s2481 = scalar_lea.vmem [#allocation8], 2
    %2482 = vst.msk [vmem:[%s2481] ss:$8 sm:$0x3] %vm1303, %v2463
    %2483 = vst.msk [vmem:[%s2481] ss:$8 sm:$0x0] %vm1303, %v2463
    %s2484 = scalar_lea.vmem [#allocation8], 34
    %2485 = vst.msk [vmem:[%s2484] ss:$8 sm:$0x3] %vm1303, %v2478
    %2486 = vst.msk [vmem:[%s2484] ss:$8 sm:$0x0] %vm1303, %v2478
    %s2487 = scalar_lea.vmem [#allocation2], 96
    %v2488 = vld [vmem:[%s2487 + $0x5] sm:$0xff]
    %v2489 = vld [vmem:[%s2487 + $0xd] sm:$0xff]
    %v2490 = vld [vmem:[%s2487 + $0x85] sm:$0xff]
    %v2491 = vld [vmem:[%s2487 + $0x8d] sm:$0xff]
    %s2492 = sld [smem:[#allocation7 + $0x1b]]
    %v2493 = vstv %s2492
    %v2494 = vmul.f32 %v2488, %v2493
    %v2495 = vmul.f32 %v2489, %v2493
    %v2496 = vmul.f32 %v2490, %v2493
    %v2497 = vmul.f32 %v2491, %v2493
    %s2498 = sld [smem:[#allocation7 + $0x1c]]
    %v2499 = vstv %s2498
    %v2500 = vmul.f32 %v2488, %v2499
    %v2501 = vmul.f32 %v2489, %v2499
    %v2502 = vmul.f32 %v2490, %v2499
    %v2503 = vmul.f32 %v2491, %v2499
    %2508 = vrot.lane.b32.xlu0 %v2500, 127
    %v2509 = vpop.permute.xlu0 %2508
    %2510 = vrot.lane.b32.xlu0 %v2501, 127
    %v2511 = vpop.permute.xlu0 %2510
    %2512 = vrot.lane.b32.xlu0 %v2502, 127
    %v2513 = vpop.permute.xlu0 %2512
    %2514 = vrot.lane.b32.xlu0 %v2503, 127
    %v2515 = vpop.permute.xlu0 %2514
    %v2520 = vadd.f32 %v2494, %v2509
    %v2521 = vadd.f32 %v2495, %v2511
    %v2522 = vadd.f32 %v2496, %v2513
    %v2523 = vadd.f32 %v2497, %v2515
    %s2524 = sld [smem:[#allocation7 + $0x1d]]
    %v2525 = vstv %s2524
    %v2526 = vmul.f32 %v2488, %v2525
    %v2527 = vmul.f32 %v2489, %v2525
    %v2528 = vmul.f32 %v2490, %v2525
    %v2529 = vmul.f32 %v2491, %v2525
    %2534 = vrot.lane.b32.xlu0 %v2526, 126
    %v2535 = vpop.permute.xlu0 %2534
    %2536 = vrot.lane.b32.xlu0 %v2527, 126
    %v2537 = vpop.permute.xlu0 %2536
    %2538 = vrot.lane.b32.xlu0 %v2528, 126
    %v2539 = vpop.permute.xlu0 %2538
    %2540 = vrot.lane.b32.xlu0 %v2529, 126
    %v2541 = vpop.permute.xlu0 %2540
    %v2546 = vadd.f32 %v2520, %v2535
    %v2547 = vadd.f32 %v2521, %v2537
    %v2548 = vadd.f32 %v2522, %v2539
    %v2549 = vadd.f32 %v2523, %v2541
    %v2550 = vld [vmem:[%s2487 + $0x6] sm:$0xff]
    %v2551 = vld [vmem:[%s2487 + $0xe] sm:$0xff]
    %v2552 = vld [vmem:[%s2487 + $0x86] sm:$0xff]
    %v2553 = vld [vmem:[%s2487 + $0x8e] sm:$0xff]
    %s2554 = sld [smem:[#allocation7 + $0x1e]]
    %v2555 = vstv %s2554
    %v2556 = vmul.f32 %v2550, %v2555
    %v2557 = vmul.f32 %v2551, %v2555
    %v2558 = vmul.f32 %v2552, %v2555
    %v2559 = vmul.f32 %v2553, %v2555
    %v2560 = vadd.f32 %v2546, %v2556
    %v2561 = vadd.f32 %v2547, %v2557
    %v2562 = vadd.f32 %v2548, %v2558
    %v2563 = vadd.f32 %v2549, %v2559
    %s2564 = sld [smem:[#allocation7 + $0x1f]]
    %v2565 = vstv %s2564
    %v2566 = vmul.f32 %v2550, %v2565
    %v2567 = vmul.f32 %v2551, %v2565
    %v2568 = vmul.f32 %v2552, %v2565
    %v2569 = vmul.f32 %v2553, %v2565
    %2574 = vrot.lane.b32.xlu0 %v2566, 127
    %v2575 = vpop.permute.xlu0 %2574
    %2576 = vrot.lane.b32.xlu0 %v2567, 127
    %v2577 = vpop.permute.xlu0 %2576
    %2578 = vrot.lane.b32.xlu0 %v2568, 127
    %v2579 = vpop.permute.xlu0 %2578
    %2580 = vrot.lane.b32.xlu0 %v2569, 127
    %v2581 = vpop.permute.xlu0 %2580
    %v2586 = vadd.f32 %v2560, %v2575
    %v2587 = vadd.f32 %v2561, %v2577
    %v2588 = vadd.f32 %v2562, %v2579
    %v2589 = vadd.f32 %v2563, %v2581
    %s2590 = sld [smem:[#allocation7 + $0x20]]
    %v2591 = vstv %s2590
    %v2592 = vmul.f32 %v2550, %v2591
    %v2593 = vmul.f32 %v2551, %v2591
    %v2594 = vmul.f32 %v2552, %v2591
    %v2595 = vmul.f32 %v2553, %v2591
    %2600 = vrot.lane.b32.xlu0 %v2592, 126
    %v2601 = vpop.permute.xlu0 %2600
    %2602 = vrot.lane.b32.xlu0 %v2593, 126
    %v2603 = vpop.permute.xlu0 %2602
    %2604 = vrot.lane.b32.xlu0 %v2594, 126
    %v2605 = vpop.permute.xlu0 %2604
    %2606 = vrot.lane.b32.xlu0 %v2595, 126
    %v2607 = vpop.permute.xlu0 %2606
    %v2612 = vadd.f32 %v2586, %v2601
    %v2613 = vadd.f32 %v2587, %v2603
    %v2614 = vadd.f32 %v2588, %v2605
    %v2615 = vadd.f32 %v2589, %v2607
    %v2616 = vld [vmem:[%s2487 + $0x7] sm:$0xff]
    %v2617 = vld [vmem:[%s2487 + $0xf] sm:$0xff]
    %v2618 = vld [vmem:[%s2487 + $0x87] sm:$0xff]
    %v2619 = vld [vmem:[%s2487 + $0x8f] sm:$0xff]
    %s2620 = sld [smem:[#allocation7 + $0x21]]
    %v2621 = vstv %s2620
    %v2622 = vmul.f32 %v2616, %v2621
    %v2623 = vmul.f32 %v2617, %v2621
    %v2624 = vmul.f32 %v2618, %v2621
    %v2625 = vmul.f32 %v2619, %v2621
    %v2626 = vadd.f32 %v2612, %v2622
    %v2627 = vadd.f32 %v2613, %v2623
    %v2628 = vadd.f32 %v2614, %v2624
    %v2629 = vadd.f32 %v2615, %v2625
    %s2630 = sld [smem:[#allocation7 + $0x22]]
    %v2631 = vstv %s2630
    %v2632 = vmul.f32 %v2616, %v2631
    %v2633 = vmul.f32 %v2617, %v2631
    %v2634 = vmul.f32 %v2618, %v2631
    %v2635 = vmul.f32 %v2619, %v2631
    %2640 = vrot.lane.b32.xlu0 %v2632, 127
    %v2641 = vpop.permute.xlu0 %2640
    %2642 = vrot.lane.b32.xlu0 %v2633, 127
    %v2643 = vpop.permute.xlu0 %2642
    %2644 = vrot.lane.b32.xlu0 %v2634, 127
    %v2645 = vpop.permute.xlu0 %2644
    %2646 = vrot.lane.b32.xlu0 %v2635, 127
    %v2647 = vpop.permute.xlu0 %2646
    %v2652 = vadd.f32 %v2626, %v2641
    %v2653 = vadd.f32 %v2627, %v2643
    %v2654 = vadd.f32 %v2628, %v2645
    %v2655 = vadd.f32 %v2629, %v2647
    %s2656 = sld [smem:[#allocation7 + $0x23]]
    %v2657 = vstv %s2656
    %v2658 = vmul.f32 %v2616, %v2657
    %v2659 = vmul.f32 %v2617, %v2657
    %v2660 = vmul.f32 %v2618, %v2657
    %v2661 = vmul.f32 %v2619, %v2657
    %2666 = vrot.lane.b32.xlu0 %v2658, 126
    %v2667 = vpop.permute.xlu0 %2666
    %2668 = vrot.lane.b32.xlu0 %v2659, 126
    %v2669 = vpop.permute.xlu0 %2668
    %2670 = vrot.lane.b32.xlu0 %v2660, 126
    %v2671 = vpop.permute.xlu0 %2670
    %2672 = vrot.lane.b32.xlu0 %v2661, 126
    %v2673 = vpop.permute.xlu0 %2672
    %v2678 = vadd.f32 %v2652, %v2667
    %v2679 = vadd.f32 %v2653, %v2669
    %v2680 = vadd.f32 %v2654, %v2671
    %v2681 = vadd.f32 %v2655, %v2673
    %2686 = vrot.lane.b32.xlu0 %v2678, 123
    %v2687 = vpop.permute.xlu0 %2686
    %2688 = vrot.lane.b32.xlu0 %v2679, 123
    %v2689 = vpop.permute.xlu0 %2688
    %2690 = vrot.lane.b32.xlu0 %v2680, 123
    %v2691 = vpop.permute.xlu0 %2690
    %2692 = vrot.lane.b32.xlu0 %v2681, 123
    %v2693 = vpop.permute.xlu0 %2692
    %v2698 = vcombine.high %v2687, 0.0
    %v2700 = vunpack.c.l.s4 1983009808
    %v2701 = vunpack.c.0.s8 %v2700
    %v2702 = vlaneseq
    %v2703 = vshrl.u32 %v2702, 7
    %v2704 = vsub.s32 %v2701, %v2703
    %v2705 = vrot.slane %v2687, %v2704
    %v2707 = vunpack.c.l.s4 1983009808
    %v2708 = vunpack.c.0.s8 %v2707
    %v2709 = vlaneseq
    %v2710 = vshrl.u32 %v2709, 7
    %v2711 = vsub.s32 %v2708, %v2710
    %v2712 = vrot.slane %v2698, %v2711
    %v2713 = vcombine.high %v2705, 0.0
    %v2715 = vunpack.c.l.s4 1934713408
    %v2716 = vunpack.c.0.s8 %v2715
    %v2717 = vlaneseq
    %v2718 = vshrl.u32 %v2717, 7
    %v2719 = vsub.s32 %v2716, %v2718
    %v2720 = vrot.slane %v2705, %v2719
    %v2722 = vunpack.c.l.s4 1934713408
    %v2723 = vunpack.c.0.s8 %v2722
    %v2724 = vlaneseq
    %v2725 = vshrl.u32 %v2724, 7
    %v2726 = vsub.s32 %v2723, %v2725
    %v2727 = vrot.slane %v2713, %v2726
    %v2728 = vcombine.high %v2712, 0.0
    %v2730 = vunpack.c.l.s4 1934713408
    %v2731 = vunpack.c.0.s8 %v2730
    %v2732 = vlaneseq
    %v2733 = vshrl.u32 %v2732, 7
    %v2734 = vsub.s32 %v2731, %v2733
    %v2735 = vrot.slane %v2712, %v2734
    %v2737 = vunpack.c.l.s4 1934713408
    %v2738 = vunpack.c.0.s8 %v2737
    %v2739 = vlaneseq
    %v2740 = vshrl.u32 %v2739, 7
    %v2741 = vsub.s32 %v2738, %v2740
    %v2742 = vrot.slane %v2728, %v2741
    %v2743 = vcombine.high %v2720, 0.0
    %v2744 = vcombine.high %v2727, 0.0
    %v2745 = vcombine.high %v2735, 0.0
    %v2746 = vcombine.high %v2742, 0.0
    %v2747 = vcombine.high %v2689, 0.0
    %v2749 = vunpack.c.l.s4 1983009808
    %v2750 = vunpack.c.0.s8 %v2749
    %v2751 = vlaneseq
    %v2752 = vshrl.u32 %v2751, 7
    %v2753 = vsub.s32 %v2750, %v2752
    %v2754 = vrot.slane %v2689, %v2753
    %v2756 = vunpack.c.l.s4 1983009808
    %v2757 = vunpack.c.0.s8 %v2756
    %v2758 = vlaneseq
    %v2759 = vshrl.u32 %v2758, 7
    %v2760 = vsub.s32 %v2757, %v2759
    %v2761 = vrot.slane %v2747, %v2760
    %v2762 = vcombine.high %v2754, 0.0
    %v2764 = vunpack.c.l.s4 1934713408
    %v2765 = vunpack.c.0.s8 %v2764
    %v2766 = vlaneseq
    %v2767 = vshrl.u32 %v2766, 7
    %v2768 = vsub.s32 %v2765, %v2767
    %v2769 = vrot.slane %v2754, %v2768
    %v2771 = vunpack.c.l.s4 1934713408
    %v2772 = vunpack.c.0.s8 %v2771
    %v2773 = vlaneseq
    %v2774 = vshrl.u32 %v2773, 7
    %v2775 = vsub.s32 %v2772, %v2774
    %v2776 = vrot.slane %v2762, %v2775
    %v2777 = vcombine.high %v2761, 0.0
    %v2779 = vunpack.c.l.s4 1934713408
    %v2780 = vunpack.c.0.s8 %v2779
    %v2781 = vlaneseq
    %v2782 = vshrl.u32 %v2781, 7
    %v2783 = vsub.s32 %v2780, %v2782
    %v2784 = vrot.slane %v2761, %v2783
    %v2786 = vunpack.c.l.s4 1934713408
    %v2787 = vunpack.c.0.s8 %v2786
    %v2788 = vlaneseq
    %v2789 = vshrl.u32 %v2788, 7
    %v2790 = vsub.s32 %v2787, %v2789
    %v2791 = vrot.slane %v2777, %v2790
    %v2792 = vcombine.high %v2769, 0.0
    %v2793 = vcombine.high %v2776, 0.0
    %v2794 = vcombine.high %v2784, 0.0
    %v2795 = vcombine.high %v2791, 0.0
    %v2796 = vcombine.high %v2691, 0.0
    %v2798 = vunpack.c.l.s4 1983009808
    %v2799 = vunpack.c.0.s8 %v2798
    %v2800 = vlaneseq
    %v2801 = vshrl.u32 %v2800, 7
    %v2802 = vsub.s32 %v2799, %v2801
    %v2803 = vrot.slane %v2691, %v2802
    %v2805 = vunpack.c.l.s4 1983009808
    %v2806 = vunpack.c.0.s8 %v2805
    %v2807 = vlaneseq
    %v2808 = vshrl.u32 %v2807, 7
    %v2809 = vsub.s32 %v2806, %v2808
    %v2810 = vrot.slane %v2796, %v2809
    %v2811 = vcombine.high %v2803, 0.0
    %v2813 = vunpack.c.l.s4 1934713408
    %v2814 = vunpack.c.0.s8 %v2813
    %v2815 = vlaneseq
    %v2816 = vshrl.u32 %v2815, 7
    %v2817 = vsub.s32 %v2814, %v2816
    %v2818 = vrot.slane %v2803, %v2817
    %v2820 = vunpack.c.l.s4 1934713408
    %v2821 = vunpack.c.0.s8 %v2820
    %v2822 = vlaneseq
    %v2823 = vshrl.u32 %v2822, 7
    %v2824 = vsub.s32 %v2821, %v2823
    %v2825 = vrot.slane %v2811, %v2824
    %v2826 = vcombine.high %v2810, 0.0
    %v2828 = vunpack.c.l.s4 1934713408
    %v2829 = vunpack.c.0.s8 %v2828
    %v2830 = vlaneseq
    %v2831 = vshrl.u32 %v2830, 7
    %v2832 = vsub.s32 %v2829, %v2831
    %v2833 = vrot.slane %v2810, %v2832
    %v2835 = vunpack.c.l.s4 1934713408
    %v2836 = vunpack.c.0.s8 %v2835
    %v2837 = vlaneseq
    %v2838 = vshrl.u32 %v2837, 7
    %v2839 = vsub.s32 %v2836, %v2838
    %v2840 = vrot.slane %v2826, %v2839
    %v2841 = vcombine.high %v2818, 0.0
    %v2842 = vcombine.high %v2825, 0.0
    %v2843 = vcombine.high %v2833, 0.0
    %v2844 = vcombine.high %v2840, 0.0
    %v2845 = vcombine.high %v2693, 0.0
    %v2847 = vunpack.c.l.s4 1983009808
    %v2848 = vunpack.c.0.s8 %v2847
    %v2849 = vlaneseq
    %v2850 = vshrl.u32 %v2849, 7
    %v2851 = vsub.s32 %v2848, %v2850
    %v2852 = vrot.slane %v2693, %v2851
    %v2854 = vunpack.c.l.s4 1983009808
    %v2855 = vunpack.c.0.s8 %v2854
    %v2856 = vlaneseq
    %v2857 = vshrl.u32 %v2856, 7
    %v2858 = vsub.s32 %v2855, %v2857
    %v2859 = vrot.slane %v2845, %v2858
    %v2860 = vcombine.high %v2852, 0.0
    %v2862 = vunpack.c.l.s4 1934713408
    %v2863 = vunpack.c.0.s8 %v2862
    %v2864 = vlaneseq
    %v2865 = vshrl.u32 %v2864, 7
    %v2866 = vsub.s32 %v2863, %v2865
    %v2867 = vrot.slane %v2852, %v2866
    %v2869 = vunpack.c.l.s4 1934713408
    %v2870 = vunpack.c.0.s8 %v2869
    %v2871 = vlaneseq
    %v2872 = vshrl.u32 %v2871, 7
    %v2873 = vsub.s32 %v2870, %v2872
    %v2874 = vrot.slane %v2860, %v2873
    %v2875 = vcombine.high %v2859, 0.0
    %v2877 = vunpack.c.l.s4 1934713408
    %v2878 = vunpack.c.0.s8 %v2877
    %v2879 = vlaneseq
    %v2880 = vshrl.u32 %v2879, 7
    %v2881 = vsub.s32 %v2878, %v2880
    %v2882 = vrot.slane %v2859, %v2881
    %v2884 = vunpack.c.l.s4 1934713408
    %v2885 = vunpack.c.0.s8 %v2884
    %v2886 = vlaneseq
    %v2887 = vshrl.u32 %v2886, 7
    %v2888 = vsub.s32 %v2885, %v2887
    %v2889 = vrot.slane %v2875, %v2888
    %v2890 = vcombine.high %v2867, 0.0
    %v2891 = vcombine.high %v2874, 0.0
    %v2892 = vcombine.high %v2882, 0.0
    %v2893 = vcombine.high %v2889, 0.0
    %2896 = vrot.lane.b32.xlu0 %v2743, 16
    %v2897 = vpop.permute.xlu0 %2896
    %2898 = vrot.lane.b32.xlu0 %v2841, 16
    %v2899 = vpop.permute.xlu0 %2898
    %2904 = vrot.lane.b32.xlu0 %v2727, 32
    %v2905 = vpop.permute.xlu0 %2904
    %2906 = vrot.lane.b32.xlu0 %v2825, 32
    %v2907 = vpop.permute.xlu0 %2906
    %2912 = vrot.lane.b32.xlu0 %v2744, 48
    %v2913 = vpop.permute.xlu0 %2912
    %2914 = vrot.lane.b32.xlu0 %v2842, 48
    %v2915 = vpop.permute.xlu0 %2914
    %2920 = vrot.lane.b32.xlu0 %v2735, 64
    %v2921 = vpop.permute.xlu0 %2920
    %2922 = vrot.lane.b32.xlu0 %v2833, 64
    %v2923 = vpop.permute.xlu0 %2922
    %2928 = vrot.lane.b32.xlu0 %v2745, 80
    %v2929 = vpop.permute.xlu0 %2928
    %2930 = vrot.lane.b32.xlu0 %v2843, 80
    %v2931 = vpop.permute.xlu0 %2930
    %2936 = vrot.lane.b32.xlu0 %v2742, 96
    %v2937 = vpop.permute.xlu0 %2936
    %2938 = vrot.lane.b32.xlu0 %v2840, 96
    %v2939 = vpop.permute.xlu0 %2938
    %2944 = vrot.lane.b32.xlu0 %v2746, 112
    %v2945 = vpop.permute.xlu0 %2944
    %2946 = vrot.lane.b32.xlu0 %v2844, 112
    %v2947 = vpop.permute.xlu0 %2946
    %2952 = vrot.lane.b32.xlu0 %v2792, 16
    %v2953 = vpop.permute.xlu0 %2952
    %2954 = vrot.lane.b32.xlu0 %v2890, 16
    %v2955 = vpop.permute.xlu0 %2954
    %2960 = vrot.lane.b32.xlu0 %v2776, 32
    %v2961 = vpop.permute.xlu0 %2960
    %2962 = vrot.lane.b32.xlu0 %v2874, 32
    %v2963 = vpop.permute.xlu0 %2962
    %2968 = vrot.lane.b32.xlu0 %v2793, 48
    %v2969 = vpop.permute.xlu0 %2968
    %2970 = vrot.lane.b32.xlu0 %v2891, 48
    %v2971 = vpop.permute.xlu0 %2970
    %2976 = vrot.lane.b32.xlu0 %v2784, 64
    %v2977 = vpop.permute.xlu0 %2976
    %2978 = vrot.lane.b32.xlu0 %v2882, 64
    %v2979 = vpop.permute.xlu0 %2978
    %2984 = vrot.lane.b32.xlu0 %v2794, 80
    %v2985 = vpop.permute.xlu0 %2984
    %2986 = vrot.lane.b32.xlu0 %v2892, 80
    %v2987 = vpop.permute.xlu0 %2986
    %2992 = vrot.lane.b32.xlu0 %v2791, 96
    %v2993 = vpop.permute.xlu0 %2992
    %2994 = vrot.lane.b32.xlu0 %v2889, 96
    %v2995 = vpop.permute.xlu0 %2994
    %3000 = vrot.lane.b32.xlu0 %v2795, 112
    %v3001 = vpop.permute.xlu0 %3000
    %3002 = vrot.lane.b32.xlu0 %v2893, 112
    %v3003 = vpop.permute.xlu0 %3002
    %v3006 = vsel %vm1229, %v2720, %v2897
    %v3007 = vsel %vm1229, %v2818, %v2899
    %v3008 = vsel %vm1232, %v3006, %v2905
    %v3009 = vsel %vm1232, %v3007, %v2907
    %v3010 = vsel %vm1235, %v3008, %v2913
    %v3011 = vsel %vm1235, %v3009, %v2915
    %v3012 = vsel %vm1238, %v3010, %v2921
    %v3013 = vsel %vm1238, %v3011, %v2923
    %v3014 = vsel %vm1241, %v3012, %v2929
    %v3015 = vsel %vm1241, %v3013, %v2931
    %v3016 = vsel %vm1244, %v3014, %v2937
    %v3017 = vsel %vm1244, %v3015, %v2939
    %v3018 = vsel %vm1247, %v3016, %v2945
    %v3019 = vsel %vm1247, %v3017, %v2947
    %v3020 = vsel %vm1229, %v2769, %v2953
    %v3021 = vsel %vm1229, %v2867, %v2955
    %v3022 = vsel %vm1232, %v3020, %v2961
    %v3023 = vsel %vm1232, %v3021, %v2963
    %v3024 = vsel %vm1235, %v3022, %v2969
    %v3025 = vsel %vm1235, %v3023, %v2971
    %v3026 = vsel %vm1238, %v3024, %v2977
    %v3027 = vsel %vm1238, %v3025, %v2979
    %v3028 = vsel %vm1241, %v3026, %v2985
    %v3029 = vsel %vm1241, %v3027, %v2987
    %v3030 = vsel %vm1244, %v3028, %v2993
    %v3031 = vsel %vm1244, %v3029, %v2995
    %v3032 = vsel %vm1247, %v3030, %v3001
    %v3033 = vsel %vm1247, %v3031, %v3003
    %v3038 = vcombine.low %v3018, %v3032
    %v3040 = vunpack.c.l.s4 1966171168
    %v3041 = vunpack.c.0.s8 %v3040
    %v3042 = vlaneseq
    %v3043 = vshrl.u32 %v3042, 7
    %v3044 = vsub.s32 %v3041, %v3043
    %v3045 = vrot.slane %v3038, %v3044
    %v3047 = vunpack.c.l.s4 1966171168
    %v3048 = vunpack.c.0.s8 %v3047
    %v3049 = vlaneseq
    %v3050 = vshrl.u32 %v3049, 7
    %v3051 = vsub.s32 %v3048, %v3050
    %v3052 = vrot.slane %v3045, %v3051
    %v3053 = vcombine.low %v3019, %v3033
    %v3055 = vunpack.c.l.s4 1966171168
    %v3056 = vunpack.c.0.s8 %v3055
    %v3057 = vlaneseq
    %v3058 = vshrl.u32 %v3057, 7
    %v3059 = vsub.s32 %v3056, %v3058
    %v3060 = vrot.slane %v3053, %v3059
    %v3062 = vunpack.c.l.s4 1966171168
    %v3063 = vunpack.c.0.s8 %v3062
    %v3064 = vlaneseq
    %v3065 = vshrl.u32 %v3064, 7
    %v3066 = vsub.s32 %v3063, %v3065
    %v3067 = vrot.slane %v3060, %v3066
    %s3070 = scalar_lea.vmem [#allocation8], 3
    %3071 = vst.msk [vmem:[%s3070] ss:$8 sm:$0x3] %vm1303, %v3052
    %3072 = vst.msk [vmem:[%s3070] ss:$8 sm:$0x0] %vm1303, %v3052
    %s3073 = scalar_lea.vmem [#allocation8], 35
    %3074 = vst.msk [vmem:[%s3073] ss:$8 sm:$0x3] %vm1303, %v3067
    %3075 = vst.msk [vmem:[%s3073] ss:$8 sm:$0x0] %vm1303, %v3067
    %v3076 = vld [vmem:[#allocation2 + $0x4] sm:$0xff]
    %v3077 = vld [vmem:[#allocation2 + $0xc] sm:$0xff]
    %v3078 = vld [vmem:[#allocation2 + $0x84] sm:$0xff]
    %v3079 = vld [vmem:[#allocation2 + $0x8c] sm:$0xff]
    %s3080 = sld [smem:[#allocation7 + $0x24]]
    %v3081 = vstv %s3080
    %v3082 = vmul.f32 %v3076, %v3081
    %v3083 = vmul.f32 %v3077, %v3081
    %v3084 = vmul.f32 %v3078, %v3081
    %v3085 = vmul.f32 %v3079, %v3081
    %s3086 = sld [smem:[#allocation7 + $0x25]]
    %v3087 = vstv %s3086
    %v3088 = vmul.f32 %v3076, %v3087
    %v3089 = vmul.f32 %v3077, %v3087
    %v3090 = vmul.f32 %v3078, %v3087
    %v3091 = vmul.f32 %v3079, %v3087
    %3096 = vrot.lane.b32.xlu0 %v3088, 126
    %v3097 = vpop.permute.xlu0 %3096
    %3098 = vrot.lane.b32.xlu0 %v3089, 126
    %v3099 = vpop.permute.xlu0 %3098
    %3100 = vrot.lane.b32.xlu0 %v3090, 126
    %v3101 = vpop.permute.xlu0 %3100
    %3102 = vrot.lane.b32.xlu0 %v3091, 126
    %v3103 = vpop.permute.xlu0 %3102
    %v3108 = vadd.f32 %v3082, %v3097
    %v3109 = vadd.f32 %v3083, %v3099
    %v3110 = vadd.f32 %v3084, %v3101
    %v3111 = vadd.f32 %v3085, %v3103
    %s3112 = sld [smem:[#allocation7 + $0x26]]
    %v3113 = vstv %s3112
    %v3114 = vmul.f32 %v3076, %v3113
    %v3115 = vmul.f32 %v3077, %v3113
    %v3116 = vmul.f32 %v3078, %v3113
    %v3117 = vmul.f32 %v3079, %v3113
    %3122 = vrot.lane.b32.xlu0 %v3114, 124
    %v3123 = vpop.permute.xlu0 %3122
    %3124 = vrot.lane.b32.xlu0 %v3115, 124
    %v3125 = vpop.permute.xlu0 %3124
    %3126 = vrot.lane.b32.xlu0 %v3116, 124
    %v3127 = vpop.permute.xlu0 %3126
    %3128 = vrot.lane.b32.xlu0 %v3117, 124
    %v3129 = vpop.permute.xlu0 %3128
    %v3134 = vadd.f32 %v3108, %v3123
    %v3135 = vadd.f32 %v3109, %v3125
    %v3136 = vadd.f32 %v3110, %v3127
    %v3137 = vadd.f32 %v3111, %v3129
    %v3138 = vld [vmem:[#allocation2 + $0x6] sm:$0xff]
    %v3139 = vld [vmem:[#allocation2 + $0xe] sm:$0xff]
    %v3140 = vld [vmem:[#allocation2 + $0x86] sm:$0xff]
    %v3141 = vld [vmem:[#allocation2 + $0x8e] sm:$0xff]
    %s3142 = sld [smem:[#allocation7 + $0x27]]
    %v3143 = vstv %s3142
    %v3144 = vmul.f32 %v3138, %v3143
    %v3145 = vmul.f32 %v3139, %v3143
    %v3146 = vmul.f32 %v3140, %v3143
    %v3147 = vmul.f32 %v3141, %v3143
    %v3148 = vadd.f32 %v3134, %v3144
    %v3149 = vadd.f32 %v3135, %v3145
    %v3150 = vadd.f32 %v3136, %v3146
    %v3151 = vadd.f32 %v3137, %v3147
    %s3152 = sld [smem:[#allocation7 + $0x28]]
    %v3153 = vstv %s3152
    %v3154 = vmul.f32 %v3138, %v3153
    %v3155 = vmul.f32 %v3139, %v3153
    %v3156 = vmul.f32 %v3140, %v3153
    %v3157 = vmul.f32 %v3141, %v3153
    %3162 = vrot.lane.b32.xlu0 %v3154, 126
    %v3163 = vpop.permute.xlu0 %3162
    %3164 = vrot.lane.b32.xlu0 %v3155, 126
    %v3165 = vpop.permute.xlu0 %3164
    %3166 = vrot.lane.b32.xlu0 %v3156, 126
    %v3167 = vpop.permute.xlu0 %3166
    %3168 = vrot.lane.b32.xlu0 %v3157, 126
    %v3169 = vpop.permute.xlu0 %3168
    %v3174 = vadd.f32 %v3148, %v3163
    %v3175 = vadd.f32 %v3149, %v3165
    %v3176 = vadd.f32 %v3150, %v3167
    %v3177 = vadd.f32 %v3151, %v3169
    %s3178 = sld [smem:[#allocation7 + $0x29]]
    %v3179 = vstv %s3178
    %v3180 = vmul.f32 %v3138, %v3179
    %v3181 = vmul.f32 %v3139, %v3179
    %v3182 = vmul.f32 %v3140, %v3179
    %v3183 = vmul.f32 %v3141, %v3179
    %3188 = vrot.lane.b32.xlu0 %v3180, 124
    %v3189 = vpop.permute.xlu0 %3188
    %3190 = vrot.lane.b32.xlu0 %v3181, 124
    %v3191 = vpop.permute.xlu0 %3190
    %3192 = vrot.lane.b32.xlu0 %v3182, 124
    %v3193 = vpop.permute.xlu0 %3192
    %3194 = vrot.lane.b32.xlu0 %v3183, 124
    %v3195 = vpop.permute.xlu0 %3194
    %v3200 = vadd.f32 %v3174, %v3189
    %v3201 = vadd.f32 %v3175, %v3191
    %v3202 = vadd.f32 %v3176, %v3193
    %v3203 = vadd.f32 %v3177, %v3195
    %v3204 = vld [vmem:[#allocation2 + $0x8] sm:$0xff]
    %v3205 = vld [vmem:[#allocation2 + $0x10] sm:$0xff]
    %v3206 = vld [vmem:[#allocation2 + $0x88] sm:$0xff]
    %v3207 = vld [vmem:[#allocation2 + $0x90] sm:$0xff]
    %s3208 = sld [smem:[#allocation7 + $0x2a]]
    %v3209 = vstv %s3208
    %v3210 = vmul.f32 %v3204, %v3209
    %v3211 = vmul.f32 %v3205, %v3209
    %v3212 = vmul.f32 %v3206, %v3209
    %v3213 = vmul.f32 %v3207, %v3209
    %v3214 = vadd.f32 %v3200, %v3210
    %v3215 = vadd.f32 %v3201, %v3211
    %v3216 = vadd.f32 %v3202, %v3212
    %v3217 = vadd.f32 %v3203, %v3213
    %s3218 = sld [smem:[#allocation7 + $0x2b]]
    %v3219 = vstv %s3218
    %v3220 = vmul.f32 %v3204, %v3219
    %v3221 = vmul.f32 %v3205, %v3219
    %v3222 = vmul.f32 %v3206, %v3219
    %v3223 = vmul.f32 %v3207, %v3219
    %3228 = vrot.lane.b32.xlu0 %v3220, 126
    %v3229 = vpop.permute.xlu0 %3228
    %3230 = vrot.lane.b32.xlu0 %v3221, 126
    %v3231 = vpop.permute.xlu0 %3230
    %3232 = vrot.lane.b32.xlu0 %v3222, 126
    %v3233 = vpop.permute.xlu0 %3232
    %3234 = vrot.lane.b32.xlu0 %v3223, 126
    %v3235 = vpop.permute.xlu0 %3234
    %v3240 = vadd.f32 %v3214, %v3229
    %v3241 = vadd.f32 %v3215, %v3231
    %v3242 = vadd.f32 %v3216, %v3233
    %v3243 = vadd.f32 %v3217, %v3235
    %s3244 = sld [smem:[#allocation7 + $0x2c]]
    %v3245 = vstv %s3244
    %v3246 = vmul.f32 %v3204, %v3245
    %v3247 = vmul.f32 %v3205, %v3245
    %v3248 = vmul.f32 %v3206, %v3245
    %v3249 = vmul.f32 %v3207, %v3245
    %3254 = vrot.lane.b32.xlu0 %v3246, 124
    %v3255 = vpop.permute.xlu0 %3254
    %3256 = vrot.lane.b32.xlu0 %v3247, 124
    %v3257 = vpop.permute.xlu0 %3256
    %3258 = vrot.lane.b32.xlu0 %v3248, 124
    %v3259 = vpop.permute.xlu0 %3258
    %3260 = vrot.lane.b32.xlu0 %v3249, 124
    %v3261 = vpop.permute.xlu0 %3260
    %v3266 = vadd.f32 %v3240, %v3255
    %v3267 = vadd.f32 %v3241, %v3257
    %v3268 = vadd.f32 %v3242, %v3259
    %v3269 = vadd.f32 %v3243, %v3261
    %3274 = vrot.lane.b32.xlu0 %v3266, 124
    %v3275 = vpop.permute.xlu0 %3274
    %3276 = vrot.lane.b32.xlu0 %v3267, 124
    %v3277 = vpop.permute.xlu0 %3276
    %3278 = vrot.lane.b32.xlu0 %v3268, 124
    %v3279 = vpop.permute.xlu0 %3278
    %3280 = vrot.lane.b32.xlu0 %v3269, 124
    %v3281 = vpop.permute.xlu0 %3280
    %v3286 = vcombine.high %v3275, 0.0
    %v3288 = vunpack.c.l.s4 1983009808
    %v3289 = vunpack.c.0.s8 %v3288
    %v3290 = vlaneseq
    %v3291 = vshrl.u32 %v3290, 7
    %v3292 = vsub.s32 %v3289, %v3291
    %v3293 = vrot.slane %v3275, %v3292
    %v3295 = vunpack.c.l.s4 1983009808
    %v3296 = vunpack.c.0.s8 %v3295
    %v3297 = vlaneseq
    %v3298 = vshrl.u32 %v3297, 7
    %v3299 = vsub.s32 %v3296, %v3298
    %v3300 = vrot.slane %v3286, %v3299
    %v3301 = vcombine.high %v3293, 0.0
    %v3303 = vunpack.c.l.s4 1934713408
    %v3304 = vunpack.c.0.s8 %v3303
    %v3305 = vlaneseq
    %v3306 = vshrl.u32 %v3305, 7
    %v3307 = vsub.s32 %v3304, %v3306
    %v3308 = vrot.slane %v3293, %v3307
    %v3310 = vunpack.c.l.s4 1934713408
    %v3311 = vunpack.c.0.s8 %v3310
    %v3312 = vlaneseq
    %v3313 = vshrl.u32 %v3312, 7
    %v3314 = vsub.s32 %v3311, %v3313
    %v3315 = vrot.slane %v3301, %v3314
    %v3316 = vcombine.high %v3300, 0.0
    %v3318 = vunpack.c.l.s4 1934713408
    %v3319 = vunpack.c.0.s8 %v3318
    %v3320 = vlaneseq
    %v3321 = vshrl.u32 %v3320, 7
    %v3322 = vsub.s32 %v3319, %v3321
    %v3323 = vrot.slane %v3300, %v3322
    %v3325 = vunpack.c.l.s4 1934713408
    %v3326 = vunpack.c.0.s8 %v3325
    %v3327 = vlaneseq
    %v3328 = vshrl.u32 %v3327, 7
    %v3329 = vsub.s32 %v3326, %v3328
    %v3330 = vrot.slane %v3316, %v3329
    %v3331 = vcombine.high %v3308, 0.0
    %v3332 = vcombine.high %v3315, 0.0
    %v3333 = vcombine.high %v3323, 0.0
    %v3334 = vcombine.high %v3330, 0.0
    %v3335 = vcombine.high %v3277, 0.0
    %v3337 = vunpack.c.l.s4 1983009808
    %v3338 = vunpack.c.0.s8 %v3337
    %v3339 = vlaneseq
    %v3340 = vshrl.u32 %v3339, 7
    %v3341 = vsub.s32 %v3338, %v3340
    %v3342 = vrot.slane %v3277, %v3341
    %v3344 = vunpack.c.l.s4 1983009808
    %v3345 = vunpack.c.0.s8 %v3344
    %v3346 = vlaneseq
    %v3347 = vshrl.u32 %v3346, 7
    %v3348 = vsub.s32 %v3345, %v3347
    %v3349 = vrot.slane %v3335, %v3348
    %v3350 = vcombine.high %v3342, 0.0
    %v3352 = vunpack.c.l.s4 1934713408
    %v3353 = vunpack.c.0.s8 %v3352
    %v3354 = vlaneseq
    %v3355 = vshrl.u32 %v3354, 7
    %v3356 = vsub.s32 %v3353, %v3355
    %v3357 = vrot.slane %v3342, %v3356
    %v3359 = vunpack.c.l.s4 1934713408
    %v3360 = vunpack.c.0.s8 %v3359
    %v3361 = vlaneseq
    %v3362 = vshrl.u32 %v3361, 7
    %v3363 = vsub.s32 %v3360, %v3362
    %v3364 = vrot.slane %v3350, %v3363
    %v3365 = vcombine.high %v3349, 0.0
    %v3367 = vunpack.c.l.s4 1934713408
    %v3368 = vunpack.c.0.s8 %v3367
    %v3369 = vlaneseq
    %v3370 = vshrl.u32 %v3369, 7
    %v3371 = vsub.s32 %v3368, %v3370
    %v3372 = vrot.slane %v3349, %v3371
    %v3374 = vunpack.c.l.s4 1934713408
    %v3375 = vunpack.c.0.s8 %v3374
    %v3376 = vlaneseq
    %v3377 = vshrl.u32 %v3376, 7
    %v3378 = vsub.s32 %v3375, %v3377
    %v3379 = vrot.slane %v3365, %v3378
    %v3380 = vcombine.high %v3357, 0.0
    %v3381 = vcombine.high %v3364, 0.0
    %v3382 = vcombine.high %v3372, 0.0
    %v3383 = vcombine.high %v3379, 0.0
    %v3384 = vcombine.high %v3279, 0.0
    %v3386 = vunpack.c.l.s4 1983009808
    %v3387 = vunpack.c.0.s8 %v3386
    %v3388 = vlaneseq
    %v3389 = vshrl.u32 %v3388, 7
    %v3390 = vsub.s32 %v3387, %v3389
    %v3391 = vrot.slane %v3279, %v3390
    %v3393 = vunpack.c.l.s4 1983009808
    %v3394 = vunpack.c.0.s8 %v3393
    %v3395 = vlaneseq
    %v3396 = vshrl.u32 %v3395, 7
    %v3397 = vsub.s32 %v3394, %v3396
    %v3398 = vrot.slane %v3384, %v3397
    %v3399 = vcombine.high %v3391, 0.0
    %v3401 = vunpack.c.l.s4 1934713408
    %v3402 = vunpack.c.0.s8 %v3401
    %v3403 = vlaneseq
    %v3404 = vshrl.u32 %v3403, 7
    %v3405 = vsub.s32 %v3402, %v3404
    %v3406 = vrot.slane %v3391, %v3405
    %v3408 = vunpack.c.l.s4 1934713408
    %v3409 = vunpack.c.0.s8 %v3408
    %v3410 = vlaneseq
    %v3411 = vshrl.u32 %v3410, 7
    %v3412 = vsub.s32 %v3409, %v3411
    %v3413 = vrot.slane %v3399, %v3412
    %v3414 = vcombine.high %v3398, 0.0
    %v3416 = vunpack.c.l.s4 1934713408
    %v3417 = vunpack.c.0.s8 %v3416
    %v3418 = vlaneseq
    %v3419 = vshrl.u32 %v3418, 7
    %v3420 = vsub.s32 %v3417, %v3419
    %v3421 = vrot.slane %v3398, %v3420
    %v3423 = vunpack.c.l.s4 1934713408
    %v3424 = vunpack.c.0.s8 %v3423
    %v3425 = vlaneseq
    %v3426 = vshrl.u32 %v3425, 7
    %v3427 = vsub.s32 %v3424, %v3426
    %v3428 = vrot.slane %v3414, %v3427
    %v3429 = vcombine.high %v3406, 0.0
    %v3430 = vcombine.high %v3413, 0.0
    %v3431 = vcombine.high %v3421, 0.0
    %v3432 = vcombine.high %v3428, 0.0
    %v3433 = vcombine.high %v3281, 0.0
    %v3435 = vunpack.c.l.s4 1983009808
    %v3436 = vunpack.c.0.s8 %v3435
    %v3437 = vlaneseq
    %v3438 = vshrl.u32 %v3437, 7
    %v3439 = vsub.s32 %v3436, %v3438
    %v3440 = vrot.slane %v3281, %v3439
    %v3442 = vunpack.c.l.s4 1983009808
    %v3443 = vunpack.c.0.s8 %v3442
    %v3444 = vlaneseq
    %v3445 = vshrl.u32 %v3444, 7
    %v3446 = vsub.s32 %v3443, %v3445
    %v3447 = vrot.slane %v3433, %v3446
    %v3448 = vcombine.high %v3440, 0.0
    %v3450 = vunpack.c.l.s4 1934713408
    %v3451 = vunpack.c.0.s8 %v3450
    %v3452 = vlaneseq
    %v3453 = vshrl.u32 %v3452, 7
    %v3454 = vsub.s32 %v3451, %v3453
    %v3455 = vrot.slane %v3440, %v3454
    %v3457 = vunpack.c.l.s4 1934713408
    %v3458 = vunpack.c.0.s8 %v3457
    %v3459 = vlaneseq
    %v3460 = vshrl.u32 %v3459, 7
    %v3461 = vsub.s32 %v3458, %v3460
    %v3462 = vrot.slane %v3448, %v3461
    %v3463 = vcombine.high %v3447, 0.0
    %v3465 = vunpack.c.l.s4 1934713408
    %v3466 = vunpack.c.0.s8 %v3465
    %v3467 = vlaneseq
    %v3468 = vshrl.u32 %v3467, 7
    %v3469 = vsub.s32 %v3466, %v3468
    %v3470 = vrot.slane %v3447, %v3469
    %v3472 = vunpack.c.l.s4 1934713408
    %v3473 = vunpack.c.0.s8 %v3472
    %v3474 = vlaneseq
    %v3475 = vshrl.u32 %v3474, 7
    %v3476 = vsub.s32 %v3473, %v3475
    %v3477 = vrot.slane %v3463, %v3476
    %v3478 = vcombine.high %v3455, 0.0
    %v3479 = vcombine.high %v3462, 0.0
    %v3480 = vcombine.high %v3470, 0.0
    %v3481 = vcombine.high %v3477, 0.0
    %3484 = vrot.lane.b32.xlu0 %v3331, 16
    %v3485 = vpop.permute.xlu0 %3484
    %3486 = vrot.lane.b32.xlu0 %v3429, 16
    %v3487 = vpop.permute.xlu0 %3486
    %3492 = vrot.lane.b32.xlu0 %v3315, 32
    %v3493 = vpop.permute.xlu0 %3492
    %3494 = vrot.lane.b32.xlu0 %v3413, 32
    %v3495 = vpop.permute.xlu0 %3494
    %3500 = vrot.lane.b32.xlu0 %v3332, 48
    %v3501 = vpop.permute.xlu0 %3500
    %3502 = vrot.lane.b32.xlu0 %v3430, 48
    %v3503 = vpop.permute.xlu0 %3502
    %3508 = vrot.lane.b32.xlu0 %v3323, 64
    %v3509 = vpop.permute.xlu0 %3508
    %3510 = vrot.lane.b32.xlu0 %v3421, 64
    %v3511 = vpop.permute.xlu0 %3510
    %3516 = vrot.lane.b32.xlu0 %v3333, 80
    %v3517 = vpop.permute.xlu0 %3516
    %3518 = vrot.lane.b32.xlu0 %v3431, 80
    %v3519 = vpop.permute.xlu0 %3518
    %3524 = vrot.lane.b32.xlu0 %v3330, 96
    %v3525 = vpop.permute.xlu0 %3524
    %3526 = vrot.lane.b32.xlu0 %v3428, 96
    %v3527 = vpop.permute.xlu0 %3526
    %3532 = vrot.lane.b32.xlu0 %v3334, 112
    %v3533 = vpop.permute.xlu0 %3532
    %3534 = vrot.lane.b32.xlu0 %v3432, 112
    %v3535 = vpop.permute.xlu0 %3534
    %3540 = vrot.lane.b32.xlu0 %v3380, 16
    %v3541 = vpop.permute.xlu0 %3540
    %3542 = vrot.lane.b32.xlu0 %v3478, 16
    %v3543 = vpop.permute.xlu0 %3542
    %3548 = vrot.lane.b32.xlu0 %v3364, 32
    %v3549 = vpop.permute.xlu0 %3548
    %3550 = vrot.lane.b32.xlu0 %v3462, 32
    %v3551 = vpop.permute.xlu0 %3550
    %3556 = vrot.lane.b32.xlu0 %v3381, 48
    %v3557 = vpop.permute.xlu0 %3556
    %3558 = vrot.lane.b32.xlu0 %v3479, 48
    %v3559 = vpop.permute.xlu0 %3558
    %3564 = vrot.lane.b32.xlu0 %v3372, 64
    %v3565 = vpop.permute.xlu0 %3564
    %3566 = vrot.lane.b32.xlu0 %v3470, 64
    %v3567 = vpop.permute.xlu0 %3566
    %3572 = vrot.lane.b32.xlu0 %v3382, 80
    %v3573 = vpop.permute.xlu0 %3572
    %3574 = vrot.lane.b32.xlu0 %v3480, 80
    %v3575 = vpop.permute.xlu0 %3574
    %3580 = vrot.lane.b32.xlu0 %v3379, 96
    %v3581 = vpop.permute.xlu0 %3580
    %3582 = vrot.lane.b32.xlu0 %v3477, 96
    %v3583 = vpop.permute.xlu0 %3582
    %3588 = vrot.lane.b32.xlu0 %v3383, 112
    %v3589 = vpop.permute.xlu0 %3588
    %3590 = vrot.lane.b32.xlu0 %v3481, 112
    %v3591 = vpop.permute.xlu0 %3590
    %v3594 = vsel %vm1229, %v3308, %v3485
    %v3595 = vsel %vm1229, %v3406, %v3487
    %v3596 = vsel %vm1232, %v3594, %v3493
    %v3597 = vsel %vm1232, %v3595, %v3495
    %v3598 = vsel %vm1235, %v3596, %v3501
    %v3599 = vsel %vm1235, %v3597, %v3503
    %v3600 = vsel %vm1238, %v3598, %v3509
    %v3601 = vsel %vm1238, %v3599, %v3511
    %v3602 = vsel %vm1241, %v3600, %v3517
    %v3603 = vsel %vm1241, %v3601, %v3519
    %v3604 = vsel %vm1244, %v3602, %v3525
    %v3605 = vsel %vm1244, %v3603, %v3527
    %v3606 = vsel %vm1247, %v3604, %v3533
    %v3607 = vsel %vm1247, %v3605, %v3535
    %v3608 = vsel %vm1229, %v3357, %v3541
    %v3609 = vsel %vm1229, %v3455, %v3543
    %v3610 = vsel %vm1232, %v3608, %v3549
    %v3611 = vsel %vm1232, %v3609, %v3551
    %v3612 = vsel %vm1235, %v3610, %v3557
    %v3613 = vsel %vm1235, %v3611, %v3559
    %v3614 = vsel %vm1238, %v3612, %v3565
    %v3615 = vsel %vm1238, %v3613, %v3567
    %v3616 = vsel %vm1241, %v3614, %v3573
    %v3617 = vsel %vm1241, %v3615, %v3575
    %v3618 = vsel %vm1244, %v3616, %v3581
    %v3619 = vsel %vm1244, %v3617, %v3583
    %v3620 = vsel %vm1247, %v3618, %v3589
    %v3621 = vsel %vm1247, %v3619, %v3591
    %v3626 = vcombine.low %v3606, %v3620
    %v3628 = vunpack.c.l.s4 1966171168
    %v3629 = vunpack.c.0.s8 %v3628
    %v3630 = vlaneseq
    %v3631 = vshrl.u32 %v3630, 7
    %v3632 = vsub.s32 %v3629, %v3631
    %v3633 = vrot.slane %v3626, %v3632
    %v3635 = vunpack.c.l.s4 1966171168
    %v3636 = vunpack.c.0.s8 %v3635
    %v3637 = vlaneseq
    %v3638 = vshrl.u32 %v3637, 7
    %v3639 = vsub.s32 %v3636, %v3638
    %v3640 = vrot.slane %v3633, %v3639
    %v3641 = vcombine.low %v3607, %v3621
    %v3643 = vunpack.c.l.s4 1966171168
    %v3644 = vunpack.c.0.s8 %v3643
    %v3645 = vlaneseq
    %v3646 = vshrl.u32 %v3645, 7
    %v3647 = vsub.s32 %v3644, %v3646
    %v3648 = vrot.slane %v3641, %v3647
    %v3650 = vunpack.c.l.s4 1966171168
    %v3651 = vunpack.c.0.s8 %v3650
    %v3652 = vlaneseq
    %v3653 = vshrl.u32 %v3652, 7
    %v3654 = vsub.s32 %v3651, %v3653
    %v3655 = vrot.slane %v3648, %v3654
    %s3658 = scalar_lea.vmem [#allocation8], 4
    %3659 = vst.msk [vmem:[%s3658] ss:$8 sm:$0x3] %vm1303, %v3640
    %3660 = vst.msk [vmem:[%s3658] ss:$8 sm:$0x0] %vm1303, %v3640
    %s3661 = scalar_lea.vmem [#allocation8], 36
    %3662 = vst.msk [vmem:[%s3661] ss:$8 sm:$0x3] %vm1303, %v3655
    %3663 = vst.msk [vmem:[%s3661] ss:$8 sm:$0x0] %vm1303, %v3655
    %v3664 = vld [vmem:[%s1309 + $0x4] sm:$0xff]
    %v3665 = vld [vmem:[%s1309 + $0xc] sm:$0xff]
    %v3666 = vld [vmem:[%s1309 + $0x84] sm:$0xff]
    %v3667 = vld [vmem:[%s1309 + $0x8c] sm:$0xff]
    %s3668 = sld [smem:[#allocation7 + $0x2d]]
    %v3669 = vstv %s3668
    %v3670 = vmul.f32 %v3664, %v3669
    %v3671 = vmul.f32 %v3665, %v3669
    %v3672 = vmul.f32 %v3666, %v3669
    %v3673 = vmul.f32 %v3667, %v3669
    %s3674 = sld [smem:[#allocation7 + $0x2e]]
    %v3675 = vstv %s3674
    %v3676 = vmul.f32 %v3664, %v3675
    %v3677 = vmul.f32 %v3665, %v3675
    %v3678 = vmul.f32 %v3666, %v3675
    %v3679 = vmul.f32 %v3667, %v3675
    %3684 = vrot.lane.b32.xlu0 %v3676, 126
    %v3685 = vpop.permute.xlu0 %3684
    %3686 = vrot.lane.b32.xlu0 %v3677, 126
    %v3687 = vpop.permute.xlu0 %3686
    %3688 = vrot.lane.b32.xlu0 %v3678, 126
    %v3689 = vpop.permute.xlu0 %3688
    %3690 = vrot.lane.b32.xlu0 %v3679, 126
    %v3691 = vpop.permute.xlu0 %3690
    %v3696 = vadd.f32 %v3670, %v3685
    %v3697 = vadd.f32 %v3671, %v3687
    %v3698 = vadd.f32 %v3672, %v3689
    %v3699 = vadd.f32 %v3673, %v3691
    %s3700 = sld [smem:[#allocation7 + $0x2f]]
    %v3701 = vstv %s3700
    %v3702 = vmul.f32 %v3664, %v3701
    %v3703 = vmul.f32 %v3665, %v3701
    %v3704 = vmul.f32 %v3666, %v3701
    %v3705 = vmul.f32 %v3667, %v3701
    %3710 = vrot.lane.b32.xlu0 %v3702, 124
    %v3711 = vpop.permute.xlu0 %3710
    %3712 = vrot.lane.b32.xlu0 %v3703, 124
    %v3713 = vpop.permute.xlu0 %3712
    %3714 = vrot.lane.b32.xlu0 %v3704, 124
    %v3715 = vpop.permute.xlu0 %3714
    %3716 = vrot.lane.b32.xlu0 %v3705, 124
    %v3717 = vpop.permute.xlu0 %3716
    %v3722 = vadd.f32 %v3696, %v3711
    %v3723 = vadd.f32 %v3697, %v3713
    %v3724 = vadd.f32 %v3698, %v3715
    %v3725 = vadd.f32 %v3699, %v3717
    %v3726 = vld [vmem:[%s1309 + $0x6] sm:$0xff]
    %v3727 = vld [vmem:[%s1309 + $0xe] sm:$0xff]
    %v3728 = vld [vmem:[%s1309 + $0x86] sm:$0xff]
    %v3729 = vld [vmem:[%s1309 + $0x8e] sm:$0xff]
    %s3730 = sld [smem:[#allocation7 + $0x30]]
    %v3731 = vstv %s3730
    %v3732 = vmul.f32 %v3726, %v3731
    %v3733 = vmul.f32 %v3727, %v3731
    %v3734 = vmul.f32 %v3728, %v3731
    %v3735 = vmul.f32 %v3729, %v3731
    %v3736 = vadd.f32 %v3722, %v3732
    %v3737 = vadd.f32 %v3723, %v3733
    %v3738 = vadd.f32 %v3724, %v3734
    %v3739 = vadd.f32 %v3725, %v3735
    %s3740 = sld [smem:[#allocation7 + $0x31]]
    %v3741 = vstv %s3740
    %v3742 = vmul.f32 %v3726, %v3741
    %v3743 = vmul.f32 %v3727, %v3741
    %v3744 = vmul.f32 %v3728, %v3741
    %v3745 = vmul.f32 %v3729, %v3741
    %3750 = vrot.lane.b32.xlu0 %v3742, 126
    %v3751 = vpop.permute.xlu0 %3750
    %3752 = vrot.lane.b32.xlu0 %v3743, 126
    %v3753 = vpop.permute.xlu0 %3752
    %3754 = vrot.lane.b32.xlu0 %v3744, 126
    %v3755 = vpop.permute.xlu0 %3754
    %3756 = vrot.lane.b32.xlu0 %v3745, 126
    %v3757 = vpop.permute.xlu0 %3756
    %v3762 = vadd.f32 %v3736, %v3751
    %v3763 = vadd.f32 %v3737, %v3753
    %v3764 = vadd.f32 %v3738, %v3755
    %v3765 = vadd.f32 %v3739, %v3757
    %s3766 = sld [smem:[#allocation7 + $0x32]]
    %v3767 = vstv %s3766
    %v3768 = vmul.f32 %v3726, %v3767
    %v3769 = vmul.f32 %v3727, %v3767
    %v3770 = vmul.f32 %v3728, %v3767
    %v3771 = vmul.f32 %v3729, %v3767
    %3776 = vrot.lane.b32.xlu0 %v3768, 124
    %v3777 = vpop.permute.xlu0 %3776
    %3778 = vrot.lane.b32.xlu0 %v3769, 124
    %v3779 = vpop.permute.xlu0 %3778
    %3780 = vrot.lane.b32.xlu0 %v3770, 124
    %v3781 = vpop.permute.xlu0 %3780
    %3782 = vrot.lane.b32.xlu0 %v3771, 124
    %v3783 = vpop.permute.xlu0 %3782
    %v3788 = vadd.f32 %v3762, %v3777
    %v3789 = vadd.f32 %v3763, %v3779
    %v3790 = vadd.f32 %v3764, %v3781
    %v3791 = vadd.f32 %v3765, %v3783
    %v3792 = vld [vmem:[%s1309 + $0x8] sm:$0xff]
    %v3793 = vld [vmem:[%s1309 + $0x10] sm:$0xff]
    %v3794 = vld [vmem:[%s1309 + $0x88] sm:$0xff]
    %v3795 = vld [vmem:[%s1309 + $0x90] sm:$0xff]
    %s3796 = sld [smem:[#allocation7 + $0x33]]
    %v3797 = vstv %s3796
    %v3798 = vmul.f32 %v3792, %v3797
    %v3799 = vmul.f32 %v3793, %v3797
    %v3800 = vmul.f32 %v3794, %v3797
    %v3801 = vmul.f32 %v3795, %v3797
    %v3802 = vadd.f32 %v3788, %v3798
    %v3803 = vadd.f32 %v3789, %v3799
    %v3804 = vadd.f32 %v3790, %v3800
    %v3805 = vadd.f32 %v3791, %v3801
    %s3806 = sld [smem:[#allocation7 + $0x34]]
    %v3807 = vstv %s3806
    %v3808 = vmul.f32 %v3792, %v3807
    %v3809 = vmul.f32 %v3793, %v3807
    %v3810 = vmul.f32 %v3794, %v3807
    %v3811 = vmul.f32 %v3795, %v3807
    %3816 = vrot.lane.b32.xlu0 %v3808, 126
    %v3817 = vpop.permute.xlu0 %3816
    %3818 = vrot.lane.b32.xlu0 %v3809, 126
    %v3819 = vpop.permute.xlu0 %3818
    %3820 = vrot.lane.b32.xlu0 %v3810, 126
    %v3821 = vpop.permute.xlu0 %3820
    %3822 = vrot.lane.b32.xlu0 %v3811, 126
    %v3823 = vpop.permute.xlu0 %3822
    %v3828 = vadd.f32 %v3802, %v3817
    %v3829 = vadd.f32 %v3803, %v3819
    %v3830 = vadd.f32 %v3804, %v3821
    %v3831 = vadd.f32 %v3805, %v3823
    %s3832 = sld [smem:[#allocation7 + $0x35]]
    %v3833 = vstv %s3832
    %v3834 = vmul.f32 %v3792, %v3833
    %v3835 = vmul.f32 %v3793, %v3833
    %v3836 = vmul.f32 %v3794, %v3833
    %v3837 = vmul.f32 %v3795, %v3833
    %3842 = vrot.lane.b32.xlu0 %v3834, 124
    %v3843 = vpop.permute.xlu0 %3842
    %3844 = vrot.lane.b32.xlu0 %v3835, 124
    %v3845 = vpop.permute.xlu0 %3844
    %3846 = vrot.lane.b32.xlu0 %v3836, 124
    %v3847 = vpop.permute.xlu0 %3846
    %3848 = vrot.lane.b32.xlu0 %v3837, 124
    %v3849 = vpop.permute.xlu0 %3848
    %v3854 = vadd.f32 %v3828, %v3843
    %v3855 = vadd.f32 %v3829, %v3845
    %v3856 = vadd.f32 %v3830, %v3847
    %v3857 = vadd.f32 %v3831, %v3849
    %3862 = vrot.lane.b32.xlu0 %v3854, 124
    %v3863 = vpop.permute.xlu0 %3862
    %3864 = vrot.lane.b32.xlu0 %v3855, 124
    %v3865 = vpop.permute.xlu0 %3864
    %3866 = vrot.lane.b32.xlu0 %v3856, 124
    %v3867 = vpop.permute.xlu0 %3866
    %3868 = vrot.lane.b32.xlu0 %v3857, 124
    %v3869 = vpop.permute.xlu0 %3868
    %v3874 = vcombine.high %v3863, 0.0
    %v3876 = vunpack.c.l.s4 1983009808
    %v3877 = vunpack.c.0.s8 %v3876
    %v3878 = vlaneseq
    %v3879 = vshrl.u32 %v3878, 7
    %v3880 = vsub.s32 %v3877, %v3879
    %v3881 = vrot.slane %v3863, %v3880
    %v3883 = vunpack.c.l.s4 1983009808
    %v3884 = vunpack.c.0.s8 %v3883
    %v3885 = vlaneseq
    %v3886 = vshrl.u32 %v3885, 7
    %v3887 = vsub.s32 %v3884, %v3886
    %v3888 = vrot.slane %v3874, %v3887
    %v3889 = vcombine.high %v3881, 0.0
    %v3891 = vunpack.c.l.s4 1934713408
    %v3892 = vunpack.c.0.s8 %v3891
    %v3893 = vlaneseq
    %v3894 = vshrl.u32 %v3893, 7
    %v3895 = vsub.s32 %v3892, %v3894
    %v3896 = vrot.slane %v3881, %v3895
    %v3898 = vunpack.c.l.s4 1934713408
    %v3899 = vunpack.c.0.s8 %v3898
    %v3900 = vlaneseq
    %v3901 = vshrl.u32 %v3900, 7
    %v3902 = vsub.s32 %v3899, %v3901
    %v3903 = vrot.slane %v3889, %v3902
    %v3904 = vcombine.high %v3888, 0.0
    %v3906 = vunpack.c.l.s4 1934713408
    %v3907 = vunpack.c.0.s8 %v3906
    %v3908 = vlaneseq
    %v3909 = vshrl.u32 %v3908, 7
    %v3910 = vsub.s32 %v3907, %v3909
    %v3911 = vrot.slane %v3888, %v3910
    %v3913 = vunpack.c.l.s4 1934713408
    %v3914 = vunpack.c.0.s8 %v3913
    %v3915 = vlaneseq
    %v3916 = vshrl.u32 %v3915, 7
    %v3917 = vsub.s32 %v3914, %v3916
    %v3918 = vrot.slane %v3904, %v3917
    %v3919 = vcombine.high %v3896, 0.0
    %v3920 = vcombine.high %v3903, 0.0
    %v3921 = vcombine.high %v3911, 0.0
    %v3922 = vcombine.high %v3918, 0.0
    %v3923 = vcombine.high %v3865, 0.0
    %v3925 = vunpack.c.l.s4 1983009808
    %v3926 = vunpack.c.0.s8 %v3925
    %v3927 = vlaneseq
    %v3928 = vshrl.u32 %v3927, 7
    %v3929 = vsub.s32 %v3926, %v3928
    %v3930 = vrot.slane %v3865, %v3929
    %v3932 = vunpack.c.l.s4 1983009808
    %v3933 = vunpack.c.0.s8 %v3932
    %v3934 = vlaneseq
    %v3935 = vshrl.u32 %v3934, 7
    %v3936 = vsub.s32 %v3933, %v3935
    %v3937 = vrot.slane %v3923, %v3936
    %v3938 = vcombine.high %v3930, 0.0
    %v3940 = vunpack.c.l.s4 1934713408
    %v3941 = vunpack.c.0.s8 %v3940
    %v3942 = vlaneseq
    %v3943 = vshrl.u32 %v3942, 7
    %v3944 = vsub.s32 %v3941, %v3943
    %v3945 = vrot.slane %v3930, %v3944
    %v3947 = vunpack.c.l.s4 1934713408
    %v3948 = vunpack.c.0.s8 %v3947
    %v3949 = vlaneseq
    %v3950 = vshrl.u32 %v3949, 7
    %v3951 = vsub.s32 %v3948, %v3950
    %v3952 = vrot.slane %v3938, %v3951
    %v3953 = vcombine.high %v3937, 0.0
    %v3955 = vunpack.c.l.s4 1934713408
    %v3956 = vunpack.c.0.s8 %v3955
    %v3957 = vlaneseq
    %v3958 = vshrl.u32 %v3957, 7
    %v3959 = vsub.s32 %v3956, %v3958
    %v3960 = vrot.slane %v3937, %v3959
    %v3962 = vunpack.c.l.s4 1934713408
    %v3963 = vunpack.c.0.s8 %v3962
    %v3964 = vlaneseq
    %v3965 = vshrl.u32 %v3964, 7
    %v3966 = vsub.s32 %v3963, %v3965
    %v3967 = vrot.slane %v3953, %v3966
    %v3968 = vcombine.high %v3945, 0.0
    %v3969 = vcombine.high %v3952, 0.0
    %v3970 = vcombine.high %v3960, 0.0
    %v3971 = vcombine.high %v3967, 0.0
    %v3972 = vcombine.high %v3867, 0.0
    %v3974 = vunpack.c.l.s4 1983009808
    %v3975 = vunpack.c.0.s8 %v3974
    %v3976 = vlaneseq
    %v3977 = vshrl.u32 %v3976, 7
    %v3978 = vsub.s32 %v3975, %v3977
    %v3979 = vrot.slane %v3867, %v3978
    %v3981 = vunpack.c.l.s4 1983009808
    %v3982 = vunpack.c.0.s8 %v3981
    %v3983 = vlaneseq
    %v3984 = vshrl.u32 %v3983, 7
    %v3985 = vsub.s32 %v3982, %v3984
    %v3986 = vrot.slane %v3972, %v3985
    %v3987 = vcombine.high %v3979, 0.0
    %v3989 = vunpack.c.l.s4 1934713408
    %v3990 = vunpack.c.0.s8 %v3989
    %v3991 = vlaneseq
    %v3992 = vshrl.u32 %v3991, 7
    %v3993 = vsub.s32 %v3990, %v3992
    %v3994 = vrot.slane %v3979, %v3993
    %v3996 = vunpack.c.l.s4 1934713408
    %v3997 = vunpack.c.0.s8 %v3996
    %v3998 = vlaneseq
    %v3999 = vshrl.u32 %v3998, 7
    %v4000 = vsub.s32 %v3997, %v3999
    %v4001 = vrot.slane %v3987, %v4000
    %v4002 = vcombine.high %v3986, 0.0
    %v4004 = vunpack.c.l.s4 1934713408
    %v4005 = vunpack.c.0.s8 %v4004
    %v4006 = vlaneseq
    %v4007 = vshrl.u32 %v4006, 7
    %v4008 = vsub.s32 %v4005, %v4007
    %v4009 = vrot.slane %v3986, %v4008
    %v4011 = vunpack.c.l.s4 1934713408
    %v4012 = vunpack.c.0.s8 %v4011
    %v4013 = vlaneseq
    %v4014 = vshrl.u32 %v4013, 7
    %v4015 = vsub.s32 %v4012, %v4014
    %v4016 = vrot.slane %v4002, %v4015
    %v4017 = vcombine.high %v3994, 0.0
    %v4018 = vcombine.high %v4001, 0.0
    %v4019 = vcombine.high %v4009, 0.0
    %v4020 = vcombine.high %v4016, 0.0
    %v4021 = vcombine.high %v3869, 0.0
    %v4023 = vunpack.c.l.s4 1983009808
    %v4024 = vunpack.c.0.s8 %v4023
    %v4025 = vlaneseq
    %v4026 = vshrl.u32 %v4025, 7
    %v4027 = vsub.s32 %v4024, %v4026
    %v4028 = vrot.slane %v3869, %v4027
    %v4030 = vunpack.c.l.s4 1983009808
    %v4031 = vunpack.c.0.s8 %v4030
    %v4032 = vlaneseq
    %v4033 = vshrl.u32 %v4032, 7
    %v4034 = vsub.s32 %v4031, %v4033
    %v4035 = vrot.slane %v4021, %v4034
    %v4036 = vcombine.high %v4028, 0.0
    %v4038 = vunpack.c.l.s4 1934713408
    %v4039 = vunpack.c.0.s8 %v4038
    %v4040 = vlaneseq
    %v4041 = vshrl.u32 %v4040, 7
    %v4042 = vsub.s32 %v4039, %v4041
    %v4043 = vrot.slane %v4028, %v4042
    %v4045 = vunpack.c.l.s4 1934713408
    %v4046 = vunpack.c.0.s8 %v4045
    %v4047 = vlaneseq
    %v4048 = vshrl.u32 %v4047, 7
    %v4049 = vsub.s32 %v4046, %v4048
    %v4050 = vrot.slane %v4036, %v4049
    %v4051 = vcombine.high %v4035, 0.0
    %v4053 = vunpack.c.l.s4 1934713408
    %v4054 = vunpack.c.0.s8 %v4053
    %v4055 = vlaneseq
    %v4056 = vshrl.u32 %v4055, 7
    %v4057 = vsub.s32 %v4054, %v4056
    %v4058 = vrot.slane %v4035, %v4057
    %v4060 = vunpack.c.l.s4 1934713408
    %v4061 = vunpack.c.0.s8 %v4060
    %v4062 = vlaneseq
    %v4063 = vshrl.u32 %v4062, 7
    %v4064 = vsub.s32 %v4061, %v4063
    %v4065 = vrot.slane %v4051, %v4064
    %v4066 = vcombine.high %v4043, 0.0
    %v4067 = vcombine.high %v4050, 0.0
    %v4068 = vcombine.high %v4058, 0.0
    %v4069 = vcombine.high %v4065, 0.0
    %4072 = vrot.lane.b32.xlu0 %v3919, 16
    %v4073 = vpop.permute.xlu0 %4072
    %4074 = vrot.lane.b32.xlu0 %v4017, 16
    %v4075 = vpop.permute.xlu0 %4074
    %4080 = vrot.lane.b32.xlu0 %v3903, 32
    %v4081 = vpop.permute.xlu0 %4080
    %4082 = vrot.lane.b32.xlu0 %v4001, 32
    %v4083 = vpop.permute.xlu0 %4082
    %4088 = vrot.lane.b32.xlu0 %v3920, 48
    %v4089 = vpop.permute.xlu0 %4088
    %4090 = vrot.lane.b32.xlu0 %v4018, 48
    %v4091 = vpop.permute.xlu0 %4090
    %4096 = vrot.lane.b32.xlu0 %v3911, 64
    %v4097 = vpop.permute.xlu0 %4096
    %4098 = vrot.lane.b32.xlu0 %v4009, 64
    %v4099 = vpop.permute.xlu0 %4098
    %4104 = vrot.lane.b32.xlu0 %v3921, 80
    %v4105 = vpop.permute.xlu0 %4104
    %4106 = vrot.lane.b32.xlu0 %v4019, 80
    %v4107 = vpop.permute.xlu0 %4106
    %4112 = vrot.lane.b32.xlu0 %v3918, 96
    %v4113 = vpop.permute.xlu0 %4112
    %4114 = vrot.lane.b32.xlu0 %v4016, 96
    %v4115 = vpop.permute.xlu0 %4114
    %4120 = vrot.lane.b32.xlu0 %v3922, 112
    %v4121 = vpop.permute.xlu0 %4120
    %4122 = vrot.lane.b32.xlu0 %v4020, 112
    %v4123 = vpop.permute.xlu0 %4122
    %4128 = vrot.lane.b32.xlu0 %v3968, 16
    %v4129 = vpop.permute.xlu0 %4128
    %4130 = vrot.lane.b32.xlu0 %v4066, 16
    %v4131 = vpop.permute.xlu0 %4130
    %4136 = vrot.lane.b32.xlu0 %v3952, 32
    %v4137 = vpop.permute.xlu0 %4136
    %4138 = vrot.lane.b32.xlu0 %v4050, 32
    %v4139 = vpop.permute.xlu0 %4138
    %4144 = vrot.lane.b32.xlu0 %v3969, 48
    %v4145 = vpop.permute.xlu0 %4144
    %4146 = vrot.lane.b32.xlu0 %v4067, 48
    %v4147 = vpop.permute.xlu0 %4146
    %4152 = vrot.lane.b32.xlu0 %v3960, 64
    %v4153 = vpop.permute.xlu0 %4152
    %4154 = vrot.lane.b32.xlu0 %v4058, 64
    %v4155 = vpop.permute.xlu0 %4154
    %4160 = vrot.lane.b32.xlu0 %v3970, 80
    %v4161 = vpop.permute.xlu0 %4160
    %4162 = vrot.lane.b32.xlu0 %v4068, 80
    %v4163 = vpop.permute.xlu0 %4162
    %4168 = vrot.lane.b32.xlu0 %v3967, 96
    %v4169 = vpop.permute.xlu0 %4168
    %4170 = vrot.lane.b32.xlu0 %v4065, 96
    %v4171 = vpop.permute.xlu0 %4170
    %4176 = vrot.lane.b32.xlu0 %v3971, 112
    %v4177 = vpop.permute.xlu0 %4176
    %4178 = vrot.lane.b32.xlu0 %v4069, 112
    %v4179 = vpop.permute.xlu0 %4178
    %v4182 = vsel %vm1229, %v3896, %v4073
    %v4183 = vsel %vm1229, %v3994, %v4075
    %v4184 = vsel %vm1232, %v4182, %v4081
    %v4185 = vsel %vm1232, %v4183, %v4083
    %v4186 = vsel %vm1235, %v4184, %v4089
    %v4187 = vsel %vm1235, %v4185, %v4091
    %v4188 = vsel %vm1238, %v4186, %v4097
    %v4189 = vsel %vm1238, %v4187, %v4099
    %v4190 = vsel %vm1241, %v4188, %v4105
    %v4191 = vsel %vm1241, %v4189, %v4107
    %v4192 = vsel %vm1244, %v4190, %v4113
    %v4193 = vsel %vm1244, %v4191, %v4115
    %v4194 = vsel %vm1247, %v4192, %v4121
    %v4195 = vsel %vm1247, %v4193, %v4123
    %v4196 = vsel %vm1229, %v3945, %v4129
    %v4197 = vsel %vm1229, %v4043, %v4131
    %v4198 = vsel %vm1232, %v4196, %v4137
    %v4199 = vsel %vm1232, %v4197, %v4139
    %v4200 = vsel %vm1235, %v4198, %v4145
    %v4201 = vsel %vm1235, %v4199, %v4147
    %v4202 = vsel %vm1238, %v4200, %v4153
    %v4203 = vsel %vm1238, %v4201, %v4155
    %v4204 = vsel %vm1241, %v4202, %v4161
    %v4205 = vsel %vm1241, %v4203, %v4163
    %v4206 = vsel %vm1244, %v4204, %v4169
    %v4207 = vsel %vm1244, %v4205, %v4171
    %v4208 = vsel %vm1247, %v4206, %v4177
    %v4209 = vsel %vm1247, %v4207, %v4179
    %v4214 = vcombine.low %v4194, %v4208
    %v4216 = vunpack.c.l.s4 1966171168
    %v4217 = vunpack.c.0.s8 %v4216
    %v4218 = vlaneseq
    %v4219 = vshrl.u32 %v4218, 7
    %v4220 = vsub.s32 %v4217, %v4219
    %v4221 = vrot.slane %v4214, %v4220
    %v4223 = vunpack.c.l.s4 1966171168
    %v4224 = vunpack.c.0.s8 %v4223
    %v4225 = vlaneseq
    %v4226 = vshrl.u32 %v4225, 7
    %v4227 = vsub.s32 %v4224, %v4226
    %v4228 = vrot.slane %v4221, %v4227
    %v4229 = vcombine.low %v4195, %v4209
    %v4231 = vunpack.c.l.s4 1966171168
    %v4232 = vunpack.c.0.s8 %v4231
    %v4233 = vlaneseq
    %v4234 = vshrl.u32 %v4233, 7
    %v4235 = vsub.s32 %v4232, %v4234
    %v4236 = vrot.slane %v4229, %v4235
    %v4238 = vunpack.c.l.s4 1966171168
    %v4239 = vunpack.c.0.s8 %v4238
    %v4240 = vlaneseq
    %v4241 = vshrl.u32 %v4240, 7
    %v4242 = vsub.s32 %v4239, %v4241
    %v4243 = vrot.slane %v4236, %v4242
    %s4246 = scalar_lea.vmem [#allocation8], 5
    %4247 = vst.msk [vmem:[%s4246] ss:$8 sm:$0x3] %vm1303, %v4228
    %4248 = vst.msk [vmem:[%s4246] ss:$8 sm:$0x0] %vm1303, %v4228
    %s4249 = scalar_lea.vmem [#allocation8], 37
    %4250 = vst.msk [vmem:[%s4249] ss:$8 sm:$0x3] %vm1303, %v4243
    %4251 = vst.msk [vmem:[%s4249] ss:$8 sm:$0x0] %vm1303, %v4243
    %v4252 = vld [vmem:[%s1898 + $0x4] sm:$0xff]
    %v4253 = vld [vmem:[%s1898 + $0xc] sm:$0xff]
    %v4254 = vld [vmem:[%s1898 + $0x84] sm:$0xff]
    %v4255 = vld [vmem:[%s1898 + $0x8c] sm:$0xff]
    %s4256 = sld [smem:[#allocation7 + $0x36]]
    %v4257 = vstv %s4256
    %v4258 = vmul.f32 %v4252, %v4257
    %v4259 = vmul.f32 %v4253, %v4257
    %v4260 = vmul.f32 %v4254, %v4257
    %v4261 = vmul.f32 %v4255, %v4257
    %s4262 = sld [smem:[#allocation7 + $0x37]]
    %v4263 = vstv %s4262
    %v4264 = vmul.f32 %v4252, %v4263
    %v4265 = vmul.f32 %v4253, %v4263
    %v4266 = vmul.f32 %v4254, %v4263
    %v4267 = vmul.f32 %v4255, %v4263
    %4272 = vrot.lane.b32.xlu0 %v4264, 126
    %v4273 = vpop.permute.xlu0 %4272
    %4274 = vrot.lane.b32.xlu0 %v4265, 126
    %v4275 = vpop.permute.xlu0 %4274
    %4276 = vrot.lane.b32.xlu0 %v4266, 126
    %v4277 = vpop.permute.xlu0 %4276
    %4278 = vrot.lane.b32.xlu0 %v4267, 126
    %v4279 = vpop.permute.xlu0 %4278
    %v4284 = vadd.f32 %v4258, %v4273
    %v4285 = vadd.f32 %v4259, %v4275
    %v4286 = vadd.f32 %v4260, %v4277
    %v4287 = vadd.f32 %v4261, %v4279
    %s4288 = sld [smem:[#allocation7 + $0x38]]
    %v4289 = vstv %s4288
    %v4290 = vmul.f32 %v4252, %v4289
    %v4291 = vmul.f32 %v4253, %v4289
    %v4292 = vmul.f32 %v4254, %v4289
    %v4293 = vmul.f32 %v4255, %v4289
    %4298 = vrot.lane.b32.xlu0 %v4290, 124
    %v4299 = vpop.permute.xlu0 %4298
    %4300 = vrot.lane.b32.xlu0 %v4291, 124
    %v4301 = vpop.permute.xlu0 %4300
    %4302 = vrot.lane.b32.xlu0 %v4292, 124
    %v4303 = vpop.permute.xlu0 %4302
    %4304 = vrot.lane.b32.xlu0 %v4293, 124
    %v4305 = vpop.permute.xlu0 %4304
    %v4310 = vadd.f32 %v4284, %v4299
    %v4311 = vadd.f32 %v4285, %v4301
    %v4312 = vadd.f32 %v4286, %v4303
    %v4313 = vadd.f32 %v4287, %v4305
    %v4314 = vld [vmem:[%s1898 + $0x6] sm:$0xff]
    %v4315 = vld [vmem:[%s1898 + $0xe] sm:$0xff]
    %v4316 = vld [vmem:[%s1898 + $0x86] sm:$0xff]
    %v4317 = vld [vmem:[%s1898 + $0x8e] sm:$0xff]
    %s4318 = sld [smem:[#allocation7 + $0x39]]
    %v4319 = vstv %s4318
    %v4320 = vmul.f32 %v4314, %v4319
    %v4321 = vmul.f32 %v4315, %v4319
    %v4322 = vmul.f32 %v4316, %v4319
    %v4323 = vmul.f32 %v4317, %v4319
    %v4324 = vadd.f32 %v4310, %v4320
    %v4325 = vadd.f32 %v4311, %v4321
    %v4326 = vadd.f32 %v4312, %v4322
    %v4327 = vadd.f32 %v4313, %v4323
    %s4328 = sld [smem:[#allocation7 + $0x3a]]
    %v4329 = vstv %s4328
    %v4330 = vmul.f32 %v4314, %v4329
    %v4331 = vmul.f32 %v4315, %v4329
    %v4332 = vmul.f32 %v4316, %v4329
    %v4333 = vmul.f32 %v4317, %v4329
    %4338 = vrot.lane.b32.xlu0 %v4330, 126
    %v4339 = vpop.permute.xlu0 %4338
    %4340 = vrot.lane.b32.xlu0 %v4331, 126
    %v4341 = vpop.permute.xlu0 %4340
    %4342 = vrot.lane.b32.xlu0 %v4332, 126
    %v4343 = vpop.permute.xlu0 %4342
    %4344 = vrot.lane.b32.xlu0 %v4333, 126
    %v4345 = vpop.permute.xlu0 %4344
    %v4350 = vadd.f32 %v4324, %v4339
    %v4351 = vadd.f32 %v4325, %v4341
    %v4352 = vadd.f32 %v4326, %v4343
    %v4353 = vadd.f32 %v4327, %v4345
    %s4354 = sld [smem:[#allocation7 + $0x3b]]
    %v4355 = vstv %s4354
    %v4356 = vmul.f32 %v4314, %v4355
    %v4357 = vmul.f32 %v4315, %v4355
    %v4358 = vmul.f32 %v4316, %v4355
    %v4359 = vmul.f32 %v4317, %v4355
    %4364 = vrot.lane.b32.xlu0 %v4356, 124
    %v4365 = vpop.permute.xlu0 %4364
    %4366 = vrot.lane.b32.xlu0 %v4357, 124
    %v4367 = vpop.permute.xlu0 %4366
    %4368 = vrot.lane.b32.xlu0 %v4358, 124
    %v4369 = vpop.permute.xlu0 %4368
    %4370 = vrot.lane.b32.xlu0 %v4359, 124
    %v4371 = vpop.permute.xlu0 %4370
    %v4376 = vadd.f32 %v4350, %v4365
    %v4377 = vadd.f32 %v4351, %v4367
    %v4378 = vadd.f32 %v4352, %v4369
    %v4379 = vadd.f32 %v4353, %v4371
    %v4380 = vld [vmem:[%s1898 + $0x8] sm:$0xff]
    %v4381 = vld [vmem:[%s1898 + $0x10] sm:$0xff]
    %v4382 = vld [vmem:[%s1898 + $0x88] sm:$0xff]
    %v4383 = vld [vmem:[%s1898 + $0x90] sm:$0xff]
    %s4384 = sld [smem:[#allocation7 + $0x3c]]
    %v4385 = vstv %s4384
    %v4386 = vmul.f32 %v4380, %v4385
    %v4387 = vmul.f32 %v4381, %v4385
    %v4388 = vmul.f32 %v4382, %v4385
    %v4389 = vmul.f32 %v4383, %v4385
    %v4390 = vadd.f32 %v4376, %v4386
    %v4391 = vadd.f32 %v4377, %v4387
    %v4392 = vadd.f32 %v4378, %v4388
    %v4393 = vadd.f32 %v4379, %v4389
    %s4394 = sld [smem:[#allocation7 + $0x3d]]
    %v4395 = vstv %s4394
    %v4396 = vmul.f32 %v4380, %v4395
    %v4397 = vmul.f32 %v4381, %v4395
    %v4398 = vmul.f32 %v4382, %v4395
    %v4399 = vmul.f32 %v4383, %v4395
    %4404 = vrot.lane.b32.xlu0 %v4396, 126
    %v4405 = vpop.permute.xlu0 %4404
    %4406 = vrot.lane.b32.xlu0 %v4397, 126
    %v4407 = vpop.permute.xlu0 %4406
    %4408 = vrot.lane.b32.xlu0 %v4398, 126
    %v4409 = vpop.permute.xlu0 %4408
    %4410 = vrot.lane.b32.xlu0 %v4399, 126
    %v4411 = vpop.permute.xlu0 %4410
    %v4416 = vadd.f32 %v4390, %v4405
    %v4417 = vadd.f32 %v4391, %v4407
    %v4418 = vadd.f32 %v4392, %v4409
    %v4419 = vadd.f32 %v4393, %v4411
    %s4420 = sld [smem:[#allocation7 + $0x3e]]
    %v4421 = vstv %s4420
    %v4422 = vmul.f32 %v4380, %v4421
    %v4423 = vmul.f32 %v4381, %v4421
    %v4424 = vmul.f32 %v4382, %v4421
    %v4425 = vmul.f32 %v4383, %v4421
    %4430 = vrot.lane.b32.xlu0 %v4422, 124
    %v4431 = vpop.permute.xlu0 %4430
    %4432 = vrot.lane.b32.xlu0 %v4423, 124
    %v4433 = vpop.permute.xlu0 %4432
    %4434 = vrot.lane.b32.xlu0 %v4424, 124
    %v4435 = vpop.permute.xlu0 %4434
    %4436 = vrot.lane.b32.xlu0 %v4425, 124
    %v4437 = vpop.permute.xlu0 %4436
    %v4442 = vadd.f32 %v4416, %v4431
    %v4443 = vadd.f32 %v4417, %v4433
    %v4444 = vadd.f32 %v4418, %v4435
    %v4445 = vadd.f32 %v4419, %v4437
    %4450 = vrot.lane.b32.xlu0 %v4442, 124
    %v4451 = vpop.permute.xlu0 %4450
    %4452 = vrot.lane.b32.xlu0 %v4443, 124
    %v4453 = vpop.permute.xlu0 %4452
    %4454 = vrot.lane.b32.xlu0 %v4444, 124
    %v4455 = vpop.permute.xlu0 %4454
    %4456 = vrot.lane.b32.xlu0 %v4445, 124
    %v4457 = vpop.permute.xlu0 %4456
    %v4462 = vcombine.high %v4451, 0.0
    %v4464 = vunpack.c.l.s4 1983009808
    %v4465 = vunpack.c.0.s8 %v4464
    %v4466 = vlaneseq
    %v4467 = vshrl.u32 %v4466, 7
    %v4468 = vsub.s32 %v4465, %v4467
    %v4469 = vrot.slane %v4451, %v4468
    %v4471 = vunpack.c.l.s4 1983009808
    %v4472 = vunpack.c.0.s8 %v4471
    %v4473 = vlaneseq
    %v4474 = vshrl.u32 %v4473, 7
    %v4475 = vsub.s32 %v4472, %v4474
    %v4476 = vrot.slane %v4462, %v4475
    %v4477 = vcombine.high %v4469, 0.0
    %v4479 = vunpack.c.l.s4 1934713408
    %v4480 = vunpack.c.0.s8 %v4479
    %v4481 = vlaneseq
    %v4482 = vshrl.u32 %v4481, 7
    %v4483 = vsub.s32 %v4480, %v4482
    %v4484 = vrot.slane %v4469, %v4483
    %v4486 = vunpack.c.l.s4 1934713408
    %v4487 = vunpack.c.0.s8 %v4486
    %v4488 = vlaneseq
    %v4489 = vshrl.u32 %v4488, 7
    %v4490 = vsub.s32 %v4487, %v4489
    %v4491 = vrot.slane %v4477, %v4490
    %v4492 = vcombine.high %v4476, 0.0
    %v4494 = vunpack.c.l.s4 1934713408
    %v4495 = vunpack.c.0.s8 %v4494
    %v4496 = vlaneseq
    %v4497 = vshrl.u32 %v4496, 7
    %v4498 = vsub.s32 %v4495, %v4497
    %v4499 = vrot.slane %v4476, %v4498
    %v4501 = vunpack.c.l.s4 1934713408
    %v4502 = vunpack.c.0.s8 %v4501
    %v4503 = vlaneseq
    %v4504 = vshrl.u32 %v4503, 7
    %v4505 = vsub.s32 %v4502, %v4504
    %v4506 = vrot.slane %v4492, %v4505
    %v4507 = vcombine.high %v4484, 0.0
    %v4508 = vcombine.high %v4491, 0.0
    %v4509 = vcombine.high %v4499, 0.0
    %v4510 = vcombine.high %v4506, 0.0
    %v4511 = vcombine.high %v4453, 0.0
    %v4513 = vunpack.c.l.s4 1983009808
    %v4514 = vunpack.c.0.s8 %v4513
    %v4515 = vlaneseq
    %v4516 = vshrl.u32 %v4515, 7
    %v4517 = vsub.s32 %v4514, %v4516
    %v4518 = vrot.slane %v4453, %v4517
    %v4520 = vunpack.c.l.s4 1983009808
    %v4521 = vunpack.c.0.s8 %v4520
    %v4522 = vlaneseq
    %v4523 = vshrl.u32 %v4522, 7
    %v4524 = vsub.s32 %v4521, %v4523
    %v4525 = vrot.slane %v4511, %v4524
    %v4526 = vcombine.high %v4518, 0.0
    %v4528 = vunpack.c.l.s4 1934713408
    %v4529 = vunpack.c.0.s8 %v4528
    %v4530 = vlaneseq
    %v4531 = vshrl.u32 %v4530, 7
    %v4532 = vsub.s32 %v4529, %v4531
    %v4533 = vrot.slane %v4518, %v4532
    %v4535 = vunpack.c.l.s4 1934713408
    %v4536 = vunpack.c.0.s8 %v4535
    %v4537 = vlaneseq
    %v4538 = vshrl.u32 %v4537, 7
    %v4539 = vsub.s32 %v4536, %v4538
    %v4540 = vrot.slane %v4526, %v4539
    %v4541 = vcombine.high %v4525, 0.0
    %v4543 = vunpack.c.l.s4 1934713408
    %v4544 = vunpack.c.0.s8 %v4543
    %v4545 = vlaneseq
    %v4546 = vshrl.u32 %v4545, 7
    %v4547 = vsub.s32 %v4544, %v4546
    %v4548 = vrot.slane %v4525, %v4547
    %v4550 = vunpack.c.l.s4 1934713408
    %v4551 = vunpack.c.0.s8 %v4550
    %v4552 = vlaneseq
    %v4553 = vshrl.u32 %v4552, 7
    %v4554 = vsub.s32 %v4551, %v4553
    %v4555 = vrot.slane %v4541, %v4554
    %v4556 = vcombine.high %v4533, 0.0
    %v4557 = vcombine.high %v4540, 0.0
    %v4558 = vcombine.high %v4548, 0.0
    %v4559 = vcombine.high %v4555, 0.0
    %v4560 = vcombine.high %v4455, 0.0
    %v4562 = vunpack.c.l.s4 1983009808
    %v4563 = vunpack.c.0.s8 %v4562
    %v4564 = vlaneseq
    %v4565 = vshrl.u32 %v4564, 7
    %v4566 = vsub.s32 %v4563, %v4565
    %v4567 = vrot.slane %v4455, %v4566
    %v4569 = vunpack.c.l.s4 1983009808
    %v4570 = vunpack.c.0.s8 %v4569
    %v4571 = vlaneseq
    %v4572 = vshrl.u32 %v4571, 7
    %v4573 = vsub.s32 %v4570, %v4572
    %v4574 = vrot.slane %v4560, %v4573
    %v4575 = vcombine.high %v4567, 0.0
    %v4577 = vunpack.c.l.s4 1934713408
    %v4578 = vunpack.c.0.s8 %v4577
    %v4579 = vlaneseq
    %v4580 = vshrl.u32 %v4579, 7
    %v4581 = vsub.s32 %v4578, %v4580
    %v4582 = vrot.slane %v4567, %v4581
    %v4584 = vunpack.c.l.s4 1934713408
    %v4585 = vunpack.c.0.s8 %v4584
    %v4586 = vlaneseq
    %v4587 = vshrl.u32 %v4586, 7
    %v4588 = vsub.s32 %v4585, %v4587
    %v4589 = vrot.slane %v4575, %v4588
    %v4590 = vcombine.high %v4574, 0.0
    %v4592 = vunpack.c.l.s4 1934713408
    %v4593 = vunpack.c.0.s8 %v4592
    %v4594 = vlaneseq
    %v4595 = vshrl.u32 %v4594, 7
    %v4596 = vsub.s32 %v4593, %v4595
    %v4597 = vrot.slane %v4574, %v4596
    %v4599 = vunpack.c.l.s4 1934713408
    %v4600 = vunpack.c.0.s8 %v4599
    %v4601 = vlaneseq
    %v4602 = vshrl.u32 %v4601, 7
    %v4603 = vsub.s32 %v4600, %v4602
    %v4604 = vrot.slane %v4590, %v4603
    %v4605 = vcombine.high %v4582, 0.0
    %v4606 = vcombine.high %v4589, 0.0
    %v4607 = vcombine.high %v4597, 0.0
    %v4608 = vcombine.high %v4604, 0.0
    %v4609 = vcombine.high %v4457, 0.0
    %v4611 = vunpack.c.l.s4 1983009808
    %v4612 = vunpack.c.0.s8 %v4611
    %v4613 = vlaneseq
    %v4614 = vshrl.u32 %v4613, 7
    %v4615 = vsub.s32 %v4612, %v4614
    %v4616 = vrot.slane %v4457, %v4615
    %v4618 = vunpack.c.l.s4 1983009808
    %v4619 = vunpack.c.0.s8 %v4618
    %v4620 = vlaneseq
    %v4621 = vshrl.u32 %v4620, 7
    %v4622 = vsub.s32 %v4619, %v4621
    %v4623 = vrot.slane %v4609, %v4622
    %v4624 = vcombine.high %v4616, 0.0
    %v4626 = vunpack.c.l.s4 1934713408
    %v4627 = vunpack.c.0.s8 %v4626
    %v4628 = vlaneseq
    %v4629 = vshrl.u32 %v4628, 7
    %v4630 = vsub.s32 %v4627, %v4629
    %v4631 = vrot.slane %v4616, %v4630
    %v4633 = vunpack.c.l.s4 1934713408
    %v4634 = vunpack.c.0.s8 %v4633
    %v4635 = vlaneseq
    %v4636 = vshrl.u32 %v4635, 7
    %v4637 = vsub.s32 %v4634, %v4636
    %v4638 = vrot.slane %v4624, %v4637
    %v4639 = vcombine.high %v4623, 0.0
    %v4641 = vunpack.c.l.s4 1934713408
    %v4642 = vunpack.c.0.s8 %v4641
    %v4643 = vlaneseq
    %v4644 = vshrl.u32 %v4643, 7
    %v4645 = vsub.s32 %v4642, %v4644
    %v4646 = vrot.slane %v4623, %v4645
    %v4648 = vunpack.c.l.s4 1934713408
    %v4649 = vunpack.c.0.s8 %v4648
    %v4650 = vlaneseq
    %v4651 = vshrl.u32 %v4650, 7
    %v4652 = vsub.s32 %v4649, %v4651
    %v4653 = vrot.slane %v4639, %v4652
    %v4654 = vcombine.high %v4631, 0.0
    %v4655 = vcombine.high %v4638, 0.0
    %v4656 = vcombine.high %v4646, 0.0
    %v4657 = vcombine.high %v4653, 0.0
    %4660 = vrot.lane.b32.xlu0 %v4507, 16
    %v4661 = vpop.permute.xlu0 %4660
    %4662 = vrot.lane.b32.xlu0 %v4605, 16
    %v4663 = vpop.permute.xlu0 %4662
    %4668 = vrot.lane.b32.xlu0 %v4491, 32
    %v4669 = vpop.permute.xlu0 %4668
    %4670 = vrot.lane.b32.xlu0 %v4589, 32
    %v4671 = vpop.permute.xlu0 %4670
    %4676 = vrot.lane.b32.xlu0 %v4508, 48
    %v4677 = vpop.permute.xlu0 %4676
    %4678 = vrot.lane.b32.xlu0 %v4606, 48
    %v4679 = vpop.permute.xlu0 %4678
    %4684 = vrot.lane.b32.xlu0 %v4499, 64
    %v4685 = vpop.permute.xlu0 %4684
    %4686 = vrot.lane.b32.xlu0 %v4597, 64
    %v4687 = vpop.permute.xlu0 %4686
    %4692 = vrot.lane.b32.xlu0 %v4509, 80
    %v4693 = vpop.permute.xlu0 %4692
    %4694 = vrot.lane.b32.xlu0 %v4607, 80
    %v4695 = vpop.permute.xlu0 %4694
    %4700 = vrot.lane.b32.xlu0 %v4506, 96
    %v4701 = vpop.permute.xlu0 %4700
    %4702 = vrot.lane.b32.xlu0 %v4604, 96
    %v4703 = vpop.permute.xlu0 %4702
    %4708 = vrot.lane.b32.xlu0 %v4510, 112
    %v4709 = vpop.permute.xlu0 %4708
    %4710 = vrot.lane.b32.xlu0 %v4608, 112
    %v4711 = vpop.permute.xlu0 %4710
    %4716 = vrot.lane.b32.xlu0 %v4556, 16
    %v4717 = vpop.permute.xlu0 %4716
    %4718 = vrot.lane.b32.xlu0 %v4654, 16
    %v4719 = vpop.permute.xlu0 %4718
    %4724 = vrot.lane.b32.xlu0 %v4540, 32
    %v4725 = vpop.permute.xlu0 %4724
    %4726 = vrot.lane.b32.xlu0 %v4638, 32
    %v4727 = vpop.permute.xlu0 %4726
    %4732 = vrot.lane.b32.xlu0 %v4557, 48
    %v4733 = vpop.permute.xlu0 %4732
    %4734 = vrot.lane.b32.xlu0 %v4655, 48
    %v4735 = vpop.permute.xlu0 %4734
    %4740 = vrot.lane.b32.xlu0 %v4548, 64
    %v4741 = vpop.permute.xlu0 %4740
    %4742 = vrot.lane.b32.xlu0 %v4646, 64
    %v4743 = vpop.permute.xlu0 %4742
    %4748 = vrot.lane.b32.xlu0 %v4558, 80
    %v4749 = vpop.permute.xlu0 %4748
    %4750 = vrot.lane.b32.xlu0 %v4656, 80
    %v4751 = vpop.permute.xlu0 %4750
    %4756 = vrot.lane.b32.xlu0 %v4555, 96
    %v4757 = vpop.permute.xlu0 %4756
    %4758 = vrot.lane.b32.xlu0 %v4653, 96
    %v4759 = vpop.permute.xlu0 %4758
    %4764 = vrot.lane.b32.xlu0 %v4559, 112
    %v4765 = vpop.permute.xlu0 %4764
    %4766 = vrot.lane.b32.xlu0 %v4657, 112
    %v4767 = vpop.permute.xlu0 %4766
    %v4770 = vsel %vm1229, %v4484, %v4661
    %v4771 = vsel %vm1229, %v4582, %v4663
    %v4772 = vsel %vm1232, %v4770, %v4669
    %v4773 = vsel %vm1232, %v4771, %v4671
    %v4774 = vsel %vm1235, %v4772, %v4677
    %v4775 = vsel %vm1235, %v4773, %v4679
    %v4776 = vsel %vm1238, %v4774, %v4685
    %v4777 = vsel %vm1238, %v4775, %v4687
    %v4778 = vsel %vm1241, %v4776, %v4693
    %v4779 = vsel %vm1241, %v4777, %v4695
    %v4780 = vsel %vm1244, %v4778, %v4701
    %v4781 = vsel %vm1244, %v4779, %v4703
    %v4782 = vsel %vm1247, %v4780, %v4709
    %v4783 = vsel %vm1247, %v4781, %v4711
    %v4784 = vsel %vm1229, %v4533, %v4717
    %v4785 = vsel %vm1229, %v4631, %v4719
    %v4786 = vsel %vm1232, %v4784, %v4725
    %v4787 = vsel %vm1232, %v4785, %v4727
    %v4788 = vsel %vm1235, %v4786, %v4733
    %v4789 = vsel %vm1235, %v4787, %v4735
    %v4790 = vsel %vm1238, %v4788, %v4741
    %v4791 = vsel %vm1238, %v4789, %v4743
    %v4792 = vsel %vm1241, %v4790, %v4749
    %v4793 = vsel %vm1241, %v4791, %v4751
    %v4794 = vsel %vm1244, %v4792, %v4757
    %v4795 = vsel %vm1244, %v4793, %v4759
    %v4796 = vsel %vm1247, %v4794, %v4765
    %v4797 = vsel %vm1247, %v4795, %v4767
    %v4802 = vcombine.low %v4782, %v4796
    %v4804 = vunpack.c.l.s4 1966171168
    %v4805 = vunpack.c.0.s8 %v4804
    %v4806 = vlaneseq
    %v4807 = vshrl.u32 %v4806, 7
    %v4808 = vsub.s32 %v4805, %v4807
    %v4809 = vrot.slane %v4802, %v4808
    %v4811 = vunpack.c.l.s4 1966171168
    %v4812 = vunpack.c.0.s8 %v4811
    %v4813 = vlaneseq
    %v4814 = vshrl.u32 %v4813, 7
    %v4815 = vsub.s32 %v4812, %v4814
    %v4816 = vrot.slane %v4809, %v4815
    %v4817 = vcombine.low %v4783, %v4797
    %v4819 = vunpack.c.l.s4 1966171168
    %v4820 = vunpack.c.0.s8 %v4819
    %v4821 = vlaneseq
    %v4822 = vshrl.u32 %v4821, 7
    %v4823 = vsub.s32 %v4820, %v4822
    %v4824 = vrot.slane %v4817, %v4823
    %v4826 = vunpack.c.l.s4 1966171168
    %v4827 = vunpack.c.0.s8 %v4826
    %v4828 = vlaneseq
    %v4829 = vshrl.u32 %v4828, 7
    %v4830 = vsub.s32 %v4827, %v4829
    %v4831 = vrot.slane %v4824, %v4830
    %s4834 = scalar_lea.vmem [#allocation8], 6
    %4835 = vst.msk [vmem:[%s4834] ss:$8 sm:$0x3] %vm1303, %v4816
    %4836 = vst.msk [vmem:[%s4834] ss:$8 sm:$0x0] %vm1303, %v4816
    %s4837 = scalar_lea.vmem [#allocation8], 38
    %4838 = vst.msk [vmem:[%s4837] ss:$8 sm:$0x3] %vm1303, %v4831
    %4839 = vst.msk [vmem:[%s4837] ss:$8 sm:$0x0] %vm1303, %v4831
    %v4840 = vld [vmem:[%s2487 + $0x4] sm:$0xff]
    %v4841 = vld [vmem:[%s2487 + $0xc] sm:$0xff]
    %v4842 = vld [vmem:[%s2487 + $0x84] sm:$0xff]
    %v4843 = vld [vmem:[%s2487 + $0x8c] sm:$0xff]
    %s4844 = sld [smem:[#allocation7 + $0x3f]]
    %v4845 = vstv %s4844
    %v4846 = vmul.f32 %v4840, %v4845
    %v4847 = vmul.f32 %v4841, %v4845
    %v4848 = vmul.f32 %v4842, %v4845
    %v4849 = vmul.f32 %v4843, %v4845
    %s4850 = sld [smem:[#allocation7 + $0x40]]
    %v4851 = vstv %s4850
    %v4852 = vmul.f32 %v4840, %v4851
    %v4853 = vmul.f32 %v4841, %v4851
    %v4854 = vmul.f32 %v4842, %v4851
    %v4855 = vmul.f32 %v4843, %v4851
    %4860 = vrot.lane.b32.xlu0 %v4852, 126
    %v4861 = vpop.permute.xlu0 %4860
    %4862 = vrot.lane.b32.xlu0 %v4853, 126
    %v4863 = vpop.permute.xlu0 %4862
    %4864 = vrot.lane.b32.xlu0 %v4854, 126
    %v4865 = vpop.permute.xlu0 %4864
    %4866 = vrot.lane.b32.xlu0 %v4855, 126
    %v4867 = vpop.permute.xlu0 %4866
    %v4872 = vadd.f32 %v4846, %v4861
    %v4873 = vadd.f32 %v4847, %v4863
    %v4874 = vadd.f32 %v4848, %v4865
    %v4875 = vadd.f32 %v4849, %v4867
    %s4876 = sld [smem:[#allocation7 + $0x41]]
    %v4877 = vstv %s4876
    %v4878 = vmul.f32 %v4840, %v4877
    %v4879 = vmul.f32 %v4841, %v4877
    %v4880 = vmul.f32 %v4842, %v4877
    %v4881 = vmul.f32 %v4843, %v4877
    %4886 = vrot.lane.b32.xlu0 %v4878, 124
    %v4887 = vpop.permute.xlu0 %4886
    %4888 = vrot.lane.b32.xlu0 %v4879, 124
    %v4889 = vpop.permute.xlu0 %4888
    %4890 = vrot.lane.b32.xlu0 %v4880, 124
    %v4891 = vpop.permute.xlu0 %4890
    %4892 = vrot.lane.b32.xlu0 %v4881, 124
    %v4893 = vpop.permute.xlu0 %4892
    %v4898 = vadd.f32 %v4872, %v4887
    %v4899 = vadd.f32 %v4873, %v4889
    %v4900 = vadd.f32 %v4874, %v4891
    %v4901 = vadd.f32 %v4875, %v4893
    %v4902 = vld [vmem:[%s2487 + $0x6] sm:$0xff]
    %v4903 = vld [vmem:[%s2487 + $0xe] sm:$0xff]
    %v4904 = vld [vmem:[%s2487 + $0x86] sm:$0xff]
    %v4905 = vld [vmem:[%s2487 + $0x8e] sm:$0xff]
    %s4906 = sld [smem:[#allocation7 + $0x42]]
    %v4907 = vstv %s4906
    %v4908 = vmul.f32 %v4902, %v4907
    %v4909 = vmul.f32 %v4903, %v4907
    %v4910 = vmul.f32 %v4904, %v4907
    %v4911 = vmul.f32 %v4905, %v4907
    %v4912 = vadd.f32 %v4898, %v4908
    %v4913 = vadd.f32 %v4899, %v4909
    %v4914 = vadd.f32 %v4900, %v4910
    %v4915 = vadd.f32 %v4901, %v4911
    %s4916 = sld [smem:[#allocation7 + $0x43]]
    %v4917 = vstv %s4916
    %v4918 = vmul.f32 %v4902, %v4917
    %v4919 = vmul.f32 %v4903, %v4917
    %v4920 = vmul.f32 %v4904, %v4917
    %v4921 = vmul.f32 %v4905, %v4917
    %4926 = vrot.lane.b32.xlu0 %v4918, 126
    %v4927 = vpop.permute.xlu0 %4926
    %4928 = vrot.lane.b32.xlu0 %v4919, 126
    %v4929 = vpop.permute.xlu0 %4928
    %4930 = vrot.lane.b32.xlu0 %v4920, 126
    %v4931 = vpop.permute.xlu0 %4930
    %4932 = vrot.lane.b32.xlu0 %v4921, 126
    %v4933 = vpop.permute.xlu0 %4932
    %v4938 = vadd.f32 %v4912, %v4927
    %v4939 = vadd.f32 %v4913, %v4929
    %v4940 = vadd.f32 %v4914, %v4931
    %v4941 = vadd.f32 %v4915, %v4933
    %s4942 = sld [smem:[#allocation7 + $0x44]]
    %v4943 = vstv %s4942
    %v4944 = vmul.f32 %v4902, %v4943
    %v4945 = vmul.f32 %v4903, %v4943
    %v4946 = vmul.f32 %v4904, %v4943
    %v4947 = vmul.f32 %v4905, %v4943
    %4952 = vrot.lane.b32.xlu0 %v4944, 124
    %v4953 = vpop.permute.xlu0 %4952
    %4954 = vrot.lane.b32.xlu0 %v4945, 124
    %v4955 = vpop.permute.xlu0 %4954
    %4956 = vrot.lane.b32.xlu0 %v4946, 124
    %v4957 = vpop.permute.xlu0 %4956
    %4958 = vrot.lane.b32.xlu0 %v4947, 124
    %v4959 = vpop.permute.xlu0 %4958
    %v4964 = vadd.f32 %v4938, %v4953
    %v4965 = vadd.f32 %v4939, %v4955
    %v4966 = vadd.f32 %v4940, %v4957
    %v4967 = vadd.f32 %v4941, %v4959
    %v4968 = vld [vmem:[%s2487 + $0x8] sm:$0xff]
    %v4969 = vld [vmem:[%s2487 + $0x10] sm:$0xff]
    %v4970 = vld [vmem:[%s2487 + $0x88] sm:$0xff]
    %v4971 = vld [vmem:[%s2487 + $0x90] sm:$0xff]
    %s4972 = sld [smem:[#allocation7 + $0x45]]
    %v4973 = vstv %s4972
    %v4974 = vmul.f32 %v4968, %v4973
    %v4975 = vmul.f32 %v4969, %v4973
    %v4976 = vmul.f32 %v4970, %v4973
    %v4977 = vmul.f32 %v4971, %v4973
    %v4978 = vadd.f32 %v4964, %v4974
    %v4979 = vadd.f32 %v4965, %v4975
    %v4980 = vadd.f32 %v4966, %v4976
    %v4981 = vadd.f32 %v4967, %v4977
    %s4982 = sld [smem:[#allocation7 + $0x46]]
    %v4983 = vstv %s4982
    %v4984 = vmul.f32 %v4968, %v4983
    %v4985 = vmul.f32 %v4969, %v4983
    %v4986 = vmul.f32 %v4970, %v4983
    %v4987 = vmul.f32 %v4971, %v4983
    %4992 = vrot.lane.b32.xlu0 %v4984, 126
    %v4993 = vpop.permute.xlu0 %4992
    %4994 = vrot.lane.b32.xlu0 %v4985, 126
    %v4995 = vpop.permute.xlu0 %4994
    %4996 = vrot.lane.b32.xlu0 %v4986, 126
    %v4997 = vpop.permute.xlu0 %4996
    %4998 = vrot.lane.b32.xlu0 %v4987, 126
    %v4999 = vpop.permute.xlu0 %4998
    %v5004 = vadd.f32 %v4978, %v4993
    %v5005 = vadd.f32 %v4979, %v4995
    %v5006 = vadd.f32 %v4980, %v4997
    %v5007 = vadd.f32 %v4981, %v4999
    %s5008 = sld [smem:[#allocation7 + $0x47]]
    %v5009 = vstv %s5008
    %v5010 = vmul.f32 %v4968, %v5009
    %v5011 = vmul.f32 %v4969, %v5009
    %v5012 = vmul.f32 %v4970, %v5009
    %v5013 = vmul.f32 %v4971, %v5009
    %5018 = vrot.lane.b32.xlu0 %v5010, 124
    %v5019 = vpop.permute.xlu0 %5018
    %5020 = vrot.lane.b32.xlu0 %v5011, 124
    %v5021 = vpop.permute.xlu0 %5020
    %5022 = vrot.lane.b32.xlu0 %v5012, 124
    %v5023 = vpop.permute.xlu0 %5022
    %5024 = vrot.lane.b32.xlu0 %v5013, 124
    %v5025 = vpop.permute.xlu0 %5024
    %v5030 = vadd.f32 %v5004, %v5019
    %v5031 = vadd.f32 %v5005, %v5021
    %v5032 = vadd.f32 %v5006, %v5023
    %v5033 = vadd.f32 %v5007, %v5025
    %5038 = vrot.lane.b32.xlu0 %v5030, 124
    %v5039 = vpop.permute.xlu0 %5038
    %5040 = vrot.lane.b32.xlu0 %v5031, 124
    %v5041 = vpop.permute.xlu0 %5040
    %5042 = vrot.lane.b32.xlu0 %v5032, 124
    %v5043 = vpop.permute.xlu0 %5042
    %5044 = vrot.lane.b32.xlu0 %v5033, 124
    %v5045 = vpop.permute.xlu0 %5044
    %v5050 = vcombine.high %v5039, 0.0
    %v5052 = vunpack.c.l.s4 1983009808
    %v5053 = vunpack.c.0.s8 %v5052
    %v5054 = vlaneseq
    %v5055 = vshrl.u32 %v5054, 7
    %v5056 = vsub.s32 %v5053, %v5055
    %v5057 = vrot.slane %v5039, %v5056
    %v5059 = vunpack.c.l.s4 1983009808
    %v5060 = vunpack.c.0.s8 %v5059
    %v5061 = vlaneseq
    %v5062 = vshrl.u32 %v5061, 7
    %v5063 = vsub.s32 %v5060, %v5062
    %v5064 = vrot.slane %v5050, %v5063
    %v5065 = vcombine.high %v5057, 0.0
    %v5067 = vunpack.c.l.s4 1934713408
    %v5068 = vunpack.c.0.s8 %v5067
    %v5069 = vlaneseq
    %v5070 = vshrl.u32 %v5069, 7
    %v5071 = vsub.s32 %v5068, %v5070
    %v5072 = vrot.slane %v5057, %v5071
    %v5074 = vunpack.c.l.s4 1934713408
    %v5075 = vunpack.c.0.s8 %v5074
    %v5076 = vlaneseq
    %v5077 = vshrl.u32 %v5076, 7
    %v5078 = vsub.s32 %v5075, %v5077
    %v5079 = vrot.slane %v5065, %v5078
    %v5080 = vcombine.high %v5064, 0.0
    %v5082 = vunpack.c.l.s4 1934713408
    %v5083 = vunpack.c.0.s8 %v5082
    %v5084 = vlaneseq
    %v5085 = vshrl.u32 %v5084, 7
    %v5086 = vsub.s32 %v5083, %v5085
    %v5087 = vrot.slane %v5064, %v5086
    %v5089 = vunpack.c.l.s4 1934713408
    %v5090 = vunpack.c.0.s8 %v5089
    %v5091 = vlaneseq
    %v5092 = vshrl.u32 %v5091, 7
    %v5093 = vsub.s32 %v5090, %v5092
    %v5094 = vrot.slane %v5080, %v5093
    %v5095 = vcombine.high %v5072, 0.0
    %v5096 = vcombine.high %v5079, 0.0
    %v5097 = vcombine.high %v5087, 0.0
    %v5098 = vcombine.high %v5094, 0.0
    %v5099 = vcombine.high %v5041, 0.0
    %v5101 = vunpack.c.l.s4 1983009808
    %v5102 = vunpack.c.0.s8 %v5101
    %v5103 = vlaneseq
    %v5104 = vshrl.u32 %v5103, 7
    %v5105 = vsub.s32 %v5102, %v5104
    %v5106 = vrot.slane %v5041, %v5105
    %v5108 = vunpack.c.l.s4 1983009808
    %v5109 = vunpack.c.0.s8 %v5108
    %v5110 = vlaneseq
    %v5111 = vshrl.u32 %v5110, 7
    %v5112 = vsub.s32 %v5109, %v5111
    %v5113 = vrot.slane %v5099, %v5112
    %v5114 = vcombine.high %v5106, 0.0
    %v5116 = vunpack.c.l.s4 1934713408
    %v5117 = vunpack.c.0.s8 %v5116
    %v5118 = vlaneseq
    %v5119 = vshrl.u32 %v5118, 7
    %v5120 = vsub.s32 %v5117, %v5119
    %v5121 = vrot.slane %v5106, %v5120
    %v5123 = vunpack.c.l.s4 1934713408
    %v5124 = vunpack.c.0.s8 %v5123
    %v5125 = vlaneseq
    %v5126 = vshrl.u32 %v5125, 7
    %v5127 = vsub.s32 %v5124, %v5126
    %v5128 = vrot.slane %v5114, %v5127
    %v5129 = vcombine.high %v5113, 0.0
    %v5131 = vunpack.c.l.s4 1934713408
    %v5132 = vunpack.c.0.s8 %v5131
    %v5133 = vlaneseq
    %v5134 = vshrl.u32 %v5133, 7
    %v5135 = vsub.s32 %v5132, %v5134
    %v5136 = vrot.slane %v5113, %v5135
    %v5138 = vunpack.c.l.s4 1934713408
    %v5139 = vunpack.c.0.s8 %v5138
    %v5140 = vlaneseq
    %v5141 = vshrl.u32 %v5140, 7
    %v5142 = vsub.s32 %v5139, %v5141
    %v5143 = vrot.slane %v5129, %v5142
    %v5144 = vcombine.high %v5121, 0.0
    %v5145 = vcombine.high %v5128, 0.0
    %v5146 = vcombine.high %v5136, 0.0
    %v5147 = vcombine.high %v5143, 0.0
    %v5148 = vcombine.high %v5043, 0.0
    %v5150 = vunpack.c.l.s4 1983009808
    %v5151 = vunpack.c.0.s8 %v5150
    %v5152 = vlaneseq
    %v5153 = vshrl.u32 %v5152, 7
    %v5154 = vsub.s32 %v5151, %v5153
    %v5155 = vrot.slane %v5043, %v5154
    %v5157 = vunpack.c.l.s4 1983009808
    %v5158 = vunpack.c.0.s8 %v5157
    %v5159 = vlaneseq
    %v5160 = vshrl.u32 %v5159, 7
    %v5161 = vsub.s32 %v5158, %v5160
    %v5162 = vrot.slane %v5148, %v5161
    %v5163 = vcombine.high %v5155, 0.0
    %v5165 = vunpack.c.l.s4 1934713408
    %v5166 = vunpack.c.0.s8 %v5165
    %v5167 = vlaneseq
    %v5168 = vshrl.u32 %v5167, 7
    %v5169 = vsub.s32 %v5166, %v5168
    %v5170 = vrot.slane %v5155, %v5169
    %v5172 = vunpack.c.l.s4 1934713408
    %v5173 = vunpack.c.0.s8 %v5172
    %v5174 = vlaneseq
    %v5175 = vshrl.u32 %v5174, 7
    %v5176 = vsub.s32 %v5173, %v5175
    %v5177 = vrot.slane %v5163, %v5176
    %v5178 = vcombine.high %v5162, 0.0
    %v5180 = vunpack.c.l.s4 1934713408
    %v5181 = vunpack.c.0.s8 %v5180
    %v5182 = vlaneseq
    %v5183 = vshrl.u32 %v5182, 7
    %v5184 = vsub.s32 %v5181, %v5183
    %v5185 = vrot.slane %v5162, %v5184
    %v5187 = vunpack.c.l.s4 1934713408
    %v5188 = vunpack.c.0.s8 %v5187
    %v5189 = vlaneseq
    %v5190 = vshrl.u32 %v5189, 7
    %v5191 = vsub.s32 %v5188, %v5190
    %v5192 = vrot.slane %v5178, %v5191
    %v5193 = vcombine.high %v5170, 0.0
    %v5194 = vcombine.high %v5177, 0.0
    %v5195 = vcombine.high %v5185, 0.0
    %v5196 = vcombine.high %v5192, 0.0
    %v5197 = vcombine.high %v5045, 0.0
    %v5199 = vunpack.c.l.s4 1983009808
    %v5200 = vunpack.c.0.s8 %v5199
    %v5201 = vlaneseq
    %v5202 = vshrl.u32 %v5201, 7
    %v5203 = vsub.s32 %v5200, %v5202
    %v5204 = vrot.slane %v5045, %v5203
    %v5206 = vunpack.c.l.s4 1983009808
    %v5207 = vunpack.c.0.s8 %v5206
    %v5208 = vlaneseq
    %v5209 = vshrl.u32 %v5208, 7
    %v5210 = vsub.s32 %v5207, %v5209
    %v5211 = vrot.slane %v5197, %v5210
    %v5212 = vcombine.high %v5204, 0.0
    %v5214 = vunpack.c.l.s4 1934713408
    %v5215 = vunpack.c.0.s8 %v5214
    %v5216 = vlaneseq
    %v5217 = vshrl.u32 %v5216, 7
    %v5218 = vsub.s32 %v5215, %v5217
    %v5219 = vrot.slane %v5204, %v5218
    %v5221 = vunpack.c.l.s4 1934713408
    %v5222 = vunpack.c.0.s8 %v5221
    %v5223 = vlaneseq
    %v5224 = vshrl.u32 %v5223, 7
    %v5225 = vsub.s32 %v5222, %v5224
    %v5226 = vrot.slane %v5212, %v5225
    %v5227 = vcombine.high %v5211, 0.0
    %v5229 = vunpack.c.l.s4 1934713408
    %v5230 = vunpack.c.0.s8 %v5229
    %v5231 = vlaneseq
    %v5232 = vshrl.u32 %v5231, 7
    %v5233 = vsub.s32 %v5230, %v5232
    %v5234 = vrot.slane %v5211, %v5233
    %v5236 = vunpack.c.l.s4 1934713408
    %v5237 = vunpack.c.0.s8 %v5236
    %v5238 = vlaneseq
    %v5239 = vshrl.u32 %v5238, 7
    %v5240 = vsub.s32 %v5237, %v5239
    %v5241 = vrot.slane %v5227, %v5240
    %v5242 = vcombine.high %v5219, 0.0
    %v5243 = vcombine.high %v5226, 0.0
    %v5244 = vcombine.high %v5234, 0.0
    %v5245 = vcombine.high %v5241, 0.0
    %5248 = vrot.lane.b32.xlu0 %v5095, 16
    %v5249 = vpop.permute.xlu0 %5248
    %5250 = vrot.lane.b32.xlu0 %v5193, 16
    %v5251 = vpop.permute.xlu0 %5250
    %5256 = vrot.lane.b32.xlu0 %v5079, 32
    %v5257 = vpop.permute.xlu0 %5256
    %5258 = vrot.lane.b32.xlu0 %v5177, 32
    %v5259 = vpop.permute.xlu0 %5258
    %5264 = vrot.lane.b32.xlu0 %v5096, 48
    %v5265 = vpop.permute.xlu0 %5264
    %5266 = vrot.lane.b32.xlu0 %v5194, 48
    %v5267 = vpop.permute.xlu0 %5266
    %5272 = vrot.lane.b32.xlu0 %v5087, 64
    %v5273 = vpop.permute.xlu0 %5272
    %5274 = vrot.lane.b32.xlu0 %v5185, 64
    %v5275 = vpop.permute.xlu0 %5274
    %5280 = vrot.lane.b32.xlu0 %v5097, 80
    %v5281 = vpop.permute.xlu0 %5280
    %5282 = vrot.lane.b32.xlu0 %v5195, 80
    %v5283 = vpop.permute.xlu0 %5282
    %5288 = vrot.lane.b32.xlu0 %v5094, 96
    %v5289 = vpop.permute.xlu0 %5288
    %5290 = vrot.lane.b32.xlu0 %v5192, 96
    %v5291 = vpop.permute.xlu0 %5290
    %5296 = vrot.lane.b32.xlu0 %v5098, 112
    %v5297 = vpop.permute.xlu0 %5296
    %5298 = vrot.lane.b32.xlu0 %v5196, 112
    %v5299 = vpop.permute.xlu0 %5298
    %5304 = vrot.lane.b32.xlu0 %v5144, 16
    %v5305 = vpop.permute.xlu0 %5304
    %5306 = vrot.lane.b32.xlu0 %v5242, 16
    %v5307 = vpop.permute.xlu0 %5306
    %5312 = vrot.lane.b32.xlu0 %v5128, 32
    %v5313 = vpop.permute.xlu0 %5312
    %5314 = vrot.lane.b32.xlu0 %v5226, 32
    %v5315 = vpop.permute.xlu0 %5314
    %5320 = vrot.lane.b32.xlu0 %v5145, 48
    %v5321 = vpop.permute.xlu0 %5320
    %5322 = vrot.lane.b32.xlu0 %v5243, 48
    %v5323 = vpop.permute.xlu0 %5322
    %5328 = vrot.lane.b32.xlu0 %v5136, 64
    %v5329 = vpop.permute.xlu0 %5328
    %5330 = vrot.lane.b32.xlu0 %v5234, 64
    %v5331 = vpop.permute.xlu0 %5330
    %5336 = vrot.lane.b32.xlu0 %v5146, 80
    %v5337 = vpop.permute.xlu0 %5336
    %5338 = vrot.lane.b32.xlu0 %v5244, 80
    %v5339 = vpop.permute.xlu0 %5338
    %5344 = vrot.lane.b32.xlu0 %v5143, 96
    %v5345 = vpop.permute.xlu0 %5344
    %5346 = vrot.lane.b32.xlu0 %v5241, 96
    %v5347 = vpop.permute.xlu0 %5346
    %5352 = vrot.lane.b32.xlu0 %v5147, 112
    %v5353 = vpop.permute.xlu0 %5352
    %5354 = vrot.lane.b32.xlu0 %v5245, 112
    %v5355 = vpop.permute.xlu0 %5354
    %v5358 = vsel %vm1229, %v5072, %v5249
    %v5359 = vsel %vm1229, %v5170, %v5251
    %v5360 = vsel %vm1232, %v5358, %v5257
    %v5361 = vsel %vm1232, %v5359, %v5259
    %v5362 = vsel %vm1235, %v5360, %v5265
    %v5363 = vsel %vm1235, %v5361, %v5267
    %v5364 = vsel %vm1238, %v5362, %v5273
    %v5365 = vsel %vm1238, %v5363, %v5275
    %v5366 = vsel %vm1241, %v5364, %v5281
    %v5367 = vsel %vm1241, %v5365, %v5283
    %v5368 = vsel %vm1244, %v5366, %v5289
    %v5369 = vsel %vm1244, %v5367, %v5291
    %v5370 = vsel %vm1247, %v5368, %v5297
    %v5371 = vsel %vm1247, %v5369, %v5299
    %v5372 = vsel %vm1229, %v5121, %v5305
    %v5373 = vsel %vm1229, %v5219, %v5307
    %v5374 = vsel %vm1232, %v5372, %v5313
    %v5375 = vsel %vm1232, %v5373, %v5315
    %v5376 = vsel %vm1235, %v5374, %v5321
    %v5377 = vsel %vm1235, %v5375, %v5323
    %v5378 = vsel %vm1238, %v5376, %v5329
    %v5379 = vsel %vm1238, %v5377, %v5331
    %v5380 = vsel %vm1241, %v5378, %v5337
    %v5381 = vsel %vm1241, %v5379, %v5339
    %v5382 = vsel %vm1244, %v5380, %v5345
    %v5383 = vsel %vm1244, %v5381, %v5347
    %v5384 = vsel %vm1247, %v5382, %v5353
    %v5385 = vsel %vm1247, %v5383, %v5355
    %v5390 = vcombine.low %v5370, %v5384
    %v5392 = vunpack.c.l.s4 1966171168
    %v5393 = vunpack.c.0.s8 %v5392
    %v5394 = vlaneseq
    %v5395 = vshrl.u32 %v5394, 7
    %v5396 = vsub.s32 %v5393, %v5395
    %v5397 = vrot.slane %v5390, %v5396
    %v5399 = vunpack.c.l.s4 1966171168
    %v5400 = vunpack.c.0.s8 %v5399
    %v5401 = vlaneseq
    %v5402 = vshrl.u32 %v5401, 7
    %v5403 = vsub.s32 %v5400, %v5402
    %v5404 = vrot.slane %v5397, %v5403
    %v5405 = vcombine.low %v5371, %v5385
    %v5407 = vunpack.c.l.s4 1966171168
    %v5408 = vunpack.c.0.s8 %v5407
    %v5409 = vlaneseq
    %v5410 = vshrl.u32 %v5409, 7
    %v5411 = vsub.s32 %v5408, %v5410
    %v5412 = vrot.slane %v5405, %v5411
    %v5414 = vunpack.c.l.s4 1966171168
    %v5415 = vunpack.c.0.s8 %v5414
    %v5416 = vlaneseq
    %v5417 = vshrl.u32 %v5416, 7
    %v5418 = vsub.s32 %v5415, %v5417
    %v5419 = vrot.slane %v5412, %v5418
    %s5422 = scalar_lea.vmem [#allocation8], 7
    %5423 = vst.msk [vmem:[%s5422] ss:$8 sm:$0x3] %vm1303, %v5404
    %5424 = vst.msk [vmem:[%s5422] ss:$8 sm:$0x0] %vm1303, %v5404
    %s5425 = scalar_lea.vmem [#allocation8], 39
    %5426 = vst.msk [vmem:[%s5425] ss:$8 sm:$0x3] %vm1303, %v5419
    %5427 = vst.msk [vmem:[%s5425] ss:$8 sm:$0x0] %vm1303, %v5419
    %v5428 = vld [vmem:[#allocation2 + $0x2] sm:$0xff]
    %v5429 = vld [vmem:[#allocation2 + $0xa] sm:$0xff]
    %v5430 = vld [vmem:[#allocation2 + $0x82] sm:$0xff]
    %v5431 = vld [vmem:[#allocation2 + $0x8a] sm:$0xff]
    %s5432 = sld [smem:[#allocation7 + $0x48]]
    %v5433 = vstv %s5432
    %v5434 = vmul.f32 %v5428, %v5433
    %v5435 = vmul.f32 %v5429, %v5433
    %v5436 = vmul.f32 %v5430, %v5433
    %v5437 = vmul.f32 %v5431, %v5433
    %s5438 = sld [smem:[#allocation7 + $0x49]]
    %v5439 = vstv %s5438
    %v5440 = vmul.f32 %v5428, %v5439
    %v5441 = vmul.f32 %v5429, %v5439
    %v5442 = vmul.f32 %v5430, %v5439
    %v5443 = vmul.f32 %v5431, %v5439
    %5448 = vrot.lane.b32.xlu0 %v5440, 124
    %v5449 = vpop.permute.xlu0 %5448
    %5450 = vrot.lane.b32.xlu0 %v5441, 124
    %v5451 = vpop.permute.xlu0 %5450
    %5452 = vrot.lane.b32.xlu0 %v5442, 124
    %v5453 = vpop.permute.xlu0 %5452
    %5454 = vrot.lane.b32.xlu0 %v5443, 124
    %v5455 = vpop.permute.xlu0 %5454
    %v5460 = vadd.f32 %v5434, %v5449
    %v5461 = vadd.f32 %v5435, %v5451
    %v5462 = vadd.f32 %v5436, %v5453
    %v5463 = vadd.f32 %v5437, %v5455
    %s5464 = sld [smem:[#allocation7 + $0x4a]]
    %v5465 = vstv %s5464
    %v5466 = vmul.f32 %v5428, %v5465
    %v5467 = vmul.f32 %v5429, %v5465
    %v5468 = vmul.f32 %v5430, %v5465
    %v5469 = vmul.f32 %v5431, %v5465
    %5474 = vrot.lane.b32.xlu0 %v5466, 120
    %v5475 = vpop.permute.xlu0 %5474
    %5476 = vrot.lane.b32.xlu0 %v5467, 120
    %v5477 = vpop.permute.xlu0 %5476
    %5478 = vrot.lane.b32.xlu0 %v5468, 120
    %v5479 = vpop.permute.xlu0 %5478
    %5480 = vrot.lane.b32.xlu0 %v5469, 120
    %v5481 = vpop.permute.xlu0 %5480
    %v5486 = vadd.f32 %v5460, %v5475
    %v5487 = vadd.f32 %v5461, %v5477
    %v5488 = vadd.f32 %v5462, %v5479
    %v5489 = vadd.f32 %v5463, %v5481
    %v5490 = vld [vmem:[#allocation2 + $0x6] sm:$0xff]
    %v5491 = vld [vmem:[#allocation2 + $0xe] sm:$0xff]
    %v5492 = vld [vmem:[#allocation2 + $0x86] sm:$0xff]
    %v5493 = vld [vmem:[#allocation2 + $0x8e] sm:$0xff]
    %s5494 = sld [smem:[#allocation7 + $0x4b]]
    %v5495 = vstv %s5494
    %v5496 = vmul.f32 %v5490, %v5495
    %v5497 = vmul.f32 %v5491, %v5495
    %v5498 = vmul.f32 %v5492, %v5495
    %v5499 = vmul.f32 %v5493, %v5495
    %v5500 = vadd.f32 %v5486, %v5496
    %v5501 = vadd.f32 %v5487, %v5497
    %v5502 = vadd.f32 %v5488, %v5498
    %v5503 = vadd.f32 %v5489, %v5499
    %s5504 = sld [smem:[#allocation7 + $0x4c]]
    %v5505 = vstv %s5504
    %v5506 = vmul.f32 %v5490, %v5505
    %v5507 = vmul.f32 %v5491, %v5505
    %v5508 = vmul.f32 %v5492, %v5505
    %v5509 = vmul.f32 %v5493, %v5505
    %5514 = vrot.lane.b32.xlu0 %v5506, 124
    %v5515 = vpop.permute.xlu0 %5514
    %5516 = vrot.lane.b32.xlu0 %v5507, 124
    %v5517 = vpop.permute.xlu0 %5516
    %5518 = vrot.lane.b32.xlu0 %v5508, 124
    %v5519 = vpop.permute.xlu0 %5518
    %5520 = vrot.lane.b32.xlu0 %v5509, 124
    %v5521 = vpop.permute.xlu0 %5520
    %v5526 = vadd.f32 %v5500, %v5515
    %v5527 = vadd.f32 %v5501, %v5517
    %v5528 = vadd.f32 %v5502, %v5519
    %v5529 = vadd.f32 %v5503, %v5521
    %s5530 = sld [smem:[#allocation7 + $0x4d]]
    %v5531 = vstv %s5530
    %v5532 = vmul.f32 %v5490, %v5531
    %v5533 = vmul.f32 %v5491, %v5531
    %v5534 = vmul.f32 %v5492, %v5531
    %v5535 = vmul.f32 %v5493, %v5531
    %5540 = vrot.lane.b32.xlu0 %v5532, 120
    %v5541 = vpop.permute.xlu0 %5540
    %5542 = vrot.lane.b32.xlu0 %v5533, 120
    %v5543 = vpop.permute.xlu0 %5542
    %5544 = vrot.lane.b32.xlu0 %v5534, 120
    %v5545 = vpop.permute.xlu0 %5544
    %5546 = vrot.lane.b32.xlu0 %v5535, 120
    %v5547 = vpop.permute.xlu0 %5546
    %v5552 = vadd.f32 %v5526, %v5541
    %v5553 = vadd.f32 %v5527, %v5543
    %v5554 = vadd.f32 %v5528, %v5545
    %v5555 = vadd.f32 %v5529, %v5547
    %v5556 = vld [vmem:[#allocation2 + $0xa] sm:$0xff]
    %v5557 = vld [vmem:[#allocation2 + $0x12] sm:$0xff]
    %v5558 = vld [vmem:[#allocation2 + $0x8a] sm:$0xff]
    %v5559 = vld [vmem:[#allocation2 + $0x92] sm:$0xff]
    %s5560 = sld [smem:[#allocation7 + $0x4e]]
    %v5561 = vstv %s5560
    %v5562 = vmul.f32 %v5556, %v5561
    %v5563 = vmul.f32 %v5557, %v5561
    %v5564 = vmul.f32 %v5558, %v5561
    %v5565 = vmul.f32 %v5559, %v5561
    %v5566 = vadd.f32 %v5552, %v5562
    %v5567 = vadd.f32 %v5553, %v5563
    %v5568 = vadd.f32 %v5554, %v5564
    %v5569 = vadd.f32 %v5555, %v5565
    %s5570 = sld [smem:[#allocation7 + $0x4f]]
    %v5571 = vstv %s5570
    %v5572 = vmul.f32 %v5556, %v5571
    %v5573 = vmul.f32 %v5557, %v5571
    %v5574 = vmul.f32 %v5558, %v5571
    %v5575 = vmul.f32 %v5559, %v5571
    %5580 = vrot.lane.b32.xlu0 %v5572, 124
    %v5581 = vpop.permute.xlu0 %5580
    %5582 = vrot.lane.b32.xlu0 %v5573, 124
    %v5583 = vpop.permute.xlu0 %5582
    %5584 = vrot.lane.b32.xlu0 %v5574, 124
    %v5585 = vpop.permute.xlu0 %5584
    %5586 = vrot.lane.b32.xlu0 %v5575, 124
    %v5587 = vpop.permute.xlu0 %5586
    %v5592 = vadd.f32 %v5566, %v5581
    %v5593 = vadd.f32 %v5567, %v5583
    %v5594 = vadd.f32 %v5568, %v5585
    %v5595 = vadd.f32 %v5569, %v5587
    %s5596 = sld [smem:[#allocation7 + $0x50]]
    %v5597 = vstv %s5596
    %v5598 = vmul.f32 %v5556, %v5597
    %v5599 = vmul.f32 %v5557, %v5597
    %v5600 = vmul.f32 %v5558, %v5597
    %v5601 = vmul.f32 %v5559, %v5597
    %5606 = vrot.lane.b32.xlu0 %v5598, 120
    %v5607 = vpop.permute.xlu0 %5606
    %5608 = vrot.lane.b32.xlu0 %v5599, 120
    %v5609 = vpop.permute.xlu0 %5608
    %5610 = vrot.lane.b32.xlu0 %v5600, 120
    %v5611 = vpop.permute.xlu0 %5610
    %5612 = vrot.lane.b32.xlu0 %v5601, 120
    %v5613 = vpop.permute.xlu0 %5612
    %v5618 = vadd.f32 %v5592, %v5607
    %v5619 = vadd.f32 %v5593, %v5609
    %v5620 = vadd.f32 %v5594, %v5611
    %v5621 = vadd.f32 %v5595, %v5613
    %5626 = vrot.lane.b32.xlu0 %v5618, 126
    %v5627 = vpop.permute.xlu0 %5626
    %5628 = vrot.lane.b32.xlu0 %v5619, 126
    %v5629 = vpop.permute.xlu0 %5628
    %5630 = vrot.lane.b32.xlu0 %v5620, 126
    %v5631 = vpop.permute.xlu0 %5630
    %5632 = vrot.lane.b32.xlu0 %v5621, 126
    %v5633 = vpop.permute.xlu0 %5632
    %v5638 = vcombine.high %v5627, 0.0
    %v5640 = vunpack.c.l.s4 1983009808
    %v5641 = vunpack.c.0.s8 %v5640
    %v5642 = vlaneseq
    %v5643 = vshrl.u32 %v5642, 7
    %v5644 = vsub.s32 %v5641, %v5643
    %v5645 = vrot.slane %v5627, %v5644
    %v5647 = vunpack.c.l.s4 1983009808
    %v5648 = vunpack.c.0.s8 %v5647
    %v5649 = vlaneseq
    %v5650 = vshrl.u32 %v5649, 7
    %v5651 = vsub.s32 %v5648, %v5650
    %v5652 = vrot.slane %v5638, %v5651
    %v5653 = vcombine.high %v5645, 0.0
    %v5655 = vunpack.c.l.s4 1934713408
    %v5656 = vunpack.c.0.s8 %v5655
    %v5657 = vlaneseq
    %v5658 = vshrl.u32 %v5657, 7
    %v5659 = vsub.s32 %v5656, %v5658
    %v5660 = vrot.slane %v5645, %v5659
    %v5662 = vunpack.c.l.s4 1934713408
    %v5663 = vunpack.c.0.s8 %v5662
    %v5664 = vlaneseq
    %v5665 = vshrl.u32 %v5664, 7
    %v5666 = vsub.s32 %v5663, %v5665
    %v5667 = vrot.slane %v5653, %v5666
    %v5668 = vcombine.high %v5652, 0.0
    %v5670 = vunpack.c.l.s4 1934713408
    %v5671 = vunpack.c.0.s8 %v5670
    %v5672 = vlaneseq
    %v5673 = vshrl.u32 %v5672, 7
    %v5674 = vsub.s32 %v5671, %v5673
    %v5675 = vrot.slane %v5652, %v5674
    %v5677 = vunpack.c.l.s4 1934713408
    %v5678 = vunpack.c.0.s8 %v5677
    %v5679 = vlaneseq
    %v5680 = vshrl.u32 %v5679, 7
    %v5681 = vsub.s32 %v5678, %v5680
    %v5682 = vrot.slane %v5668, %v5681
    %v5683 = vcombine.high %v5660, 0.0
    %v5684 = vcombine.high %v5667, 0.0
    %v5685 = vcombine.high %v5675, 0.0
    %v5686 = vcombine.high %v5682, 0.0
    %v5687 = vcombine.high %v5629, 0.0
    %v5689 = vunpack.c.l.s4 1983009808
    %v5690 = vunpack.c.0.s8 %v5689
    %v5691 = vlaneseq
    %v5692 = vshrl.u32 %v5691, 7
    %v5693 = vsub.s32 %v5690, %v5692
    %v5694 = vrot.slane %v5629, %v5693
    %v5696 = vunpack.c.l.s4 1983009808
    %v5697 = vunpack.c.0.s8 %v5696
    %v5698 = vlaneseq
    %v5699 = vshrl.u32 %v5698, 7
    %v5700 = vsub.s32 %v5697, %v5699
    %v5701 = vrot.slane %v5687, %v5700
    %v5702 = vcombine.high %v5694, 0.0
    %v5704 = vunpack.c.l.s4 1934713408
    %v5705 = vunpack.c.0.s8 %v5704
    %v5706 = vlaneseq
    %v5707 = vshrl.u32 %v5706, 7
    %v5708 = vsub.s32 %v5705, %v5707
    %v5709 = vrot.slane %v5694, %v5708
    %v5711 = vunpack.c.l.s4 1934713408
    %v5712 = vunpack.c.0.s8 %v5711
    %v5713 = vlaneseq
    %v5714 = vshrl.u32 %v5713, 7
    %v5715 = vsub.s32 %v5712, %v5714
    %v5716 = vrot.slane %v5702, %v5715
    %v5717 = vcombine.high %v5701, 0.0
    %v5719 = vunpack.c.l.s4 1934713408
    %v5720 = vunpack.c.0.s8 %v5719
    %v5721 = vlaneseq
    %v5722 = vshrl.u32 %v5721, 7
    %v5723 = vsub.s32 %v5720, %v5722
    %v5724 = vrot.slane %v5701, %v5723
    %v5726 = vunpack.c.l.s4 1934713408
    %v5727 = vunpack.c.0.s8 %v5726
    %v5728 = vlaneseq
    %v5729 = vshrl.u32 %v5728, 7
    %v5730 = vsub.s32 %v5727, %v5729
    %v5731 = vrot.slane %v5717, %v5730
    %v5732 = vcombine.high %v5709, 0.0
    %v5733 = vcombine.high %v5716, 0.0
    %v5734 = vcombine.high %v5724, 0.0
    %v5735 = vcombine.high %v5731, 0.0
    %v5736 = vcombine.high %v5631, 0.0
    %v5738 = vunpack.c.l.s4 1983009808
    %v5739 = vunpack.c.0.s8 %v5738
    %v5740 = vlaneseq
    %v5741 = vshrl.u32 %v5740, 7
    %v5742 = vsub.s32 %v5739, %v5741
    %v5743 = vrot.slane %v5631, %v5742
    %v5745 = vunpack.c.l.s4 1983009808
    %v5746 = vunpack.c.0.s8 %v5745
    %v5747 = vlaneseq
    %v5748 = vshrl.u32 %v5747, 7
    %v5749 = vsub.s32 %v5746, %v5748
    %v5750 = vrot.slane %v5736, %v5749
    %v5751 = vcombine.high %v5743, 0.0
    %v5753 = vunpack.c.l.s4 1934713408
    %v5754 = vunpack.c.0.s8 %v5753
    %v5755 = vlaneseq
    %v5756 = vshrl.u32 %v5755, 7
    %v5757 = vsub.s32 %v5754, %v5756
    %v5758 = vrot.slane %v5743, %v5757
    %v5760 = vunpack.c.l.s4 1934713408
    %v5761 = vunpack.c.0.s8 %v5760
    %v5762 = vlaneseq
    %v5763 = vshrl.u32 %v5762, 7
    %v5764 = vsub.s32 %v5761, %v5763
    %v5765 = vrot.slane %v5751, %v5764
    %v5766 = vcombine.high %v5750, 0.0
    %v5768 = vunpack.c.l.s4 1934713408
    %v5769 = vunpack.c.0.s8 %v5768
    %v5770 = vlaneseq
    %v5771 = vshrl.u32 %v5770, 7
    %v5772 = vsub.s32 %v5769, %v5771
    %v5773 = vrot.slane %v5750, %v5772
    %v5775 = vunpack.c.l.s4 1934713408
    %v5776 = vunpack.c.0.s8 %v5775
    %v5777 = vlaneseq
    %v5778 = vshrl.u32 %v5777, 7
    %v5779 = vsub.s32 %v5776, %v5778
    %v5780 = vrot.slane %v5766, %v5779
    %v5781 = vcombine.high %v5758, 0.0
    %v5782 = vcombine.high %v5765, 0.0
    %v5783 = vcombine.high %v5773, 0.0
    %v5784 = vcombine.high %v5780, 0.0
    %v5785 = vcombine.high %v5633, 0.0
    %v5787 = vunpack.c.l.s4 1983009808
    %v5788 = vunpack.c.0.s8 %v5787
    %v5789 = vlaneseq
    %v5790 = vshrl.u32 %v5789, 7
    %v5791 = vsub.s32 %v5788, %v5790
    %v5792 = vrot.slane %v5633, %v5791
    %v5794 = vunpack.c.l.s4 1983009808
    %v5795 = vunpack.c.0.s8 %v5794
    %v5796 = vlaneseq
    %v5797 = vshrl.u32 %v5796, 7
    %v5798 = vsub.s32 %v5795, %v5797
    %v5799 = vrot.slane %v5785, %v5798
    %v5800 = vcombine.high %v5792, 0.0
    %v5802 = vunpack.c.l.s4 1934713408
    %v5803 = vunpack.c.0.s8 %v5802
    %v5804 = vlaneseq
    %v5805 = vshrl.u32 %v5804, 7
    %v5806 = vsub.s32 %v5803, %v5805
    %v5807 = vrot.slane %v5792, %v5806
    %v5809 = vunpack.c.l.s4 1934713408
    %v5810 = vunpack.c.0.s8 %v5809
    %v5811 = vlaneseq
    %v5812 = vshrl.u32 %v5811, 7
    %v5813 = vsub.s32 %v5810, %v5812
    %v5814 = vrot.slane %v5800, %v5813
    %v5815 = vcombine.high %v5799, 0.0
    %v5817 = vunpack.c.l.s4 1934713408
    %v5818 = vunpack.c.0.s8 %v5817
    %v5819 = vlaneseq
    %v5820 = vshrl.u32 %v5819, 7
    %v5821 = vsub.s32 %v5818, %v5820
    %v5822 = vrot.slane %v5799, %v5821
    %v5824 = vunpack.c.l.s4 1934713408
    %v5825 = vunpack.c.0.s8 %v5824
    %v5826 = vlaneseq
    %v5827 = vshrl.u32 %v5826, 7
    %v5828 = vsub.s32 %v5825, %v5827
    %v5829 = vrot.slane %v5815, %v5828
    %v5830 = vcombine.high %v5807, 0.0
    %v5831 = vcombine.high %v5814, 0.0
    %v5832 = vcombine.high %v5822, 0.0
    %v5833 = vcombine.high %v5829, 0.0
    %5836 = vrot.lane.b32.xlu0 %v5683, 16
    %v5837 = vpop.permute.xlu0 %5836
    %5838 = vrot.lane.b32.xlu0 %v5781, 16
    %v5839 = vpop.permute.xlu0 %5838
    %5844 = vrot.lane.b32.xlu0 %v5667, 32
    %v5845 = vpop.permute.xlu0 %5844
    %5846 = vrot.lane.b32.xlu0 %v5765, 32
    %v5847 = vpop.permute.xlu0 %5846
    %5852 = vrot.lane.b32.xlu0 %v5684, 48
    %v5853 = vpop.permute.xlu0 %5852
    %5854 = vrot.lane.b32.xlu0 %v5782, 48
    %v5855 = vpop.permute.xlu0 %5854
    %5860 = vrot.lane.b32.xlu0 %v5675, 64
    %v5861 = vpop.permute.xlu0 %5860
    %5862 = vrot.lane.b32.xlu0 %v5773, 64
    %v5863 = vpop.permute.xlu0 %5862
    %5868 = vrot.lane.b32.xlu0 %v5685, 80
    %v5869 = vpop.permute.xlu0 %5868
    %5870 = vrot.lane.b32.xlu0 %v5783, 80
    %v5871 = vpop.permute.xlu0 %5870
    %5876 = vrot.lane.b32.xlu0 %v5682, 96
    %v5877 = vpop.permute.xlu0 %5876
    %5878 = vrot.lane.b32.xlu0 %v5780, 96
    %v5879 = vpop.permute.xlu0 %5878
    %5884 = vrot.lane.b32.xlu0 %v5686, 112
    %v5885 = vpop.permute.xlu0 %5884
    %5886 = vrot.lane.b32.xlu0 %v5784, 112
    %v5887 = vpop.permute.xlu0 %5886
    %5892 = vrot.lane.b32.xlu0 %v5732, 16
    %v5893 = vpop.permute.xlu0 %5892
    %5894 = vrot.lane.b32.xlu0 %v5830, 16
    %v5895 = vpop.permute.xlu0 %5894
    %5900 = vrot.lane.b32.xlu0 %v5716, 32
    %v5901 = vpop.permute.xlu0 %5900
    %5902 = vrot.lane.b32.xlu0 %v5814, 32
    %v5903 = vpop.permute.xlu0 %5902
    %5908 = vrot.lane.b32.xlu0 %v5733, 48
    %v5909 = vpop.permute.xlu0 %5908
    %5910 = vrot.lane.b32.xlu0 %v5831, 48
    %v5911 = vpop.permute.xlu0 %5910
    %5916 = vrot.lane.b32.xlu0 %v5724, 64
    %v5917 = vpop.permute.xlu0 %5916
    %5918 = vrot.lane.b32.xlu0 %v5822, 64
    %v5919 = vpop.permute.xlu0 %5918
    %5924 = vrot.lane.b32.xlu0 %v5734, 80
    %v5925 = vpop.permute.xlu0 %5924
    %5926 = vrot.lane.b32.xlu0 %v5832, 80
    %v5927 = vpop.permute.xlu0 %5926
    %5932 = vrot.lane.b32.xlu0 %v5731, 96
    %v5933 = vpop.permute.xlu0 %5932
    %5934 = vrot.lane.b32.xlu0 %v5829, 96
    %v5935 = vpop.permute.xlu0 %5934
    %5940 = vrot.lane.b32.xlu0 %v5735, 112
    %v5941 = vpop.permute.xlu0 %5940
    %5942 = vrot.lane.b32.xlu0 %v5833, 112
    %v5943 = vpop.permute.xlu0 %5942
    %v5946 = vsel %vm1229, %v5660, %v5837
    %v5947 = vsel %vm1229, %v5758, %v5839
    %v5948 = vsel %vm1232, %v5946, %v5845
    %v5949 = vsel %vm1232, %v5947, %v5847
    %v5950 = vsel %vm1235, %v5948, %v5853
    %v5951 = vsel %vm1235, %v5949, %v5855
    %v5952 = vsel %vm1238, %v5950, %v5861
    %v5953 = vsel %vm1238, %v5951, %v5863
    %v5954 = vsel %vm1241, %v5952, %v5869
    %v5955 = vsel %vm1241, %v5953, %v5871
    %v5956 = vsel %vm1244, %v5954, %v5877
    %v5957 = vsel %vm1244, %v5955, %v5879
    %v5958 = vsel %vm1247, %v5956, %v5885
    %v5959 = vsel %vm1247, %v5957, %v5887
    %v5960 = vsel %vm1229, %v5709, %v5893
    %v5961 = vsel %vm1229, %v5807, %v5895
    %v5962 = vsel %vm1232, %v5960, %v5901
    %v5963 = vsel %vm1232, %v5961, %v5903
    %v5964 = vsel %vm1235, %v5962, %v5909
    %v5965 = vsel %vm1235, %v5963, %v5911
    %v5966 = vsel %vm1238, %v5964, %v5917
    %v5967 = vsel %vm1238, %v5965, %v5919
    %v5968 = vsel %vm1241, %v5966, %v5925
    %v5969 = vsel %vm1241, %v5967, %v5927
    %v5970 = vsel %vm1244, %v5968, %v5933
    %v5971 = vsel %vm1244, %v5969, %v5935
    %v5972 = vsel %vm1247, %v5970, %v5941
    %v5973 = vsel %vm1247, %v5971, %v5943
    %v5978 = vcombine.low %v5958, %v5972
    %v5980 = vunpack.c.l.s4 1966171168
    %v5981 = vunpack.c.0.s8 %v5980
    %v5982 = vlaneseq
    %v5983 = vshrl.u32 %v5982, 7
    %v5984 = vsub.s32 %v5981, %v5983
    %v5985 = vrot.slane %v5978, %v5984
    %v5987 = vunpack.c.l.s4 1966171168
    %v5988 = vunpack.c.0.s8 %v5987
    %v5989 = vlaneseq
    %v5990 = vshrl.u32 %v5989, 7
    %v5991 = vsub.s32 %v5988, %v5990
    %v5992 = vrot.slane %v5985, %v5991
    %v5993 = vcombine.low %v5959, %v5973
    %v5995 = vunpack.c.l.s4 1966171168
    %v5996 = vunpack.c.0.s8 %v5995
    %v5997 = vlaneseq
    %v5998 = vshrl.u32 %v5997, 7
    %v5999 = vsub.s32 %v5996, %v5998
    %v6000 = vrot.slane %v5993, %v5999
    %v6002 = vunpack.c.l.s4 1966171168
    %v6003 = vunpack.c.0.s8 %v6002
    %v6004 = vlaneseq
    %v6005 = vshrl.u32 %v6004, 7
    %v6006 = vsub.s32 %v6003, %v6005
    %v6007 = vrot.slane %v6000, %v6006
    %s6010 = scalar_lea.vmem [#allocation8], 16
    %6011 = vst.msk [vmem:[%s6010] ss:$8 sm:$0x3] %vm1303, %v5992
    %6012 = vst.msk [vmem:[%s6010] ss:$8 sm:$0x0] %vm1303, %v5992
    %s6013 = scalar_lea.vmem [#allocation8], 48
    %6014 = vst.msk [vmem:[%s6013] ss:$8 sm:$0x3] %vm1303, %v6007
    %6015 = vst.msk [vmem:[%s6013] ss:$8 sm:$0x0] %vm1303, %v6007
    %v6016 = vld [vmem:[%s1309 + $0x2] sm:$0xff]
    %v6017 = vld [vmem:[%s1309 + $0xa] sm:$0xff]
    %v6018 = vld [vmem:[%s1309 + $0x82] sm:$0xff]
    %v6019 = vld [vmem:[%s1309 + $0x8a] sm:$0xff]
    %s6020 = sld [smem:[#allocation7 + $0x51]]
    %v6021 = vstv %s6020
    %v6022 = vmul.f32 %v6016, %v6021
    %v6023 = vmul.f32 %v6017, %v6021
    %v6024 = vmul.f32 %v6018, %v6021
    %v6025 = vmul.f32 %v6019, %v6021
    %s6026 = sld [smem:[#allocation7 + $0x52]]
    %v6027 = vstv %s6026
    %v6028 = vmul.f32 %v6016, %v6027
    %v6029 = vmul.f32 %v6017, %v6027
    %v6030 = vmul.f32 %v6018, %v6027
    %v6031 = vmul.f32 %v6019, %v6027
    %6036 = vrot.lane.b32.xlu0 %v6028, 124
    %v6037 = vpop.permute.xlu0 %6036
    %6038 = vrot.lane.b32.xlu0 %v6029, 124
    %v6039 = vpop.permute.xlu0 %6038
    %6040 = vrot.lane.b32.xlu0 %v6030, 124
    %v6041 = vpop.permute.xlu0 %6040
    %6042 = vrot.lane.b32.xlu0 %v6031, 124
    %v6043 = vpop.permute.xlu0 %6042
    %v6048 = vadd.f32 %v6022, %v6037
    %v6049 = vadd.f32 %v6023, %v6039
    %v6050 = vadd.f32 %v6024, %v6041
    %v6051 = vadd.f32 %v6025, %v6043
    %s6052 = sld [smem:[#allocation7 + $0x53]]
    %v6053 = vstv %s6052
    %v6054 = vmul.f32 %v6016, %v6053
    %v6055 = vmul.f32 %v6017, %v6053
    %v6056 = vmul.f32 %v6018, %v6053
    %v6057 = vmul.f32 %v6019, %v6053
    %6062 = vrot.lane.b32.xlu0 %v6054, 120
    %v6063 = vpop.permute.xlu0 %6062
    %6064 = vrot.lane.b32.xlu0 %v6055, 120
    %v6065 = vpop.permute.xlu0 %6064
    %6066 = vrot.lane.b32.xlu0 %v6056, 120
    %v6067 = vpop.permute.xlu0 %6066
    %6068 = vrot.lane.b32.xlu0 %v6057, 120
    %v6069 = vpop.permute.xlu0 %6068
    %v6074 = vadd.f32 %v6048, %v6063
    %v6075 = vadd.f32 %v6049, %v6065
    %v6076 = vadd.f32 %v6050, %v6067
    %v6077 = vadd.f32 %v6051, %v6069
    %v6078 = vld [vmem:[%s1309 + $0x6] sm:$0xff]
    %v6079 = vld [vmem:[%s1309 + $0xe] sm:$0xff]
    %v6080 = vld [vmem:[%s1309 + $0x86] sm:$0xff]
    %v6081 = vld [vmem:[%s1309 + $0x8e] sm:$0xff]
    %s6082 = sld [smem:[#allocation7 + $0x54]]
    %v6083 = vstv %s6082
    %v6084 = vmul.f32 %v6078, %v6083
    %v6085 = vmul.f32 %v6079, %v6083
    %v6086 = vmul.f32 %v6080, %v6083
    %v6087 = vmul.f32 %v6081, %v6083
    %v6088 = vadd.f32 %v6074, %v6084
    %v6089 = vadd.f32 %v6075, %v6085
    %v6090 = vadd.f32 %v6076, %v6086
    %v6091 = vadd.f32 %v6077, %v6087
    %s6092 = sld [smem:[#allocation7 + $0x55]]
    %v6093 = vstv %s6092
    %v6094 = vmul.f32 %v6078, %v6093
    %v6095 = vmul.f32 %v6079, %v6093
    %v6096 = vmul.f32 %v6080, %v6093
    %v6097 = vmul.f32 %v6081, %v6093
    %6102 = vrot.lane.b32.xlu0 %v6094, 124
    %v6103 = vpop.permute.xlu0 %6102
    %6104 = vrot.lane.b32.xlu0 %v6095, 124
    %v6105 = vpop.permute.xlu0 %6104
    %6106 = vrot.lane.b32.xlu0 %v6096, 124
    %v6107 = vpop.permute.xlu0 %6106
    %6108 = vrot.lane.b32.xlu0 %v6097, 124
    %v6109 = vpop.permute.xlu0 %6108
    %v6114 = vadd.f32 %v6088, %v6103
    %v6115 = vadd.f32 %v6089, %v6105
    %v6116 = vadd.f32 %v6090, %v6107
    %v6117 = vadd.f32 %v6091, %v6109
    %s6118 = sld [smem:[#allocation7 + $0x56]]
    %v6119 = vstv %s6118
    %v6120 = vmul.f32 %v6078, %v6119
    %v6121 = vmul.f32 %v6079, %v6119
    %v6122 = vmul.f32 %v6080, %v6119
    %v6123 = vmul.f32 %v6081, %v6119
    %6128 = vrot.lane.b32.xlu0 %v6120, 120
    %v6129 = vpop.permute.xlu0 %6128
    %6130 = vrot.lane.b32.xlu0 %v6121, 120
    %v6131 = vpop.permute.xlu0 %6130
    %6132 = vrot.lane.b32.xlu0 %v6122, 120
    %v6133 = vpop.permute.xlu0 %6132
    %6134 = vrot.lane.b32.xlu0 %v6123, 120
    %v6135 = vpop.permute.xlu0 %6134
    %v6140 = vadd.f32 %v6114, %v6129
    %v6141 = vadd.f32 %v6115, %v6131
    %v6142 = vadd.f32 %v6116, %v6133
    %v6143 = vadd.f32 %v6117, %v6135
    %v6144 = vld [vmem:[%s1309 + $0xa] sm:$0xff]
    %v6145 = vld [vmem:[%s1309 + $0x12] sm:$0xff]
    %v6146 = vld [vmem:[%s1309 + $0x8a] sm:$0xff]
    %v6147 = vld [vmem:[%s1309 + $0x92] sm:$0xff]
    %s6148 = sld [smem:[#allocation7 + $0x57]]
    %v6149 = vstv %s6148
    %v6150 = vmul.f32 %v6144, %v6149
    %v6151 = vmul.f32 %v6145, %v6149
    %v6152 = vmul.f32 %v6146, %v6149
    %v6153 = vmul.f32 %v6147, %v6149
    %v6154 = vadd.f32 %v6140, %v6150
    %v6155 = vadd.f32 %v6141, %v6151
    %v6156 = vadd.f32 %v6142, %v6152
    %v6157 = vadd.f32 %v6143, %v6153
    %s6158 = sld [smem:[#allocation7 + $0x58]]
    %v6159 = vstv %s6158
    %v6160 = vmul.f32 %v6144, %v6159
    %v6161 = vmul.f32 %v6145, %v6159
    %v6162 = vmul.f32 %v6146, %v6159
    %v6163 = vmul.f32 %v6147, %v6159
    %6168 = vrot.lane.b32.xlu0 %v6160, 124
    %v6169 = vpop.permute.xlu0 %6168
    %6170 = vrot.lane.b32.xlu0 %v6161, 124
    %v6171 = vpop.permute.xlu0 %6170
    %6172 = vrot.lane.b32.xlu0 %v6162, 124
    %v6173 = vpop.permute.xlu0 %6172
    %6174 = vrot.lane.b32.xlu0 %v6163, 124
    %v6175 = vpop.permute.xlu0 %6174
    %v6180 = vadd.f32 %v6154, %v6169
    %v6181 = vadd.f32 %v6155, %v6171
    %v6182 = vadd.f32 %v6156, %v6173
    %v6183 = vadd.f32 %v6157, %v6175
    %s6184 = sld [smem:[#allocation7 + $0x59]]
    %v6185 = vstv %s6184
    %v6186 = vmul.f32 %v6144, %v6185
    %v6187 = vmul.f32 %v6145, %v6185
    %v6188 = vmul.f32 %v6146, %v6185
    %v6189 = vmul.f32 %v6147, %v6185
    %6194 = vrot.lane.b32.xlu0 %v6186, 120
    %v6195 = vpop.permute.xlu0 %6194
    %6196 = vrot.lane.b32.xlu0 %v6187, 120
    %v6197 = vpop.permute.xlu0 %6196
    %6198 = vrot.lane.b32.xlu0 %v6188, 120
    %v6199 = vpop.permute.xlu0 %6198
    %6200 = vrot.lane.b32.xlu0 %v6189, 120
    %v6201 = vpop.permute.xlu0 %6200
    %v6206 = vadd.f32 %v6180, %v6195
    %v6207 = vadd.f32 %v6181, %v6197
    %v6208 = vadd.f32 %v6182, %v6199
    %v6209 = vadd.f32 %v6183, %v6201
    %6214 = vrot.lane.b32.xlu0 %v6206, 126
    %v6215 = vpop.permute.xlu0 %6214
    %6216 = vrot.lane.b32.xlu0 %v6207, 126
    %v6217 = vpop.permute.xlu0 %6216
    %6218 = vrot.lane.b32.xlu0 %v6208, 126
    %v6219 = vpop.permute.xlu0 %6218
    %6220 = vrot.lane.b32.xlu0 %v6209, 126
    %v6221 = vpop.permute.xlu0 %6220
    %v6226 = vcombine.high %v6215, 0.0
    %v6228 = vunpack.c.l.s4 1983009808
    %v6229 = vunpack.c.0.s8 %v6228
    %v6230 = vlaneseq
    %v6231 = vshrl.u32 %v6230, 7
    %v6232 = vsub.s32 %v6229, %v6231
    %v6233 = vrot.slane %v6215, %v6232
    %v6235 = vunpack.c.l.s4 1983009808
    %v6236 = vunpack.c.0.s8 %v6235
    %v6237 = vlaneseq
    %v6238 = vshrl.u32 %v6237, 7
    %v6239 = vsub.s32 %v6236, %v6238
    %v6240 = vrot.slane %v6226, %v6239
    %v6241 = vcombine.high %v6233, 0.0
    %v6243 = vunpack.c.l.s4 1934713408
    %v6244 = vunpack.c.0.s8 %v6243
    %v6245 = vlaneseq
    %v6246 = vshrl.u32 %v6245, 7
    %v6247 = vsub.s32 %v6244, %v6246
    %v6248 = vrot.slane %v6233, %v6247
    %v6250 = vunpack.c.l.s4 1934713408
    %v6251 = vunpack.c.0.s8 %v6250
    %v6252 = vlaneseq
    %v6253 = vshrl.u32 %v6252, 7
    %v6254 = vsub.s32 %v6251, %v6253
    %v6255 = vrot.slane %v6241, %v6254
    %v6256 = vcombine.high %v6240, 0.0
    %v6258 = vunpack.c.l.s4 1934713408
    %v6259 = vunpack.c.0.s8 %v6258
    %v6260 = vlaneseq
    %v6261 = vshrl.u32 %v6260, 7
    %v6262 = vsub.s32 %v6259, %v6261
    %v6263 = vrot.slane %v6240, %v6262
    %v6265 = vunpack.c.l.s4 1934713408
    %v6266 = vunpack.c.0.s8 %v6265
    %v6267 = vlaneseq
    %v6268 = vshrl.u32 %v6267, 7
    %v6269 = vsub.s32 %v6266, %v6268
    %v6270 = vrot.slane %v6256, %v6269
    %v6271 = vcombine.high %v6248, 0.0
    %v6272 = vcombine.high %v6255, 0.0
    %v6273 = vcombine.high %v6263, 0.0
    %v6274 = vcombine.high %v6270, 0.0
    %v6275 = vcombine.high %v6217, 0.0
    %v6277 = vunpack.c.l.s4 1983009808
    %v6278 = vunpack.c.0.s8 %v6277
    %v6279 = vlaneseq
    %v6280 = vshrl.u32 %v6279, 7
    %v6281 = vsub.s32 %v6278, %v6280
    %v6282 = vrot.slane %v6217, %v6281
    %v6284 = vunpack.c.l.s4 1983009808
    %v6285 = vunpack.c.0.s8 %v6284
    %v6286 = vlaneseq
    %v6287 = vshrl.u32 %v6286, 7
    %v6288 = vsub.s32 %v6285, %v6287
    %v6289 = vrot.slane %v6275, %v6288
    %v6290 = vcombine.high %v6282, 0.0
    %v6292 = vunpack.c.l.s4 1934713408
    %v6293 = vunpack.c.0.s8 %v6292
    %v6294 = vlaneseq
    %v6295 = vshrl.u32 %v6294, 7
    %v6296 = vsub.s32 %v6293, %v6295
    %v6297 = vrot.slane %v6282, %v6296
    %v6299 = vunpack.c.l.s4 1934713408
    %v6300 = vunpack.c.0.s8 %v6299
    %v6301 = vlaneseq
    %v6302 = vshrl.u32 %v6301, 7
    %v6303 = vsub.s32 %v6300, %v6302
    %v6304 = vrot.slane %v6290, %v6303
    %v6305 = vcombine.high %v6289, 0.0
    %v6307 = vunpack.c.l.s4 1934713408
    %v6308 = vunpack.c.0.s8 %v6307
    %v6309 = vlaneseq
    %v6310 = vshrl.u32 %v6309, 7
    %v6311 = vsub.s32 %v6308, %v6310
    %v6312 = vrot.slane %v6289, %v6311
    %v6314 = vunpack.c.l.s4 1934713408
    %v6315 = vunpack.c.0.s8 %v6314
    %v6316 = vlaneseq
    %v6317 = vshrl.u32 %v6316, 7
    %v6318 = vsub.s32 %v6315, %v6317
    %v6319 = vrot.slane %v6305, %v6318
    %v6320 = vcombine.high %v6297, 0.0
    %v6321 = vcombine.high %v6304, 0.0
    %v6322 = vcombine.high %v6312, 0.0
    %v6323 = vcombine.high %v6319, 0.0
    %v6324 = vcombine.high %v6219, 0.0
    %v6326 = vunpack.c.l.s4 1983009808
    %v6327 = vunpack.c.0.s8 %v6326
    %v6328 = vlaneseq
    %v6329 = vshrl.u32 %v6328, 7
    %v6330 = vsub.s32 %v6327, %v6329
    %v6331 = vrot.slane %v6219, %v6330
    %v6333 = vunpack.c.l.s4 1983009808
    %v6334 = vunpack.c.0.s8 %v6333
    %v6335 = vlaneseq
    %v6336 = vshrl.u32 %v6335, 7
    %v6337 = vsub.s32 %v6334, %v6336
    %v6338 = vrot.slane %v6324, %v6337
    %v6339 = vcombine.high %v6331, 0.0
    %v6341 = vunpack.c.l.s4 1934713408
    %v6342 = vunpack.c.0.s8 %v6341
    %v6343 = vlaneseq
    %v6344 = vshrl.u32 %v6343, 7
    %v6345 = vsub.s32 %v6342, %v6344
    %v6346 = vrot.slane %v6331, %v6345
    %v6348 = vunpack.c.l.s4 1934713408
    %v6349 = vunpack.c.0.s8 %v6348
    %v6350 = vlaneseq
    %v6351 = vshrl.u32 %v6350, 7
    %v6352 = vsub.s32 %v6349, %v6351
    %v6353 = vrot.slane %v6339, %v6352
    %v6354 = vcombine.high %v6338, 0.0
    %v6356 = vunpack.c.l.s4 1934713408
    %v6357 = vunpack.c.0.s8 %v6356
    %v6358 = vlaneseq
    %v6359 = vshrl.u32 %v6358, 7
    %v6360 = vsub.s32 %v6357, %v6359
    %v6361 = vrot.slane %v6338, %v6360
    %v6363 = vunpack.c.l.s4 1934713408
    %v6364 = vunpack.c.0.s8 %v6363
    %v6365 = vlaneseq
    %v6366 = vshrl.u32 %v6365, 7
    %v6367 = vsub.s32 %v6364, %v6366
    %v6368 = vrot.slane %v6354, %v6367
    %v6369 = vcombine.high %v6346, 0.0
    %v6370 = vcombine.high %v6353, 0.0
    %v6371 = vcombine.high %v6361, 0.0
    %v6372 = vcombine.high %v6368, 0.0
    %v6373 = vcombine.high %v6221, 0.0
    %v6375 = vunpack.c.l.s4 1983009808
    %v6376 = vunpack.c.0.s8 %v6375
    %v6377 = vlaneseq
    %v6378 = vshrl.u32 %v6377, 7
    %v6379 = vsub.s32 %v6376, %v6378
    %v6380 = vrot.slane %v6221, %v6379
    %v6382 = vunpack.c.l.s4 1983009808
    %v6383 = vunpack.c.0.s8 %v6382
    %v6384 = vlaneseq
    %v6385 = vshrl.u32 %v6384, 7
    %v6386 = vsub.s32 %v6383, %v6385
    %v6387 = vrot.slane %v6373, %v6386
    %v6388 = vcombine.high %v6380, 0.0
    %v6390 = vunpack.c.l.s4 1934713408
    %v6391 = vunpack.c.0.s8 %v6390
    %v6392 = vlaneseq
    %v6393 = vshrl.u32 %v6392, 7
    %v6394 = vsub.s32 %v6391, %v6393
    %v6395 = vrot.slane %v6380, %v6394
    %v6397 = vunpack.c.l.s4 1934713408
    %v6398 = vunpack.c.0.s8 %v6397
    %v6399 = vlaneseq
    %v6400 = vshrl.u32 %v6399, 7
    %v6401 = vsub.s32 %v6398, %v6400
    %v6402 = vrot.slane %v6388, %v6401
    %v6403 = vcombine.high %v6387, 0.0
    %v6405 = vunpack.c.l.s4 1934713408
    %v6406 = vunpack.c.0.s8 %v6405
    %v6407 = vlaneseq
    %v6408 = vshrl.u32 %v6407, 7
    %v6409 = vsub.s32 %v6406, %v6408
    %v6410 = vrot.slane %v6387, %v6409
    %v6412 = vunpack.c.l.s4 1934713408
    %v6413 = vunpack.c.0.s8 %v6412
    %v6414 = vlaneseq
    %v6415 = vshrl.u32 %v6414, 7
    %v6416 = vsub.s32 %v6413, %v6415
    %v6417 = vrot.slane %v6403, %v6416
    %v6418 = vcombine.high %v6395, 0.0
    %v6419 = vcombine.high %v6402, 0.0
    %v6420 = vcombine.high %v6410, 0.0
    %v6421 = vcombine.high %v6417, 0.0
    %6424 = vrot.lane.b32.xlu0 %v6271, 16
    %v6425 = vpop.permute.xlu0 %6424
    %6426 = vrot.lane.b32.xlu0 %v6369, 16
    %v6427 = vpop.permute.xlu0 %6426
    %6432 = vrot.lane.b32.xlu0 %v6255, 32
    %v6433 = vpop.permute.xlu0 %6432
    %6434 = vrot.lane.b32.xlu0 %v6353, 32
    %v6435 = vpop.permute.xlu0 %6434
    %6440 = vrot.lane.b32.xlu0 %v6272, 48
    %v6441 = vpop.permute.xlu0 %6440
    %6442 = vrot.lane.b32.xlu0 %v6370, 48
    %v6443 = vpop.permute.xlu0 %6442
    %6448 = vrot.lane.b32.xlu0 %v6263, 64
    %v6449 = vpop.permute.xlu0 %6448
    %6450 = vrot.lane.b32.xlu0 %v6361, 64
    %v6451 = vpop.permute.xlu0 %6450
    %6456 = vrot.lane.b32.xlu0 %v6273, 80
    %v6457 = vpop.permute.xlu0 %6456
    %6458 = vrot.lane.b32.xlu0 %v6371, 80
    %v6459 = vpop.permute.xlu0 %6458
    %6464 = vrot.lane.b32.xlu0 %v6270, 96
    %v6465 = vpop.permute.xlu0 %6464
    %6466 = vrot.lane.b32.xlu0 %v6368, 96
    %v6467 = vpop.permute.xlu0 %6466
    %6472 = vrot.lane.b32.xlu0 %v6274, 112
    %v6473 = vpop.permute.xlu0 %6472
    %6474 = vrot.lane.b32.xlu0 %v6372, 112
    %v6475 = vpop.permute.xlu0 %6474
    %6480 = vrot.lane.b32.xlu0 %v6320, 16
    %v6481 = vpop.permute.xlu0 %6480
    %6482 = vrot.lane.b32.xlu0 %v6418, 16
    %v6483 = vpop.permute.xlu0 %6482
    %6488 = vrot.lane.b32.xlu0 %v6304, 32
    %v6489 = vpop.permute.xlu0 %6488
    %6490 = vrot.lane.b32.xlu0 %v6402, 32
    %v6491 = vpop.permute.xlu0 %6490
    %6496 = vrot.lane.b32.xlu0 %v6321, 48
    %v6497 = vpop.permute.xlu0 %6496
    %6498 = vrot.lane.b32.xlu0 %v6419, 48
    %v6499 = vpop.permute.xlu0 %6498
    %6504 = vrot.lane.b32.xlu0 %v6312, 64
    %v6505 = vpop.permute.xlu0 %6504
    %6506 = vrot.lane.b32.xlu0 %v6410, 64
    %v6507 = vpop.permute.xlu0 %6506
    %6512 = vrot.lane.b32.xlu0 %v6322, 80
    %v6513 = vpop.permute.xlu0 %6512
    %6514 = vrot.lane.b32.xlu0 %v6420, 80
    %v6515 = vpop.permute.xlu0 %6514
    %6520 = vrot.lane.b32.xlu0 %v6319, 96
    %v6521 = vpop.permute.xlu0 %6520
    %6522 = vrot.lane.b32.xlu0 %v6417, 96
    %v6523 = vpop.permute.xlu0 %6522
    %6528 = vrot.lane.b32.xlu0 %v6323, 112
    %v6529 = vpop.permute.xlu0 %6528
    %6530 = vrot.lane.b32.xlu0 %v6421, 112
    %v6531 = vpop.permute.xlu0 %6530
    %v6534 = vsel %vm1229, %v6248, %v6425
    %v6535 = vsel %vm1229, %v6346, %v6427
    %v6536 = vsel %vm1232, %v6534, %v6433
    %v6537 = vsel %vm1232, %v6535, %v6435
    %v6538 = vsel %vm1235, %v6536, %v6441
    %v6539 = vsel %vm1235, %v6537, %v6443
    %v6540 = vsel %vm1238, %v6538, %v6449
    %v6541 = vsel %vm1238, %v6539, %v6451
    %v6542 = vsel %vm1241, %v6540, %v6457
    %v6543 = vsel %vm1241, %v6541, %v6459
    %v6544 = vsel %vm1244, %v6542, %v6465
    %v6545 = vsel %vm1244, %v6543, %v6467
    %v6546 = vsel %vm1247, %v6544, %v6473
    %v6547 = vsel %vm1247, %v6545, %v6475
    %v6548 = vsel %vm1229, %v6297, %v6481
    %v6549 = vsel %vm1229, %v6395, %v6483
    %v6550 = vsel %vm1232, %v6548, %v6489
    %v6551 = vsel %vm1232, %v6549, %v6491
    %v6552 = vsel %vm1235, %v6550, %v6497
    %v6553 = vsel %vm1235, %v6551, %v6499
    %v6554 = vsel %vm1238, %v6552, %v6505
    %v6555 = vsel %vm1238, %v6553, %v6507
    %v6556 = vsel %vm1241, %v6554, %v6513
    %v6557 = vsel %vm1241, %v6555, %v6515
    %v6558 = vsel %vm1244, %v6556, %v6521
    %v6559 = vsel %vm1244, %v6557, %v6523
    %v6560 = vsel %vm1247, %v6558, %v6529
    %v6561 = vsel %vm1247, %v6559, %v6531
    %v6566 = vcombine.low %v6546, %v6560
    %v6568 = vunpack.c.l.s4 1966171168
    %v6569 = vunpack.c.0.s8 %v6568
    %v6570 = vlaneseq
    %v6571 = vshrl.u32 %v6570, 7
    %v6572 = vsub.s32 %v6569, %v6571
    %v6573 = vrot.slane %v6566, %v6572
    %v6575 = vunpack.c.l.s4 1966171168
    %v6576 = vunpack.c.0.s8 %v6575
    %v6577 = vlaneseq
    %v6578 = vshrl.u32 %v6577, 7
    %v6579 = vsub.s32 %v6576, %v6578
    %v6580 = vrot.slane %v6573, %v6579
    %v6581 = vcombine.low %v6547, %v6561
    %v6583 = vunpack.c.l.s4 1966171168
    %v6584 = vunpack.c.0.s8 %v6583
    %v6585 = vlaneseq
    %v6586 = vshrl.u32 %v6585, 7
    %v6587 = vsub.s32 %v6584, %v6586
    %v6588 = vrot.slane %v6581, %v6587
    %v6590 = vunpack.c.l.s4 1966171168
    %v6591 = vunpack.c.0.s8 %v6590
    %v6592 = vlaneseq
    %v6593 = vshrl.u32 %v6592, 7
    %v6594 = vsub.s32 %v6591, %v6593
    %v6595 = vrot.slane %v6588, %v6594
    %s6598 = scalar_lea.vmem [#allocation8], 17
    %6599 = vst.msk [vmem:[%s6598] ss:$8 sm:$0x3] %vm1303, %v6580
    %6600 = vst.msk [vmem:[%s6598] ss:$8 sm:$0x0] %vm1303, %v6580
    %s6601 = scalar_lea.vmem [#allocation8], 49
    %6602 = vst.msk [vmem:[%s6601] ss:$8 sm:$0x3] %vm1303, %v6595
    %6603 = vst.msk [vmem:[%s6601] ss:$8 sm:$0x0] %vm1303, %v6595
    %v6604 = vld [vmem:[%s1898 + $0x2] sm:$0xff]
    %v6605 = vld [vmem:[%s1898 + $0xa] sm:$0xff]
    %v6606 = vld [vmem:[%s1898 + $0x82] sm:$0xff]
    %v6607 = vld [vmem:[%s1898 + $0x8a] sm:$0xff]
    %s6608 = sld [smem:[#allocation7 + $0x5a]]
    %v6609 = vstv %s6608
    %v6610 = vmul.f32 %v6604, %v6609
    %v6611 = vmul.f32 %v6605, %v6609
    %v6612 = vmul.f32 %v6606, %v6609
    %v6613 = vmul.f32 %v6607, %v6609
    %s6614 = sld [smem:[#allocation7 + $0x5b]]
    %v6615 = vstv %s6614
    %v6616 = vmul.f32 %v6604, %v6615
    %v6617 = vmul.f32 %v6605, %v6615
    %v6618 = vmul.f32 %v6606, %v6615
    %v6619 = vmul.f32 %v6607, %v6615
    %6624 = vrot.lane.b32.xlu0 %v6616, 124
    %v6625 = vpop.permute.xlu0 %6624
    %6626 = vrot.lane.b32.xlu0 %v6617, 124
    %v6627 = vpop.permute.xlu0 %6626
    %6628 = vrot.lane.b32.xlu0 %v6618, 124
    %v6629 = vpop.permute.xlu0 %6628
    %6630 = vrot.lane.b32.xlu0 %v6619, 124
    %v6631 = vpop.permute.xlu0 %6630
    %v6636 = vadd.f32 %v6610, %v6625
    %v6637 = vadd.f32 %v6611, %v6627
    %v6638 = vadd.f32 %v6612, %v6629
    %v6639 = vadd.f32 %v6613, %v6631
    %s6640 = sld [smem:[#allocation7 + $0x5c]]
    %v6641 = vstv %s6640
    %v6642 = vmul.f32 %v6604, %v6641
    %v6643 = vmul.f32 %v6605, %v6641
    %v6644 = vmul.f32 %v6606, %v6641
    %v6645 = vmul.f32 %v6607, %v6641
    %6650 = vrot.lane.b32.xlu0 %v6642, 120
    %v6651 = vpop.permute.xlu0 %6650
    %6652 = vrot.lane.b32.xlu0 %v6643, 120
    %v6653 = vpop.permute.xlu0 %6652
    %6654 = vrot.lane.b32.xlu0 %v6644, 120
    %v6655 = vpop.permute.xlu0 %6654
    %6656 = vrot.lane.b32.xlu0 %v6645, 120
    %v6657 = vpop.permute.xlu0 %6656
    %v6662 = vadd.f32 %v6636, %v6651
    %v6663 = vadd.f32 %v6637, %v6653
    %v6664 = vadd.f32 %v6638, %v6655
    %v6665 = vadd.f32 %v6639, %v6657
    %v6666 = vld [vmem:[%s1898 + $0x6] sm:$0xff]
    %v6667 = vld [vmem:[%s1898 + $0xe] sm:$0xff]
    %v6668 = vld [vmem:[%s1898 + $0x86] sm:$0xff]
    %v6669 = vld [vmem:[%s1898 + $0x8e] sm:$0xff]
    %s6670 = sld [smem:[#allocation7 + $0x5d]]
    %v6671 = vstv %s6670
    %v6672 = vmul.f32 %v6666, %v6671
    %v6673 = vmul.f32 %v6667, %v6671
    %v6674 = vmul.f32 %v6668, %v6671
    %v6675 = vmul.f32 %v6669, %v6671
    %v6676 = vadd.f32 %v6662, %v6672
    %v6677 = vadd.f32 %v6663, %v6673
    %v6678 = vadd.f32 %v6664, %v6674
    %v6679 = vadd.f32 %v6665, %v6675
    %s6680 = sld [smem:[#allocation7 + $0x5e]]
    %v6681 = vstv %s6680
    %v6682 = vmul.f32 %v6666, %v6681
    %v6683 = vmul.f32 %v6667, %v6681
    %v6684 = vmul.f32 %v6668, %v6681
    %v6685 = vmul.f32 %v6669, %v6681
    %6690 = vrot.lane.b32.xlu0 %v6682, 124
    %v6691 = vpop.permute.xlu0 %6690
    %6692 = vrot.lane.b32.xlu0 %v6683, 124
    %v6693 = vpop.permute.xlu0 %6692
    %6694 = vrot.lane.b32.xlu0 %v6684, 124
    %v6695 = vpop.permute.xlu0 %6694
    %6696 = vrot.lane.b32.xlu0 %v6685, 124
    %v6697 = vpop.permute.xlu0 %6696
    %v6702 = vadd.f32 %v6676, %v6691
    %v6703 = vadd.f32 %v6677, %v6693
    %v6704 = vadd.f32 %v6678, %v6695
    %v6705 = vadd.f32 %v6679, %v6697
    %s6706 = sld [smem:[#allocation7 + $0x5f]]
    %v6707 = vstv %s6706
    %v6708 = vmul.f32 %v6666, %v6707
    %v6709 = vmul.f32 %v6667, %v6707
    %v6710 = vmul.f32 %v6668, %v6707
    %v6711 = vmul.f32 %v6669, %v6707
    %6716 = vrot.lane.b32.xlu0 %v6708, 120
    %v6717 = vpop.permute.xlu0 %6716
    %6718 = vrot.lane.b32.xlu0 %v6709, 120
    %v6719 = vpop.permute.xlu0 %6718
    %6720 = vrot.lane.b32.xlu0 %v6710, 120
    %v6721 = vpop.permute.xlu0 %6720
    %6722 = vrot.lane.b32.xlu0 %v6711, 120
    %v6723 = vpop.permute.xlu0 %6722
    %v6728 = vadd.f32 %v6702, %v6717
    %v6729 = vadd.f32 %v6703, %v6719
    %v6730 = vadd.f32 %v6704, %v6721
    %v6731 = vadd.f32 %v6705, %v6723
    %v6732 = vld [vmem:[%s1898 + $0xa] sm:$0xff]
    %v6733 = vld [vmem:[%s1898 + $0x12] sm:$0xff]
    %v6734 = vld [vmem:[%s1898 + $0x8a] sm:$0xff]
    %v6735 = vld [vmem:[%s1898 + $0x92] sm:$0xff]
    %s6736 = sld [smem:[#allocation7 + $0x60]]
    %v6737 = vstv %s6736
    %v6738 = vmul.f32 %v6732, %v6737
    %v6739 = vmul.f32 %v6733, %v6737
    %v6740 = vmul.f32 %v6734, %v6737
    %v6741 = vmul.f32 %v6735, %v6737
    %v6742 = vadd.f32 %v6728, %v6738
    %v6743 = vadd.f32 %v6729, %v6739
    %v6744 = vadd.f32 %v6730, %v6740
    %v6745 = vadd.f32 %v6731, %v6741
    %s6746 = sld [smem:[#allocation7 + $0x61]]
    %v6747 = vstv %s6746
    %v6748 = vmul.f32 %v6732, %v6747
    %v6749 = vmul.f32 %v6733, %v6747
    %v6750 = vmul.f32 %v6734, %v6747
    %v6751 = vmul.f32 %v6735, %v6747
    %6756 = vrot.lane.b32.xlu0 %v6748, 124
    %v6757 = vpop.permute.xlu0 %6756
    %6758 = vrot.lane.b32.xlu0 %v6749, 124
    %v6759 = vpop.permute.xlu0 %6758
    %6760 = vrot.lane.b32.xlu0 %v6750, 124
    %v6761 = vpop.permute.xlu0 %6760
    %6762 = vrot.lane.b32.xlu0 %v6751, 124
    %v6763 = vpop.permute.xlu0 %6762
    %v6768 = vadd.f32 %v6742, %v6757
    %v6769 = vadd.f32 %v6743, %v6759
    %v6770 = vadd.f32 %v6744, %v6761
    %v6771 = vadd.f32 %v6745, %v6763
    %s6772 = sld [smem:[#allocation7 + $0x62]]
    %v6773 = vstv %s6772
    %v6774 = vmul.f32 %v6732, %v6773
    %v6775 = vmul.f32 %v6733, %v6773
    %v6776 = vmul.f32 %v6734, %v6773
    %v6777 = vmul.f32 %v6735, %v6773
    %6782 = vrot.lane.b32.xlu0 %v6774, 120
    %v6783 = vpop.permute.xlu0 %6782
    %6784 = vrot.lane.b32.xlu0 %v6775, 120
    %v6785 = vpop.permute.xlu0 %6784
    %6786 = vrot.lane.b32.xlu0 %v6776, 120
    %v6787 = vpop.permute.xlu0 %6786
    %6788 = vrot.lane.b32.xlu0 %v6777, 120
    %v6789 = vpop.permute.xlu0 %6788
    %v6794 = vadd.f32 %v6768, %v6783
    %v6795 = vadd.f32 %v6769, %v6785
    %v6796 = vadd.f32 %v6770, %v6787
    %v6797 = vadd.f32 %v6771, %v6789
    %6802 = vrot.lane.b32.xlu0 %v6794, 126
    %v6803 = vpop.permute.xlu0 %6802
    %6804 = vrot.lane.b32.xlu0 %v6795, 126
    %v6805 = vpop.permute.xlu0 %6804
    %6806 = vrot.lane.b32.xlu0 %v6796, 126
    %v6807 = vpop.permute.xlu0 %6806
    %6808 = vrot.lane.b32.xlu0 %v6797, 126
    %v6809 = vpop.permute.xlu0 %6808
    %v6814 = vcombine.high %v6803, 0.0
    %v6816 = vunpack.c.l.s4 1983009808
    %v6817 = vunpack.c.0.s8 %v6816
    %v6818 = vlaneseq
    %v6819 = vshrl.u32 %v6818, 7
    %v6820 = vsub.s32 %v6817, %v6819
    %v6821 = vrot.slane %v6803, %v6820
    %v6823 = vunpack.c.l.s4 1983009808
    %v6824 = vunpack.c.0.s8 %v6823
    %v6825 = vlaneseq
    %v6826 = vshrl.u32 %v6825, 7
    %v6827 = vsub.s32 %v6824, %v6826
    %v6828 = vrot.slane %v6814, %v6827
    %v6829 = vcombine.high %v6821, 0.0
    %v6831 = vunpack.c.l.s4 1934713408
    %v6832 = vunpack.c.0.s8 %v6831
    %v6833 = vlaneseq
    %v6834 = vshrl.u32 %v6833, 7
    %v6835 = vsub.s32 %v6832, %v6834
    %v6836 = vrot.slane %v6821, %v6835
    %v6838 = vunpack.c.l.s4 1934713408
    %v6839 = vunpack.c.0.s8 %v6838
    %v6840 = vlaneseq
    %v6841 = vshrl.u32 %v6840, 7
    %v6842 = vsub.s32 %v6839, %v6841
    %v6843 = vrot.slane %v6829, %v6842
    %v6844 = vcombine.high %v6828, 0.0
    %v6846 = vunpack.c.l.s4 1934713408
    %v6847 = vunpack.c.0.s8 %v6846
    %v6848 = vlaneseq
    %v6849 = vshrl.u32 %v6848, 7
    %v6850 = vsub.s32 %v6847, %v6849
    %v6851 = vrot.slane %v6828, %v6850
    %v6853 = vunpack.c.l.s4 1934713408
    %v6854 = vunpack.c.0.s8 %v6853
    %v6855 = vlaneseq
    %v6856 = vshrl.u32 %v6855, 7
    %v6857 = vsub.s32 %v6854, %v6856
    %v6858 = vrot.slane %v6844, %v6857
    %v6859 = vcombine.high %v6836, 0.0
    %v6860 = vcombine.high %v6843, 0.0
    %v6861 = vcombine.high %v6851, 0.0
    %v6862 = vcombine.high %v6858, 0.0
    %v6863 = vcombine.high %v6805, 0.0
    %v6865 = vunpack.c.l.s4 1983009808
    %v6866 = vunpack.c.0.s8 %v6865
    %v6867 = vlaneseq
    %v6868 = vshrl.u32 %v6867, 7
    %v6869 = vsub.s32 %v6866, %v6868
    %v6870 = vrot.slane %v6805, %v6869
    %v6872 = vunpack.c.l.s4 1983009808
    %v6873 = vunpack.c.0.s8 %v6872
    %v6874 = vlaneseq
    %v6875 = vshrl.u32 %v6874, 7
    %v6876 = vsub.s32 %v6873, %v6875
    %v6877 = vrot.slane %v6863, %v6876
    %v6878 = vcombine.high %v6870, 0.0
    %v6880 = vunpack.c.l.s4 1934713408
    %v6881 = vunpack.c.0.s8 %v6880
    %v6882 = vlaneseq
    %v6883 = vshrl.u32 %v6882, 7
    %v6884 = vsub.s32 %v6881, %v6883
    %v6885 = vrot.slane %v6870, %v6884
    %v6887 = vunpack.c.l.s4 1934713408
    %v6888 = vunpack.c.0.s8 %v6887
    %v6889 = vlaneseq
    %v6890 = vshrl.u32 %v6889, 7
    %v6891 = vsub.s32 %v6888, %v6890
    %v6892 = vrot.slane %v6878, %v6891
    %v6893 = vcombine.high %v6877, 0.0
    %v6895 = vunpack.c.l.s4 1934713408
    %v6896 = vunpack.c.0.s8 %v6895
    %v6897 = vlaneseq
    %v6898 = vshrl.u32 %v6897, 7
    %v6899 = vsub.s32 %v6896, %v6898
    %v6900 = vrot.slane %v6877, %v6899
    %v6902 = vunpack.c.l.s4 1934713408
    %v6903 = vunpack.c.0.s8 %v6902
    %v6904 = vlaneseq
    %v6905 = vshrl.u32 %v6904, 7
    %v6906 = vsub.s32 %v6903, %v6905
    %v6907 = vrot.slane %v6893, %v6906
    %v6908 = vcombine.high %v6885, 0.0
    %v6909 = vcombine.high %v6892, 0.0
    %v6910 = vcombine.high %v6900, 0.0
    %v6911 = vcombine.high %v6907, 0.0
    %v6912 = vcombine.high %v6807, 0.0
    %v6914 = vunpack.c.l.s4 1983009808
    %v6915 = vunpack.c.0.s8 %v6914
    %v6916 = vlaneseq
    %v6917 = vshrl.u32 %v6916, 7
    %v6918 = vsub.s32 %v6915, %v6917
    %v6919 = vrot.slane %v6807, %v6918
    %v6921 = vunpack.c.l.s4 1983009808
    %v6922 = vunpack.c.0.s8 %v6921
    %v6923 = vlaneseq
    %v6924 = vshrl.u32 %v6923, 7
    %v6925 = vsub.s32 %v6922, %v6924
    %v6926 = vrot.slane %v6912, %v6925
    %v6927 = vcombine.high %v6919, 0.0
    %v6929 = vunpack.c.l.s4 1934713408
    %v6930 = vunpack.c.0.s8 %v6929
    %v6931 = vlaneseq
    %v6932 = vshrl.u32 %v6931, 7
    %v6933 = vsub.s32 %v6930, %v6932
    %v6934 = vrot.slane %v6919, %v6933
    %v6936 = vunpack.c.l.s4 1934713408
    %v6937 = vunpack.c.0.s8 %v6936
    %v6938 = vlaneseq
    %v6939 = vshrl.u32 %v6938, 7
    %v6940 = vsub.s32 %v6937, %v6939
    %v6941 = vrot.slane %v6927, %v6940
    %v6942 = vcombine.high %v6926, 0.0
    %v6944 = vunpack.c.l.s4 1934713408
    %v6945 = vunpack.c.0.s8 %v6944
    %v6946 = vlaneseq
    %v6947 = vshrl.u32 %v6946, 7
    %v6948 = vsub.s32 %v6945, %v6947
    %v6949 = vrot.slane %v6926, %v6948
    %v6951 = vunpack.c.l.s4 1934713408
    %v6952 = vunpack.c.0.s8 %v6951
    %v6953 = vlaneseq
    %v6954 = vshrl.u32 %v6953, 7
    %v6955 = vsub.s32 %v6952, %v6954
    %v6956 = vrot.slane %v6942, %v6955
    %v6957 = vcombine.high %v6934, 0.0
    %v6958 = vcombine.high %v6941, 0.0
    %v6959 = vcombine.high %v6949, 0.0
    %v6960 = vcombine.high %v6956, 0.0
    %v6961 = vcombine.high %v6809, 0.0
    %v6963 = vunpack.c.l.s4 1983009808
    %v6964 = vunpack.c.0.s8 %v6963
    %v6965 = vlaneseq
    %v6966 = vshrl.u32 %v6965, 7
    %v6967 = vsub.s32 %v6964, %v6966
    %v6968 = vrot.slane %v6809, %v6967
    %v6970 = vunpack.c.l.s4 1983009808
    %v6971 = vunpack.c.0.s8 %v6970
    %v6972 = vlaneseq
    %v6973 = vshrl.u32 %v6972, 7
    %v6974 = vsub.s32 %v6971, %v6973
    %v6975 = vrot.slane %v6961, %v6974
    %v6976 = vcombine.high %v6968, 0.0
    %v6978 = vunpack.c.l.s4 1934713408
    %v6979 = vunpack.c.0.s8 %v6978
    %v6980 = vlaneseq
    %v6981 = vshrl.u32 %v6980, 7
    %v6982 = vsub.s32 %v6979, %v6981
    %v6983 = vrot.slane %v6968, %v6982
    %v6985 = vunpack.c.l.s4 1934713408
    %v6986 = vunpack.c.0.s8 %v6985
    %v6987 = vlaneseq
    %v6988 = vshrl.u32 %v6987, 7
    %v6989 = vsub.s32 %v6986, %v6988
    %v6990 = vrot.slane %v6976, %v6989
    %v6991 = vcombine.high %v6975, 0.0
    %v6993 = vunpack.c.l.s4 1934713408
    %v6994 = vunpack.c.0.s8 %v6993
    %v6995 = vlaneseq
    %v6996 = vshrl.u32 %v6995, 7
    %v6997 = vsub.s32 %v6994, %v6996
    %v6998 = vrot.slane %v6975, %v6997
    %v7000 = vunpack.c.l.s4 1934713408
    %v7001 = vunpack.c.0.s8 %v7000
    %v7002 = vlaneseq
    %v7003 = vshrl.u32 %v7002, 7
    %v7004 = vsub.s32 %v7001, %v7003
    %v7005 = vrot.slane %v6991, %v7004
    %v7006 = vcombine.high %v6983, 0.0
    %v7007 = vcombine.high %v6990, 0.0
    %v7008 = vcombine.high %v6998, 0.0
    %v7009 = vcombine.high %v7005, 0.0
    %7012 = vrot.lane.b32.xlu0 %v6859, 16
    %v7013 = vpop.permute.xlu0 %7012
    %7014 = vrot.lane.b32.xlu0 %v6957, 16
    %v7015 = vpop.permute.xlu0 %7014
    %7020 = vrot.lane.b32.xlu0 %v6843, 32
    %v7021 = vpop.permute.xlu0 %7020
    %7022 = vrot.lane.b32.xlu0 %v6941, 32
    %v7023 = vpop.permute.xlu0 %7022
    %7028 = vrot.lane.b32.xlu0 %v6860, 48
    %v7029 = vpop.permute.xlu0 %7028
    %7030 = vrot.lane.b32.xlu0 %v6958, 48
    %v7031 = vpop.permute.xlu0 %7030
    %7036 = vrot.lane.b32.xlu0 %v6851, 64
    %v7037 = vpop.permute.xlu0 %7036
    %7038 = vrot.lane.b32.xlu0 %v6949, 64
    %v7039 = vpop.permute.xlu0 %7038
    %7044 = vrot.lane.b32.xlu0 %v6861, 80
    %v7045 = vpop.permute.xlu0 %7044
    %7046 = vrot.lane.b32.xlu0 %v6959, 80
    %v7047 = vpop.permute.xlu0 %7046
    %7052 = vrot.lane.b32.xlu0 %v6858, 96
    %v7053 = vpop.permute.xlu0 %7052
    %7054 = vrot.lane.b32.xlu0 %v6956, 96
    %v7055 = vpop.permute.xlu0 %7054
    %7060 = vrot.lane.b32.xlu0 %v6862, 112
    %v7061 = vpop.permute.xlu0 %7060
    %7062 = vrot.lane.b32.xlu0 %v6960, 112
    %v7063 = vpop.permute.xlu0 %7062
    %7068 = vrot.lane.b32.xlu0 %v6908, 16
    %v7069 = vpop.permute.xlu0 %7068
    %7070 = vrot.lane.b32.xlu0 %v7006, 16
    %v7071 = vpop.permute.xlu0 %7070
    %7076 = vrot.lane.b32.xlu0 %v6892, 32
    %v7077 = vpop.permute.xlu0 %7076
    %7078 = vrot.lane.b32.xlu0 %v6990, 32
    %v7079 = vpop.permute.xlu0 %7078
    %7084 = vrot.lane.b32.xlu0 %v6909, 48
    %v7085 = vpop.permute.xlu0 %7084
    %7086 = vrot.lane.b32.xlu0 %v7007, 48
    %v7087 = vpop.permute.xlu0 %7086
    %7092 = vrot.lane.b32.xlu0 %v6900, 64
    %v7093 = vpop.permute.xlu0 %7092
    %7094 = vrot.lane.b32.xlu0 %v6998, 64
    %v7095 = vpop.permute.xlu0 %7094
    %7100 = vrot.lane.b32.xlu0 %v6910, 80
    %v7101 = vpop.permute.xlu0 %7100
    %7102 = vrot.lane.b32.xlu0 %v7008, 80
    %v7103 = vpop.permute.xlu0 %7102
    %7108 = vrot.lane.b32.xlu0 %v6907, 96
    %v7109 = vpop.permute.xlu0 %7108
    %7110 = vrot.lane.b32.xlu0 %v7005, 96
    %v7111 = vpop.permute.xlu0 %7110
    %7116 = vrot.lane.b32.xlu0 %v6911, 112
    %v7117 = vpop.permute.xlu0 %7116
    %7118 = vrot.lane.b32.xlu0 %v7009, 112
    %v7119 = vpop.permute.xlu0 %7118
    %v7122 = vsel %vm1229, %v6836, %v7013
    %v7123 = vsel %vm1229, %v6934, %v7015
    %v7124 = vsel %vm1232, %v7122, %v7021
    %v7125 = vsel %vm1232, %v7123, %v7023
    %v7126 = vsel %vm1235, %v7124, %v7029
    %v7127 = vsel %vm1235, %v7125, %v7031
    %v7128 = vsel %vm1238, %v7126, %v7037
    %v7129 = vsel %vm1238, %v7127, %v7039
    %v7130 = vsel %vm1241, %v7128, %v7045
    %v7131 = vsel %vm1241, %v7129, %v7047
    %v7132 = vsel %vm1244, %v7130, %v7053
    %v7133 = vsel %vm1244, %v7131, %v7055
    %v7134 = vsel %vm1247, %v7132, %v7061
    %v7135 = vsel %vm1247, %v7133, %v7063
    %v7136 = vsel %vm1229, %v6885, %v7069
    %v7137 = vsel %vm1229, %v6983, %v7071
    %v7138 = vsel %vm1232, %v7136, %v7077
    %v7139 = vsel %vm1232, %v7137, %v7079
    %v7140 = vsel %vm1235, %v7138, %v7085
    %v7141 = vsel %vm1235, %v7139, %v7087
    %v7142 = vsel %vm1238, %v7140, %v7093
    %v7143 = vsel %vm1238, %v7141, %v7095
    %v7144 = vsel %vm1241, %v7142, %v7101
    %v7145 = vsel %vm1241, %v7143, %v7103
    %v7146 = vsel %vm1244, %v7144, %v7109
    %v7147 = vsel %vm1244, %v7145, %v7111
    %v7148 = vsel %vm1247, %v7146, %v7117
    %v7149 = vsel %vm1247, %v7147, %v7119
    %v7154 = vcombine.low %v7134, %v7148
    %v7156 = vunpack.c.l.s4 1966171168
    %v7157 = vunpack.c.0.s8 %v7156
    %v7158 = vlaneseq
    %v7159 = vshrl.u32 %v7158, 7
    %v7160 = vsub.s32 %v7157, %v7159
    %v7161 = vrot.slane %v7154, %v7160
    %v7163 = vunpack.c.l.s4 1966171168
    %v7164 = vunpack.c.0.s8 %v7163
    %v7165 = vlaneseq
    %v7166 = vshrl.u32 %v7165, 7
    %v7167 = vsub.s32 %v7164, %v7166
    %v7168 = vrot.slane %v7161, %v7167
    %v7169 = vcombine.low %v7135, %v7149
    %v7171 = vunpack.c.l.s4 1966171168
    %v7172 = vunpack.c.0.s8 %v7171
    %v7173 = vlaneseq
    %v7174 = vshrl.u32 %v7173, 7
    %v7175 = vsub.s32 %v7172, %v7174
    %v7176 = vrot.slane %v7169, %v7175
    %v7178 = vunpack.c.l.s4 1966171168
    %v7179 = vunpack.c.0.s8 %v7178
    %v7180 = vlaneseq
    %v7181 = vshrl.u32 %v7180, 7
    %v7182 = vsub.s32 %v7179, %v7181
    %v7183 = vrot.slane %v7176, %v7182
    %s7186 = scalar_lea.vmem [#allocation8], 18
    %7187 = vst.msk [vmem:[%s7186] ss:$8 sm:$0x3] %vm1303, %v7168
    %7188 = vst.msk [vmem:[%s7186] ss:$8 sm:$0x0] %vm1303, %v7168
    %s7189 = scalar_lea.vmem [#allocation8], 50
    %7190 = vst.msk [vmem:[%s7189] ss:$8 sm:$0x3] %vm1303, %v7183
    %7191 = vst.msk [vmem:[%s7189] ss:$8 sm:$0x0] %vm1303, %v7183
    %v7192 = vld [vmem:[%s2487 + $0x2] sm:$0xff]
    %v7193 = vld [vmem:[%s2487 + $0xa] sm:$0xff]
    %v7194 = vld [vmem:[%s2487 + $0x82] sm:$0xff]
    %v7195 = vld [vmem:[%s2487 + $0x8a] sm:$0xff]
    %s7196 = sld [smem:[#allocation7 + $0x63]]
    %v7197 = vstv %s7196
    %v7198 = vmul.f32 %v7192, %v7197
    %v7199 = vmul.f32 %v7193, %v7197
    %v7200 = vmul.f32 %v7194, %v7197
    %v7201 = vmul.f32 %v7195, %v7197
    %s7202 = sld [smem:[#allocation7 + $0x64]]
    %v7203 = vstv %s7202
    %v7204 = vmul.f32 %v7192, %v7203
    %v7205 = vmul.f32 %v7193, %v7203
    %v7206 = vmul.f32 %v7194, %v7203
    %v7207 = vmul.f32 %v7195, %v7203
    %7212 = vrot.lane.b32.xlu0 %v7204, 124
    %v7213 = vpop.permute.xlu0 %7212
    %7214 = vrot.lane.b32.xlu0 %v7205, 124
    %v7215 = vpop.permute.xlu0 %7214
    %7216 = vrot.lane.b32.xlu0 %v7206, 124
    %v7217 = vpop.permute.xlu0 %7216
    %7218 = vrot.lane.b32.xlu0 %v7207, 124
    %v7219 = vpop.permute.xlu0 %7218
    %v7224 = vadd.f32 %v7198, %v7213
    %v7225 = vadd.f32 %v7199, %v7215
    %v7226 = vadd.f32 %v7200, %v7217
    %v7227 = vadd.f32 %v7201, %v7219
    %s7228 = sld [smem:[#allocation7 + $0x65]]
    %v7229 = vstv %s7228
    %v7230 = vmul.f32 %v7192, %v7229
    %v7231 = vmul.f32 %v7193, %v7229
    %v7232 = vmul.f32 %v7194, %v7229
    %v7233 = vmul.f32 %v7195, %v7229
    %7238 = vrot.lane.b32.xlu0 %v7230, 120
    %v7239 = vpop.permute.xlu0 %7238
    %7240 = vrot.lane.b32.xlu0 %v7231, 120
    %v7241 = vpop.permute.xlu0 %7240
    %7242 = vrot.lane.b32.xlu0 %v7232, 120
    %v7243 = vpop.permute.xlu0 %7242
    %7244 = vrot.lane.b32.xlu0 %v7233, 120
    %v7245 = vpop.permute.xlu0 %7244
    %v7250 = vadd.f32 %v7224, %v7239
    %v7251 = vadd.f32 %v7225, %v7241
    %v7252 = vadd.f32 %v7226, %v7243
    %v7253 = vadd.f32 %v7227, %v7245
    %v7254 = vld [vmem:[%s2487 + $0x6] sm:$0xff]
    %v7255 = vld [vmem:[%s2487 + $0xe] sm:$0xff]
    %v7256 = vld [vmem:[%s2487 + $0x86] sm:$0xff]
    %v7257 = vld [vmem:[%s2487 + $0x8e] sm:$0xff]
    %s7258 = sld [smem:[#allocation7 + $0x66]]
    %v7259 = vstv %s7258
    %v7260 = vmul.f32 %v7254, %v7259
    %v7261 = vmul.f32 %v7255, %v7259
    %v7262 = vmul.f32 %v7256, %v7259
    %v7263 = vmul.f32 %v7257, %v7259
    %v7264 = vadd.f32 %v7250, %v7260
    %v7265 = vadd.f32 %v7251, %v7261
    %v7266 = vadd.f32 %v7252, %v7262
    %v7267 = vadd.f32 %v7253, %v7263
    %s7268 = sld [smem:[#allocation7 + $0x67]]
    %v7269 = vstv %s7268
    %v7270 = vmul.f32 %v7254, %v7269
    %v7271 = vmul.f32 %v7255, %v7269
    %v7272 = vmul.f32 %v7256, %v7269
    %v7273 = vmul.f32 %v7257, %v7269
    %7278 = vrot.lane.b32.xlu0 %v7270, 124
    %v7279 = vpop.permute.xlu0 %7278
    %7280 = vrot.lane.b32.xlu0 %v7271, 124
    %v7281 = vpop.permute.xlu0 %7280
    %7282 = vrot.lane.b32.xlu0 %v7272, 124
    %v7283 = vpop.permute.xlu0 %7282
    %7284 = vrot.lane.b32.xlu0 %v7273, 124
    %v7285 = vpop.permute.xlu0 %7284
    %v7290 = vadd.f32 %v7264, %v7279
    %v7291 = vadd.f32 %v7265, %v7281
    %v7292 = vadd.f32 %v7266, %v7283
    %v7293 = vadd.f32 %v7267, %v7285
    %s7294 = sld [smem:[#allocation7 + $0x68]]
    %v7295 = vstv %s7294
    %v7296 = vmul.f32 %v7254, %v7295
    %v7297 = vmul.f32 %v7255, %v7295
    %v7298 = vmul.f32 %v7256, %v7295
    %v7299 = vmul.f32 %v7257, %v7295
    %7304 = vrot.lane.b32.xlu0 %v7296, 120
    %v7305 = vpop.permute.xlu0 %7304
    %7306 = vrot.lane.b32.xlu0 %v7297, 120
    %v7307 = vpop.permute.xlu0 %7306
    %7308 = vrot.lane.b32.xlu0 %v7298, 120
    %v7309 = vpop.permute.xlu0 %7308
    %7310 = vrot.lane.b32.xlu0 %v7299, 120
    %v7311 = vpop.permute.xlu0 %7310
    %v7316 = vadd.f32 %v7290, %v7305
    %v7317 = vadd.f32 %v7291, %v7307
    %v7318 = vadd.f32 %v7292, %v7309
    %v7319 = vadd.f32 %v7293, %v7311
    %v7320 = vld [vmem:[%s2487 + $0xa] sm:$0xff]
    %v7321 = vld [vmem:[%s2487 + $0x12] sm:$0xff]
    %v7322 = vld [vmem:[%s2487 + $0x8a] sm:$0xff]
    %v7323 = vld [vmem:[%s2487 + $0x92] sm:$0xff]
    %s7324 = sld [smem:[#allocation7 + $0x69]]
    %v7325 = vstv %s7324
    %v7326 = vmul.f32 %v7320, %v7325
    %v7327 = vmul.f32 %v7321, %v7325
    %v7328 = vmul.f32 %v7322, %v7325
    %v7329 = vmul.f32 %v7323, %v7325
    %v7330 = vadd.f32 %v7316, %v7326
    %v7331 = vadd.f32 %v7317, %v7327
    %v7332 = vadd.f32 %v7318, %v7328
    %v7333 = vadd.f32 %v7319, %v7329
    %s7334 = sld [smem:[#allocation7 + $0x6a]]
    %v7335 = vstv %s7334
    %v7336 = vmul.f32 %v7320, %v7335
    %v7337 = vmul.f32 %v7321, %v7335
    %v7338 = vmul.f32 %v7322, %v7335
    %v7339 = vmul.f32 %v7323, %v7335
    %7344 = vrot.lane.b32.xlu0 %v7336, 124
    %v7345 = vpop.permute.xlu0 %7344
    %7346 = vrot.lane.b32.xlu0 %v7337, 124
    %v7347 = vpop.permute.xlu0 %7346
    %7348 = vrot.lane.b32.xlu0 %v7338, 124
    %v7349 = vpop.permute.xlu0 %7348
    %7350 = vrot.lane.b32.xlu0 %v7339, 124
    %v7351 = vpop.permute.xlu0 %7350
    %v7356 = vadd.f32 %v7330, %v7345
    %v7357 = vadd.f32 %v7331, %v7347
    %v7358 = vadd.f32 %v7332, %v7349
    %v7359 = vadd.f32 %v7333, %v7351
    %s7360 = sld [smem:[#allocation7 + $0x6b]]
    %v7361 = vstv %s7360
    %v7362 = vmul.f32 %v7320, %v7361
    %v7363 = vmul.f32 %v7321, %v7361
    %v7364 = vmul.f32 %v7322, %v7361
    %v7365 = vmul.f32 %v7323, %v7361
    %7370 = vrot.lane.b32.xlu0 %v7362, 120
    %v7371 = vpop.permute.xlu0 %7370
    %7372 = vrot.lane.b32.xlu0 %v7363, 120
    %v7373 = vpop.permute.xlu0 %7372
    %7374 = vrot.lane.b32.xlu0 %v7364, 120
    %v7375 = vpop.permute.xlu0 %7374
    %7376 = vrot.lane.b32.xlu0 %v7365, 120
    %v7377 = vpop.permute.xlu0 %7376
    %v7382 = vadd.f32 %v7356, %v7371
    %v7383 = vadd.f32 %v7357, %v7373
    %v7384 = vadd.f32 %v7358, %v7375
    %v7385 = vadd.f32 %v7359, %v7377
    %7390 = vrot.lane.b32.xlu0 %v7382, 126
    %v7391 = vpop.permute.xlu0 %7390
    %7392 = vrot.lane.b32.xlu0 %v7383, 126
    %v7393 = vpop.permute.xlu0 %7392
    %7394 = vrot.lane.b32.xlu0 %v7384, 126
    %v7395 = vpop.permute.xlu0 %7394
    %7396 = vrot.lane.b32.xlu0 %v7385, 126
    %v7397 = vpop.permute.xlu0 %7396
    %v7402 = vcombine.high %v7391, 0.0
    %v7404 = vunpack.c.l.s4 1983009808
    %v7405 = vunpack.c.0.s8 %v7404
    %v7406 = vlaneseq
    %v7407 = vshrl.u32 %v7406, 7
    %v7408 = vsub.s32 %v7405, %v7407
    %v7409 = vrot.slane %v7391, %v7408
    %v7411 = vunpack.c.l.s4 1983009808
    %v7412 = vunpack.c.0.s8 %v7411
    %v7413 = vlaneseq
    %v7414 = vshrl.u32 %v7413, 7
    %v7415 = vsub.s32 %v7412, %v7414
    %v7416 = vrot.slane %v7402, %v7415
    %v7417 = vcombine.high %v7409, 0.0
    %v7419 = vunpack.c.l.s4 1934713408
    %v7420 = vunpack.c.0.s8 %v7419
    %v7421 = vlaneseq
    %v7422 = vshrl.u32 %v7421, 7
    %v7423 = vsub.s32 %v7420, %v7422
    %v7424 = vrot.slane %v7409, %v7423
    %v7426 = vunpack.c.l.s4 1934713408
    %v7427 = vunpack.c.0.s8 %v7426
    %v7428 = vlaneseq
    %v7429 = vshrl.u32 %v7428, 7
    %v7430 = vsub.s32 %v7427, %v7429
    %v7431 = vrot.slane %v7417, %v7430
    %v7432 = vcombine.high %v7416, 0.0
    %v7434 = vunpack.c.l.s4 1934713408
    %v7435 = vunpack.c.0.s8 %v7434
    %v7436 = vlaneseq
    %v7437 = vshrl.u32 %v7436, 7
    %v7438 = vsub.s32 %v7435, %v7437
    %v7439 = vrot.slane %v7416, %v7438
    %v7441 = vunpack.c.l.s4 1934713408
    %v7442 = vunpack.c.0.s8 %v7441
    %v7443 = vlaneseq
    %v7444 = vshrl.u32 %v7443, 7
    %v7445 = vsub.s32 %v7442, %v7444
    %v7446 = vrot.slane %v7432, %v7445
    %v7447 = vcombine.high %v7424, 0.0
    %v7448 = vcombine.high %v7431, 0.0
    %v7449 = vcombine.high %v7439, 0.0
    %v7450 = vcombine.high %v7446, 0.0
    %v7451 = vcombine.high %v7393, 0.0
    %v7453 = vunpack.c.l.s4 1983009808
    %v7454 = vunpack.c.0.s8 %v7453
    %v7455 = vlaneseq
    %v7456 = vshrl.u32 %v7455, 7
    %v7457 = vsub.s32 %v7454, %v7456
    %v7458 = vrot.slane %v7393, %v7457
    %v7460 = vunpack.c.l.s4 1983009808
    %v7461 = vunpack.c.0.s8 %v7460
    %v7462 = vlaneseq
    %v7463 = vshrl.u32 %v7462, 7
    %v7464 = vsub.s32 %v7461, %v7463
    %v7465 = vrot.slane %v7451, %v7464
    %v7466 = vcombine.high %v7458, 0.0
    %v7468 = vunpack.c.l.s4 1934713408
    %v7469 = vunpack.c.0.s8 %v7468
    %v7470 = vlaneseq
    %v7471 = vshrl.u32 %v7470, 7
    %v7472 = vsub.s32 %v7469, %v7471
    %v7473 = vrot.slane %v7458, %v7472
    %v7475 = vunpack.c.l.s4 1934713408
    %v7476 = vunpack.c.0.s8 %v7475
    %v7477 = vlaneseq
    %v7478 = vshrl.u32 %v7477, 7
    %v7479 = vsub.s32 %v7476, %v7478
    %v7480 = vrot.slane %v7466, %v7479
    %v7481 = vcombine.high %v7465, 0.0
    %v7483 = vunpack.c.l.s4 1934713408
    %v7484 = vunpack.c.0.s8 %v7483
    %v7485 = vlaneseq
    %v7486 = vshrl.u32 %v7485, 7
    %v7487 = vsub.s32 %v7484, %v7486
    %v7488 = vrot.slane %v7465, %v7487
    %v7490 = vunpack.c.l.s4 1934713408
    %v7491 = vunpack.c.0.s8 %v7490
    %v7492 = vlaneseq
    %v7493 = vshrl.u32 %v7492, 7
    %v7494 = vsub.s32 %v7491, %v7493
    %v7495 = vrot.slane %v7481, %v7494
    %v7496 = vcombine.high %v7473, 0.0
    %v7497 = vcombine.high %v7480, 0.0
    %v7498 = vcombine.high %v7488, 0.0
    %v7499 = vcombine.high %v7495, 0.0
    %v7500 = vcombine.high %v7395, 0.0
    %v7502 = vunpack.c.l.s4 1983009808
    %v7503 = vunpack.c.0.s8 %v7502
    %v7504 = vlaneseq
    %v7505 = vshrl.u32 %v7504, 7
    %v7506 = vsub.s32 %v7503, %v7505
    %v7507 = vrot.slane %v7395, %v7506
    %v7509 = vunpack.c.l.s4 1983009808
    %v7510 = vunpack.c.0.s8 %v7509
    %v7511 = vlaneseq
    %v7512 = vshrl.u32 %v7511, 7
    %v7513 = vsub.s32 %v7510, %v7512
    %v7514 = vrot.slane %v7500, %v7513
    %v7515 = vcombine.high %v7507, 0.0
    %v7517 = vunpack.c.l.s4 1934713408
    %v7518 = vunpack.c.0.s8 %v7517
    %v7519 = vlaneseq
    %v7520 = vshrl.u32 %v7519, 7
    %v7521 = vsub.s32 %v7518, %v7520
    %v7522 = vrot.slane %v7507, %v7521
    %v7524 = vunpack.c.l.s4 1934713408
    %v7525 = vunpack.c.0.s8 %v7524
    %v7526 = vlaneseq
    %v7527 = vshrl.u32 %v7526, 7
    %v7528 = vsub.s32 %v7525, %v7527
    %v7529 = vrot.slane %v7515, %v7528
    %v7530 = vcombine.high %v7514, 0.0
    %v7532 = vunpack.c.l.s4 1934713408
    %v7533 = vunpack.c.0.s8 %v7532
    %v7534 = vlaneseq
    %v7535 = vshrl.u32 %v7534, 7
    %v7536 = vsub.s32 %v7533, %v7535
    %v7537 = vrot.slane %v7514, %v7536
    %v7539 = vunpack.c.l.s4 1934713408
    %v7540 = vunpack.c.0.s8 %v7539
    %v7541 = vlaneseq
    %v7542 = vshrl.u32 %v7541, 7
    %v7543 = vsub.s32 %v7540, %v7542
    %v7544 = vrot.slane %v7530, %v7543
    %v7545 = vcombine.high %v7522, 0.0
    %v7546 = vcombine.high %v7529, 0.0
    %v7547 = vcombine.high %v7537, 0.0
    %v7548 = vcombine.high %v7544, 0.0
    %v7549 = vcombine.high %v7397, 0.0
    %v7551 = vunpack.c.l.s4 1983009808
    %v7552 = vunpack.c.0.s8 %v7551
    %v7553 = vlaneseq
    %v7554 = vshrl.u32 %v7553, 7
    %v7555 = vsub.s32 %v7552, %v7554
    %v7556 = vrot.slane %v7397, %v7555
    %v7558 = vunpack.c.l.s4 1983009808
    %v7559 = vunpack.c.0.s8 %v7558
    %v7560 = vlaneseq
    %v7561 = vshrl.u32 %v7560, 7
    %v7562 = vsub.s32 %v7559, %v7561
    %v7563 = vrot.slane %v7549, %v7562
    %v7564 = vcombine.high %v7556, 0.0
    %v7566 = vunpack.c.l.s4 1934713408
    %v7567 = vunpack.c.0.s8 %v7566
    %v7568 = vlaneseq
    %v7569 = vshrl.u32 %v7568, 7
    %v7570 = vsub.s32 %v7567, %v7569
    %v7571 = vrot.slane %v7556, %v7570
    %v7573 = vunpack.c.l.s4 1934713408
    %v7574 = vunpack.c.0.s8 %v7573
    %v7575 = vlaneseq
    %v7576 = vshrl.u32 %v7575, 7
    %v7577 = vsub.s32 %v7574, %v7576
    %v7578 = vrot.slane %v7564, %v7577
    %v7579 = vcombine.high %v7563, 0.0
    %v7581 = vunpack.c.l.s4 1934713408
    %v7582 = vunpack.c.0.s8 %v7581
    %v7583 = vlaneseq
    %v7584 = vshrl.u32 %v7583, 7
    %v7585 = vsub.s32 %v7582, %v7584
    %v7586 = vrot.slane %v7563, %v7585
    %v7588 = vunpack.c.l.s4 1934713408
    %v7589 = vunpack.c.0.s8 %v7588
    %v7590 = vlaneseq
    %v7591 = vshrl.u32 %v7590, 7
    %v7592 = vsub.s32 %v7589, %v7591
    %v7593 = vrot.slane %v7579, %v7592
    %v7594 = vcombine.high %v7571, 0.0
    %v7595 = vcombine.high %v7578, 0.0
    %v7596 = vcombine.high %v7586, 0.0
    %v7597 = vcombine.high %v7593, 0.0
    %7600 = vrot.lane.b32.xlu0 %v7447, 16
    %v7601 = vpop.permute.xlu0 %7600
    %7602 = vrot.lane.b32.xlu0 %v7545, 16
    %v7603 = vpop.permute.xlu0 %7602
    %7608 = vrot.lane.b32.xlu0 %v7431, 32
    %v7609 = vpop.permute.xlu0 %7608
    %7610 = vrot.lane.b32.xlu0 %v7529, 32
    %v7611 = vpop.permute.xlu0 %7610
    %7616 = vrot.lane.b32.xlu0 %v7448, 48
    %v7617 = vpop.permute.xlu0 %7616
    %7618 = vrot.lane.b32.xlu0 %v7546, 48
    %v7619 = vpop.permute.xlu0 %7618
    %7624 = vrot.lane.b32.xlu0 %v7439, 64
    %v7625 = vpop.permute.xlu0 %7624
    %7626 = vrot.lane.b32.xlu0 %v7537, 64
    %v7627 = vpop.permute.xlu0 %7626
    %7632 = vrot.lane.b32.xlu0 %v7449, 80
    %v7633 = vpop.permute.xlu0 %7632
    %7634 = vrot.lane.b32.xlu0 %v7547, 80
    %v7635 = vpop.permute.xlu0 %7634
    %7640 = vrot.lane.b32.xlu0 %v7446, 96
    %v7641 = vpop.permute.xlu0 %7640
    %7642 = vrot.lane.b32.xlu0 %v7544, 96
    %v7643 = vpop.permute.xlu0 %7642
    %7648 = vrot.lane.b32.xlu0 %v7450, 112
    %v7649 = vpop.permute.xlu0 %7648
    %7650 = vrot.lane.b32.xlu0 %v7548, 112
    %v7651 = vpop.permute.xlu0 %7650
    %7656 = vrot.lane.b32.xlu0 %v7496, 16
    %v7657 = vpop.permute.xlu0 %7656
    %7658 = vrot.lane.b32.xlu0 %v7594, 16
    %v7659 = vpop.permute.xlu0 %7658
    %7664 = vrot.lane.b32.xlu0 %v7480, 32
    %v7665 = vpop.permute.xlu0 %7664
    %7666 = vrot.lane.b32.xlu0 %v7578, 32
    %v7667 = vpop.permute.xlu0 %7666
    %7672 = vrot.lane.b32.xlu0 %v7497, 48
    %v7673 = vpop.permute.xlu0 %7672
    %7674 = vrot.lane.b32.xlu0 %v7595, 48
    %v7675 = vpop.permute.xlu0 %7674
    %7680 = vrot.lane.b32.xlu0 %v7488, 64
    %v7681 = vpop.permute.xlu0 %7680
    %7682 = vrot.lane.b32.xlu0 %v7586, 64
    %v7683 = vpop.permute.xlu0 %7682
    %7688 = vrot.lane.b32.xlu0 %v7498, 80
    %v7689 = vpop.permute.xlu0 %7688
    %7690 = vrot.lane.b32.xlu0 %v7596, 80
    %v7691 = vpop.permute.xlu0 %7690
    %7696 = vrot.lane.b32.xlu0 %v7495, 96
    %v7697 = vpop.permute.xlu0 %7696
    %7698 = vrot.lane.b32.xlu0 %v7593, 96
    %v7699 = vpop.permute.xlu0 %7698
    %7704 = vrot.lane.b32.xlu0 %v7499, 112
    %v7705 = vpop.permute.xlu0 %7704
    %7706 = vrot.lane.b32.xlu0 %v7597, 112
    %v7707 = vpop.permute.xlu0 %7706
    %v7710 = vsel %vm1229, %v7424, %v7601
    %v7711 = vsel %vm1229, %v7522, %v7603
    %v7712 = vsel %vm1232, %v7710, %v7609
    %v7713 = vsel %vm1232, %v7711, %v7611
    %v7714 = vsel %vm1235, %v7712, %v7617
    %v7715 = vsel %vm1235, %v7713, %v7619
    %v7716 = vsel %vm1238, %v7714, %v7625
    %v7717 = vsel %vm1238, %v7715, %v7627
    %v7718 = vsel %vm1241, %v7716, %v7633
    %v7719 = vsel %vm1241, %v7717, %v7635
    %v7720 = vsel %vm1244, %v7718, %v7641
    %v7721 = vsel %vm1244, %v7719, %v7643
    %v7722 = vsel %vm1247, %v7720, %v7649
    %v7723 = vsel %vm1247, %v7721, %v7651
    %v7724 = vsel %vm1229, %v7473, %v7657
    %v7725 = vsel %vm1229, %v7571, %v7659
    %v7726 = vsel %vm1232, %v7724, %v7665
    %v7727 = vsel %vm1232, %v7725, %v7667
    %v7728 = vsel %vm1235, %v7726, %v7673
    %v7729 = vsel %vm1235, %v7727, %v7675
    %v7730 = vsel %vm1238, %v7728, %v7681
    %v7731 = vsel %vm1238, %v7729, %v7683
    %v7732 = vsel %vm1241, %v7730, %v7689
    %v7733 = vsel %vm1241, %v7731, %v7691
    %v7734 = vsel %vm1244, %v7732, %v7697
    %v7735 = vsel %vm1244, %v7733, %v7699
    %v7736 = vsel %vm1247, %v7734, %v7705
    %v7737 = vsel %vm1247, %v7735, %v7707
    %v7742 = vcombine.low %v7722, %v7736
    %v7744 = vunpack.c.l.s4 1966171168
    %v7745 = vunpack.c.0.s8 %v7744
    %v7746 = vlaneseq
    %v7747 = vshrl.u32 %v7746, 7
    %v7748 = vsub.s32 %v7745, %v7747
    %v7749 = vrot.slane %v7742, %v7748
    %v7751 = vunpack.c.l.s4 1966171168
    %v7752 = vunpack.c.0.s8 %v7751
    %v7753 = vlaneseq
    %v7754 = vshrl.u32 %v7753, 7
    %v7755 = vsub.s32 %v7752, %v7754
    %v7756 = vrot.slane %v7749, %v7755
    %v7757 = vcombine.low %v7723, %v7737
    %v7759 = vunpack.c.l.s4 1966171168
    %v7760 = vunpack.c.0.s8 %v7759
    %v7761 = vlaneseq
    %v7762 = vshrl.u32 %v7761, 7
    %v7763 = vsub.s32 %v7760, %v7762
    %v7764 = vrot.slane %v7757, %v7763
    %v7766 = vunpack.c.l.s4 1966171168
    %v7767 = vunpack.c.0.s8 %v7766
    %v7768 = vlaneseq
    %v7769 = vshrl.u32 %v7768, 7
    %v7770 = vsub.s32 %v7767, %v7769
    %v7771 = vrot.slane %v7764, %v7770
    %s7774 = scalar_lea.vmem [#allocation8], 19
    %7775 = vst.msk [vmem:[%s7774] ss:$8 sm:$0x3] %vm1303, %v7756
    %7776 = vst.msk [vmem:[%s7774] ss:$8 sm:$0x0] %vm1303, %v7756
    %s7777 = scalar_lea.vmem [#allocation8], 51
    %7778 = vst.msk [vmem:[%s7777] ss:$8 sm:$0x3] %vm1303, %v7771
    %7779 = vst.msk [vmem:[%s7777] ss:$8 sm:$0x0] %vm1303, %v7771
    %v7780 = vld [vmem:[#allocation2] sm:$0xff]
    %v7781 = vld [vmem:[#allocation2 + $0x8] sm:$0xff]
    %v7782 = vld [vmem:[#allocation2 + $0x80] sm:$0xff]
    %v7783 = vld [vmem:[#allocation2 + $0x88] sm:$0xff]
    %s7784 = sld [smem:[#allocation7 + $0x6c]]
    %v7785 = vstv %s7784
    %v7786 = vmul.f32 %v7780, %v7785
    %v7787 = vmul.f32 %v7781, %v7785
    %v7788 = vmul.f32 %v7782, %v7785
    %v7789 = vmul.f32 %v7783, %v7785
    %s7790 = sld [smem:[#allocation7 + $0x6d]]
    %v7791 = vstv %s7790
    %v7792 = vmul.f32 %v7780, %v7791
    %v7793 = vmul.f32 %v7781, %v7791
    %v7794 = vmul.f32 %v7782, %v7791
    %v7795 = vmul.f32 %v7783, %v7791
    %7800 = vrot.lane.b32.xlu0 %v7792, 122
    %v7801 = vpop.permute.xlu0 %7800
    %7802 = vrot.lane.b32.xlu0 %v7793, 122
    %v7803 = vpop.permute.xlu0 %7802
    %7804 = vrot.lane.b32.xlu0 %v7794, 122
    %v7805 = vpop.permute.xlu0 %7804
    %7806 = vrot.lane.b32.xlu0 %v7795, 122
    %v7807 = vpop.permute.xlu0 %7806
    %v7812 = vadd.f32 %v7786, %v7801
    %v7813 = vadd.f32 %v7787, %v7803
    %v7814 = vadd.f32 %v7788, %v7805
    %v7815 = vadd.f32 %v7789, %v7807
    %s7816 = sld [smem:[#allocation7 + $0x6e]]
    %v7817 = vstv %s7816
    %v7818 = vmul.f32 %v7780, %v7817
    %v7819 = vmul.f32 %v7781, %v7817
    %v7820 = vmul.f32 %v7782, %v7817
    %v7821 = vmul.f32 %v7783, %v7817
    %7826 = vrot.lane.b32.xlu0 %v7818, 116
    %v7827 = vpop.permute.xlu0 %7826
    %7828 = vrot.lane.b32.xlu0 %v7819, 116
    %v7829 = vpop.permute.xlu0 %7828
    %7830 = vrot.lane.b32.xlu0 %v7820, 116
    %v7831 = vpop.permute.xlu0 %7830
    %7832 = vrot.lane.b32.xlu0 %v7821, 116
    %v7833 = vpop.permute.xlu0 %7832
    %v7838 = vadd.f32 %v7812, %v7827
    %v7839 = vadd.f32 %v7813, %v7829
    %v7840 = vadd.f32 %v7814, %v7831
    %v7841 = vadd.f32 %v7815, %v7833
    %v7842 = vld [vmem:[#allocation2 + $0x6] sm:$0xff]
    %v7843 = vld [vmem:[#allocation2 + $0xe] sm:$0xff]
    %v7844 = vld [vmem:[#allocation2 + $0x86] sm:$0xff]
    %v7845 = vld [vmem:[#allocation2 + $0x8e] sm:$0xff]
    %s7846 = sld [smem:[#allocation7 + $0x6f]]
    %v7847 = vstv %s7846
    %v7848 = vmul.f32 %v7842, %v7847
    %v7849 = vmul.f32 %v7843, %v7847
    %v7850 = vmul.f32 %v7844, %v7847
    %v7851 = vmul.f32 %v7845, %v7847
    %v7852 = vadd.f32 %v7838, %v7848
    %v7853 = vadd.f32 %v7839, %v7849
    %v7854 = vadd.f32 %v7840, %v7850
    %v7855 = vadd.f32 %v7841, %v7851
    %s7856 = sld [smem:[#allocation7 + $0x70]]
    %v7857 = vstv %s7856
    %v7858 = vmul.f32 %v7842, %v7857
    %v7859 = vmul.f32 %v7843, %v7857
    %v7860 = vmul.f32 %v7844, %v7857
    %v7861 = vmul.f32 %v7845, %v7857
    %7866 = vrot.lane.b32.xlu0 %v7858, 122
    %v7867 = vpop.permute.xlu0 %7866
    %7868 = vrot.lane.b32.xlu0 %v7859, 122
    %v7869 = vpop.permute.xlu0 %7868
    %7870 = vrot.lane.b32.xlu0 %v7860, 122
    %v7871 = vpop.permute.xlu0 %7870
    %7872 = vrot.lane.b32.xlu0 %v7861, 122
    %v7873 = vpop.permute.xlu0 %7872
    %v7878 = vadd.f32 %v7852, %v7867
    %v7879 = vadd.f32 %v7853, %v7869
    %v7880 = vadd.f32 %v7854, %v7871
    %v7881 = vadd.f32 %v7855, %v7873
    %s7882 = sld [smem:[#allocation7 + $0x71]]
    %v7883 = vstv %s7882
    %v7884 = vmul.f32 %v7842, %v7883
    %v7885 = vmul.f32 %v7843, %v7883
    %v7886 = vmul.f32 %v7844, %v7883
    %v7887 = vmul.f32 %v7845, %v7883
    %7892 = vrot.lane.b32.xlu0 %v7884, 116
    %v7893 = vpop.permute.xlu0 %7892
    %7894 = vrot.lane.b32.xlu0 %v7885, 116
    %v7895 = vpop.permute.xlu0 %7894
    %7896 = vrot.lane.b32.xlu0 %v7886, 116
    %v7897 = vpop.permute.xlu0 %7896
    %7898 = vrot.lane.b32.xlu0 %v7887, 116
    %v7899 = vpop.permute.xlu0 %7898
    %v7904 = vadd.f32 %v7878, %v7893
    %v7905 = vadd.f32 %v7879, %v7895
    %v7906 = vadd.f32 %v7880, %v7897
    %v7907 = vadd.f32 %v7881, %v7899
    %v7908 = vld [vmem:[#allocation2 + $0xc] sm:$0xff]
    %v7909 = vld [vmem:[#allocation2 + $0x14] sm:$0xff]
    %v7910 = vld [vmem:[#allocation2 + $0x8c] sm:$0xff]
    %v7911 = vld [vmem:[#allocation2 + $0x94] sm:$0xff]
    %s7912 = sld [smem:[#allocation7 + $0x72]]
    %v7913 = vstv %s7912
    %v7914 = vmul.f32 %v7908, %v7913
    %v7915 = vmul.f32 %v7909, %v7913
    %v7916 = vmul.f32 %v7910, %v7913
    %v7917 = vmul.f32 %v7911, %v7913
    %v7918 = vadd.f32 %v7904, %v7914
    %v7919 = vadd.f32 %v7905, %v7915
    %v7920 = vadd.f32 %v7906, %v7916
    %v7921 = vadd.f32 %v7907, %v7917
    %s7922 = sld [smem:[#allocation7 + $0x73]]
    %v7923 = vstv %s7922
    %v7924 = vmul.f32 %v7908, %v7923
    %v7925 = vmul.f32 %v7909, %v7923
    %v7926 = vmul.f32 %v7910, %v7923
    %v7927 = vmul.f32 %v7911, %v7923
    %7932 = vrot.lane.b32.xlu0 %v7924, 122
    %v7933 = vpop.permute.xlu0 %7932
    %7934 = vrot.lane.b32.xlu0 %v7925, 122
    %v7935 = vpop.permute.xlu0 %7934
    %7936 = vrot.lane.b32.xlu0 %v7926, 122
    %v7937 = vpop.permute.xlu0 %7936
    %7938 = vrot.lane.b32.xlu0 %v7927, 122
    %v7939 = vpop.permute.xlu0 %7938
    %v7944 = vadd.f32 %v7918, %v7933
    %v7945 = vadd.f32 %v7919, %v7935
    %v7946 = vadd.f32 %v7920, %v7937
    %v7947 = vadd.f32 %v7921, %v7939
    %s7948 = sld [smem:[#allocation7 + $0x74]]
    %v7949 = vstv %s7948
    %v7950 = vmul.f32 %v7908, %v7949
    %v7951 = vmul.f32 %v7909, %v7949
    %v7952 = vmul.f32 %v7910, %v7949
    %v7953 = vmul.f32 %v7911, %v7949
    %7958 = vrot.lane.b32.xlu0 %v7950, 116
    %v7959 = vpop.permute.xlu0 %7958
    %7960 = vrot.lane.b32.xlu0 %v7951, 116
    %v7961 = vpop.permute.xlu0 %7960
    %7962 = vrot.lane.b32.xlu0 %v7952, 116
    %v7963 = vpop.permute.xlu0 %7962
    %7964 = vrot.lane.b32.xlu0 %v7953, 116
    %v7965 = vpop.permute.xlu0 %7964
    %v7970 = vadd.f32 %v7944, %v7959
    %v7971 = vadd.f32 %v7945, %v7961
    %v7972 = vadd.f32 %v7946, %v7963
    %v7973 = vadd.f32 %v7947, %v7965
    %v7974 = vcombine.high %v7970, 0.0
    %v7976 = vunpack.c.l.s4 1983009808
    %v7977 = vunpack.c.0.s8 %v7976
    %v7978 = vlaneseq
    %v7979 = vshrl.u32 %v7978, 7
    %v7980 = vsub.s32 %v7977, %v7979
    %v7981 = vrot.slane %v7970, %v7980
    %v7983 = vunpack.c.l.s4 1983009808
    %v7984 = vunpack.c.0.s8 %v7983
    %v7985 = vlaneseq
    %v7986 = vshrl.u32 %v7985, 7
    %v7987 = vsub.s32 %v7984, %v7986
    %v7988 = vrot.slane %v7974, %v7987
    %v7989 = vcombine.high %v7981, 0.0
    %v7991 = vunpack.c.l.s4 1934713408
    %v7992 = vunpack.c.0.s8 %v7991
    %v7993 = vlaneseq
    %v7994 = vshrl.u32 %v7993, 7
    %v7995 = vsub.s32 %v7992, %v7994
    %v7996 = vrot.slane %v7981, %v7995
    %v7998 = vunpack.c.l.s4 1934713408
    %v7999 = vunpack.c.0.s8 %v7998
    %v8000 = vlaneseq
    %v8001 = vshrl.u32 %v8000, 7
    %v8002 = vsub.s32 %v7999, %v8001
    %v8003 = vrot.slane %v7989, %v8002
    %v8004 = vcombine.high %v7988, 0.0
    %v8006 = vunpack.c.l.s4 1934713408
    %v8007 = vunpack.c.0.s8 %v8006
    %v8008 = vlaneseq
    %v8009 = vshrl.u32 %v8008, 7
    %v8010 = vsub.s32 %v8007, %v8009
    %v8011 = vrot.slane %v7988, %v8010
    %v8013 = vunpack.c.l.s4 1934713408
    %v8014 = vunpack.c.0.s8 %v8013
    %v8015 = vlaneseq
    %v8016 = vshrl.u32 %v8015, 7
    %v8017 = vsub.s32 %v8014, %v8016
    %v8018 = vrot.slane %v8004, %v8017
    %v8019 = vcombine.high %v7996, 0.0
    %v8020 = vcombine.high %v8003, 0.0
    %v8021 = vcombine.high %v8011, 0.0
    %v8022 = vcombine.high %v8018, 0.0
    %v8023 = vcombine.high %v7971, 0.0
    %v8025 = vunpack.c.l.s4 1983009808
    %v8026 = vunpack.c.0.s8 %v8025
    %v8027 = vlaneseq
    %v8028 = vshrl.u32 %v8027, 7
    %v8029 = vsub.s32 %v8026, %v8028
    %v8030 = vrot.slane %v7971, %v8029
    %v8032 = vunpack.c.l.s4 1983009808
    %v8033 = vunpack.c.0.s8 %v8032
    %v8034 = vlaneseq
    %v8035 = vshrl.u32 %v8034, 7
    %v8036 = vsub.s32 %v8033, %v8035
    %v8037 = vrot.slane %v8023, %v8036
    %v8038 = vcombine.high %v8030, 0.0
    %v8040 = vunpack.c.l.s4 1934713408
    %v8041 = vunpack.c.0.s8 %v8040
    %v8042 = vlaneseq
    %v8043 = vshrl.u32 %v8042, 7
    %v8044 = vsub.s32 %v8041, %v8043
    %v8045 = vrot.slane %v8030, %v8044
    %v8047 = vunpack.c.l.s4 1934713408
    %v8048 = vunpack.c.0.s8 %v8047
    %v8049 = vlaneseq
    %v8050 = vshrl.u32 %v8049, 7
    %v8051 = vsub.s32 %v8048, %v8050
    %v8052 = vrot.slane %v8038, %v8051
    %v8053 = vcombine.high %v8037, 0.0
    %v8055 = vunpack.c.l.s4 1934713408
    %v8056 = vunpack.c.0.s8 %v8055
    %v8057 = vlaneseq
    %v8058 = vshrl.u32 %v8057, 7
    %v8059 = vsub.s32 %v8056, %v8058
    %v8060 = vrot.slane %v8037, %v8059
    %v8062 = vunpack.c.l.s4 1934713408
    %v8063 = vunpack.c.0.s8 %v8062
    %v8064 = vlaneseq
    %v8065 = vshrl.u32 %v8064, 7
    %v8066 = vsub.s32 %v8063, %v8065
    %v8067 = vrot.slane %v8053, %v8066
    %v8068 = vcombine.high %v8045, 0.0
    %v8069 = vcombine.high %v8052, 0.0
    %v8070 = vcombine.high %v8060, 0.0
    %v8071 = vcombine.high %v8067, 0.0
    %v8072 = vcombine.high %v7972, 0.0
    %v8074 = vunpack.c.l.s4 1983009808
    %v8075 = vunpack.c.0.s8 %v8074
    %v8076 = vlaneseq
    %v8077 = vshrl.u32 %v8076, 7
    %v8078 = vsub.s32 %v8075, %v8077
    %v8079 = vrot.slane %v7972, %v8078
    %v8081 = vunpack.c.l.s4 1983009808
    %v8082 = vunpack.c.0.s8 %v8081
    %v8083 = vlaneseq
    %v8084 = vshrl.u32 %v8083, 7
    %v8085 = vsub.s32 %v8082, %v8084
    %v8086 = vrot.slane %v8072, %v8085
    %v8087 = vcombine.high %v8079, 0.0
    %v8089 = vunpack.c.l.s4 1934713408
    %v8090 = vunpack.c.0.s8 %v8089
    %v8091 = vlaneseq
    %v8092 = vshrl.u32 %v8091, 7
    %v8093 = vsub.s32 %v8090, %v8092
    %v8094 = vrot.slane %v8079, %v8093
    %v8096 = vunpack.c.l.s4 1934713408
    %v8097 = vunpack.c.0.s8 %v8096
    %v8098 = vlaneseq
    %v8099 = vshrl.u32 %v8098, 7
    %v8100 = vsub.s32 %v8097, %v8099
    %v8101 = vrot.slane %v8087, %v8100
    %v8102 = vcombine.high %v8086, 0.0
    %v8104 = vunpack.c.l.s4 1934713408
    %v8105 = vunpack.c.0.s8 %v8104
    %v8106 = vlaneseq
    %v8107 = vshrl.u32 %v8106, 7
    %v8108 = vsub.s32 %v8105, %v8107
    %v8109 = vrot.slane %v8086, %v8108
    %v8111 = vunpack.c.l.s4 1934713408
    %v8112 = vunpack.c.0.s8 %v8111
    %v8113 = vlaneseq
    %v8114 = vshrl.u32 %v8113, 7
    %v8115 = vsub.s32 %v8112, %v8114
    %v8116 = vrot.slane %v8102, %v8115
    %v8117 = vcombine.high %v8094, 0.0
    %v8118 = vcombine.high %v8101, 0.0
    %v8119 = vcombine.high %v8109, 0.0
    %v8120 = vcombine.high %v8116, 0.0
    %v8121 = vcombine.high %v7973, 0.0
    %v8123 = vunpack.c.l.s4 1983009808
    %v8124 = vunpack.c.0.s8 %v8123
    %v8125 = vlaneseq
    %v8126 = vshrl.u32 %v8125, 7
    %v8127 = vsub.s32 %v8124, %v8126
    %v8128 = vrot.slane %v7973, %v8127
    %v8130 = vunpack.c.l.s4 1983009808
    %v8131 = vunpack.c.0.s8 %v8130
    %v8132 = vlaneseq
    %v8133 = vshrl.u32 %v8132, 7
    %v8134 = vsub.s32 %v8131, %v8133
    %v8135 = vrot.slane %v8121, %v8134
    %v8136 = vcombine.high %v8128, 0.0
    %v8138 = vunpack.c.l.s4 1934713408
    %v8139 = vunpack.c.0.s8 %v8138
    %v8140 = vlaneseq
    %v8141 = vshrl.u32 %v8140, 7
    %v8142 = vsub.s32 %v8139, %v8141
    %v8143 = vrot.slane %v8128, %v8142
    %v8145 = vunpack.c.l.s4 1934713408
    %v8146 = vunpack.c.0.s8 %v8145
    %v8147 = vlaneseq
    %v8148 = vshrl.u32 %v8147, 7
    %v8149 = vsub.s32 %v8146, %v8148
    %v8150 = vrot.slane %v8136, %v8149
    %v8151 = vcombine.high %v8135, 0.0
    %v8153 = vunpack.c.l.s4 1934713408
    %v8154 = vunpack.c.0.s8 %v8153
    %v8155 = vlaneseq
    %v8156 = vshrl.u32 %v8155, 7
    %v8157 = vsub.s32 %v8154, %v8156
    %v8158 = vrot.slane %v8135, %v8157
    %v8160 = vunpack.c.l.s4 1934713408
    %v8161 = vunpack.c.0.s8 %v8160
    %v8162 = vlaneseq
    %v8163 = vshrl.u32 %v8162, 7
    %v8164 = vsub.s32 %v8161, %v8163
    %v8165 = vrot.slane %v8151, %v8164
    %v8166 = vcombine.high %v8143, 0.0
    %v8167 = vcombine.high %v8150, 0.0
    %v8168 = vcombine.high %v8158, 0.0
    %v8169 = vcombine.high %v8165, 0.0
    %8172 = vrot.lane.b32.xlu0 %v8019, 16
    %v8173 = vpop.permute.xlu0 %8172
    %8174 = vrot.lane.b32.xlu0 %v8117, 16
    %v8175 = vpop.permute.xlu0 %8174
    %8180 = vrot.lane.b32.xlu0 %v8003, 32
    %v8181 = vpop.permute.xlu0 %8180
    %8182 = vrot.lane.b32.xlu0 %v8101, 32
    %v8183 = vpop.permute.xlu0 %8182
    %8188 = vrot.lane.b32.xlu0 %v8020, 48
    %v8189 = vpop.permute.xlu0 %8188
    %8190 = vrot.lane.b32.xlu0 %v8118, 48
    %v8191 = vpop.permute.xlu0 %8190
    %8196 = vrot.lane.b32.xlu0 %v8011, 64
    %v8197 = vpop.permute.xlu0 %8196
    %8198 = vrot.lane.b32.xlu0 %v8109, 64
    %v8199 = vpop.permute.xlu0 %8198
    %8204 = vrot.lane.b32.xlu0 %v8021, 80
    %v8205 = vpop.permute.xlu0 %8204
    %8206 = vrot.lane.b32.xlu0 %v8119, 80
    %v8207 = vpop.permute.xlu0 %8206
    %8212 = vrot.lane.b32.xlu0 %v8018, 96
    %v8213 = vpop.permute.xlu0 %8212
    %8214 = vrot.lane.b32.xlu0 %v8116, 96
    %v8215 = vpop.permute.xlu0 %8214
    %8220 = vrot.lane.b32.xlu0 %v8022, 112
    %v8221 = vpop.permute.xlu0 %8220
    %8222 = vrot.lane.b32.xlu0 %v8120, 112
    %v8223 = vpop.permute.xlu0 %8222
    %8228 = vrot.lane.b32.xlu0 %v8068, 16
    %v8229 = vpop.permute.xlu0 %8228
    %8230 = vrot.lane.b32.xlu0 %v8166, 16
    %v8231 = vpop.permute.xlu0 %8230
    %8236 = vrot.lane.b32.xlu0 %v8052, 32
    %v8237 = vpop.permute.xlu0 %8236
    %8238 = vrot.lane.b32.xlu0 %v8150, 32
    %v8239 = vpop.permute.xlu0 %8238
    %8244 = vrot.lane.b32.xlu0 %v8069, 48
    %v8245 = vpop.permute.xlu0 %8244
    %8246 = vrot.lane.b32.xlu0 %v8167, 48
    %v8247 = vpop.permute.xlu0 %8246
    %8252 = vrot.lane.b32.xlu0 %v8060, 64
    %v8253 = vpop.permute.xlu0 %8252
    %8254 = vrot.lane.b32.xlu0 %v8158, 64
    %v8255 = vpop.permute.xlu0 %8254
    %8260 = vrot.lane.b32.xlu0 %v8070, 80
    %v8261 = vpop.permute.xlu0 %8260
    %8262 = vrot.lane.b32.xlu0 %v8168, 80
    %v8263 = vpop.permute.xlu0 %8262
    %8268 = vrot.lane.b32.xlu0 %v8067, 96
    %v8269 = vpop.permute.xlu0 %8268
    %8270 = vrot.lane.b32.xlu0 %v8165, 96
    %v8271 = vpop.permute.xlu0 %8270
    %8276 = vrot.lane.b32.xlu0 %v8071, 112
    %v8277 = vpop.permute.xlu0 %8276
    %8278 = vrot.lane.b32.xlu0 %v8169, 112
    %v8279 = vpop.permute.xlu0 %8278
    %v8282 = vsel %vm1229, %v7996, %v8173
    %v8283 = vsel %vm1229, %v8094, %v8175
    %v8284 = vsel %vm1232, %v8282, %v8181
    %v8285 = vsel %vm1232, %v8283, %v8183
    %v8286 = vsel %vm1235, %v8284, %v8189
    %v8287 = vsel %vm1235, %v8285, %v8191
    %v8288 = vsel %vm1238, %v8286, %v8197
    %v8289 = vsel %vm1238, %v8287, %v8199
    %v8290 = vsel %vm1241, %v8288, %v8205
    %v8291 = vsel %vm1241, %v8289, %v8207
    %v8292 = vsel %vm1244, %v8290, %v8213
    %v8293 = vsel %vm1244, %v8291, %v8215
    %v8294 = vsel %vm1247, %v8292, %v8221
    %v8295 = vsel %vm1247, %v8293, %v8223
    %v8296 = vsel %vm1229, %v8045, %v8229
    %v8297 = vsel %vm1229, %v8143, %v8231
    %v8298 = vsel %vm1232, %v8296, %v8237
    %v8299 = vsel %vm1232, %v8297, %v8239
    %v8300 = vsel %vm1235, %v8298, %v8245
    %v8301 = vsel %vm1235, %v8299, %v8247
    %v8302 = vsel %vm1238, %v8300, %v8253
    %v8303 = vsel %vm1238, %v8301, %v8255
    %v8304 = vsel %vm1241, %v8302, %v8261
    %v8305 = vsel %vm1241, %v8303, %v8263
    %v8306 = vsel %vm1244, %v8304, %v8269
    %v8307 = vsel %vm1244, %v8305, %v8271
    %v8308 = vsel %vm1247, %v8306, %v8277
    %v8309 = vsel %vm1247, %v8307, %v8279
    %v8314 = vcombine.low %v8294, %v8308
    %v8316 = vunpack.c.l.s4 1966171168
    %v8317 = vunpack.c.0.s8 %v8316
    %v8318 = vlaneseq
    %v8319 = vshrl.u32 %v8318, 7
    %v8320 = vsub.s32 %v8317, %v8319
    %v8321 = vrot.slane %v8314, %v8320
    %v8323 = vunpack.c.l.s4 1966171168
    %v8324 = vunpack.c.0.s8 %v8323
    %v8325 = vlaneseq
    %v8326 = vshrl.u32 %v8325, 7
    %v8327 = vsub.s32 %v8324, %v8326
    %v8328 = vrot.slane %v8321, %v8327
    %v8329 = vcombine.low %v8295, %v8309
    %v8331 = vunpack.c.l.s4 1966171168
    %v8332 = vunpack.c.0.s8 %v8331
    %v8333 = vlaneseq
    %v8334 = vshrl.u32 %v8333, 7
    %v8335 = vsub.s32 %v8332, %v8334
    %v8336 = vrot.slane %v8329, %v8335
    %v8338 = vunpack.c.l.s4 1966171168
    %v8339 = vunpack.c.0.s8 %v8338
    %v8340 = vlaneseq
    %v8341 = vshrl.u32 %v8340, 7
    %v8342 = vsub.s32 %v8339, %v8341
    %v8343 = vrot.slane %v8336, %v8342
    %s8346 = scalar_lea.vmem [#allocation8], 20
    %8347 = vst.msk [vmem:[%s8346] ss:$8 sm:$0x3] %vm1303, %v8328
    %8348 = vst.msk [vmem:[%s8346] ss:$8 sm:$0x0] %vm1303, %v8328
    %s8349 = scalar_lea.vmem [#allocation8], 52
    %8350 = vst.msk [vmem:[%s8349] ss:$8 sm:$0x3] %vm1303, %v8343
    %8351 = vst.msk [vmem:[%s8349] ss:$8 sm:$0x0] %vm1303, %v8343
    %v8352 = vld [vmem:[%s1309] sm:$0xff]
    %v8353 = vld [vmem:[%s1309 + $0x8] sm:$0xff]
    %v8354 = vld [vmem:[%s1309 + $0x80] sm:$0xff]
    %v8355 = vld [vmem:[%s1309 + $0x88] sm:$0xff]
    %s8356 = sld [smem:[#allocation7 + $0x75]]
    %v8357 = vstv %s8356
    %v8358 = vmul.f32 %v8352, %v8357
    %v8359 = vmul.f32 %v8353, %v8357
    %v8360 = vmul.f32 %v8354, %v8357
    %v8361 = vmul.f32 %v8355, %v8357
    %s8362 = sld [smem:[#allocation7 + $0x76]]
    %v8363 = vstv %s8362
    %v8364 = vmul.f32 %v8352, %v8363
    %v8365 = vmul.f32 %v8353, %v8363
    %v8366 = vmul.f32 %v8354, %v8363
    %v8367 = vmul.f32 %v8355, %v8363
    %8372 = vrot.lane.b32.xlu0 %v8364, 122
    %v8373 = vpop.permute.xlu0 %8372
    %8374 = vrot.lane.b32.xlu0 %v8365, 122
    %v8375 = vpop.permute.xlu0 %8374
    %8376 = vrot.lane.b32.xlu0 %v8366, 122
    %v8377 = vpop.permute.xlu0 %8376
    %8378 = vrot.lane.b32.xlu0 %v8367, 122
    %v8379 = vpop.permute.xlu0 %8378
    %v8384 = vadd.f32 %v8358, %v8373
    %v8385 = vadd.f32 %v8359, %v8375
    %v8386 = vadd.f32 %v8360, %v8377
    %v8387 = vadd.f32 %v8361, %v8379
    %s8388 = sld [smem:[#allocation7 + $0x77]]
    %v8389 = vstv %s8388
    %v8390 = vmul.f32 %v8352, %v8389
    %v8391 = vmul.f32 %v8353, %v8389
    %v8392 = vmul.f32 %v8354, %v8389
    %v8393 = vmul.f32 %v8355, %v8389
    %8398 = vrot.lane.b32.xlu0 %v8390, 116
    %v8399 = vpop.permute.xlu0 %8398
    %8400 = vrot.lane.b32.xlu0 %v8391, 116
    %v8401 = vpop.permute.xlu0 %8400
    %8402 = vrot.lane.b32.xlu0 %v8392, 116
    %v8403 = vpop.permute.xlu0 %8402
    %8404 = vrot.lane.b32.xlu0 %v8393, 116
    %v8405 = vpop.permute.xlu0 %8404
    %v8410 = vadd.f32 %v8384, %v8399
    %v8411 = vadd.f32 %v8385, %v8401
    %v8412 = vadd.f32 %v8386, %v8403
    %v8413 = vadd.f32 %v8387, %v8405
    %v8414 = vld [vmem:[%s1309 + $0x6] sm:$0xff]
    %v8415 = vld [vmem:[%s1309 + $0xe] sm:$0xff]
    %v8416 = vld [vmem:[%s1309 + $0x86] sm:$0xff]
    %v8417 = vld [vmem:[%s1309 + $0x8e] sm:$0xff]
    %s8418 = sld [smem:[#allocation7 + $0x78]]
    %v8419 = vstv %s8418
    %v8420 = vmul.f32 %v8414, %v8419
    %v8421 = vmul.f32 %v8415, %v8419
    %v8422 = vmul.f32 %v8416, %v8419
    %v8423 = vmul.f32 %v8417, %v8419
    %v8424 = vadd.f32 %v8410, %v8420
    %v8425 = vadd.f32 %v8411, %v8421
    %v8426 = vadd.f32 %v8412, %v8422
    %v8427 = vadd.f32 %v8413, %v8423
    %s8428 = sld [smem:[#allocation7 + $0x79]]
    %v8429 = vstv %s8428
    %v8430 = vmul.f32 %v8414, %v8429
    %v8431 = vmul.f32 %v8415, %v8429
    %v8432 = vmul.f32 %v8416, %v8429
    %v8433 = vmul.f32 %v8417, %v8429
    %8438 = vrot.lane.b32.xlu0 %v8430, 122
    %v8439 = vpop.permute.xlu0 %8438
    %8440 = vrot.lane.b32.xlu0 %v8431, 122
    %v8441 = vpop.permute.xlu0 %8440
    %8442 = vrot.lane.b32.xlu0 %v8432, 122
    %v8443 = vpop.permute.xlu0 %8442
    %8444 = vrot.lane.b32.xlu0 %v8433, 122
    %v8445 = vpop.permute.xlu0 %8444
    %v8450 = vadd.f32 %v8424, %v8439
    %v8451 = vadd.f32 %v8425, %v8441
    %v8452 = vadd.f32 %v8426, %v8443
    %v8453 = vadd.f32 %v8427, %v8445
    %s8454 = sld [smem:[#allocation7 + $0x7a]]
    %v8455 = vstv %s8454
    %v8456 = vmul.f32 %v8414, %v8455
    %v8457 = vmul.f32 %v8415, %v8455
    %v8458 = vmul.f32 %v8416, %v8455
    %v8459 = vmul.f32 %v8417, %v8455
    %8464 = vrot.lane.b32.xlu0 %v8456, 116
    %v8465 = vpop.permute.xlu0 %8464
    %8466 = vrot.lane.b32.xlu0 %v8457, 116
    %v8467 = vpop.permute.xlu0 %8466
    %8468 = vrot.lane.b32.xlu0 %v8458, 116
    %v8469 = vpop.permute.xlu0 %8468
    %8470 = vrot.lane.b32.xlu0 %v8459, 116
    %v8471 = vpop.permute.xlu0 %8470
    %v8476 = vadd.f32 %v8450, %v8465
    %v8477 = vadd.f32 %v8451, %v8467
    %v8478 = vadd.f32 %v8452, %v8469
    %v8479 = vadd.f32 %v8453, %v8471
    %v8480 = vld [vmem:[%s1309 + $0xc] sm:$0xff]
    %v8481 = vld [vmem:[%s1309 + $0x14] sm:$0xff]
    %v8482 = vld [vmem:[%s1309 + $0x8c] sm:$0xff]
    %v8483 = vld [vmem:[%s1309 + $0x94] sm:$0xff]
    %s8484 = sld [smem:[#allocation7 + $0x7b]]
    %v8485 = vstv %s8484
    %v8486 = vmul.f32 %v8480, %v8485
    %v8487 = vmul.f32 %v8481, %v8485
    %v8488 = vmul.f32 %v8482, %v8485
    %v8489 = vmul.f32 %v8483, %v8485
    %v8490 = vadd.f32 %v8476, %v8486
    %v8491 = vadd.f32 %v8477, %v8487
    %v8492 = vadd.f32 %v8478, %v8488
    %v8493 = vadd.f32 %v8479, %v8489
    %s8494 = sld [smem:[#allocation7 + $0x7c]]
    %v8495 = vstv %s8494
    %v8496 = vmul.f32 %v8480, %v8495
    %v8497 = vmul.f32 %v8481, %v8495
    %v8498 = vmul.f32 %v8482, %v8495
    %v8499 = vmul.f32 %v8483, %v8495
    %8504 = vrot.lane.b32.xlu0 %v8496, 122
    %v8505 = vpop.permute.xlu0 %8504
    %8506 = vrot.lane.b32.xlu0 %v8497, 122
    %v8507 = vpop.permute.xlu0 %8506
    %8508 = vrot.lane.b32.xlu0 %v8498, 122
    %v8509 = vpop.permute.xlu0 %8508
    %8510 = vrot.lane.b32.xlu0 %v8499, 122
    %v8511 = vpop.permute.xlu0 %8510
    %v8516 = vadd.f32 %v8490, %v8505
    %v8517 = vadd.f32 %v8491, %v8507
    %v8518 = vadd.f32 %v8492, %v8509
    %v8519 = vadd.f32 %v8493, %v8511
    %s8520 = sld [smem:[#allocation7 + $0x7d]]
    %v8521 = vstv %s8520
    %v8522 = vmul.f32 %v8480, %v8521
    %v8523 = vmul.f32 %v8481, %v8521
    %v8524 = vmul.f32 %v8482, %v8521
    %v8525 = vmul.f32 %v8483, %v8521
    %8530 = vrot.lane.b32.xlu0 %v8522, 116
    %v8531 = vpop.permute.xlu0 %8530
    %8532 = vrot.lane.b32.xlu0 %v8523, 116
    %v8533 = vpop.permute.xlu0 %8532
    %8534 = vrot.lane.b32.xlu0 %v8524, 116
    %v8535 = vpop.permute.xlu0 %8534
    %8536 = vrot.lane.b32.xlu0 %v8525, 116
    %v8537 = vpop.permute.xlu0 %8536
    %v8542 = vadd.f32 %v8516, %v8531
    %v8543 = vadd.f32 %v8517, %v8533
    %v8544 = vadd.f32 %v8518, %v8535
    %v8545 = vadd.f32 %v8519, %v8537
    %v8546 = vcombine.high %v8542, 0.0
    %v8548 = vunpack.c.l.s4 1983009808
    %v8549 = vunpack.c.0.s8 %v8548
    %v8550 = vlaneseq
    %v8551 = vshrl.u32 %v8550, 7
    %v8552 = vsub.s32 %v8549, %v8551
    %v8553 = vrot.slane %v8542, %v8552
    %v8555 = vunpack.c.l.s4 1983009808
    %v8556 = vunpack.c.0.s8 %v8555
    %v8557 = vlaneseq
    %v8558 = vshrl.u32 %v8557, 7
    %v8559 = vsub.s32 %v8556, %v8558
    %v8560 = vrot.slane %v8546, %v8559
    %v8561 = vcombine.high %v8553, 0.0
    %v8563 = vunpack.c.l.s4 1934713408
    %v8564 = vunpack.c.0.s8 %v8563
    %v8565 = vlaneseq
    %v8566 = vshrl.u32 %v8565, 7
    %v8567 = vsub.s32 %v8564, %v8566
    %v8568 = vrot.slane %v8553, %v8567
    %v8570 = vunpack.c.l.s4 1934713408
    %v8571 = vunpack.c.0.s8 %v8570
    %v8572 = vlaneseq
    %v8573 = vshrl.u32 %v8572, 7
    %v8574 = vsub.s32 %v8571, %v8573
    %v8575 = vrot.slane %v8561, %v8574
    %v8576 = vcombine.high %v8560, 0.0
    %v8578 = vunpack.c.l.s4 1934713408
    %v8579 = vunpack.c.0.s8 %v8578
    %v8580 = vlaneseq
    %v8581 = vshrl.u32 %v8580, 7
    %v8582 = vsub.s32 %v8579, %v8581
    %v8583 = vrot.slane %v8560, %v8582
    %v8585 = vunpack.c.l.s4 1934713408
    %v8586 = vunpack.c.0.s8 %v8585
    %v8587 = vlaneseq
    %v8588 = vshrl.u32 %v8587, 7
    %v8589 = vsub.s32 %v8586, %v8588
    %v8590 = vrot.slane %v8576, %v8589
    %v8591 = vcombine.high %v8568, 0.0
    %v8592 = vcombine.high %v8575, 0.0
    %v8593 = vcombine.high %v8583, 0.0
    %v8594 = vcombine.high %v8590, 0.0
    %v8595 = vcombine.high %v8543, 0.0
    %v8597 = vunpack.c.l.s4 1983009808
    %v8598 = vunpack.c.0.s8 %v8597
    %v8599 = vlaneseq
    %v8600 = vshrl.u32 %v8599, 7
    %v8601 = vsub.s32 %v8598, %v8600
    %v8602 = vrot.slane %v8543, %v8601
    %v8604 = vunpack.c.l.s4 1983009808
    %v8605 = vunpack.c.0.s8 %v8604
    %v8606 = vlaneseq
    %v8607 = vshrl.u32 %v8606, 7
    %v8608 = vsub.s32 %v8605, %v8607
    %v8609 = vrot.slane %v8595, %v8608
    %v8610 = vcombine.high %v8602, 0.0
    %v8612 = vunpack.c.l.s4 1934713408
    %v8613 = vunpack.c.0.s8 %v8612
    %v8614 = vlaneseq
    %v8615 = vshrl.u32 %v8614, 7
    %v8616 = vsub.s32 %v8613, %v8615
    %v8617 = vrot.slane %v8602, %v8616
    %v8619 = vunpack.c.l.s4 1934713408
    %v8620 = vunpack.c.0.s8 %v8619
    %v8621 = vlaneseq
    %v8622 = vshrl.u32 %v8621, 7
    %v8623 = vsub.s32 %v8620, %v8622
    %v8624 = vrot.slane %v8610, %v8623
    %v8625 = vcombine.high %v8609, 0.0
    %v8627 = vunpack.c.l.s4 1934713408
    %v8628 = vunpack.c.0.s8 %v8627
    %v8629 = vlaneseq
    %v8630 = vshrl.u32 %v8629, 7
    %v8631 = vsub.s32 %v8628, %v8630
    %v8632 = vrot.slane %v8609, %v8631
    %v8634 = vunpack.c.l.s4 1934713408
    %v8635 = vunpack.c.0.s8 %v8634
    %v8636 = vlaneseq
    %v8637 = vshrl.u32 %v8636, 7
    %v8638 = vsub.s32 %v8635, %v8637
    %v8639 = vrot.slane %v8625, %v8638
    %v8640 = vcombine.high %v8617, 0.0
    %v8641 = vcombine.high %v8624, 0.0
    %v8642 = vcombine.high %v8632, 0.0
    %v8643 = vcombine.high %v8639, 0.0
    %v8644 = vcombine.high %v8544, 0.0
    %v8646 = vunpack.c.l.s4 1983009808
    %v8647 = vunpack.c.0.s8 %v8646
    %v8648 = vlaneseq
    %v8649 = vshrl.u32 %v8648, 7
    %v8650 = vsub.s32 %v8647, %v8649
    %v8651 = vrot.slane %v8544, %v8650
    %v8653 = vunpack.c.l.s4 1983009808
    %v8654 = vunpack.c.0.s8 %v8653
    %v8655 = vlaneseq
    %v8656 = vshrl.u32 %v8655, 7
    %v8657 = vsub.s32 %v8654, %v8656
    %v8658 = vrot.slane %v8644, %v8657
    %v8659 = vcombine.high %v8651, 0.0
    %v8661 = vunpack.c.l.s4 1934713408
    %v8662 = vunpack.c.0.s8 %v8661
    %v8663 = vlaneseq
    %v8664 = vshrl.u32 %v8663, 7
    %v8665 = vsub.s32 %v8662, %v8664
    %v8666 = vrot.slane %v8651, %v8665
    %v8668 = vunpack.c.l.s4 1934713408
    %v8669 = vunpack.c.0.s8 %v8668
    %v8670 = vlaneseq
    %v8671 = vshrl.u32 %v8670, 7
    %v8672 = vsub.s32 %v8669, %v8671
    %v8673 = vrot.slane %v8659, %v8672
    %v8674 = vcombine.high %v8658, 0.0
    %v8676 = vunpack.c.l.s4 1934713408
    %v8677 = vunpack.c.0.s8 %v8676
    %v8678 = vlaneseq
    %v8679 = vshrl.u32 %v8678, 7
    %v8680 = vsub.s32 %v8677, %v8679
    %v8681 = vrot.slane %v8658, %v8680
    %v8683 = vunpack.c.l.s4 1934713408
    %v8684 = vunpack.c.0.s8 %v8683
    %v8685 = vlaneseq
    %v8686 = vshrl.u32 %v8685, 7
    %v8687 = vsub.s32 %v8684, %v8686
    %v8688 = vrot.slane %v8674, %v8687
    %v8689 = vcombine.high %v8666, 0.0
    %v8690 = vcombine.high %v8673, 0.0
    %v8691 = vcombine.high %v8681, 0.0
    %v8692 = vcombine.high %v8688, 0.0
    %v8693 = vcombine.high %v8545, 0.0
    %v8695 = vunpack.c.l.s4 1983009808
    %v8696 = vunpack.c.0.s8 %v8695
    %v8697 = vlaneseq
    %v8698 = vshrl.u32 %v8697, 7
    %v8699 = vsub.s32 %v8696, %v8698
    %v8700 = vrot.slane %v8545, %v8699
    %v8702 = vunpack.c.l.s4 1983009808
    %v8703 = vunpack.c.0.s8 %v8702
    %v8704 = vlaneseq
    %v8705 = vshrl.u32 %v8704, 7
    %v8706 = vsub.s32 %v8703, %v8705
    %v8707 = vrot.slane %v8693, %v8706
    %v8708 = vcombine.high %v8700, 0.0
    %v8710 = vunpack.c.l.s4 1934713408
    %v8711 = vunpack.c.0.s8 %v8710
    %v8712 = vlaneseq
    %v8713 = vshrl.u32 %v8712, 7
    %v8714 = vsub.s32 %v8711, %v8713
    %v8715 = vrot.slane %v8700, %v8714
    %v8717 = vunpack.c.l.s4 1934713408
    %v8718 = vunpack.c.0.s8 %v8717
    %v8719 = vlaneseq
    %v8720 = vshrl.u32 %v8719, 7
    %v8721 = vsub.s32 %v8718, %v8720
    %v8722 = vrot.slane %v8708, %v8721
    %v8723 = vcombine.high %v8707, 0.0
    %v8725 = vunpack.c.l.s4 1934713408
    %v8726 = vunpack.c.0.s8 %v8725
    %v8727 = vlaneseq
    %v8728 = vshrl.u32 %v8727, 7
    %v8729 = vsub.s32 %v8726, %v8728
    %v8730 = vrot.slane %v8707, %v8729
    %v8732 = vunpack.c.l.s4 1934713408
    %v8733 = vunpack.c.0.s8 %v8732
    %v8734 = vlaneseq
    %v8735 = vshrl.u32 %v8734, 7
    %v8736 = vsub.s32 %v8733, %v8735
    %v8737 = vrot.slane %v8723, %v8736
    %v8738 = vcombine.high %v8715, 0.0
    %v8739 = vcombine.high %v8722, 0.0
    %v8740 = vcombine.high %v8730, 0.0
    %v8741 = vcombine.high %v8737, 0.0
    %8744 = vrot.lane.b32.xlu0 %v8591, 16
    %v8745 = vpop.permute.xlu0 %8744
    %8746 = vrot.lane.b32.xlu0 %v8689, 16
    %v8747 = vpop.permute.xlu0 %8746
    %8752 = vrot.lane.b32.xlu0 %v8575, 32
    %v8753 = vpop.permute.xlu0 %8752
    %8754 = vrot.lane.b32.xlu0 %v8673, 32
    %v8755 = vpop.permute.xlu0 %8754
    %8760 = vrot.lane.b32.xlu0 %v8592, 48
    %v8761 = vpop.permute.xlu0 %8760
    %8762 = vrot.lane.b32.xlu0 %v8690, 48
    %v8763 = vpop.permute.xlu0 %8762
    %8768 = vrot.lane.b32.xlu0 %v8583, 64
    %v8769 = vpop.permute.xlu0 %8768
    %8770 = vrot.lane.b32.xlu0 %v8681, 64
    %v8771 = vpop.permute.xlu0 %8770
    %8776 = vrot.lane.b32.xlu0 %v8593, 80
    %v8777 = vpop.permute.xlu0 %8776
    %8778 = vrot.lane.b32.xlu0 %v8691, 80
    %v8779 = vpop.permute.xlu0 %8778
    %8784 = vrot.lane.b32.xlu0 %v8590, 96
    %v8785 = vpop.permute.xlu0 %8784
    %8786 = vrot.lane.b32.xlu0 %v8688, 96
    %v8787 = vpop.permute.xlu0 %8786
    %8792 = vrot.lane.b32.xlu0 %v8594, 112
    %v8793 = vpop.permute.xlu0 %8792
    %8794 = vrot.lane.b32.xlu0 %v8692, 112
    %v8795 = vpop.permute.xlu0 %8794
    %8800 = vrot.lane.b32.xlu0 %v8640, 16
    %v8801 = vpop.permute.xlu0 %8800
    %8802 = vrot.lane.b32.xlu0 %v8738, 16
    %v8803 = vpop.permute.xlu0 %8802
    %8808 = vrot.lane.b32.xlu0 %v8624, 32
    %v8809 = vpop.permute.xlu0 %8808
    %8810 = vrot.lane.b32.xlu0 %v8722, 32
    %v8811 = vpop.permute.xlu0 %8810
    %8816 = vrot.lane.b32.xlu0 %v8641, 48
    %v8817 = vpop.permute.xlu0 %8816
    %8818 = vrot.lane.b32.xlu0 %v8739, 48
    %v8819 = vpop.permute.xlu0 %8818
    %8824 = vrot.lane.b32.xlu0 %v8632, 64
    %v8825 = vpop.permute.xlu0 %8824
    %8826 = vrot.lane.b32.xlu0 %v8730, 64
    %v8827 = vpop.permute.xlu0 %8826
    %8832 = vrot.lane.b32.xlu0 %v8642, 80
    %v8833 = vpop.permute.xlu0 %8832
    %8834 = vrot.lane.b32.xlu0 %v8740, 80
    %v8835 = vpop.permute.xlu0 %8834
    %8840 = vrot.lane.b32.xlu0 %v8639, 96
    %v8841 = vpop.permute.xlu0 %8840
    %8842 = vrot.lane.b32.xlu0 %v8737, 96
    %v8843 = vpop.permute.xlu0 %8842
    %8848 = vrot.lane.b32.xlu0 %v8643, 112
    %v8849 = vpop.permute.xlu0 %8848
    %8850 = vrot.lane.b32.xlu0 %v8741, 112
    %v8851 = vpop.permute.xlu0 %8850
    %v8854 = vsel %vm1229, %v8568, %v8745
    %v8855 = vsel %vm1229, %v8666, %v8747
    %v8856 = vsel %vm1232, %v8854, %v8753
    %v8857 = vsel %vm1232, %v8855, %v8755
    %v8858 = vsel %vm1235, %v8856, %v8761
    %v8859 = vsel %vm1235, %v8857, %v8763
    %v8860 = vsel %vm1238, %v8858, %v8769
    %v8861 = vsel %vm1238, %v8859, %v8771
    %v8862 = vsel %vm1241, %v8860, %v8777
    %v8863 = vsel %vm1241, %v8861, %v8779
    %v8864 = vsel %vm1244, %v8862, %v8785
    %v8865 = vsel %vm1244, %v8863, %v8787
    %v8866 = vsel %vm1247, %v8864, %v8793
    %v8867 = vsel %vm1247, %v8865, %v8795
    %v8868 = vsel %vm1229, %v8617, %v8801
    %v8869 = vsel %vm1229, %v8715, %v8803
    %v8870 = vsel %vm1232, %v8868, %v8809
    %v8871 = vsel %vm1232, %v8869, %v8811
    %v8872 = vsel %vm1235, %v8870, %v8817
    %v8873 = vsel %vm1235, %v8871, %v8819
    %v8874 = vsel %vm1238, %v8872, %v8825
    %v8875 = vsel %vm1238, %v8873, %v8827
    %v8876 = vsel %vm1241, %v8874, %v8833
    %v8877 = vsel %vm1241, %v8875, %v8835
    %v8878 = vsel %vm1244, %v8876, %v8841
    %v8879 = vsel %vm1244, %v8877, %v8843
    %v8880 = vsel %vm1247, %v8878, %v8849
    %v8881 = vsel %vm1247, %v8879, %v8851
    %v8886 = vcombine.low %v8866, %v8880
    %v8888 = vunpack.c.l.s4 1966171168
    %v8889 = vunpack.c.0.s8 %v8888
    %v8890 = vlaneseq
    %v8891 = vshrl.u32 %v8890, 7
    %v8892 = vsub.s32 %v8889, %v8891
    %v8893 = vrot.slane %v8886, %v8892
    %v8895 = vunpack.c.l.s4 1966171168
    %v8896 = vunpack.c.0.s8 %v8895
    %v8897 = vlaneseq
    %v8898 = vshrl.u32 %v8897, 7
    %v8899 = vsub.s32 %v8896, %v8898
    %v8900 = vrot.slane %v8893, %v8899
    %v8901 = vcombine.low %v8867, %v8881
    %v8903 = vunpack.c.l.s4 1966171168
    %v8904 = vunpack.c.0.s8 %v8903
    %v8905 = vlaneseq
    %v8906 = vshrl.u32 %v8905, 7
    %v8907 = vsub.s32 %v8904, %v8906
    %v8908 = vrot.slane %v8901, %v8907
    %v8910 = vunpack.c.l.s4 1966171168
    %v8911 = vunpack.c.0.s8 %v8910
    %v8912 = vlaneseq
    %v8913 = vshrl.u32 %v8912, 7
    %v8914 = vsub.s32 %v8911, %v8913
    %v8915 = vrot.slane %v8908, %v8914
    %s8918 = scalar_lea.vmem [#allocation8], 21
    %8919 = vst.msk [vmem:[%s8918] ss:$8 sm:$0x3] %vm1303, %v8900
    %8920 = vst.msk [vmem:[%s8918] ss:$8 sm:$0x0] %vm1303, %v8900
    %s8921 = scalar_lea.vmem [#allocation8], 53
    %8922 = vst.msk [vmem:[%s8921] ss:$8 sm:$0x3] %vm1303, %v8915
    %8923 = vst.msk [vmem:[%s8921] ss:$8 sm:$0x0] %vm1303, %v8915
    %v8924 = vld [vmem:[%s1898] sm:$0xff]
    %v8925 = vld [vmem:[%s1898 + $0x8] sm:$0xff]
    %v8926 = vld [vmem:[%s1898 + $0x80] sm:$0xff]
    %v8927 = vld [vmem:[%s1898 + $0x88] sm:$0xff]
    %s8928 = sld [smem:[#allocation7 + $0x7e]]
    %v8929 = vstv %s8928
    %v8930 = vmul.f32 %v8924, %v8929
    %v8931 = vmul.f32 %v8925, %v8929
    %v8932 = vmul.f32 %v8926, %v8929
    %v8933 = vmul.f32 %v8927, %v8929
    %s8934 = sld [smem:[#allocation7 + $0x7f]]
    %v8935 = vstv %s8934
    %v8936 = vmul.f32 %v8924, %v8935
    %v8937 = vmul.f32 %v8925, %v8935
    %v8938 = vmul.f32 %v8926, %v8935
    %v8939 = vmul.f32 %v8927, %v8935
    %8944 = vrot.lane.b32.xlu0 %v8936, 122
    %v8945 = vpop.permute.xlu0 %8944
    %8946 = vrot.lane.b32.xlu0 %v8937, 122
    %v8947 = vpop.permute.xlu0 %8946
    %8948 = vrot.lane.b32.xlu0 %v8938, 122
    %v8949 = vpop.permute.xlu0 %8948
    %8950 = vrot.lane.b32.xlu0 %v8939, 122
    %v8951 = vpop.permute.xlu0 %8950
    %v8956 = vadd.f32 %v8930, %v8945
    %v8957 = vadd.f32 %v8931, %v8947
    %v8958 = vadd.f32 %v8932, %v8949
    %v8959 = vadd.f32 %v8933, %v8951
    %s8960 = sld [smem:[#allocation7 + $0x80]]
    %v8961 = vstv %s8960
    %v8962 = vmul.f32 %v8924, %v8961
    %v8963 = vmul.f32 %v8925, %v8961
    %v8964 = vmul.f32 %v8926, %v8961
    %v8965 = vmul.f32 %v8927, %v8961
    %8970 = vrot.lane.b32.xlu0 %v8962, 116
    %v8971 = vpop.permute.xlu0 %8970
    %8972 = vrot.lane.b32.xlu0 %v8963, 116
    %v8973 = vpop.permute.xlu0 %8972
    %8974 = vrot.lane.b32.xlu0 %v8964, 116
    %v8975 = vpop.permute.xlu0 %8974
    %8976 = vrot.lane.b32.xlu0 %v8965, 116
    %v8977 = vpop.permute.xlu0 %8976
    %v8982 = vadd.f32 %v8956, %v8971
    %v8983 = vadd.f32 %v8957, %v8973
    %v8984 = vadd.f32 %v8958, %v8975
    %v8985 = vadd.f32 %v8959, %v8977
    %v8986 = vld [vmem:[%s1898 + $0x6] sm:$0xff]
    %v8987 = vld [vmem:[%s1898 + $0xe] sm:$0xff]
    %v8988 = vld [vmem:[%s1898 + $0x86] sm:$0xff]
    %v8989 = vld [vmem:[%s1898 + $0x8e] sm:$0xff]
    %s8990 = sld [smem:[#allocation7 + $0x81]]
    %v8991 = vstv %s8990
    %v8992 = vmul.f32 %v8986, %v8991
    %v8993 = vmul.f32 %v8987, %v8991
    %v8994 = vmul.f32 %v8988, %v8991
    %v8995 = vmul.f32 %v8989, %v8991
    %v8996 = vadd.f32 %v8982, %v8992
    %v8997 = vadd.f32 %v8983, %v8993
    %v8998 = vadd.f32 %v8984, %v8994
    %v8999 = vadd.f32 %v8985, %v8995
    %s9000 = sld [smem:[#allocation7 + $0x82]]
    %v9001 = vstv %s9000
    %v9002 = vmul.f32 %v8986, %v9001
    %v9003 = vmul.f32 %v8987, %v9001
    %v9004 = vmul.f32 %v8988, %v9001
    %v9005 = vmul.f32 %v8989, %v9001
    %9010 = vrot.lane.b32.xlu0 %v9002, 122
    %v9011 = vpop.permute.xlu0 %9010
    %9012 = vrot.lane.b32.xlu0 %v9003, 122
    %v9013 = vpop.permute.xlu0 %9012
    %9014 = vrot.lane.b32.xlu0 %v9004, 122
    %v9015 = vpop.permute.xlu0 %9014
    %9016 = vrot.lane.b32.xlu0 %v9005, 122
    %v9017 = vpop.permute.xlu0 %9016
    %v9022 = vadd.f32 %v8996, %v9011
    %v9023 = vadd.f32 %v8997, %v9013
    %v9024 = vadd.f32 %v8998, %v9015
    %v9025 = vadd.f32 %v8999, %v9017
    %s9026 = sld [smem:[#allocation7 + $0x83]]
    %v9027 = vstv %s9026
    %v9028 = vmul.f32 %v8986, %v9027
    %v9029 = vmul.f32 %v8987, %v9027
    %v9030 = vmul.f32 %v8988, %v9027
    %v9031 = vmul.f32 %v8989, %v9027
    %9036 = vrot.lane.b32.xlu0 %v9028, 116
    %v9037 = vpop.permute.xlu0 %9036
    %9038 = vrot.lane.b32.xlu0 %v9029, 116
    %v9039 = vpop.permute.xlu0 %9038
    %9040 = vrot.lane.b32.xlu0 %v9030, 116
    %v9041 = vpop.permute.xlu0 %9040
    %9042 = vrot.lane.b32.xlu0 %v9031, 116
    %v9043 = vpop.permute.xlu0 %9042
    %v9048 = vadd.f32 %v9022, %v9037
    %v9049 = vadd.f32 %v9023, %v9039
    %v9050 = vadd.f32 %v9024, %v9041
    %v9051 = vadd.f32 %v9025, %v9043
    %v9052 = vld [vmem:[%s1898 + $0xc] sm:$0xff]
    %v9053 = vld [vmem:[%s1898 + $0x14] sm:$0xff]
    %v9054 = vld [vmem:[%s1898 + $0x8c] sm:$0xff]
    %v9055 = vld [vmem:[%s1898 + $0x94] sm:$0xff]
    %s9056 = sld [smem:[#allocation7 + $0x84]]
    %v9057 = vstv %s9056
    %v9058 = vmul.f32 %v9052, %v9057
    %v9059 = vmul.f32 %v9053, %v9057
    %v9060 = vmul.f32 %v9054, %v9057
    %v9061 = vmul.f32 %v9055, %v9057
    %v9062 = vadd.f32 %v9048, %v9058
    %v9063 = vadd.f32 %v9049, %v9059
    %v9064 = vadd.f32 %v9050, %v9060
    %v9065 = vadd.f32 %v9051, %v9061
    %s9066 = sld [smem:[#allocation7 + $0x85]]
    %v9067 = vstv %s9066
    %v9068 = vmul.f32 %v9052, %v9067
    %v9069 = vmul.f32 %v9053, %v9067
    %v9070 = vmul.f32 %v9054, %v9067
    %v9071 = vmul.f32 %v9055, %v9067
    %9076 = vrot.lane.b32.xlu0 %v9068, 122
    %v9077 = vpop.permute.xlu0 %9076
    %9078 = vrot.lane.b32.xlu0 %v9069, 122
    %v9079 = vpop.permute.xlu0 %9078
    %9080 = vrot.lane.b32.xlu0 %v9070, 122
    %v9081 = vpop.permute.xlu0 %9080
    %9082 = vrot.lane.b32.xlu0 %v9071, 122
    %v9083 = vpop.permute.xlu0 %9082
    %v9088 = vadd.f32 %v9062, %v9077
    %v9089 = vadd.f32 %v9063, %v9079
    %v9090 = vadd.f32 %v9064, %v9081
    %v9091 = vadd.f32 %v9065, %v9083
    %s9092 = sld [smem:[#allocation7 + $0x86]]
    %v9093 = vstv %s9092
    %v9094 = vmul.f32 %v9052, %v9093
    %v9095 = vmul.f32 %v9053, %v9093
    %v9096 = vmul.f32 %v9054, %v9093
    %v9097 = vmul.f32 %v9055, %v9093
    %9102 = vrot.lane.b32.xlu0 %v9094, 116
    %v9103 = vpop.permute.xlu0 %9102
    %9104 = vrot.lane.b32.xlu0 %v9095, 116
    %v9105 = vpop.permute.xlu0 %9104
    %9106 = vrot.lane.b32.xlu0 %v9096, 116
    %v9107 = vpop.permute.xlu0 %9106
    %9108 = vrot.lane.b32.xlu0 %v9097, 116
    %v9109 = vpop.permute.xlu0 %9108
    %v9114 = vadd.f32 %v9088, %v9103
    %v9115 = vadd.f32 %v9089, %v9105
    %v9116 = vadd.f32 %v9090, %v9107
    %v9117 = vadd.f32 %v9091, %v9109
    %v9118 = vcombine.high %v9114, 0.0
    %v9120 = vunpack.c.l.s4 1983009808
    %v9121 = vunpack.c.0.s8 %v9120
    %v9122 = vlaneseq
    %v9123 = vshrl.u32 %v9122, 7
    %v9124 = vsub.s32 %v9121, %v9123
    %v9125 = vrot.slane %v9114, %v9124
    %v9127 = vunpack.c.l.s4 1983009808
    %v9128 = vunpack.c.0.s8 %v9127
    %v9129 = vlaneseq
    %v9130 = vshrl.u32 %v9129, 7
    %v9131 = vsub.s32 %v9128, %v9130
    %v9132 = vrot.slane %v9118, %v9131
    %v9133 = vcombine.high %v9125, 0.0
    %v9135 = vunpack.c.l.s4 1934713408
    %v9136 = vunpack.c.0.s8 %v9135
    %v9137 = vlaneseq
    %v9138 = vshrl.u32 %v9137, 7
    %v9139 = vsub.s32 %v9136, %v9138
    %v9140 = vrot.slane %v9125, %v9139
    %v9142 = vunpack.c.l.s4 1934713408
    %v9143 = vunpack.c.0.s8 %v9142
    %v9144 = vlaneseq
    %v9145 = vshrl.u32 %v9144, 7
    %v9146 = vsub.s32 %v9143, %v9145
    %v9147 = vrot.slane %v9133, %v9146
    %v9148 = vcombine.high %v9132, 0.0
    %v9150 = vunpack.c.l.s4 1934713408
    %v9151 = vunpack.c.0.s8 %v9150
    %v9152 = vlaneseq
    %v9153 = vshrl.u32 %v9152, 7
    %v9154 = vsub.s32 %v9151, %v9153
    %v9155 = vrot.slane %v9132, %v9154
    %v9157 = vunpack.c.l.s4 1934713408
    %v9158 = vunpack.c.0.s8 %v9157
    %v9159 = vlaneseq
    %v9160 = vshrl.u32 %v9159, 7
    %v9161 = vsub.s32 %v9158, %v9160
    %v9162 = vrot.slane %v9148, %v9161
    %v9163 = vcombine.high %v9140, 0.0
    %v9164 = vcombine.high %v9147, 0.0
    %v9165 = vcombine.high %v9155, 0.0
    %v9166 = vcombine.high %v9162, 0.0
    %v9167 = vcombine.high %v9115, 0.0
    %v9169 = vunpack.c.l.s4 1983009808
    %v9170 = vunpack.c.0.s8 %v9169
    %v9171 = vlaneseq
    %v9172 = vshrl.u32 %v9171, 7
    %v9173 = vsub.s32 %v9170, %v9172
    %v9174 = vrot.slane %v9115, %v9173
    %v9176 = vunpack.c.l.s4 1983009808
    %v9177 = vunpack.c.0.s8 %v9176
    %v9178 = vlaneseq
    %v9179 = vshrl.u32 %v9178, 7
    %v9180 = vsub.s32 %v9177, %v9179
    %v9181 = vrot.slane %v9167, %v9180
    %v9182 = vcombine.high %v9174, 0.0
    %v9184 = vunpack.c.l.s4 1934713408
    %v9185 = vunpack.c.0.s8 %v9184
    %v9186 = vlaneseq
    %v9187 = vshrl.u32 %v9186, 7
    %v9188 = vsub.s32 %v9185, %v9187
    %v9189 = vrot.slane %v9174, %v9188
    %v9191 = vunpack.c.l.s4 1934713408
    %v9192 = vunpack.c.0.s8 %v9191
    %v9193 = vlaneseq
    %v9194 = vshrl.u32 %v9193, 7
    %v9195 = vsub.s32 %v9192, %v9194
    %v9196 = vrot.slane %v9182, %v9195
    %v9197 = vcombine.high %v9181, 0.0
    %v9199 = vunpack.c.l.s4 1934713408
    %v9200 = vunpack.c.0.s8 %v9199
    %v9201 = vlaneseq
    %v9202 = vshrl.u32 %v9201, 7
    %v9203 = vsub.s32 %v9200, %v9202
    %v9204 = vrot.slane %v9181, %v9203
    %v9206 = vunpack.c.l.s4 1934713408
    %v9207 = vunpack.c.0.s8 %v9206
    %v9208 = vlaneseq
    %v9209 = vshrl.u32 %v9208, 7
    %v9210 = vsub.s32 %v9207, %v9209
    %v9211 = vrot.slane %v9197, %v9210
    %v9212 = vcombine.high %v9189, 0.0
    %v9213 = vcombine.high %v9196, 0.0
    %v9214 = vcombine.high %v9204, 0.0
    %v9215 = vcombine.high %v9211, 0.0
    %v9216 = vcombine.high %v9116, 0.0
    %v9218 = vunpack.c.l.s4 1983009808
    %v9219 = vunpack.c.0.s8 %v9218
    %v9220 = vlaneseq
    %v9221 = vshrl.u32 %v9220, 7
    %v9222 = vsub.s32 %v9219, %v9221
    %v9223 = vrot.slane %v9116, %v9222
    %v9225 = vunpack.c.l.s4 1983009808
    %v9226 = vunpack.c.0.s8 %v9225
    %v9227 = vlaneseq
    %v9228 = vshrl.u32 %v9227, 7
    %v9229 = vsub.s32 %v9226, %v9228
    %v9230 = vrot.slane %v9216, %v9229
    %v9231 = vcombine.high %v9223, 0.0
    %v9233 = vunpack.c.l.s4 1934713408
    %v9234 = vunpack.c.0.s8 %v9233
    %v9235 = vlaneseq
    %v9236 = vshrl.u32 %v9235, 7
    %v9237 = vsub.s32 %v9234, %v9236
    %v9238 = vrot.slane %v9223, %v9237
    %v9240 = vunpack.c.l.s4 1934713408
    %v9241 = vunpack.c.0.s8 %v9240
    %v9242 = vlaneseq
    %v9243 = vshrl.u32 %v9242, 7
    %v9244 = vsub.s32 %v9241, %v9243
    %v9245 = vrot.slane %v9231, %v9244
    %v9246 = vcombine.high %v9230, 0.0
    %v9248 = vunpack.c.l.s4 1934713408
    %v9249 = vunpack.c.0.s8 %v9248
    %v9250 = vlaneseq
    %v9251 = vshrl.u32 %v9250, 7
    %v9252 = vsub.s32 %v9249, %v9251
    %v9253 = vrot.slane %v9230, %v9252
    %v9255 = vunpack.c.l.s4 1934713408
    %v9256 = vunpack.c.0.s8 %v9255
    %v9257 = vlaneseq
    %v9258 = vshrl.u32 %v9257, 7
    %v9259 = vsub.s32 %v9256, %v9258
    %v9260 = vrot.slane %v9246, %v9259
    %v9261 = vcombine.high %v9238, 0.0
    %v9262 = vcombine.high %v9245, 0.0
    %v9263 = vcombine.high %v9253, 0.0
    %v9264 = vcombine.high %v9260, 0.0
    %v9265 = vcombine.high %v9117, 0.0
    %v9267 = vunpack.c.l.s4 1983009808
    %v9268 = vunpack.c.0.s8 %v9267
    %v9269 = vlaneseq
    %v9270 = vshrl.u32 %v9269, 7
    %v9271 = vsub.s32 %v9268, %v9270
    %v9272 = vrot.slane %v9117, %v9271
    %v9274 = vunpack.c.l.s4 1983009808
    %v9275 = vunpack.c.0.s8 %v9274
    %v9276 = vlaneseq
    %v9277 = vshrl.u32 %v9276, 7
    %v9278 = vsub.s32 %v9275, %v9277
    %v9279 = vrot.slane %v9265, %v9278
    %v9280 = vcombine.high %v9272, 0.0
    %v9282 = vunpack.c.l.s4 1934713408
    %v9283 = vunpack.c.0.s8 %v9282
    %v9284 = vlaneseq
    %v9285 = vshrl.u32 %v9284, 7
    %v9286 = vsub.s32 %v9283, %v9285
    %v9287 = vrot.slane %v9272, %v9286
    %v9289 = vunpack.c.l.s4 1934713408
    %v9290 = vunpack.c.0.s8 %v9289
    %v9291 = vlaneseq
    %v9292 = vshrl.u32 %v9291, 7
    %v9293 = vsub.s32 %v9290, %v9292
    %v9294 = vrot.slane %v9280, %v9293
    %v9295 = vcombine.high %v9279, 0.0
    %v9297 = vunpack.c.l.s4 1934713408
    %v9298 = vunpack.c.0.s8 %v9297
    %v9299 = vlaneseq
    %v9300 = vshrl.u32 %v9299, 7
    %v9301 = vsub.s32 %v9298, %v9300
    %v9302 = vrot.slane %v9279, %v9301
    %v9304 = vunpack.c.l.s4 1934713408
    %v9305 = vunpack.c.0.s8 %v9304
    %v9306 = vlaneseq
    %v9307 = vshrl.u32 %v9306, 7
    %v9308 = vsub.s32 %v9305, %v9307
    %v9309 = vrot.slane %v9295, %v9308
    %v9310 = vcombine.high %v9287, 0.0
    %v9311 = vcombine.high %v9294, 0.0
    %v9312 = vcombine.high %v9302, 0.0
    %v9313 = vcombine.high %v9309, 0.0
    %9316 = vrot.lane.b32.xlu0 %v9163, 16
    %v9317 = vpop.permute.xlu0 %9316
    %9318 = vrot.lane.b32.xlu0 %v9261, 16
    %v9319 = vpop.permute.xlu0 %9318
    %9324 = vrot.lane.b32.xlu0 %v9147, 32
    %v9325 = vpop.permute.xlu0 %9324
    %9326 = vrot.lane.b32.xlu0 %v9245, 32
    %v9327 = vpop.permute.xlu0 %9326
    %9332 = vrot.lane.b32.xlu0 %v9164, 48
    %v9333 = vpop.permute.xlu0 %9332
    %9334 = vrot.lane.b32.xlu0 %v9262, 48
    %v9335 = vpop.permute.xlu0 %9334
    %9340 = vrot.lane.b32.xlu0 %v9155, 64
    %v9341 = vpop.permute.xlu0 %9340
    %9342 = vrot.lane.b32.xlu0 %v9253, 64
    %v9343 = vpop.permute.xlu0 %9342
    %9348 = vrot.lane.b32.xlu0 %v9165, 80
    %v9349 = vpop.permute.xlu0 %9348
    %9350 = vrot.lane.b32.xlu0 %v9263, 80
    %v9351 = vpop.permute.xlu0 %9350
    %9356 = vrot.lane.b32.xlu0 %v9162, 96
    %v9357 = vpop.permute.xlu0 %9356
    %9358 = vrot.lane.b32.xlu0 %v9260, 96
    %v9359 = vpop.permute.xlu0 %9358
    %9364 = vrot.lane.b32.xlu0 %v9166, 112
    %v9365 = vpop.permute.xlu0 %9364
    %9366 = vrot.lane.b32.xlu0 %v9264, 112
    %v9367 = vpop.permute.xlu0 %9366
    %9372 = vrot.lane.b32.xlu0 %v9212, 16
    %v9373 = vpop.permute.xlu0 %9372
    %9374 = vrot.lane.b32.xlu0 %v9310, 16
    %v9375 = vpop.permute.xlu0 %9374
    %9380 = vrot.lane.b32.xlu0 %v9196, 32
    %v9381 = vpop.permute.xlu0 %9380
    %9382 = vrot.lane.b32.xlu0 %v9294, 32
    %v9383 = vpop.permute.xlu0 %9382
    %9388 = vrot.lane.b32.xlu0 %v9213, 48
    %v9389 = vpop.permute.xlu0 %9388
    %9390 = vrot.lane.b32.xlu0 %v9311, 48
    %v9391 = vpop.permute.xlu0 %9390
    %9396 = vrot.lane.b32.xlu0 %v9204, 64
    %v9397 = vpop.permute.xlu0 %9396
    %9398 = vrot.lane.b32.xlu0 %v9302, 64
    %v9399 = vpop.permute.xlu0 %9398
    %9404 = vrot.lane.b32.xlu0 %v9214, 80
    %v9405 = vpop.permute.xlu0 %9404
    %9406 = vrot.lane.b32.xlu0 %v9312, 80
    %v9407 = vpop.permute.xlu0 %9406
    %9412 = vrot.lane.b32.xlu0 %v9211, 96
    %v9413 = vpop.permute.xlu0 %9412
    %9414 = vrot.lane.b32.xlu0 %v9309, 96
    %v9415 = vpop.permute.xlu0 %9414
    %9420 = vrot.lane.b32.xlu0 %v9215, 112
    %v9421 = vpop.permute.xlu0 %9420
    %9422 = vrot.lane.b32.xlu0 %v9313, 112
    %v9423 = vpop.permute.xlu0 %9422
    %v9426 = vsel %vm1229, %v9140, %v9317
    %v9427 = vsel %vm1229, %v9238, %v9319
    %v9428 = vsel %vm1232, %v9426, %v9325
    %v9429 = vsel %vm1232, %v9427, %v9327
    %v9430 = vsel %vm1235, %v9428, %v9333
    %v9431 = vsel %vm1235, %v9429, %v9335
    %v9432 = vsel %vm1238, %v9430, %v9341
    %v9433 = vsel %vm1238, %v9431, %v9343
    %v9434 = vsel %vm1241, %v9432, %v9349
    %v9435 = vsel %vm1241, %v9433, %v9351
    %v9436 = vsel %vm1244, %v9434, %v9357
    %v9437 = vsel %vm1244, %v9435, %v9359
    %v9438 = vsel %vm1247, %v9436, %v9365
    %v9439 = vsel %vm1247, %v9437, %v9367
    %v9440 = vsel %vm1229, %v9189, %v9373
    %v9441 = vsel %vm1229, %v9287, %v9375
    %v9442 = vsel %vm1232, %v9440, %v9381
    %v9443 = vsel %vm1232, %v9441, %v9383
    %v9444 = vsel %vm1235, %v9442, %v9389
    %v9445 = vsel %vm1235, %v9443, %v9391
    %v9446 = vsel %vm1238, %v9444, %v9397
    %v9447 = vsel %vm1238, %v9445, %v9399
    %v9448 = vsel %vm1241, %v9446, %v9405
    %v9449 = vsel %vm1241, %v9447, %v9407
    %v9450 = vsel %vm1244, %v9448, %v9413
    %v9451 = vsel %vm1244, %v9449, %v9415
    %v9452 = vsel %vm1247, %v9450, %v9421
    %v9453 = vsel %vm1247, %v9451, %v9423
    %v9458 = vcombine.low %v9438, %v9452
    %v9460 = vunpack.c.l.s4 1966171168
    %v9461 = vunpack.c.0.s8 %v9460
    %v9462 = vlaneseq
    %v9463 = vshrl.u32 %v9462, 7
    %v9464 = vsub.s32 %v9461, %v9463
    %v9465 = vrot.slane %v9458, %v9464
    %v9467 = vunpack.c.l.s4 1966171168
    %v9468 = vunpack.c.0.s8 %v9467
    %v9469 = vlaneseq
    %v9470 = vshrl.u32 %v9469, 7
    %v9471 = vsub.s32 %v9468, %v9470
    %v9472 = vrot.slane %v9465, %v9471
    %v9473 = vcombine.low %v9439, %v9453
    %v9475 = vunpack.c.l.s4 1966171168
    %v9476 = vunpack.c.0.s8 %v9475
    %v9477 = vlaneseq
    %v9478 = vshrl.u32 %v9477, 7
    %v9479 = vsub.s32 %v9476, %v9478
    %v9480 = vrot.slane %v9473, %v9479
    %v9482 = vunpack.c.l.s4 1966171168
    %v9483 = vunpack.c.0.s8 %v9482
    %v9484 = vlaneseq
    %v9485 = vshrl.u32 %v9484, 7
    %v9486 = vsub.s32 %v9483, %v9485
    %v9487 = vrot.slane %v9480, %v9486
    %s9490 = scalar_lea.vmem [#allocation8], 22
    %9491 = vst.msk [vmem:[%s9490] ss:$8 sm:$0x3] %vm1303, %v9472
    %9492 = vst.msk [vmem:[%s9490] ss:$8 sm:$0x0] %vm1303, %v9472
    %s9493 = scalar_lea.vmem [#allocation8], 54
    %9494 = vst.msk [vmem:[%s9493] ss:$8 sm:$0x3] %vm1303, %v9487
    %9495 = vst.msk [vmem:[%s9493] ss:$8 sm:$0x0] %vm1303, %v9487
    %v9496 = vld [vmem:[%s2487] sm:$0xff]
    %v9497 = vld [vmem:[%s2487 + $0x8] sm:$0xff]
    %v9498 = vld [vmem:[%s2487 + $0x80] sm:$0xff]
    %v9499 = vld [vmem:[%s2487 + $0x88] sm:$0xff]
    %s9500 = sld [smem:[#allocation7 + $0x87]]
    %v9501 = vstv %s9500
    %v9502 = vmul.f32 %v9496, %v9501
    %v9503 = vmul.f32 %v9497, %v9501
    %v9504 = vmul.f32 %v9498, %v9501
    %v9505 = vmul.f32 %v9499, %v9501
    %s9506 = sld [smem:[#allocation7 + $0x88]]
    %v9507 = vstv %s9506
    %v9508 = vmul.f32 %v9496, %v9507
    %v9509 = vmul.f32 %v9497, %v9507
    %v9510 = vmul.f32 %v9498, %v9507
    %v9511 = vmul.f32 %v9499, %v9507
    %9516 = vrot.lane.b32.xlu0 %v9508, 122
    %v9517 = vpop.permute.xlu0 %9516
    %9518 = vrot.lane.b32.xlu0 %v9509, 122
    %v9519 = vpop.permute.xlu0 %9518
    %9520 = vrot.lane.b32.xlu0 %v9510, 122
    %v9521 = vpop.permute.xlu0 %9520
    %9522 = vrot.lane.b32.xlu0 %v9511, 122
    %v9523 = vpop.permute.xlu0 %9522
    %v9528 = vadd.f32 %v9502, %v9517
    %v9529 = vadd.f32 %v9503, %v9519
    %v9530 = vadd.f32 %v9504, %v9521
    %v9531 = vadd.f32 %v9505, %v9523
    %s9532 = sld [smem:[#allocation7 + $0x89]]
    %v9533 = vstv %s9532
    %v9534 = vmul.f32 %v9496, %v9533
    %v9535 = vmul.f32 %v9497, %v9533
    %v9536 = vmul.f32 %v9498, %v9533
    %v9537 = vmul.f32 %v9499, %v9533
    %9542 = vrot.lane.b32.xlu0 %v9534, 116
    %v9543 = vpop.permute.xlu0 %9542
    %9544 = vrot.lane.b32.xlu0 %v9535, 116
    %v9545 = vpop.permute.xlu0 %9544
    %9546 = vrot.lane.b32.xlu0 %v9536, 116
    %v9547 = vpop.permute.xlu0 %9546
    %9548 = vrot.lane.b32.xlu0 %v9537, 116
    %v9549 = vpop.permute.xlu0 %9548
    %v9554 = vadd.f32 %v9528, %v9543
    %v9555 = vadd.f32 %v9529, %v9545
    %v9556 = vadd.f32 %v9530, %v9547
    %v9557 = vadd.f32 %v9531, %v9549
    %v9558 = vld [vmem:[%s2487 + $0x6] sm:$0xff]
    %v9559 = vld [vmem:[%s2487 + $0xe] sm:$0xff]
    %v9560 = vld [vmem:[%s2487 + $0x86] sm:$0xff]
    %v9561 = vld [vmem:[%s2487 + $0x8e] sm:$0xff]
    %s9562 = sld [smem:[#allocation7 + $0x8a]]
    %v9563 = vstv %s9562
    %v9564 = vmul.f32 %v9558, %v9563
    %v9565 = vmul.f32 %v9559, %v9563
    %v9566 = vmul.f32 %v9560, %v9563
    %v9567 = vmul.f32 %v9561, %v9563
    %v9568 = vadd.f32 %v9554, %v9564
    %v9569 = vadd.f32 %v9555, %v9565
    %v9570 = vadd.f32 %v9556, %v9566
    %v9571 = vadd.f32 %v9557, %v9567
    %s9572 = sld [smem:[#allocation7 + $0x8b]]
    %v9573 = vstv %s9572
    %v9574 = vmul.f32 %v9558, %v9573
    %v9575 = vmul.f32 %v9559, %v9573
    %v9576 = vmul.f32 %v9560, %v9573
    %v9577 = vmul.f32 %v9561, %v9573
    %9582 = vrot.lane.b32.xlu0 %v9574, 122
    %v9583 = vpop.permute.xlu0 %9582
    %9584 = vrot.lane.b32.xlu0 %v9575, 122
    %v9585 = vpop.permute.xlu0 %9584
    %9586 = vrot.lane.b32.xlu0 %v9576, 122
    %v9587 = vpop.permute.xlu0 %9586
    %9588 = vrot.lane.b32.xlu0 %v9577, 122
    %v9589 = vpop.permute.xlu0 %9588
    %v9594 = vadd.f32 %v9568, %v9583
    %v9595 = vadd.f32 %v9569, %v9585
    %v9596 = vadd.f32 %v9570, %v9587
    %v9597 = vadd.f32 %v9571, %v9589
    %s9598 = sld [smem:[#allocation7 + $0x8c]]
    %v9599 = vstv %s9598
    %v9600 = vmul.f32 %v9558, %v9599
    %v9601 = vmul.f32 %v9559, %v9599
    %v9602 = vmul.f32 %v9560, %v9599
    %v9603 = vmul.f32 %v9561, %v9599
    %9608 = vrot.lane.b32.xlu0 %v9600, 116
    %v9609 = vpop.permute.xlu0 %9608
    %9610 = vrot.lane.b32.xlu0 %v9601, 116
    %v9611 = vpop.permute.xlu0 %9610
    %9612 = vrot.lane.b32.xlu0 %v9602, 116
    %v9613 = vpop.permute.xlu0 %9612
    %9614 = vrot.lane.b32.xlu0 %v9603, 116
    %v9615 = vpop.permute.xlu0 %9614
    %v9620 = vadd.f32 %v9594, %v9609
    %v9621 = vadd.f32 %v9595, %v9611
    %v9622 = vadd.f32 %v9596, %v9613
    %v9623 = vadd.f32 %v9597, %v9615
    %v9624 = vld [vmem:[%s2487 + $0xc] sm:$0xff]
    %v9625 = vld [vmem:[%s2487 + $0x14] sm:$0xff]
    %v9626 = vld [vmem:[%s2487 + $0x8c] sm:$0xff]
    %v9627 = vld [vmem:[%s2487 + $0x94] sm:$0xff]
    %s9628 = sld [smem:[#allocation7 + $0x8d]]
    %v9629 = vstv %s9628
    %v9630 = vmul.f32 %v9624, %v9629
    %v9631 = vmul.f32 %v9625, %v9629
    %v9632 = vmul.f32 %v9626, %v9629
    %v9633 = vmul.f32 %v9627, %v9629
    %v9634 = vadd.f32 %v9620, %v9630
    %v9635 = vadd.f32 %v9621, %v9631
    %v9636 = vadd.f32 %v9622, %v9632
    %v9637 = vadd.f32 %v9623, %v9633
    %s9638 = sld [smem:[#allocation7 + $0x8e]]
    %v9639 = vstv %s9638
    %v9640 = vmul.f32 %v9624, %v9639
    %v9641 = vmul.f32 %v9625, %v9639
    %v9642 = vmul.f32 %v9626, %v9639
    %v9643 = vmul.f32 %v9627, %v9639
    %9648 = vrot.lane.b32.xlu0 %v9640, 122
    %v9649 = vpop.permute.xlu0 %9648
    %9650 = vrot.lane.b32.xlu0 %v9641, 122
    %v9651 = vpop.permute.xlu0 %9650
    %9652 = vrot.lane.b32.xlu0 %v9642, 122
    %v9653 = vpop.permute.xlu0 %9652
    %9654 = vrot.lane.b32.xlu0 %v9643, 122
    %v9655 = vpop.permute.xlu0 %9654
    %v9660 = vadd.f32 %v9634, %v9649
    %v9661 = vadd.f32 %v9635, %v9651
    %v9662 = vadd.f32 %v9636, %v9653
    %v9663 = vadd.f32 %v9637, %v9655
    %s9664 = sld [smem:[#allocation7 + $0x8f]]
    %v9665 = vstv %s9664
    %v9666 = vmul.f32 %v9624, %v9665
    %v9667 = vmul.f32 %v9625, %v9665
    %v9668 = vmul.f32 %v9626, %v9665
    %v9669 = vmul.f32 %v9627, %v9665
    %9674 = vrot.lane.b32.xlu0 %v9666, 116
    %v9675 = vpop.permute.xlu0 %9674
    %9676 = vrot.lane.b32.xlu0 %v9667, 116
    %v9677 = vpop.permute.xlu0 %9676
    %9678 = vrot.lane.b32.xlu0 %v9668, 116
    %v9679 = vpop.permute.xlu0 %9678
    %9680 = vrot.lane.b32.xlu0 %v9669, 116
    %v9681 = vpop.permute.xlu0 %9680
    %v9686 = vadd.f32 %v9660, %v9675
    %v9687 = vadd.f32 %v9661, %v9677
    %v9688 = vadd.f32 %v9662, %v9679
    %v9689 = vadd.f32 %v9663, %v9681
    %v9690 = vcombine.high %v9686, 0.0
    %v9692 = vunpack.c.l.s4 1983009808
    %v9693 = vunpack.c.0.s8 %v9692
    %v9694 = vlaneseq
    %v9695 = vshrl.u32 %v9694, 7
    %v9696 = vsub.s32 %v9693, %v9695
    %v9697 = vrot.slane %v9686, %v9696
    %v9699 = vunpack.c.l.s4 1983009808
    %v9700 = vunpack.c.0.s8 %v9699
    %v9701 = vlaneseq
    %v9702 = vshrl.u32 %v9701, 7
    %v9703 = vsub.s32 %v9700, %v9702
    %v9704 = vrot.slane %v9690, %v9703
    %v9705 = vcombine.high %v9697, 0.0
    %v9707 = vunpack.c.l.s4 1934713408
    %v9708 = vunpack.c.0.s8 %v9707
    %v9709 = vlaneseq
    %v9710 = vshrl.u32 %v9709, 7
    %v9711 = vsub.s32 %v9708, %v9710
    %v9712 = vrot.slane %v9697, %v9711
    %v9714 = vunpack.c.l.s4 1934713408
    %v9715 = vunpack.c.0.s8 %v9714
    %v9716 = vlaneseq
    %v9717 = vshrl.u32 %v9716, 7
    %v9718 = vsub.s32 %v9715, %v9717
    %v9719 = vrot.slane %v9705, %v9718
    %v9720 = vcombine.high %v9704, 0.0
    %v9722 = vunpack.c.l.s4 1934713408
    %v9723 = vunpack.c.0.s8 %v9722
    %v9724 = vlaneseq
    %v9725 = vshrl.u32 %v9724, 7
    %v9726 = vsub.s32 %v9723, %v9725
    %v9727 = vrot.slane %v9704, %v9726
    %v9729 = vunpack.c.l.s4 1934713408
    %v9730 = vunpack.c.0.s8 %v9729
    %v9731 = vlaneseq
    %v9732 = vshrl.u32 %v9731, 7
    %v9733 = vsub.s32 %v9730, %v9732
    %v9734 = vrot.slane %v9720, %v9733
    %v9735 = vcombine.high %v9712, 0.0
    %v9736 = vcombine.high %v9719, 0.0
    %v9737 = vcombine.high %v9727, 0.0
    %v9738 = vcombine.high %v9734, 0.0
    %v9739 = vcombine.high %v9687, 0.0
    %v9741 = vunpack.c.l.s4 1983009808
    %v9742 = vunpack.c.0.s8 %v9741
    %v9743 = vlaneseq
    %v9744 = vshrl.u32 %v9743, 7
    %v9745 = vsub.s32 %v9742, %v9744
    %v9746 = vrot.slane %v9687, %v9745
    %v9748 = vunpack.c.l.s4 1983009808
    %v9749 = vunpack.c.0.s8 %v9748
    %v9750 = vlaneseq
    %v9751 = vshrl.u32 %v9750, 7
    %v9752 = vsub.s32 %v9749, %v9751
    %v9753 = vrot.slane %v9739, %v9752
    %v9754 = vcombine.high %v9746, 0.0
    %v9756 = vunpack.c.l.s4 1934713408
    %v9757 = vunpack.c.0.s8 %v9756
    %v9758 = vlaneseq
    %v9759 = vshrl.u32 %v9758, 7
    %v9760 = vsub.s32 %v9757, %v9759
    %v9761 = vrot.slane %v9746, %v9760
    %v9763 = vunpack.c.l.s4 1934713408
    %v9764 = vunpack.c.0.s8 %v9763
    %v9765 = vlaneseq
    %v9766 = vshrl.u32 %v9765, 7
    %v9767 = vsub.s32 %v9764, %v9766
    %v9768 = vrot.slane %v9754, %v9767
    %v9769 = vcombine.high %v9753, 0.0
    %v9771 = vunpack.c.l.s4 1934713408
    %v9772 = vunpack.c.0.s8 %v9771
    %v9773 = vlaneseq
    %v9774 = vshrl.u32 %v9773, 7
    %v9775 = vsub.s32 %v9772, %v9774
    %v9776 = vrot.slane %v9753, %v9775
    %v9778 = vunpack.c.l.s4 1934713408
    %v9779 = vunpack.c.0.s8 %v9778
    %v9780 = vlaneseq
    %v9781 = vshrl.u32 %v9780, 7
    %v9782 = vsub.s32 %v9779, %v9781
    %v9783 = vrot.slane %v9769, %v9782
    %v9784 = vcombine.high %v9761, 0.0
    %v9785 = vcombine.high %v9768, 0.0
    %v9786 = vcombine.high %v9776, 0.0
    %v9787 = vcombine.high %v9783, 0.0
    %v9788 = vcombine.high %v9688, 0.0
    %v9790 = vunpack.c.l.s4 1983009808
    %v9791 = vunpack.c.0.s8 %v9790
    %v9792 = vlaneseq
    %v9793 = vshrl.u32 %v9792, 7
    %v9794 = vsub.s32 %v9791, %v9793
    %v9795 = vrot.slane %v9688, %v9794
    %v9797 = vunpack.c.l.s4 1983009808
    %v9798 = vunpack.c.0.s8 %v9797
    %v9799 = vlaneseq
    %v9800 = vshrl.u32 %v9799, 7
    %v9801 = vsub.s32 %v9798, %v9800
    %v9802 = vrot.slane %v9788, %v9801
    %v9803 = vcombine.high %v9795, 0.0
    %v9805 = vunpack.c.l.s4 1934713408
    %v9806 = vunpack.c.0.s8 %v9805
    %v9807 = vlaneseq
    %v9808 = vshrl.u32 %v9807, 7
    %v9809 = vsub.s32 %v9806, %v9808
    %v9810 = vrot.slane %v9795, %v9809
    %v9812 = vunpack.c.l.s4 1934713408
    %v9813 = vunpack.c.0.s8 %v9812
    %v9814 = vlaneseq
    %v9815 = vshrl.u32 %v9814, 7
    %v9816 = vsub.s32 %v9813, %v9815
    %v9817 = vrot.slane %v9803, %v9816
    %v9818 = vcombine.high %v9802, 0.0
    %v9820 = vunpack.c.l.s4 1934713408
    %v9821 = vunpack.c.0.s8 %v9820
    %v9822 = vlaneseq
    %v9823 = vshrl.u32 %v9822, 7
    %v9824 = vsub.s32 %v9821, %v9823
    %v9825 = vrot.slane %v9802, %v9824
    %v9827 = vunpack.c.l.s4 1934713408
    %v9828 = vunpack.c.0.s8 %v9827
    %v9829 = vlaneseq
    %v9830 = vshrl.u32 %v9829, 7
    %v9831 = vsub.s32 %v9828, %v9830
    %v9832 = vrot.slane %v9818, %v9831
    %v9833 = vcombine.high %v9810, 0.0
    %v9834 = vcombine.high %v9817, 0.0
    %v9835 = vcombine.high %v9825, 0.0
    %v9836 = vcombine.high %v9832, 0.0
    %v9837 = vcombine.high %v9689, 0.0
    %v9839 = vunpack.c.l.s4 1983009808
    %v9840 = vunpack.c.0.s8 %v9839
    %v9841 = vlaneseq
    %v9842 = vshrl.u32 %v9841, 7
    %v9843 = vsub.s32 %v9840, %v9842
    %v9844 = vrot.slane %v9689, %v9843
    %v9846 = vunpack.c.l.s4 1983009808
    %v9847 = vunpack.c.0.s8 %v9846
    %v9848 = vlaneseq
    %v9849 = vshrl.u32 %v9848, 7
    %v9850 = vsub.s32 %v9847, %v9849
    %v9851 = vrot.slane %v9837, %v9850
    %v9852 = vcombine.high %v9844, 0.0
    %v9854 = vunpack.c.l.s4 1934713408
    %v9855 = vunpack.c.0.s8 %v9854
    %v9856 = vlaneseq
    %v9857 = vshrl.u32 %v9856, 7
    %v9858 = vsub.s32 %v9855, %v9857
    %v9859 = vrot.slane %v9844, %v9858
    %v9861 = vunpack.c.l.s4 1934713408
    %v9862 = vunpack.c.0.s8 %v9861
    %v9863 = vlaneseq
    %v9864 = vshrl.u32 %v9863, 7
    %v9865 = vsub.s32 %v9862, %v9864
    %v9866 = vrot.slane %v9852, %v9865
    %v9867 = vcombine.high %v9851, 0.0
    %v9869 = vunpack.c.l.s4 1934713408
    %v9870 = vunpack.c.0.s8 %v9869
    %v9871 = vlaneseq
    %v9872 = vshrl.u32 %v9871, 7
    %v9873 = vsub.s32 %v9870, %v9872
    %v9874 = vrot.slane %v9851, %v9873
    %v9876 = vunpack.c.l.s4 1934713408
    %v9877 = vunpack.c.0.s8 %v9876
    %v9878 = vlaneseq
    %v9879 = vshrl.u32 %v9878, 7
    %v9880 = vsub.s32 %v9877, %v9879
    %v9881 = vrot.slane %v9867, %v9880
    %v9882 = vcombine.high %v9859, 0.0
    %v9883 = vcombine.high %v9866, 0.0
    %v9884 = vcombine.high %v9874, 0.0
    %v9885 = vcombine.high %v9881, 0.0
    %9888 = vrot.lane.b32.xlu0 %v9735, 16
    %v9889 = vpop.permute.xlu0 %9888
    %9890 = vrot.lane.b32.xlu0 %v9833, 16
    %v9891 = vpop.permute.xlu0 %9890
    %9896 = vrot.lane.b32.xlu0 %v9719, 32
    %v9897 = vpop.permute.xlu0 %9896
    %9898 = vrot.lane.b32.xlu0 %v9817, 32
    %v9899 = vpop.permute.xlu0 %9898
    %9904 = vrot.lane.b32.xlu0 %v9736, 48
    %v9905 = vpop.permute.xlu0 %9904
    %9906 = vrot.lane.b32.xlu0 %v9834, 48
    %v9907 = vpop.permute.xlu0 %9906
    %9912 = vrot.lane.b32.xlu0 %v9727, 64
    %v9913 = vpop.permute.xlu0 %9912
    %9914 = vrot.lane.b32.xlu0 %v9825, 64
    %v9915 = vpop.permute.xlu0 %9914
    %9920 = vrot.lane.b32.xlu0 %v9737, 80
    %v9921 = vpop.permute.xlu0 %9920
    %9922 = vrot.lane.b32.xlu0 %v9835, 80
    %v9923 = vpop.permute.xlu0 %9922
    %9928 = vrot.lane.b32.xlu0 %v9734, 96
    %v9929 = vpop.permute.xlu0 %9928
    %9930 = vrot.lane.b32.xlu0 %v9832, 96
    %v9931 = vpop.permute.xlu0 %9930
    %9936 = vrot.lane.b32.xlu0 %v9738, 112
    %v9937 = vpop.permute.xlu0 %9936
    %9938 = vrot.lane.b32.xlu0 %v9836, 112
    %v9939 = vpop.permute.xlu0 %9938
    %9944 = vrot.lane.b32.xlu0 %v9784, 16
    %v9945 = vpop.permute.xlu0 %9944
    %9946 = vrot.lane.b32.xlu0 %v9882, 16
    %v9947 = vpop.permute.xlu0 %9946
    %9952 = vrot.lane.b32.xlu0 %v9768, 32
    %v9953 = vpop.permute.xlu0 %9952
    %9954 = vrot.lane.b32.xlu0 %v9866, 32
    %v9955 = vpop.permute.xlu0 %9954
    %9960 = vrot.lane.b32.xlu0 %v9785, 48
    %v9961 = vpop.permute.xlu0 %9960
    %9962 = vrot.lane.b32.xlu0 %v9883, 48
    %v9963 = vpop.permute.xlu0 %9962
    %9968 = vrot.lane.b32.xlu0 %v9776, 64
    %v9969 = vpop.permute.xlu0 %9968
    %9970 = vrot.lane.b32.xlu0 %v9874, 64
    %v9971 = vpop.permute.xlu0 %9970
    %9976 = vrot.lane.b32.xlu0 %v9786, 80
    %v9977 = vpop.permute.xlu0 %9976
    %9978 = vrot.lane.b32.xlu0 %v9884, 80
    %v9979 = vpop.permute.xlu0 %9978
    %9984 = vrot.lane.b32.xlu0 %v9783, 96
    %v9985 = vpop.permute.xlu0 %9984
    %9986 = vrot.lane.b32.xlu0 %v9881, 96
    %v9987 = vpop.permute.xlu0 %9986
    %9992 = vrot.lane.b32.xlu0 %v9787, 112
    %v9993 = vpop.permute.xlu0 %9992
    %9994 = vrot.lane.b32.xlu0 %v9885, 112
    %v9995 = vpop.permute.xlu0 %9994
    %v9998 = vsel %vm1229, %v9712, %v9889
    %v9999 = vsel %vm1229, %v9810, %v9891
    %v10000 = vsel %vm1232, %v9998, %v9897
    %v10001 = vsel %vm1232, %v9999, %v9899
    %v10002 = vsel %vm1235, %v10000, %v9905
    %v10003 = vsel %vm1235, %v10001, %v9907
    %v10004 = vsel %vm1238, %v10002, %v9913
    %v10005 = vsel %vm1238, %v10003, %v9915
    %v10006 = vsel %vm1241, %v10004, %v9921
    %v10007 = vsel %vm1241, %v10005, %v9923
    %v10008 = vsel %vm1244, %v10006, %v9929
    %v10009 = vsel %vm1244, %v10007, %v9931
    %v10010 = vsel %vm1247, %v10008, %v9937
    %v10011 = vsel %vm1247, %v10009, %v9939
    %v10012 = vsel %vm1229, %v9761, %v9945
    %v10013 = vsel %vm1229, %v9859, %v9947
    %v10014 = vsel %vm1232, %v10012, %v9953
    %v10015 = vsel %vm1232, %v10013, %v9955
    %v10016 = vsel %vm1235, %v10014, %v9961
    %v10017 = vsel %vm1235, %v10015, %v9963
    %v10018 = vsel %vm1238, %v10016, %v9969
    %v10019 = vsel %vm1238, %v10017, %v9971
    %v10020 = vsel %vm1241, %v10018, %v9977
    %v10021 = vsel %vm1241, %v10019, %v9979
    %v10022 = vsel %vm1244, %v10020, %v9985
    %v10023 = vsel %vm1244, %v10021, %v9987
    %v10024 = vsel %vm1247, %v10022, %v9993
    %v10025 = vsel %vm1247, %v10023, %v9995
    %v10030 = vcombine.low %v10010, %v10024
    %v10032 = vunpack.c.l.s4 1966171168
    %v10033 = vunpack.c.0.s8 %v10032
    %v10034 = vlaneseq
    %v10035 = vshrl.u32 %v10034, 7
    %v10036 = vsub.s32 %v10033, %v10035
    %v10037 = vrot.slane %v10030, %v10036
    %v10039 = vunpack.c.l.s4 1966171168
    %v10040 = vunpack.c.0.s8 %v10039
    %v10041 = vlaneseq
    %v10042 = vshrl.u32 %v10041, 7
    %v10043 = vsub.s32 %v10040, %v10042
    %v10044 = vrot.slane %v10037, %v10043
    %v10045 = vcombine.low %v10011, %v10025
    %v10047 = vunpack.c.l.s4 1966171168
    %v10048 = vunpack.c.0.s8 %v10047
    %v10049 = vlaneseq
    %v10050 = vshrl.u32 %v10049, 7
    %v10051 = vsub.s32 %v10048, %v10050
    %v10052 = vrot.slane %v10045, %v10051
    %v10054 = vunpack.c.l.s4 1966171168
    %v10055 = vunpack.c.0.s8 %v10054
    %v10056 = vlaneseq
    %v10057 = vshrl.u32 %v10056, 7
    %v10058 = vsub.s32 %v10055, %v10057
    %v10059 = vrot.slane %v10052, %v10058
    %s10062 = scalar_lea.vmem [#allocation8], 23
    %10063 = vst.msk [vmem:[%s10062] ss:$8 sm:$0x3] %vm1303, %v10044
    %10064 = vst.msk [vmem:[%s10062] ss:$8 sm:$0x0] %vm1303, %v10044
    %s10065 = scalar_lea.vmem [#allocation8], 55
    %10066 = vst.msk [vmem:[%s10065] ss:$8 sm:$0x3] %vm1303, %v10059
    %10067 = vst.msk [vmem:[%s10065] ss:$8 sm:$0x0] %vm1303, %v10059
    // Predicated region
    $region30: #{tpu_custom_call.1} parent=1 // pred_check
      _
    $region31: #{tpu_custom_call.1} parent=1 // pred_check_branch
      %10069 = sbr.rel (0) target = $region33
    $region32: #{tpu_custom_call.1} parent=1 // pred_region
      %s10071 = ssub.s32 1024, 1024
      %10072 = vsyncadd [#allocation5], %s10071
      %s10073 = sshll.u32 [#allocation8], 4
      %s10074 = int_to_ptr.vmem [resolvable:$true] %s10073
      %10079 = dma.vmem_to_hbm [thread:$0]  %s10074, 1024, %s5, [#allocation5], 256, 256, 16
    $region33: #{tpu_custom_call.1} parent=1 // pred_fallthru
      _
    // Predicated region
    $region34: #{tpu_custom_call.1} parent=1 // pred_check
      _
    $region35: #{tpu_custom_call.1} parent=1 // pred_check_branch
      %10081 = sbr.rel (0) target = $region37
    $region36: #{tpu_custom_call.1} parent=1 // pred_region
      %10082 = dma.done [#allocation5], 1024
    $region37: #{tpu_custom_call.1} parent=1 // pred_fallthru
      _
    %10083 = vsyncpa [#allocation4], 1
    %10084 = vsyncpa [#allocation5], 1
    %10085 = vsyncpa [#allocation6], 1

</llo_original>
